<compile_context>
chip_gen: v7x
topology: tpu7x:2x2x1
jax: 0.10.0
libtpu: 0.0.40
codegen_flags: <defaults>
</compile_context>

<pallas_src>
import functools

import jax
import jax.numpy as jnp
from jax.experimental import pallas as pl
from jax.experimental.pallas import tpu as pltpu

DP = 128   # hidden dim padded to the 128-lane vreg width (logical hidden_dim <= DP)
AP = 128   # attention dim padded to 128 lanes (logical attn_dim <= AP)
ET = 128   # edge tile size (grid reduction axis)


# ----------------------------------------------------------------------------
# Fused per-layer Pallas kernel: GNN message/attention/scatter + GRU + scores
# ----------------------------------------------------------------------------
def tpar_layer_kernel(hs_ref, hr_ref, hqr_ref, dtau_ref, obj_ref, h0_ref,
                      wcat_ref, wh_ref, wih_ref, whh_ref, gbias_ref, vecs_ref,
                      hid_out_ref, score_out_ref, agg_ref):
    e = pl.program_id(0)

    @pl.when(e == 0)
    def _():
        agg_ref[...] = jnp.zeros_like(agg_ref)

    hs = hs_ref[...]            # (ET, DP) f32
    hr = hr_ref[...]            # (ET, DP) f32
    hqr = hqr_ref[...]          # (ET, DP) f32
    dtau = dtau_ref[...]        # (ET, 1)  f32

    # Packed small vectors (one (8, 128) f32 slab).
    vecs = vecs_ref[...]
    wt1, bt1 = vecs[0:1, :], vecs[1:2, :]
    wt2, bt2 = vecs[2:3, :], vecs[3:4, :]
    bqr, wa = vecs[4:5, :], vecs[5:6, :]
    wf = vecs[6:7, :]
    ba = vecs[7:8, 0:1]

    # Temporal encoding (f32 elementwise on VPU/EUP): h_tau1 + sin(h_tau2).
    h_hau = wt1 * dtau + bt1 + jnp.sin(wt2 * dtau + bt2)        # (ET, DP)

    message = hs + hr + h_hau                                   # (ET, DP) f32

    # Fused 4-way attention matmul: one K = 4*DP bf16 MXU pass.
    cat = jnp.concatenate([hs, hr, hqr, h_hau], axis=-1).astype(jnp.bfloat16)
    attn = jnp.dot(cat, wcat_ref[...], preferred_element_type=jnp.float32)
    attn = jnp.maximum(attn + bqr, 0.0)                         # ReLU, (ET, AP)

    # alpha via lane reduction (XLU) instead of a width-1 MXU output.
    alpha = jax.nn.sigmoid(jnp.sum(attn * wa, axis=-1, keepdims=True) + ba)

    weighted = (alpha * message).astype(jnp.bfloat16)           # (ET, DP)

    # Exact sum-scatter over destination nodes: bf16 0/1 one-hot @ messages,
    # accumulated in an f32 VMEM scratch across edge tiles.
    n_node = agg_ref.shape[0]
    e_tile = obj_ref.shape[1]
    row_ids = jax.lax.broadcasted_iota(jnp.int32, (n_node, e_tile), 0)
    onehot = (row_ids == obj_ref[...]).astype(jnp.bfloat16)     # (N, ET)
    agg_ref[...] += jnp.dot(onehot, weighted,
                            preferred_element_type=jnp.float32)  # (N, DP)

    @pl.when(e == pl.num_programs(0) - 1)
    def _():
        dp = h0_ref.shape[1]
        agg = agg_ref[...]
        # hidden_new = act(W_h(message_agg)); act == relu
        h_new = jnp.maximum(
            jnp.dot(agg.astype(jnp.bfloat16), wh_ref[...],
                    preferred_element_type=jnp.float32), 0.0)    # (N, DP)

        # Single-step GRU cell (seq_len == 1 in the reference forward).
        h0 = h0_ref[...]
        gbias = gbias_ref[...]                                   # (2, 3*DP)
        gi = jnp.dot(h_new.astype(jnp.bfloat16), wih_ref[...],
                     preferred_element_type=jnp.float32) + gbias[0:1, :]
        gh = jnp.dot(h0.astype(jnp.bfloat16), whh_ref[...],
                     preferred_element_type=jnp.float32) + gbias[1:2, :]
        r = jax.nn.sigmoid(gi[:, :dp] + gh[:, :dp])
        z = jax.nn.sigmoid(gi[:, dp:2 * dp] + gh[:, dp:2 * dp])
        g = jnp.tanh(gi[:, 2 * dp:] + r * gh[:, 2 * dp:])
        h_out = (1.0 - z) * g + z * h0                           # (N, DP)

        hid_out_ref[...] = h_out
        # W_final (no bias) as a lane reduction instead of a (DP,1) matmul.
        score_out_ref[...] = jnp.sum(h_out * wf, axis=-1, keepdims=True)


def tpar_layer(hs, hr, hqr, dtau, obj_row, h0, lp, gp):
    """One fused GNN-layer + GRU + score pallas_call. Edge axis is tiled."""
    np_rows = h0.shape[0]               # node count padded to a multiple of 8
    ep = hs.shape[0]
    n_tiles = ep // ET

    def cspec(shape):
        return pl.BlockSpec(shape, lambda e: (0, 0))

    grid_spec = pltpu.PrefetchScalarGridSpec(
        num_scalar_prefetch=0,
        grid=(n_tiles,),
        in_specs=[
            pl.BlockSpec((ET, DP), lambda e: (e, 0)),    # hs
            pl.BlockSpec((ET, DP), lambda e: (e, 0)),    # hr
            pl.BlockSpec((ET, DP), lambda e: (e, 0)),    # hqr
            pl.BlockSpec((ET, 1), lambda e: (e, 0)),     # dtau
            pl.BlockSpec((1, ET), lambda e: (0, e)),     # obj (dest node ids)
            cspec((np_rows, DP)),                        # h0 (padded rows)
            cspec((4 * DP, AP)),                         # stacked attn weights
            cspec((DP, DP)),                             # W_h
            cspec((DP, 3 * DP)),                         # GRU W_ih (gate-padded)
            cspec((DP, 3 * DP)),                         # GRU W_hh (gate-padded)
            cspec((2, 3 * DP)),                          # GRU biases [b_ih; b_hh]
            cspec((8, DP)),                              # packed small vectors
        ],
        out_specs=(
            cspec((np_rows, DP)),                        # new hidden (post-GRU)
            cspec((np_rows, 1)),                         # W_final scores
        ),
        scratch_shapes=[pltpu.VMEM((np_rows, DP), jnp.float32)],
    )
    hidden_new, scores = pl.pallas_call(
        tpar_layer_kernel,
        out_shape=(jax.ShapeDtypeStruct((np_rows, DP), jnp.float32),
                   jax.ShapeDtypeStruct((np_rows, 1), jnp.float32)),
        grid_spec=grid_spec,
        compiler_params=pltpu.CompilerParams(
            dimension_semantics=("arbitrary",)),
    )(hs, hr, hqr, dtau, obj_row, h0,
      lp['Wcat'], lp['Wh'], gp['wih'], gp['whh'], gp['gbias'], lp['vecs'])
    return hidden_new, scores


# ----------------------------------------------------------------------------
# Parameter init (logical shapes) + one-time padding / stacking / bf16 cast
# ----------------------------------------------------------------------------
def init_params(key, d, a, n_rel, n_layer):
    def nrm(k, shape, scale=0.1):
        return (scale * jax.random.normal(k, shape)).astype(jnp.float32)

    keys = jax.random.split(key, n_layer + 2)
    layers = []
    for i in range(n_layer):
        ks = jax.random.split(keys[i], 13)
        layers.append(dict(
            rela_embed=nrm(ks[0], (2 * n_rel + 1, d)),
            # Linear weights stored pre-transposed: y = x @ W
            Ws=nrm(ks[1], (d, a)), Wr=nrm(ks[2], (d, a)),
            Wqr=nrm(ks[3], (d, a)), bqr=nrm(ks[4], (1, a)),
            Wtau=nrm(ks[5], (d, a)),
            wa=nrm(ks[6], (a, 1)), ba=nrm(ks[7], (1, 1)),
            Wh=nrm(ks[8], (d, d)),
            wt1=nrm(ks[9], (1, d), 1.0), bt1=nrm(ks[10], (1, d), 1.0),
            wt2=nrm(ks[11], (1, d), 1.0), bt2=nrm(ks[12], (1, d), 1.0),
        ))
    kg = jax.random.split(keys[n_layer], 4)
    gru = dict(
        wih=nrm(kg[0], (d, 3 * d)), whh=nrm(kg[1], (d, 3 * d)),
        bih=nrm(kg[2], (1, 3 * d)), bhh=nrm(kg[3], (1, 3 * d)),
    )
    w_final = nrm(keys[n_layer + 1], (d, 1))
    return dict(layers=layers, gru=gru, W_final=w_final)


def _pad2(x, rows, cols):
    out = jnp.zeros((rows, cols), x.dtype)
    return out.at[:x.shape[0], :x.shape[1]].set(x)


def prepare_params(raw):
    """Zero-pad features to 128 lanes, stack the 4 attention weights into one
    (4*DP, AP) matrix, pack all small per-layer vectors into one (8, DP) slab,
    split+re-pad GRU gates, and pre-cast MXU operands to bf16.  Done once,
    outside any pallas_call."""
    layers = []
    for p in raw['layers']:
        wcat = jnp.concatenate(
            [_pad2(p['Ws'], DP, AP), _pad2(p['Wr'], DP, AP),
             _pad2(p['Wqr'], DP, AP), _pad2(p['Wtau'], DP, AP)],
            axis=0).astype(jnp.bfloat16)                       # (4*DP, AP)
        vecs = jnp.zeros((8, DP), jnp.float32)
        vecs = vecs.at[0:1, :].set(_pad2(p['wt1'], 1, DP))
        vecs = vecs.at[1:2, :].set(_pad2(p['bt1'], 1, DP))
        vecs = vecs.at[2:3, :].set(_pad2(p['wt2'], 1, DP))
        vecs = vecs.at[3:4, :].set(_pad2(p['bt2'], 1, DP))
        vecs = vecs.at[4:5, :].set(_pad2(p['bqr'], 1, AP))
        vecs = vecs.at[5:6, :].set(_pad2(p['wa'].T, 1, AP))
        vecs = vecs.at[6:7, :].set(_pad2(raw['W_final'].T, 1, DP))
        vecs = vecs.at[7, 0].set(p['ba'][0, 0])
        layers.append(dict(
            rela_embed=_pad2(p['rela_embed'], p['rela_embed'].shape[0], DP),
            Wcat=wcat,
            Wh=_pad2(p['Wh'], DP, DP).astype(jnp.bfloat16),
            vecs=vecs,
        ))

    g = raw['gru']
    d = g['wih'].shape[0]

    def pad_gates(w, rows):   # (rows_logical, 3d) -> (rows, 3*DP), per-gate padded
        blocks = [w[:, i * d:(i + 1) * d] for i in range(3)]
        return jnp.concatenate([_pad2(b, rows, DP) for b in blocks], axis=1)

    gru = dict(
        wih=pad_gates(g['wih'], DP).astype(jnp.bfloat16),
        whh=pad_gates(g['whh'], DP).astype(jnp.bfloat16),
        gbias=jnp.concatenate(
            [pad_gates(g['bih'], 1), pad_gates(g['bhh'], 1)], axis=0),
    )
    return dict(layers=layers, gru=gru)


# ----------------------------------------------------------------------------
# TPAR forward glue
# ----------------------------------------------------------------------------
def tpar_forward(params, q_sub, q_rel, q_tau, layers_data, n_ent):
    del q_sub  # unused inside GNNLayer.forward (only shapes the batch)
    n = q_rel.shape[0]
    hidden = jnp.zeros((n, DP), jnp.float32)
    h0_prev = jnp.zeros((n, DP), jnp.float32)
    nodes = None
    scores = None

    for i, (nodes_i, edges, old_nodes_new_idx) in enumerate(layers_data):
        lp = params['layers'][i]
        n_node = int(nodes_i.shape[0])
        np_rows = -(-n_node // 8) * 8     # pad node rows to sublane multiple
        n_edge = int(edges.shape[0])
        ep = -(-n_edge // ET) * ET        # pad edges to a multiple of the tile
        pad = ep - n_edge

        sub = jnp.pad(edges[:, 5], (0, pad))
        rel = jnp.pad(edges[:, 2], (0, pad))
        obj = jnp.pad(edges[:, 6], (0, pad), constant_values=-1)  # -1: no match
        tau = jnp.pad(edges[:, 4], (0, pad), constant_values=-1)
        r_idx = jnp.pad(edges[:, 0], (0, pad))

        # Row gathers kept as XLA glue (everything downstream runs in Pallas).
        hs = hidden[sub]                          # (Ep, DP)
        hr = lp['rela_embed'][rel]                # (Ep, DP)
        hqr = lp['rela_embed'][q_rel][r_idx]      # (Ep, DP)
        taus_q = q_tau[r_idx]
        tau_eff = jnp.where(tau >= 0, tau, taus_q)
        dtau = (tau_eff - taus_q).astype(jnp.float32)[:, None]    # (Ep, 1)

        # h0 = zeros(1, n_node, D).index_copy_(1, old_nodes_new_idx, h0)
        h0 = jnp.zeros((np_rows, DP), jnp.float32).at[old_nodes_new_idx].set(h0_prev)

        # TODO(synk): nn.Dropout omitted (equivalent to eval mode / p == 0).
        hidden_pad, scores_pad = tpar_layer(hs, hr, hqr, dtau,
                                            obj[None, :].astype(jnp.int32),
                                            h0, lp, params['gru'])
        hidden = hidden_pad[:n_node]
        scores = scores_pad[:n_node, 0]
        h0_prev = hidden
        nodes = nodes_i

    scores_all = jnp.zeros((n, n_ent), jnp.float32)
    scores_all = scores_all.at[nodes[:, 0], nodes[:, 1]].set(scores)
    return scores_all


# ----------------------------------------------------------------------------
if __name__ == "__main__":
    n, hidden_dim, attn_dim = 4, 32, 16
    n_rel, n_ent, n_layer = 5, 20, 2

    key = jax.random.PRNGKey(0)
    k_params, k_data = jax.random.split(key)
    raw_params = init_params(k_params, hidden_dim, attn_dim, n_rel, n_layer)
    params = prepare_params(raw_params)

    k1, k2, k3, k_edges = jax.random.split(k_data, 4)
    q_sub = jax.random.randint(k1, (n,), 0, n_ent, dtype=jnp.int32)
    q_rel = jax.random.randint(k2, (n,), 0, 2 * n_rel + 1, dtype=jnp.int32)
    q_tau = jax.random.randint(k3, (n,), 0, 366, dtype=jnp.int32)

    # TODO(synk): loader.get_neighbors is host-side graph sampling with no
    # Pallas equivalent; replaced with a deterministic synthetic graph.
    layer_sizes = [(24, 12, n), (40, 16, 12)]   # (n_edges, n_node_new, n_node_prev)
    layers_data = []
    ek = k_edges
    for (E, n_new, n_prev) in layer_sizes:
        ek, ka, kb, kc, kt, km = jax.random.split(ek, 6)
        r_idx = jax.random.randint(ka, (E,), 0, n, dtype=jnp.int32)
        rel = jax.random.randint(kb, (E,), 0, 2 * n_rel + 1, dtype=jnp.int32)
        sub = jax.random.randint(kc, (E,), 0, n_prev, dtype=jnp.int32)
        obj = jax.random.randint(km, (E,), 0, n_new, dtype=jnp.int32)
        tau_raw = jax.random.randint(kt, (E,), 0, 366, dtype=jnp.int32)
        tau = jnp.where(jnp.arange(E) % 5 == 0, -1, tau_raw).astype(jnp.int32)
        edges = jnp.zeros((E, 7), jnp.int32)
        edges = (edges.at[:, 0].set(r_idx).at[:, 2].set(rel)
                 .at[:, 4].set(tau).at[:, 5].set(sub).at[:, 6].set(obj))
        nodes_i = jnp.stack(
            [jnp.arange(n_new, dtype=jnp.int32) % n,
             jnp.arange(n_new, dtype=jnp.int32) % n_ent], axis=1)
        old_idx = jnp.arange(n_prev, dtype=jnp.int32)
        layers_data.append((nodes_i, edges, old_idx))

    fwd = jax.jit(functools.partial(tpar_forward, params, n_ent=n_ent))
    out = fwd(q_sub, q_rel, q_tau, layers_data)
    jax.block_until_ready(out)
    assert out.shape == (n, n_ent)
    print("KERNEL_OK")
</pallas_src>

<mosaic_0001>
module attributes {stable_mosaic.version = 11 : i64} {
  func.func @tpar_layer_kernel(%arg0: i32, %arg1: memref<128x128xf32, #tpu.memory_space<vmem>>, %arg2: memref<128x128xf32, #tpu.memory_space<vmem>>, %arg3: memref<128x128xf32, #tpu.memory_space<vmem>>, %arg4: memref<128x1xf32, #tpu.memory_space<vmem>>, %arg5: memref<1x128xi32, #tpu.memory_space<vmem>>, %arg6: memref<16x128xf32, #tpu.memory_space<vmem>>, %arg7: memref<512x128xbf16, #tpu.memory_space<vmem>>, %arg8: memref<128x128xbf16, #tpu.memory_space<vmem>>, %arg9: memref<128x384xbf16, #tpu.memory_space<vmem>>, %arg10: memref<128x384xbf16, #tpu.memory_space<vmem>>, %arg11: memref<2x384xf32, #tpu.memory_space<vmem>>, %arg12: memref<8x128xf32, #tpu.memory_space<vmem>>, %arg13: memref<16x128xf32, #tpu.memory_space<vmem>>, %arg14: memref<16x1xf32, #tpu.memory_space<vmem>>, %arg15: memref<16x128xf32, #tpu.memory_space<vmem>>) attributes {dimension_semantics = [#tpu.dimension_semantics<arbitrary>], iteration_bounds = array<i64: 1>, scalar_prefetch = 0 : i64, scratch_operands = 1 : i64, tpu.core_type = #tpu.core_type<tc>, window_params = [{transform_indices = @transform_0, window_bounds = array<i64: 128, 128>}, {transform_indices = @transform_1, window_bounds = array<i64: 128, 128>}, {transform_indices = @transform_2, window_bounds = array<i64: 128, 128>}, {transform_indices = @transform_3, window_bounds = array<i64: 128, 1>}, {transform_indices = @transform_4, window_bounds = array<i64: 1, 128>}, {pipeline_mode = #tpu.pipeline_mode<synchronous>, transform_indices = @transform_5, window_bounds = array<i64: 16, 128>}, {pipeline_mode = #tpu.pipeline_mode<synchronous>, transform_indices = @transform_6, window_bounds = array<i64: 512, 128>}, {pipeline_mode = #tpu.pipeline_mode<synchronous>, transform_indices = @transform_7, window_bounds = array<i64: 128, 128>}, {pipeline_mode = #tpu.pipeline_mode<synchronous>, transform_indices = @transform_8, window_bounds = array<i64: 128, 384>}, {pipeline_mode = #tpu.pipeline_mode<synchronous>, transform_indices = @transform_9, window_bounds = array<i64: 128, 384>}, {pipeline_mode = #tpu.pipeline_mode<synchronous>, transform_indices = @transform_10, window_bounds = array<i64: 2, 384>}, {pipeline_mode = #tpu.pipeline_mode<synchronous>, transform_indices = @transform_11, window_bounds = array<i64: 8, 128>}, {pipeline_mode = #tpu.pipeline_mode<synchronous>, transform_indices = @transform_12, window_bounds = array<i64: 16, 128>}, {pipeline_mode = #tpu.pipeline_mode<synchronous>, transform_indices = @transform_13, window_bounds = array<i64: 16, 1>}]} {
    %c0_i32 = arith.constant 0 : i32
    %0 = arith.cmpi eq, %arg0, %c0_i32 : i32
    %1 = arith.extui %0 : i1 to i32
    %c0_i32_0 = arith.constant 0 : i32
    %2 = arith.cmpi ne, %1, %c0_i32_0 : i32
    scf.if %2 {
      %cst_24 = arith.constant 0.000000e+00 : f32
      %66 = vector.broadcast %cst_24 : f32 to vector<16x128xf32>
      %c0_25 = arith.constant 0 : index
      %c0_26 = arith.constant 0 : index
      %67 = vector.load %arg15[%c0_25, %c0_26] : memref<16x128xf32, #tpu.memory_space<vmem>>, vector<16x128xf32>
      tpu.vector_store %arg15[%c0_25, %c0_26], %66 {strides = array<i32>} : memref<16x128xf32, #tpu.memory_space<vmem>>, vector<16x128xf32>,
    } else {
    }
    %c0 = arith.constant 0 : index
    %c0_1 = arith.constant 0 : index
    %3 = vector.load %arg1[%c0, %c0_1] : memref<128x128xf32, #tpu.memory_space<vmem>>, vector<128x128xf32>
    %c0_2 = arith.constant 0 : index
    %c0_3 = arith.constant 0 : index
    %4 = vector.load %arg2[%c0_2, %c0_3] : memref<128x128xf32, #tpu.memory_space<vmem>>, vector<128x128xf32>
    %c0_4 = arith.constant 0 : index
    %c0_5 = arith.constant 0 : index
    %5 = vector.load %arg3[%c0_4, %c0_5] : memref<128x128xf32, #tpu.memory_space<vmem>>, vector<128x128xf32>
    %c0_6 = arith.constant 0 : index
    %c0_7 = arith.constant 0 : index
    %6 = vector.load %arg4[%c0_6, %c0_7] : memref<128x1xf32, #tpu.memory_space<vmem>>, vector<128x1xf32>
    %c0_8 = arith.constant 0 : index
    %c0_9 = arith.constant 0 : index
    %7 = vector.load %arg12[%c0_8, %c0_9] : memref<8x128xf32, #tpu.memory_space<vmem>>, vector<8x128xf32>
    %8 = vector.extract_strided_slice %7 {offsets = [0, 0], sizes = [1, 128], strides = [1, 1]} : vector<8x128xf32> to vector<1x128xf32>
    %9 = vector.extract_strided_slice %7 {offsets = [1, 0], sizes = [1, 128], strides = [1, 1]} : vector<8x128xf32> to vector<1x128xf32>
    %10 = vector.extract_strided_slice %7 {offsets = [2, 0], sizes = [1, 128], strides = [1, 1]} : vector<8x128xf32> to vector<1x128xf32>
    %11 = vector.extract_strided_slice %7 {offsets = [3, 0], sizes = [1, 128], strides = [1, 1]} : vector<8x128xf32> to vector<1x128xf32>
    %12 = vector.extract_strided_slice %7 {offsets = [4, 0], sizes = [1, 128], strides = [1, 1]} : vector<8x128xf32> to vector<1x128xf32>
    %13 = vector.extract_strided_slice %7 {offsets = [5, 0], sizes = [1, 128], strides = [1, 1]} : vector<8x128xf32> to vector<1x128xf32>
    %14 = vector.extract_strided_slice %7 {offsets = [6, 0], sizes = [1, 128], strides = [1, 1]} : vector<8x128xf32> to vector<1x128xf32>
    %15 = vector.extract_strided_slice %7 {offsets = [7, 0], sizes = [1, 1], strides = [1, 1]} : vector<8x128xf32> to vector<1x1xf32>
    %16 = vector.broadcast %8 : vector<1x128xf32> to vector<128x128xf32>
    %17 = vector.broadcast %6 : vector<128x1xf32> to vector<128x128xf32>
    %18 = arith.mulf %16, %17 : vector<128x128xf32>
    %19 = vector.broadcast %9 : vector<1x128xf32> to vector<128x128xf32>
    %20 = arith.addf %18, %19 : vector<128x128xf32>
    %21 = vector.broadcast %10 : vector<1x128xf32> to vector<128x128xf32>
    %22 = vector.broadcast %6 : vector<128x1xf32> to vector<128x128xf32>
    %23 = arith.mulf %21, %22 : vector<128x128xf32>
    %24 = vector.broadcast %11 : vector<1x128xf32> to vector<128x128xf32>
    %25 = arith.addf %23, %24 : vector<128x128xf32>
    %26 = math.sin %25 : vector<128x128xf32>
    %27 = arith.addf %20, %26 : vector<128x128xf32>
    %28 = arith.addf %3, %4 : vector<128x128xf32>
    %29 = arith.addf %28, %27 : vector<128x128xf32>
    %30 = tpu.concatenate %3, %4, %5, %27 in 1 : vector<128x128xf32>, vector<128x128xf32>, vector<128x128xf32>, vector<128x128xf32> -> vector<128x512xf32>
    %31 = arith.truncf %30 : vector<128x512xf32> to vector<128x512xbf16>
    %c0_10 = arith.constant 0 : index
    %c0_11 = arith.constant 0 : index
    %32 = vector.load %arg7[%c0_10, %c0_11] : memref<512x128xbf16, #tpu.memory_space<vmem>>, vector<512x128xbf16>
    %cst = arith.constant dense<0.000000e+00> : vector<128x128xf32>
    %33 = tpu.matmul %31, %32, %cst {dimension_numbers = #tpu.dot_dimension_numbers<[1], [0], [0], [1], [0, 0, 1, 1], [], []>} : vector<128x512xbf16>, vector<512x128xbf16>, vector<128x128xf32> -> vector<128x128xf32>
    %34 = vector.broadcast %12 : vector<1x128xf32> to vector<128x128xf32>
    %35 = arith.addf %33, %34 : vector<128x128xf32>
    %cst_12 = arith.constant 0.000000e+00 : f32
    %36 = vector.broadcast %cst_12 : f32 to vector<128x128xf32>
    %37 = arith.maximumf %35, %36 : vector<128x128xf32>
    %38 = vector.broadcast %13 : vector<1x128xf32> to vector<128x128xf32>
    %39 = arith.mulf %37, %38 : vector<128x128xf32>
    %cst_13 = arith.constant dense<0.000000e+00> : vector<128xf32>
    %40 = vector.multi_reduction <add>, %39, %cst_13 [1] : vector<128x128xf32> to vector<128xf32>
    %41 = vector.shape_cast %40 : vector<128xf32> to vector<128x1xf32>
    %42 = vector.broadcast %15 : vector<1x1xf32> to vector<128x1xf32>
    %43 = arith.addf %41, %42 : vector<128x1xf32>
    %44 = arith.negf %43 : vector<128x1xf32>
    %45 = math.exp %44 : vector<128x1xf32>
    %cst_14 = arith.constant 1.000000e+00 : f32
    %46 = vector.broadcast %cst_14 : f32 to vector<128x1xf32>
    %47 = arith.addf %46, %45 : vector<128x1xf32>
    %48 = arith.divf %46, %47 : vector<128x1xf32>
    %49 = vector.broadcast %48 : vector<128x1xf32> to vector<128x128xf32>
    %50 = arith.mulf %49, %29 : vector<128x128xf32>
    %51 = arith.truncf %50 : vector<128x128xf32> to vector<128x128xbf16>
    %52 = tpu.iota {dimensions = array<i32: 0>} : vector<16x128xi32>
    %c0_15 = arith.constant 0 : index
    %c0_16 = arith.constant 0 : index
    %53 = vector.load %arg5[%c0_15, %c0_16] : memref<1x128xi32, #tpu.memory_space<vmem>>, vector<1x128xi32>
    %54 = vector.broadcast %53 : vector<1x128xi32> to vector<16x128xi32>
    %55 = arith.cmpi eq, %52, %54 : vector<16x128xi32>
    %56 = arith.extui %55 : vector<16x128xi1> to vector<16x128xi32>
    %57 = arith.sitofp %56 : vector<16x128xi32> to vector<16x128xf32>
    %58 = arith.truncf %57 : vector<16x128xf32> to vector<16x128xbf16>
    %c0_17 = arith.constant 0 : index
    %c0_18 = arith.constant 0 : index
    %59 = vector.load %arg15[%c0_17, %c0_18] : memref<16x128xf32, #tpu.memory_space<vmem>>, vector<16x128xf32>
    %cst_19 = arith.constant dense<0.000000e+00> : vector<16x128xf32>
    %60 = tpu.matmul %58, %51, %cst_19 {dimension_numbers = #tpu.dot_dimension_numbers<[1], [0], [0], [1], [0, 0, 1, 1], [], []>} : vector<16x128xbf16>, vector<128x128xbf16>, vector<16x128xf32> -> vector<16x128xf32>
    %61 = arith.addf %59, %60 : vector<16x128xf32>
    %c0_20 = arith.constant 0 : index
    %c0_21 = arith.constant 0 : index
    %62 = vector.load %arg15[%c0_20, %c0_21] : memref<16x128xf32, #tpu.memory_space<vmem>>, vector<16x128xf32>
    tpu.vector_store %arg15[%c0_20, %c0_21], %61 {strides = array<i32>} : memref<16x128xf32, #tpu.memory_space<vmem>>, vector<16x128xf32>,
    %c0_i32_22 = arith.constant 0 : i32
    %63 = arith.cmpi eq, %arg0, %c0_i32_22 : i32
    %64 = arith.extui %63 : i1 to i32
    %c0_i32_23 = arith.constant 0 : i32
    %65 = arith.cmpi ne, %64, %c0_i32_23 : i32
    scf.if %65 {
      %c0_24 = arith.constant 0 : index
      %c0_25 = arith.constant 0 : index
      %66 = vector.load %arg15[%c0_24, %c0_25] : memref<16x128xf32, #tpu.memory_space<vmem>>, vector<16x128xf32>
      %67 = arith.truncf %66 : vector<16x128xf32> to vector<16x128xbf16>
      %c0_26 = arith.constant 0 : index
      %c0_27 = arith.constant 0 : index
      %68 = vector.load %arg8[%c0_26, %c0_27] : memref<128x128xbf16, #tpu.memory_space<vmem>>, vector<128x128xbf16>
      %cst_28 = arith.constant dense<0.000000e+00> : vector<16x128xf32>
      %69 = tpu.matmul %67, %68, %cst_28 {dimension_numbers = #tpu.dot_dimension_numbers<[1], [0], [0], [1], [0, 0, 1, 1], [], []>} : vector<16x128xbf16>, vector<128x128xbf16>, vector<16x128xf32> -> vector<16x128xf32>
      %cst_29 = arith.constant 0.000000e+00 : f32
      %70 = vector.broadcast %cst_29 : f32 to vector<16x128xf32>
      %71 = arith.maximumf %69, %70 : vector<16x128xf32>
      %c0_30 = arith.constant 0 : index
      %c0_31 = arith.constant 0 : index
      %72 = vector.load %arg6[%c0_30, %c0_31] : memref<16x128xf32, #tpu.memory_space<vmem>>, vector<16x128xf32>
      %c0_32 = arith.constant 0 : index
      %c0_33 = arith.constant 0 : index
      %73 = vector.load %arg11[%c0_32, %c0_33] : memref<2x384xf32, #tpu.memory_space<vmem>>, vector<2x384xf32>
      %74 = arith.truncf %71 : vector<16x128xf32> to vector<16x128xbf16>
      %c0_34 = arith.constant 0 : index
      %c0_35 = arith.constant 0 : index
      %75 = vector.load %arg9[%c0_34, %c0_35] : memref<128x384xbf16, #tpu.memory_space<vmem>>, vector<128x384xbf16>
      %cst_36 = arith.constant dense<0.000000e+00> : vector<16x384xf32>
      %76 = tpu.matmul %74, %75, %cst_36 {dimension_numbers = #tpu.dot_dimension_numbers<[1], [0], [0], [1], [0, 0, 1, 1], [], []>} : vector<16x128xbf16>, vector<128x384xbf16>, vector<16x384xf32> -> vector<16x384xf32>
      %77 = vector.extract_strided_slice %73 {offsets = [0, 0], sizes = [1, 384], strides = [1, 1]} : vector<2x384xf32> to vector<1x384xf32>
      %78 = vector.broadcast %77 : vector<1x384xf32> to vector<16x384xf32>
      %79 = arith.addf %76, %78 : vector<16x384xf32>
      %80 = arith.truncf %72 : vector<16x128xf32> to vector<16x128xbf16>
      %c0_37 = arith.constant 0 : index
      %c0_38 = arith.constant 0 : index
      %81 = vector.load %arg10[%c0_37, %c0_38] : memref<128x384xbf16, #tpu.memory_space<vmem>>, vector<128x384xbf16>
      %cst_39 = arith.constant dense<0.000000e+00> : vector<16x384xf32>
      %82 = tpu.matmul %80, %81, %cst_39 {dimension_numbers = #tpu.dot_dimension_numbers<[1], [0], [0], [1], [0, 0, 1, 1], [], []>} : vector<16x128xbf16>, vector<128x384xbf16>, vector<16x384xf32> -> vector<16x384xf32>
      %83 = vector.extract_strided_slice %73 {offsets = [1, 0], sizes = [1, 384], strides = [1, 1]} : vector<2x384xf32> to vector<1x384xf32>
      %84 = vector.broadcast %83 : vector<1x384xf32> to vector<16x384xf32>
      %85 = arith.addf %82, %84 : vector<16x384xf32>
      %86 = vector.extract_strided_slice %79 {offsets = [0, 0], sizes = [16, 128], strides = [1, 1]} : vector<16x384xf32> to vector<16x128xf32>
      %87 = vector.extract_strided_slice %85 {offsets = [0, 0], sizes = [16, 128], strides = [1, 1]} : vector<16x384xf32> to vector<16x128xf32>
      %88 = arith.addf %86, %87 : vector<16x128xf32>
      %89 = arith.negf %88 : vector<16x128xf32>
      %90 = math.exp %89 : vector<16x128xf32>
      %cst_40 = arith.constant 1.000000e+00 : f32
      %91 = vector.broadcast %cst_40 : f32 to vector<16x128xf32>
      %92 = arith.addf %91, %90 : vector<16x128xf32>
      %93 = arith.divf %91, %92 : vector<16x128xf32>
      %94 = vector.extract_strided_slice %79 {offsets = [0, 128], sizes = [16, 128], strides = [1, 1]} : vector<16x384xf32> to vector<16x128xf32>
      %95 = vector.extract_strided_slice %85 {offsets = [0, 128], sizes = [16, 128], strides = [1, 1]} : vector<16x384xf32> to vector<16x128xf32>
      %96 = arith.addf %94, %95 : vector<16x128xf32>
      %97 = arith.negf %96 : vector<16x128xf32>
      %98 = math.exp %97 : vector<16x128xf32>
      %cst_41 = arith.constant 1.000000e+00 : f32
      %99 = vector.broadcast %cst_41 : f32 to vector<16x128xf32>
      %100 = arith.addf %99, %98 : vector<16x128xf32>
      %101 = arith.divf %99, %100 : vector<16x128xf32>
      %102 = vector.extract_strided_slice %79 {offsets = [0, 256], sizes = [16, 128], strides = [1, 1]} : vector<16x384xf32> to vector<16x128xf32>
      %103 = vector.extract_strided_slice %85 {offsets = [0, 256], sizes = [16, 128], strides = [1, 1]} : vector<16x384xf32> to vector<16x128xf32>
      %104 = arith.mulf %93, %103 : vector<16x128xf32>
      %105 = arith.addf %102, %104 : vector<16x128xf32>
      %106 = math.tanh %105 : vector<16x128xf32>
      %cst_42 = arith.constant 1.000000e+00 : f32
      %107 = vector.broadcast %cst_42 : f32 to vector<16x128xf32>
      %108 = arith.subf %107, %101 : vector<16x128xf32>
      %109 = arith.mulf %108, %106 : vector<16x128xf32>
      %110 = arith.mulf %101, %72 : vector<16x128xf32>
      %111 = arith.addf %109, %110 : vector<16x128xf32>
      %c0_43 = arith.constant 0 : index
      %c0_44 = arith.constant 0 : index
      %112 = vector.load %arg13[%c0_43, %c0_44] : memref<16x128xf32, #tpu.memory_space<vmem>>, vector<16x128xf32>
      tpu.vector_store %arg13[%c0_43, %c0_44], %111 {strides = array<i32>} : memref<16x128xf32, #tpu.memory_space<vmem>>, vector<16x128xf32>,
      %113 = vector.broadcast %14 : vector<1x128xf32> to vector<16x128xf32>
      %114 = arith.mulf %111, %113 : vector<16x128xf32>
      %cst_45 = arith.constant dense<0.000000e+00> : vector<16xf32>
      %115 = vector.multi_reduction <add>, %114, %cst_45 [1] : vector<16x128xf32> to vector<16xf32>
      %116 = vector.shape_cast %115 : vector<16xf32> to vector<16x1xf32>
      %c0_46 = arith.constant 0 : index
      %c0_47 = arith.constant 0 : index
      %117 = vector.load %arg14[%c0_46, %c0_47] : memref<16x1xf32, #tpu.memory_space<vmem>>, vector<16x1xf32>
      tpu.vector_store %arg14[%c0_46, %c0_47], %116 {strides = array<i32>} : memref<16x1xf32, #tpu.memory_space<vmem>>, vector<16x1xf32>,
    } else {
    }
    return
  }
  func.func @transform_0(%arg0: i32) -> (i32, i32) {
    %c0_i32 = arith.constant 0 : i32
    %c0_i32_0 = arith.constant 0 : i32
    return %arg0, %c0_i32 : i32, i32
  }
  func.func @transform_1(%arg0: i32) -> (i32, i32) {
    %c0_i32 = arith.constant 0 : i32
    %c0_i32_0 = arith.constant 0 : i32
    return %arg0, %c0_i32 : i32, i32
  }
  func.func @transform_2(%arg0: i32) -> (i32, i32) {
    %c0_i32 = arith.constant 0 : i32
    %c0_i32_0 = arith.constant 0 : i32
    return %arg0, %c0_i32 : i32, i32
  }
  func.func @transform_3(%arg0: i32) -> (i32, i32) {
    %c0_i32 = arith.constant 0 : i32
    %c0_i32_0 = arith.constant 0 : i32
    return %arg0, %c0_i32 : i32, i32
  }
  func.func @transform_4(%arg0: i32) -> (i32, i32) {
    %c0_i32 = arith.constant 0 : i32
    %c0_i32_0 = arith.constant 0 : i32
    return %c0_i32, %arg0 : i32, i32
  }
  func.func @transform_5(%arg0: i32) -> (i32, i32) {
    %c0_i32 = arith.constant 0 : i32
    %c0_i32_0 = arith.constant 0 : i32
    %c0_i32_1 = arith.constant 0 : i32
    return %c0_i32, %c0_i32_0 : i32, i32
  }
  func.func @transform_6(%arg0: i32) -> (i32, i32) {
    %c0_i32 = arith.constant 0 : i32
    %c0_i32_0 = arith.constant 0 : i32
    %c0_i32_1 = arith.constant 0 : i32
    return %c0_i32, %c0_i32_0 : i32, i32
  }
  func.func @transform_7(%arg0: i32) -> (i32, i32) {
    %c0_i32 = arith.constant 0 : i32
    %c0_i32_0 = arith.constant 0 : i32
    %c0_i32_1 = arith.constant 0 : i32
    return %c0_i32, %c0_i32_0 : i32, i32
  }
  func.func @transform_8(%arg0: i32) -> (i32, i32) {
    %c0_i32 = arith.constant 0 : i32
    %c0_i32_0 = arith.constant 0 : i32
    %c0_i32_1 = arith.constant 0 : i32
    return %c0_i32, %c0_i32_0 : i32, i32
  }
  func.func @transform_9(%arg0: i32) -> (i32, i32) {
    %c0_i32 = arith.constant 0 : i32
    %c0_i32_0 = arith.constant 0 : i32
    %c0_i32_1 = arith.constant 0 : i32
    return %c0_i32, %c0_i32_0 : i32, i32
  }
  func.func @transform_10(%arg0: i32) -> (i32, i32) {
    %c0_i32 = arith.constant 0 : i32
    %c0_i32_0 = arith.constant 0 : i32
    %c0_i32_1 = arith.constant 0 : i32
    return %c0_i32, %c0_i32_0 : i32, i32
  }
  func.func @transform_11(%arg0: i32) -> (i32, i32) {
    %c0_i32 = arith.constant 0 : i32
    %c0_i32_0 = arith.constant 0 : i32
    %c0_i32_1 = arith.constant 0 : i32
    return %c0_i32, %c0_i32_0 : i32, i32
  }
  func.func @transform_12(%arg0: i32) -> (i32, i32) {
    %c0_i32 = arith.constant 0 : i32
    %c0_i32_0 = arith.constant 0 : i32
    %c0_i32_1 = arith.constant 0 : i32
    return %c0_i32, %c0_i32_0 : i32, i32
  }
  func.func @transform_13(%arg0: i32) -> (i32, i32) {
    %c0_i32 = arith.constant 0 : i32
    %c0_i32_0 = arith.constant 0 : i32
    %c0_i32_1 = arith.constant 0 : i32
    return %c0_i32, %c0_i32_0 : i32, i32
  }
}

module attributes {stable_mosaic.version = 11 : i64} {
  func.func @tpar_layer_kernel(%arg0: i32, %arg1: memref<128x128xf32, #tpu.memory_space<vmem>>, %arg2: memref<128x128xf32, #tpu.memory_space<vmem>>, %arg3: memref<128x128xf32, #tpu.memory_space<vmem>>, %arg4: memref<128x1xf32, #tpu.memory_space<vmem>>, %arg5: memref<1x128xi32, #tpu.memory_space<vmem>>, %arg6: memref<16x128xf32, #tpu.memory_space<vmem>>, %arg7: memref<512x128xbf16, #tpu.memory_space<vmem>>, %arg8: memref<128x128xbf16, #tpu.memory_space<vmem>>, %arg9: memref<128x384xbf16, #tpu.memory_space<vmem>>, %arg10: memref<128x384xbf16, #tpu.memory_space<vmem>>, %arg11: memref<2x384xf32, #tpu.memory_space<vmem>>, %arg12: memref<8x128xf32, #tpu.memory_space<vmem>>, %arg13: memref<16x128xf32, #tpu.memory_space<vmem>>, %arg14: memref<16x1xf32, #tpu.memory_space<vmem>>, %arg15: memref<16x128xf32, #tpu.memory_space<vmem>>) attributes {dimension_semantics = [#tpu.dimension_semantics<arbitrary>], iteration_bounds = array<i64: 1>, scalar_prefetch = 0 : i64, scratch_operands = 1 : i64, tpu.core_type = #tpu.core_type<tc>, window_params = [{transform_indices = @transform_0, window_bounds = array<i64: 128, 128>}, {transform_indices = @transform_1, window_bounds = array<i64: 128, 128>}, {transform_indices = @transform_2, window_bounds = array<i64: 128, 128>}, {transform_indices = @transform_3, window_bounds = array<i64: 128, 1>}, {transform_indices = @transform_4, window_bounds = array<i64: 1, 128>}, {pipeline_mode = #tpu.pipeline_mode<synchronous>, transform_indices = @transform_5, window_bounds = array<i64: 16, 128>}, {pipeline_mode = #tpu.pipeline_mode<synchronous>, transform_indices = @transform_6, window_bounds = array<i64: 512, 128>}, {pipeline_mode = #tpu.pipeline_mode<synchronous>, transform_indices = @transform_7, window_bounds = array<i64: 128, 128>}, {pipeline_mode = #tpu.pipeline_mode<synchronous>, transform_indices = @transform_8, window_bounds = array<i64: 128, 384>}, {pipeline_mode = #tpu.pipeline_mode<synchronous>, transform_indices = @transform_9, window_bounds = array<i64: 128, 384>}, {pipeline_mode = #tpu.pipeline_mode<synchronous>, transform_indices = @transform_10, window_bounds = array<i64: 2, 384>}, {pipeline_mode = #tpu.pipeline_mode<synchronous>, transform_indices = @transform_11, window_bounds = array<i64: 8, 128>}, {pipeline_mode = #tpu.pipeline_mode<synchronous>, transform_indices = @transform_12, window_bounds = array<i64: 16, 128>}, {pipeline_mode = #tpu.pipeline_mode<synchronous>, transform_indices = @transform_13, window_bounds = array<i64: 16, 1>}]} {
    %c0_i32 = arith.constant 0 : i32
    %0 = arith.cmpi eq, %arg0, %c0_i32 : i32
    %1 = arith.extui %0 : i1 to i32
    %c0_i32_0 = arith.constant 0 : i32
    %2 = arith.cmpi ne, %1, %c0_i32_0 : i32
    scf.if %2 {
      %cst_24 = arith.constant 0.000000e+00 : f32
      %66 = vector.broadcast %cst_24 : f32 to vector<16x128xf32>
      %c0_25 = arith.constant 0 : index
      %c0_26 = arith.constant 0 : index
      %67 = vector.load %arg15[%c0_25, %c0_26] : memref<16x128xf32, #tpu.memory_space<vmem>>, vector<16x128xf32>
      tpu.vector_store %arg15[%c0_25, %c0_26], %66 {strides = array<i32>} : memref<16x128xf32, #tpu.memory_space<vmem>>, vector<16x128xf32>,
    } else {
    }
    %c0 = arith.constant 0 : index
    %c0_1 = arith.constant 0 : index
    %3 = vector.load %arg1[%c0, %c0_1] : memref<128x128xf32, #tpu.memory_space<vmem>>, vector<128x128xf32>
    %c0_2 = arith.constant 0 : index
    %c0_3 = arith.constant 0 : index
    %4 = vector.load %arg2[%c0_2, %c0_3] : memref<128x128xf32, #tpu.memory_space<vmem>>, vector<128x128xf32>
    %c0_4 = arith.constant 0 : index
    %c0_5 = arith.constant 0 : index
    %5 = vector.load %arg3[%c0_4, %c0_5] : memref<128x128xf32, #tpu.memory_space<vmem>>, vector<128x128xf32>
    %c0_6 = arith.constant 0 : index
    %c0_7 = arith.constant 0 : index
    %6 = vector.load %arg4[%c0_6, %c0_7] : memref<128x1xf32, #tpu.memory_space<vmem>>, vector<128x1xf32>
    %c0_8 = arith.constant 0 : index
    %c0_9 = arith.constant 0 : index
    %7 = vector.load %arg12[%c0_8, %c0_9] : memref<8x128xf32, #tpu.memory_space<vmem>>, vector<8x128xf32>
    %8 = vector.extract_strided_slice %7 {offsets = [0, 0], sizes = [1, 128], strides = [1, 1]} : vector<8x128xf32> to vector<1x128xf32>
    %9 = vector.extract_strided_slice %7 {offsets = [1, 0], sizes = [1, 128], strides = [1, 1]} : vector<8x128xf32> to vector<1x128xf32>
    %10 = vector.extract_strided_slice %7 {offsets = [2, 0], sizes = [1, 128], strides = [1, 1]} : vector<8x128xf32> to vector<1x128xf32>
    %11 = vector.extract_strided_slice %7 {offsets = [3, 0], sizes = [1, 128], strides = [1, 1]} : vector<8x128xf32> to vector<1x128xf32>
    %12 = vector.extract_strided_slice %7 {offsets = [4, 0], sizes = [1, 128], strides = [1, 1]} : vector<8x128xf32> to vector<1x128xf32>
    %13 = vector.extract_strided_slice %7 {offsets = [5, 0], sizes = [1, 128], strides = [1, 1]} : vector<8x128xf32> to vector<1x128xf32>
    %14 = vector.extract_strided_slice %7 {offsets = [6, 0], sizes = [1, 128], strides = [1, 1]} : vector<8x128xf32> to vector<1x128xf32>
    %15 = vector.extract_strided_slice %7 {offsets = [7, 0], sizes = [1, 1], strides = [1, 1]} : vector<8x128xf32> to vector<1x1xf32>
    %16 = vector.broadcast %8 : vector<1x128xf32> to vector<128x128xf32>
    %17 = vector.broadcast %6 : vector<128x1xf32> to vector<128x128xf32>
    %18 = arith.mulf %16, %17 : vector<128x128xf32>
    %19 = vector.broadcast %9 : vector<1x128xf32> to vector<128x128xf32>
    %20 = arith.addf %18, %19 : vector<128x128xf32>
    %21 = vector.broadcast %10 : vector<1x128xf32> to vector<128x128xf32>
    %22 = vector.broadcast %6 : vector<128x1xf32> to vector<128x128xf32>
    %23 = arith.mulf %21, %22 : vector<128x128xf32>
    %24 = vector.broadcast %11 : vector<1x128xf32> to vector<128x128xf32>
    %25 = arith.addf %23, %24 : vector<128x128xf32>
    %26 = math.sin %25 : vector<128x128xf32>
    %27 = arith.addf %20, %26 : vector<128x128xf32>
    %28 = arith.addf %3, %4 : vector<128x128xf32>
    %29 = arith.addf %28, %27 : vector<128x128xf32>
    %30 = tpu.concatenate %3, %4, %5, %27 in 1 : vector<128x128xf32>, vector<128x128xf32>, vector<128x128xf32>, vector<128x128xf32> -> vector<128x512xf32>
    %31 = arith.truncf %30 : vector<128x512xf32> to vector<128x512xbf16>
    %c0_10 = arith.constant 0 : index
    %c0_11 = arith.constant 0 : index
    %32 = vector.load %arg7[%c0_10, %c0_11] : memref<512x128xbf16, #tpu.memory_space<vmem>>, vector<512x128xbf16>
    %cst = arith.constant dense<0.000000e+00> : vector<128x128xf32>
    %33 = tpu.matmul %31, %32, %cst {dimension_numbers = #tpu.dot_dimension_numbers<[1], [0], [0], [1], [0, 0, 1, 1], [], []>} : vector<128x512xbf16>, vector<512x128xbf16>, vector<128x128xf32> -> vector<128x128xf32>
    %34 = vector.broadcast %12 : vector<1x128xf32> to vector<128x128xf32>
    %35 = arith.addf %33, %34 : vector<128x128xf32>
    %cst_12 = arith.constant 0.000000e+00 : f32
    %36 = vector.broadcast %cst_12 : f32 to vector<128x128xf32>
    %37 = arith.maximumf %35, %36 : vector<128x128xf32>
    %38 = vector.broadcast %13 : vector<1x128xf32> to vector<128x128xf32>
    %39 = arith.mulf %37, %38 : vector<128x128xf32>
    %cst_13 = arith.constant dense<0.000000e+00> : vector<128xf32>
    %40 = vector.multi_reduction <add>, %39, %cst_13 [1] : vector<128x128xf32> to vector<128xf32>
    %41 = vector.shape_cast %40 : vector<128xf32> to vector<128x1xf32>
    %42 = vector.broadcast %15 : vector<1x1xf32> to vector<128x1xf32>
    %43 = arith.addf %41, %42 : vector<128x1xf32>
    %44 = arith.negf %43 : vector<128x1xf32>
    %45 = math.exp %44 : vector<128x1xf32>
    %cst_14 = arith.constant 1.000000e+00 : f32
    %46 = vector.broadcast %cst_14 : f32 to vector<128x1xf32>
    %47 = arith.addf %46, %45 : vector<128x1xf32>
    %48 = arith.divf %46, %47 : vector<128x1xf32>
    %49 = vector.broadcast %48 : vector<128x1xf32> to vector<128x128xf32>
    %50 = arith.mulf %49, %29 : vector<128x128xf32>
    %51 = arith.truncf %50 : vector<128x128xf32> to vector<128x128xbf16>
    %52 = tpu.iota {dimensions = array<i32: 0>} : vector<16x128xi32>
    %c0_15 = arith.constant 0 : index
    %c0_16 = arith.constant 0 : index
    %53 = vector.load %arg5[%c0_15, %c0_16] : memref<1x128xi32, #tpu.memory_space<vmem>>, vector<1x128xi32>
    %54 = vector.broadcast %53 : vector<1x128xi32> to vector<16x128xi32>
    %55 = arith.cmpi eq, %52, %54 : vector<16x128xi32>
    %56 = arith.extui %55 : vector<16x128xi1> to vector<16x128xi32>
    %57 = arith.sitofp %56 : vector<16x128xi32> to vector<16x128xf32>
    %58 = arith.truncf %57 : vector<16x128xf32> to vector<16x128xbf16>
    %c0_17 = arith.constant 0 : index
    %c0_18 = arith.constant 0 : index
    %59 = vector.load %arg15[%c0_17, %c0_18] : memref<16x128xf32, #tpu.memory_space<vmem>>, vector<16x128xf32>
    %cst_19 = arith.constant dense<0.000000e+00> : vector<16x128xf32>
    %60 = tpu.matmul %58, %51, %cst_19 {dimension_numbers = #tpu.dot_dimension_numbers<[1], [0], [0], [1], [0, 0, 1, 1], [], []>} : vector<16x128xbf16>, vector<128x128xbf16>, vector<16x128xf32> -> vector<16x128xf32>
    %61 = arith.addf %59, %60 : vector<16x128xf32>
    %c0_20 = arith.constant 0 : index
    %c0_21 = arith.constant 0 : index
    %62 = vector.load %arg15[%c0_20, %c0_21] : memref<16x128xf32, #tpu.memory_space<vmem>>, vector<16x128xf32>
    tpu.vector_store %arg15[%c0_20, %c0_21], %61 {strides = array<i32>} : memref<16x128xf32, #tpu.memory_space<vmem>>, vector<16x128xf32>,
    %c0_i32_22 = arith.constant 0 : i32
    %63 = arith.cmpi eq, %arg0, %c0_i32_22 : i32
    %64 = arith.extui %63 : i1 to i32
    %c0_i32_23 = arith.constant 0 : i32
    %65 = arith.cmpi ne, %64, %c0_i32_23 : i32
    scf.if %65 {
      %c0_24 = arith.constant 0 : index
      %c0_25 = arith.constant 0 : index
      %66 = vector.load %arg15[%c0_24, %c0_25] : memref<16x128xf32, #tpu.memory_space<vmem>>, vector<16x128xf32>
      %67 = arith.truncf %66 : vector<16x128xf32> to vector<16x128xbf16>
      %c0_26 = arith.constant 0 : index
      %c0_27 = arith.constant 0 : index
      %68 = vector.load %arg8[%c0_26, %c0_27] : memref<128x128xbf16, #tpu.memory_space<vmem>>, vector<128x128xbf16>
      %cst_28 = arith.constant dense<0.000000e+00> : vector<16x128xf32>
      %69 = tpu.matmul %67, %68, %cst_28 {dimension_numbers = #tpu.dot_dimension_numbers<[1], [0], [0], [1], [0, 0, 1, 1], [], []>} : vector<16x128xbf16>, vector<128x128xbf16>, vector<16x128xf32> -> vector<16x128xf32>
      %cst_29 = arith.constant 0.000000e+00 : f32
      %70 = vector.broadcast %cst_29 : f32 to vector<16x128xf32>
      %71 = arith.maximumf %69, %70 : vector<16x128xf32>
      %c0_30 = arith.constant 0 : index
      %c0_31 = arith.constant 0 : index
      %72 = vector.load %arg6[%c0_30, %c0_31] : memref<16x128xf32, #tpu.memory_space<vmem>>, vector<16x128xf32>
      %c0_32 = arith.constant 0 : index
      %c0_33 = arith.constant 0 : index
      %73 = vector.load %arg11[%c0_32, %c0_33] : memref<2x384xf32, #tpu.memory_space<vmem>>, vector<2x384xf32>
      %74 = arith.truncf %71 : vector<16x128xf32> to vector<16x128xbf16>
      %c0_34 = arith.constant 0 : index
      %c0_35 = arith.constant 0 : index
      %75 = vector.load %arg9[%c0_34, %c0_35] : memref<128x384xbf16, #tpu.memory_space<vmem>>, vector<128x384xbf16>
      %cst_36 = arith.constant dense<0.000000e+00> : vector<16x384xf32>
      %76 = tpu.matmul %74, %75, %cst_36 {dimension_numbers = #tpu.dot_dimension_numbers<[1], [0], [0], [1], [0, 0, 1, 1], [], []>} : vector<16x128xbf16>, vector<128x384xbf16>, vector<16x384xf32> -> vector<16x384xf32>
      %77 = vector.extract_strided_slice %73 {offsets = [0, 0], sizes = [1, 384], strides = [1, 1]} : vector<2x384xf32> to vector<1x384xf32>
      %78 = vector.broadcast %77 : vector<1x384xf32> to vector<16x384xf32>
      %79 = arith.addf %76, %78 : vector<16x384xf32>
      %80 = arith.truncf %72 : vector<16x128xf32> to vector<16x128xbf16>
      %c0_37 = arith.constant 0 : index
      %c0_38 = arith.constant 0 : index
      %81 = vector.load %arg10[%c0_37, %c0_38] : memref<128x384xbf16, #tpu.memory_space<vmem>>, vector<128x384xbf16>
      %cst_39 = arith.constant dense<0.000000e+00> : vector<16x384xf32>
      %82 = tpu.matmul %80, %81, %cst_39 {dimension_numbers = #tpu.dot_dimension_numbers<[1], [0], [0], [1], [0, 0, 1, 1], [], []>} : vector<16x128xbf16>, vector<128x384xbf16>, vector<16x384xf32> -> vector<16x384xf32>
      %83 = vector.extract_strided_slice %73 {offsets = [1, 0], sizes = [1, 384], strides = [1, 1]} : vector<2x384xf32> to vector<1x384xf32>
      %84 = vector.broadcast %83 : vector<1x384xf32> to vector<16x384xf32>
      %85 = arith.addf %82, %84 : vector<16x384xf32>
      %86 = vector.extract_strided_slice %79 {offsets = [0, 0], sizes = [16, 128], strides = [1, 1]} : vector<16x384xf32> to vector<16x128xf32>
      %87 = vector.extract_strided_slice %85 {offsets = [0, 0], sizes = [16, 128], strides = [1, 1]} : vector<16x384xf32> to vector<16x128xf32>
      %88 = arith.addf %86, %87 : vector<16x128xf32>
      %89 = arith.negf %88 : vector<16x128xf32>
      %90 = math.exp %89 : vector<16x128xf32>
      %cst_40 = arith.constant 1.000000e+00 : f32
      %91 = vector.broadcast %cst_40 : f32 to vector<16x128xf32>
      %92 = arith.addf %91, %90 : vector<16x128xf32>
      %93 = arith.divf %91, %92 : vector<16x128xf32>
      %94 = vector.extract_strided_slice %79 {offsets = [0, 128], sizes = [16, 128], strides = [1, 1]} : vector<16x384xf32> to vector<16x128xf32>
      %95 = vector.extract_strided_slice %85 {offsets = [0, 128], sizes = [16, 128], strides = [1, 1]} : vector<16x384xf32> to vector<16x128xf32>
      %96 = arith.addf %94, %95 : vector<16x128xf32>
      %97 = arith.negf %96 : vector<16x128xf32>
      %98 = math.exp %97 : vector<16x128xf32>
      %cst_41 = arith.constant 1.000000e+00 : f32
      %99 = vector.broadcast %cst_41 : f32 to vector<16x128xf32>
      %100 = arith.addf %99, %98 : vector<16x128xf32>
      %101 = arith.divf %99, %100 : vector<16x128xf32>
      %102 = vector.extract_strided_slice %79 {offsets = [0, 256], sizes = [16, 128], strides = [1, 1]} : vector<16x384xf32> to vector<16x128xf32>
      %103 = vector.extract_strided_slice %85 {offsets = [0, 256], sizes = [16, 128], strides = [1, 1]} : vector<16x384xf32> to vector<16x128xf32>
      %104 = arith.mulf %93, %103 : vector<16x128xf32>
      %105 = arith.addf %102, %104 : vector<16x128xf32>
      %106 = math.tanh %105 : vector<16x128xf32>
      %cst_42 = arith.constant 1.000000e+00 : f32
      %107 = vector.broadcast %cst_42 : f32 to vector<16x128xf32>
      %108 = arith.subf %107, %101 : vector<16x128xf32>
      %109 = arith.mulf %108, %106 : vector<16x128xf32>
      %110 = arith.mulf %101, %72 : vector<16x128xf32>
      %111 = arith.addf %109, %110 : vector<16x128xf32>
      %c0_43 = arith.constant 0 : index
      %c0_44 = arith.constant 0 : index
      %112 = vector.load %arg13[%c0_43, %c0_44] : memref<16x128xf32, #tpu.memory_space<vmem>>, vector<16x128xf32>
      tpu.vector_store %arg13[%c0_43, %c0_44], %111 {strides = array<i32>} : memref<16x128xf32, #tpu.memory_space<vmem>>, vector<16x128xf32>,
      %113 = vector.broadcast %14 : vector<1x128xf32> to vector<16x128xf32>
      %114 = arith.mulf %111, %113 : vector<16x128xf32>
      %cst_45 = arith.constant dense<0.000000e+00> : vector<16xf32>
      %115 = vector.multi_reduction <add>, %114, %cst_45 [1] : vector<16x128xf32> to vector<16xf32>
      %116 = vector.shape_cast %115 : vector<16xf32> to vector<16x1xf32>
      %c0_46 = arith.constant 0 : index
      %c0_47 = arith.constant 0 : index
      %117 = vector.load %arg14[%c0_46, %c0_47] : memref<16x1xf32, #tpu.memory_space<vmem>>, vector<16x1xf32>
      tpu.vector_store %arg14[%c0_46, %c0_47], %116 {strides = array<i32>} : memref<16x1xf32, #tpu.memory_space<vmem>>, vector<16x1xf32>,
    } else {
    }
    return
  }
  func.func @transform_0(%arg0: i32) -> (i32, i32) {
    %c0_i32 = arith.constant 0 : i32
    %c0_i32_0 = arith.constant 0 : i32
    return %arg0, %c0_i32 : i32, i32
  }
  func.func @transform_1(%arg0: i32) -> (i32, i32) {
    %c0_i32 = arith.constant 0 : i32
    %c0_i32_0 = arith.constant 0 : i32
    return %arg0, %c0_i32 : i32, i32
  }
  func.func @transform_2(%arg0: i32) -> (i32, i32) {
    %c0_i32 = arith.constant 0 : i32
    %c0_i32_0 = arith.constant 0 : i32
    return %arg0, %c0_i32 : i32, i32
  }
  func.func @transform_3(%arg0: i32) -> (i32, i32) {
    %c0_i32 = arith.constant 0 : i32
    %c0_i32_0 = arith.constant 0 : i32
    return %arg0, %c0_i32 : i32, i32
  }
  func.func @transform_4(%arg0: i32) -> (i32, i32) {
    %c0_i32 = arith.constant 0 : i32
    %c0_i32_0 = arith.constant 0 : i32
    return %c0_i32, %arg0 : i32, i32
  }
  func.func @transform_5(%arg0: i32) -> (i32, i32) {
    %c0_i32 = arith.constant 0 : i32
    %c0_i32_0 = arith.constant 0 : i32
    %c0_i32_1 = arith.constant 0 : i32
    return %c0_i32, %c0_i32_0 : i32, i32
  }
  func.func @transform_6(%arg0: i32) -> (i32, i32) {
    %c0_i32 = arith.constant 0 : i32
    %c0_i32_0 = arith.constant 0 : i32
    %c0_i32_1 = arith.constant 0 : i32
    return %c0_i32, %c0_i32_0 : i32, i32
  }
  func.func @transform_7(%arg0: i32) -> (i32, i32) {
    %c0_i32 = arith.constant 0 : i32
    %c0_i32_0 = arith.constant 0 : i32
    %c0_i32_1 = arith.constant 0 : i32
    return %c0_i32, %c0_i32_0 : i32, i32
  }
  func.func @transform_8(%arg0: i32) -> (i32, i32) {
    %c0_i32 = arith.constant 0 : i32
    %c0_i32_0 = arith.constant 0 : i32
    %c0_i32_1 = arith.constant 0 : i32
    return %c0_i32, %c0_i32_0 : i32, i32
  }
  func.func @transform_9(%arg0: i32) -> (i32, i32) {
    %c0_i32 = arith.constant 0 : i32
    %c0_i32_0 = arith.constant 0 : i32
    %c0_i32_1 = arith.constant 0 : i32
    return %c0_i32, %c0_i32_0 : i32, i32
  }
  func.func @transform_10(%arg0: i32) -> (i32, i32) {
    %c0_i32 = arith.constant 0 : i32
    %c0_i32_0 = arith.constant 0 : i32
    %c0_i32_1 = arith.constant 0 : i32
    return %c0_i32, %c0_i32_0 : i32, i32
  }
  func.func @transform_11(%arg0: i32) -> (i32, i32) {
    %c0_i32 = arith.constant 0 : i32
    %c0_i32_0 = arith.constant 0 : i32
    %c0_i32_1 = arith.constant 0 : i32
    return %c0_i32, %c0_i32_0 : i32, i32
  }
  func.func @transform_12(%arg0: i32) -> (i32, i32) {
    %c0_i32 = arith.constant 0 : i32
    %c0_i32_0 = arith.constant 0 : i32
    %c0_i32_1 = arith.constant 0 : i32
    return %c0_i32, %c0_i32_0 : i32, i32
  }
  func.func @transform_13(%arg0: i32) -> (i32, i32) {
    %c0_i32 = arith.constant 0 : i32
    %c0_i32_0 = arith.constant 0 : i32
    %c0_i32_1 = arith.constant 0 : i32
    return %c0_i32, %c0_i32_0 : i32, i32
  }
}

</mosaic_0001>

<llo_original>
// kernel: tpar_forward.2
$region0: #{tpar_forward.2}
  #allocation0 [shape = 'u32[]', space=smem, size = 0x4, offset = 0x4, fixed_abs, tag = 'smem constant byte address 0x4 - core index']
  #allocation1 [shape = 'u32[144,128]{1,0:T(1,128)}', space=vmem, size = 0x12000, scoped, tag = 'internal scratch']
  #allocation2 [shape = 'f32[16,128]{1,0:T(8,128)}', space=vmem, size = 0x2000, scoped, tag = 'scratch operand']
  %s0 = inlined_call_operand.vmem [shape: f32[128,128], index: 0, kind: input, shape index: {}]
  %s1 = inlined_call_operand.vmem [shape: f32[128,128], index: 1, kind: input, shape index: {}]
  %s2 = inlined_call_operand.vmem [shape: f32[128,128], index: 2, kind: input, shape index: {}]
  %s3 = inlined_call_operand.vmem [shape: f32[128,1], index: 3, kind: input, shape index: {}]
  %s4 = inlined_call_operand.vmem [shape: s32[1,128], index: 4, kind: input, shape index: {}]
  %s5 = inlined_call_operand.vmem [shape: f32[16,128], index: 5, kind: input, shape index: {}]
  %s6 = inlined_call_operand.vmem [shape: bf16[512,128], index: 6, kind: input, shape index: {}]
  %s7 = inlined_call_operand.vmem [shape: bf16[128,128], index: 7, kind: input, shape index: {}]
  %s8 = inlined_call_operand.vmem [shape: bf16[128,384], index: 8, kind: input, shape index: {}]
  %s9 = inlined_call_operand.vmem [shape: bf16[128,384], index: 9, kind: input, shape index: {}]
  %s10 = inlined_call_operand.vmem [shape: f32[2,384], index: 10, kind: input, shape index: {}]
  %s11 = inlined_call_operand.vmem [shape: f32[8,128], index: 11, kind: input, shape index: {}]
  %s12 = inlined_call_operand.vmem [shape: f32[16,128], index: 12, kind: output, shape index: {0}]
  %s13 = inlined_call_operand.hbm [shape: f32[16,1], index: 13, kind: output, shape index: {1}]
  %14 = xla_tuple %s12, %s13
  %s15 = sld [smem:[#allocation0]]
  $region74: #{tpar_forward.2} parent=0
    _
  %s17 = ssub.s32 1, %s15
  %s18 = scalar_select 0, %s17, %s15
  $region1: #{tpar_forward.2} parent=0
    #allocation3 [shape = 'u8[8192]{0}', space=vmem, size = 0x2000, scoped, tag = 'output window, operand 1, single buffered']
    #allocation4 [shape = 's32[1]{0}', space=sflag, size = 0x4, scoped, tag = 'scoped memory for tpar_forward.2']
    %19 = vsyncpa [#allocation4], 0
    // Predicated region
    $region2: #{tpar_forward.2} parent=1 // pred_check
      _
    $region3: #{tpar_forward.2} parent=1 // pred_check_branch
      %21 = sbr.rel (0) target = $region5
    $region4: #{tpar_forward.2} parent=1 // pred_region
      _
    $region5: #{tpar_forward.2} parent=1 // pred_fallthru
      _
    // Predicated region
    $region6: #{tpar_forward.2} parent=1 // pred_check
      _
    $region7: #{tpar_forward.2} parent=1 // pred_check_branch
      %23 = sbr.rel (0) target = $region9
    $region8: #{tpar_forward.2} parent=1 // pred_region
      _
    $region9: #{tpar_forward.2} parent=1 // pred_fallthru
      _
    // Predicated region
    $region10: #{tpar_forward.2} parent=1 // pred_check
      _
    $region11: #{tpar_forward.2} parent=1 // pred_check_branch
      %25 = sbr.rel (0) target = $region13
    $region12: #{tpar_forward.2} parent=1 // pred_region
      _
    $region13: #{tpar_forward.2} parent=1 // pred_fallthru
      _
    // Predicated region
    $region14: #{tpar_forward.2} parent=1 // pred_check
      _
    $region15: #{tpar_forward.2} parent=1 // pred_check_branch
      %27 = sbr.rel (0) target = $region17
    $region16: #{tpar_forward.2} parent=1 // pred_region
      _
    $region17: #{tpar_forward.2} parent=1 // pred_fallthru
      _
    // Predicated region
    $region18: #{tpar_forward.2} parent=1 // pred_check
      _
    $region19: #{tpar_forward.2} parent=1 // pred_check_branch
      %29 = sbr.rel (0) target = $region21
    $region20: #{tpar_forward.2} parent=1 // pred_region
      _
    $region21: #{tpar_forward.2} parent=1 // pred_fallthru
      _
    // Predicated region
    $region22: #{tpar_forward.2} parent=1 // pred_check
      _
    $region23: #{tpar_forward.2} parent=1 // pred_check_branch
      %31 = sbr.rel (0) target = $region25
    $region24: #{tpar_forward.2} parent=1 // pred_region
      _
    $region25: #{tpar_forward.2} parent=1 // pred_fallthru
      _
    // Predicated region
    $region26: #{tpar_forward.2} parent=1 // pred_check
      _
    $region27: #{tpar_forward.2} parent=1 // pred_check_branch
      %33 = sbr.rel (0) target = $region29
    $region28: #{tpar_forward.2} parent=1 // pred_region
      _
    $region29: #{tpar_forward.2} parent=1 // pred_fallthru
      _
    // Predicated region
    $region30: #{tpar_forward.2} parent=1 // pred_check
      _
    $region31: #{tpar_forward.2} parent=1 // pred_check_branch
      %35 = sbr.rel (0) target = $region33
    $region32: #{tpar_forward.2} parent=1 // pred_region
      _
    $region33: #{tpar_forward.2} parent=1 // pred_fallthru
      _
    // Predicated region
    $region34: #{tpar_forward.2} parent=1 // pred_check
      _
    $region35: #{tpar_forward.2} parent=1 // pred_check_branch
      %37 = sbr.rel (0) target = $region37
    $region36: #{tpar_forward.2} parent=1 // pred_region
      _
    $region37: #{tpar_forward.2} parent=1 // pred_fallthru
      _
    // Predicated region
    $region38: #{tpar_forward.2} parent=1 // pred_check
      _
    $region39: #{tpar_forward.2} parent=1 // pred_check_branch
      %39 = sbr.rel (0) target = $region41
    $region40: #{tpar_forward.2} parent=1 // pred_region
      _
    $region41: #{tpar_forward.2} parent=1 // pred_fallthru
      _
    // Predicated region
    $region42: #{tpar_forward.2} parent=1 // pred_check
      _
    $region43: #{tpar_forward.2} parent=1 // pred_check_branch
      %41 = sbr.rel (0) target = $region45
    $region44: #{tpar_forward.2} parent=1 // pred_region
      _
    $region45: #{tpar_forward.2} parent=1 // pred_fallthru
      _
    // Predicated region
    $region46: #{tpar_forward.2} parent=1 // pred_check
      _
    $region47: #{tpar_forward.2} parent=1 // pred_check_branch
      %43 = sbr.rel (0) target = $region49
    $region48: #{tpar_forward.2} parent=1 // pred_region
      _
    $region49: #{tpar_forward.2} parent=1 // pred_fallthru
      _
    %p45 = scmp.eq.s32.totalorder 0, 0
    // Predicated region
    $region50: #{tpar_forward.2} parent=1 // pred_check
      %p46 = pneg %p45
    $region51: #{tpar_forward.2} parent=1 // pred_check_branch
      %48 = sbr.rel (%p46) target = $region53
    $region52: #{tpar_forward.2} parent=1 // pred_region
      %49 = vst [vmem:[#allocation2] sm:$0xff] 0.0
      %50 = vst [vmem:[#allocation2 + $0x8] sm:$0xff] 0.0
    $region53: #{tpar_forward.2} parent=1 // pred_fallthru
      _
    %v51 = vld [vmem:[%s0] sm:$0xff]
    %v52 = vld [vmem:[%s0 + $0x8] sm:$0xff]
    %v53 = vld [vmem:[%s0 + $0x10] sm:$0xff]
    %v54 = vld [vmem:[%s0 + $0x18] sm:$0xff]
    %v55 = vld [vmem:[%s0 + $0x20] sm:$0xff]
    %v56 = vld [vmem:[%s0 + $0x28] sm:$0xff]
    %v57 = vld [vmem:[%s0 + $0x30] sm:$0xff]
    %v58 = vld [vmem:[%s0 + $0x38] sm:$0xff]
    %v59 = vld [vmem:[%s0 + $0x40] sm:$0xff]
    %v60 = vld [vmem:[%s0 + $0x48] sm:$0xff]
    %v61 = vld [vmem:[%s0 + $0x50] sm:$0xff]
    %v62 = vld [vmem:[%s0 + $0x58] sm:$0xff]
    %v63 = vld [vmem:[%s0 + $0x60] sm:$0xff]
    %v64 = vld [vmem:[%s0 + $0x68] sm:$0xff]
    %v65 = vld [vmem:[%s0 + $0x70] sm:$0xff]
    %v66 = vld [vmem:[%s0 + $0x78] sm:$0xff]
    %v67 = vld [vmem:[%s1] sm:$0xff]
    %v68 = vld [vmem:[%s1 + $0x8] sm:$0xff]
    %v69 = vld [vmem:[%s1 + $0x10] sm:$0xff]
    %v70 = vld [vmem:[%s1 + $0x18] sm:$0xff]
    %v71 = vld [vmem:[%s1 + $0x20] sm:$0xff]
    %v72 = vld [vmem:[%s1 + $0x28] sm:$0xff]
    %v73 = vld [vmem:[%s1 + $0x30] sm:$0xff]
    %v74 = vld [vmem:[%s1 + $0x38] sm:$0xff]
    %v75 = vld [vmem:[%s1 + $0x40] sm:$0xff]
    %v76 = vld [vmem:[%s1 + $0x48] sm:$0xff]
    %v77 = vld [vmem:[%s1 + $0x50] sm:$0xff]
    %v78 = vld [vmem:[%s1 + $0x58] sm:$0xff]
    %v79 = vld [vmem:[%s1 + $0x60] sm:$0xff]
    %v80 = vld [vmem:[%s1 + $0x68] sm:$0xff]
    %v81 = vld [vmem:[%s1 + $0x70] sm:$0xff]
    %v82 = vld [vmem:[%s1 + $0x78] sm:$0xff]
    %v83 = vld [vmem:[%s2] sm:$0xff]
    %v84 = vld [vmem:[%s2 + $0x8] sm:$0xff]
    %v85 = vld [vmem:[%s2 + $0x10] sm:$0xff]
    %v86 = vld [vmem:[%s2 + $0x18] sm:$0xff]
    %v87 = vld [vmem:[%s2 + $0x20] sm:$0xff]
    %v88 = vld [vmem:[%s2 + $0x28] sm:$0xff]
    %v89 = vld [vmem:[%s2 + $0x30] sm:$0xff]
    %v90 = vld [vmem:[%s2 + $0x38] sm:$0xff]
    %v91 = vld [vmem:[%s2 + $0x40] sm:$0xff]
    %v92 = vld [vmem:[%s2 + $0x48] sm:$0xff]
    %v93 = vld [vmem:[%s2 + $0x50] sm:$0xff]
    %v94 = vld [vmem:[%s2 + $0x58] sm:$0xff]
    %v95 = vld [vmem:[%s2 + $0x60] sm:$0xff]
    %v96 = vld [vmem:[%s2 + $0x68] sm:$0xff]
    %v97 = vld [vmem:[%s2 + $0x70] sm:$0xff]
    %v98 = vld [vmem:[%s2 + $0x78] sm:$0xff]
    %v99 = vld [vmem:[%s3] sm:$0xff]
    %v100 = vld [vmem:[%s3 + $0x8] sm:$0xff]
    %v101 = vld [vmem:[%s3 + $0x10] sm:$0xff]
    %v102 = vld [vmem:[%s3 + $0x18] sm:$0xff]
    %v103 = vld [vmem:[%s3 + $0x20] sm:$0xff]
    %v104 = vld [vmem:[%s3 + $0x28] sm:$0xff]
    %v105 = vld [vmem:[%s3 + $0x30] sm:$0xff]
    %v106 = vld [vmem:[%s3 + $0x38] sm:$0xff]
    %v107 = vld [vmem:[%s3 + $0x40] sm:$0xff]
    %v108 = vld [vmem:[%s3 + $0x48] sm:$0xff]
    %v109 = vld [vmem:[%s3 + $0x50] sm:$0xff]
    %v110 = vld [vmem:[%s3 + $0x58] sm:$0xff]
    %v111 = vld [vmem:[%s3 + $0x60] sm:$0xff]
    %v112 = vld [vmem:[%s3 + $0x68] sm:$0xff]
    %v113 = vld [vmem:[%s3 + $0x70] sm:$0xff]
    %v114 = vld [vmem:[%s3 + $0x78] sm:$0xff]
    %v115 = vld [vmem:[%s11] sm:$0xff]
    %v116 = vlaneseq
    %v117 = vshrl.u32 %v116, 7
    %v118 = vsub.s32 0, %v117
    %v119 = vrot.slane %v115, %v118
    %121 = vset.pattern.permute.xlu0 0
    %122 = vperm.xlu0 %121, %v99
    %v123 = vpop.permute.xlu0 %122
    %126 = vset.pattern.permute.xlu0 0
    %127 = vperm.xlu0 %126, %v100
    %v128 = vpop.permute.xlu0 %127
    %131 = vset.pattern.permute.xlu0 0
    %132 = vperm.xlu0 %131, %v101
    %v133 = vpop.permute.xlu0 %132
    %136 = vset.pattern.permute.xlu0 0
    %137 = vperm.xlu0 %136, %v102
    %v138 = vpop.permute.xlu0 %137
    %141 = vset.pattern.permute.xlu0 0
    %142 = vperm.xlu0 %141, %v103
    %v143 = vpop.permute.xlu0 %142
    %146 = vset.pattern.permute.xlu0 0
    %147 = vperm.xlu0 %146, %v104
    %v148 = vpop.permute.xlu0 %147
    %151 = vset.pattern.permute.xlu0 0
    %152 = vperm.xlu0 %151, %v105
    %v153 = vpop.permute.xlu0 %152
    %156 = vset.pattern.permute.xlu0 0
    %157 = vperm.xlu0 %156, %v106
    %v158 = vpop.permute.xlu0 %157
    %161 = vset.pattern.permute.xlu0 0
    %162 = vperm.xlu0 %161, %v107
    %v163 = vpop.permute.xlu0 %162
    %166 = vset.pattern.permute.xlu0 0
    %167 = vperm.xlu0 %166, %v108
    %v168 = vpop.permute.xlu0 %167
    %171 = vset.pattern.permute.xlu0 0
    %172 = vperm.xlu0 %171, %v109
    %v173 = vpop.permute.xlu0 %172
    %176 = vset.pattern.permute.xlu0 0
    %177 = vperm.xlu0 %176, %v110
    %v178 = vpop.permute.xlu0 %177
    %181 = vset.pattern.permute.xlu0 0
    %182 = vperm.xlu0 %181, %v111
    %v183 = vpop.permute.xlu0 %182
    %186 = vset.pattern.permute.xlu0 0
    %187 = vperm.xlu0 %186, %v112
    %v188 = vpop.permute.xlu0 %187
    %191 = vset.pattern.permute.xlu0 0
    %192 = vperm.xlu0 %191, %v113
    %v193 = vpop.permute.xlu0 %192
    %196 = vset.pattern.permute.xlu0 0
    %197 = vperm.xlu0 %196, %v114
    %v198 = vpop.permute.xlu0 %197
    %v200 = vmul.f32 %v119, %v123
    %v201 = vmul.f32 %v119, %v128
    %v202 = vmul.f32 %v119, %v133
    %v203 = vmul.f32 %v119, %v138
    %v204 = vmul.f32 %v119, %v143
    %v205 = vmul.f32 %v119, %v148
    %v206 = vmul.f32 %v119, %v153
    %v207 = vmul.f32 %v119, %v158
    %v208 = vmul.f32 %v119, %v163
    %v209 = vmul.f32 %v119, %v168
    %v210 = vmul.f32 %v119, %v173
    %v211 = vmul.f32 %v119, %v178
    %v212 = vmul.f32 %v119, %v183
    %v213 = vmul.f32 %v119, %v188
    %v214 = vmul.f32 %v119, %v193
    %v215 = vmul.f32 %v119, %v198
    %v216 = vlaneseq
    %v217 = vshrl.u32 %v216, 7
    %v218 = vsub.s32 1, %v217
    %v219 = vrot.slane %v115, %v218
    %v220 = vadd.f32 %v200, %v219
    %v221 = vadd.f32 %v201, %v219
    %v222 = vadd.f32 %v202, %v219
    %v223 = vadd.f32 %v203, %v219
    %v224 = vadd.f32 %v204, %v219
    %v225 = vadd.f32 %v205, %v219
    %v226 = vadd.f32 %v206, %v219
    %v227 = vadd.f32 %v207, %v219
    %v228 = vadd.f32 %v208, %v219
    %v229 = vadd.f32 %v209, %v219
    %v230 = vadd.f32 %v210, %v219
    %v231 = vadd.f32 %v211, %v219
    %v232 = vadd.f32 %v212, %v219
    %v233 = vadd.f32 %v213, %v219
    %v234 = vadd.f32 %v214, %v219
    %v235 = vadd.f32 %v215, %v219
    %v236 = vlaneseq
    %v237 = vshrl.u32 %v236, 7
    %v238 = vsub.s32 2, %v237
    %v239 = vrot.slane %v115, %v238
    %v240 = vmul.f32 %v239, %v123
    %v241 = vmul.f32 %v239, %v128
    %v242 = vmul.f32 %v239, %v133
    %v243 = vmul.f32 %v239, %v138
    %v244 = vmul.f32 %v239, %v143
    %v245 = vmul.f32 %v239, %v148
    %v246 = vmul.f32 %v239, %v153
    %v247 = vmul.f32 %v239, %v158
    %v248 = vmul.f32 %v239, %v163
    %v249 = vmul.f32 %v239, %v168
    %v250 = vmul.f32 %v239, %v173
    %v251 = vmul.f32 %v239, %v178
    %v252 = vmul.f32 %v239, %v183
    %v253 = vmul.f32 %v239, %v188
    %v254 = vmul.f32 %v239, %v193
    %v255 = vmul.f32 %v239, %v198
    %v256 = vlaneseq
    %v257 = vshrl.u32 %v256, 7
    %v258 = vsub.s32 3, %v257
    %v259 = vrot.slane %v115, %v258
    %v260 = vadd.f32 %v240, %v259
    %v261 = vadd.f32 %v241, %v259
    %v262 = vadd.f32 %v242, %v259
    %v263 = vadd.f32 %v243, %v259
    %v264 = vadd.f32 %v244, %v259
    %v265 = vadd.f32 %v245, %v259
    %v266 = vadd.f32 %v246, %v259
    %v267 = vadd.f32 %v247, %v259
    %v268 = vadd.f32 %v248, %v259
    %v269 = vadd.f32 %v249, %v259
    %v270 = vadd.f32 %v250, %v259
    %v271 = vadd.f32 %v251, %v259
    %v272 = vadd.f32 %v252, %v259
    %v273 = vadd.f32 %v253, %v259
    %v274 = vadd.f32 %v254, %v259
    %v275 = vadd.f32 %v255, %v259
    %v276 = vand.u32 2147483647, %v260
    %vm277 = vcmp.le.f32.partialorder %v276, 0.7853982
    %vm278 = vcmp.lt.s32.totalorder %v260, 0
    %v279 = vand.u32 %v260, 2139095040
    %v280 = vshrl.u32 %v279, 23
    %v281 = vsub.s32 %v280, 127
    %v282 = vand.u32 2147483647, %v260
    %v283 = vand.u32 %v282, 8388607
    %v284 = vor.u32 %v283, 8388608
    %v285 = vsub.s32 0, %v284
    %v286 = vadd.s32 %v281, 1
    %vm287 = vcmp.gt.s32.totalorder %v286, 0
    %v288 = vsel %vm287, %v286, 0
    %v289 = vshrl.u32 %v288, 5
    %v290 = vand.u32 %v288, 31
    %v291 = vsub.s32 32, %v290
    %v292 = vshrl.u32 683565275, %v291
    %v293 = vshll.u32 683565275, %v290
    %v294 = vshrl.u32 2475754826, %v291
    %v295 = vor.u32 %v293, %v294
    %v296 = vshll.u32 2475754826, %v290
    %v297 = vshrl.u32 2131351028, %v291
    %v298 = vor.u32 %v296, %v297
    %v299 = vshll.u32 2131351028, %v290
    %v300 = vshrl.u32 2102212464, %v291
    %v301 = vor.u32 %v299, %v300
    %v302 = vshll.u32 2102212464, %v290
    %v303 = vshrl.u32 920167782, %v291
    %v304 = vor.u32 %v302, %v303
    %v305 = vshll.u32 920167782, %v290
    %v306 = vshrl.u32 1326507024, %v291
    %v307 = vor.u32 %v305, %v306
    %vm308 = vcmp.lt.s32.totalorder %v289, 1
    %vm309 = vcmp.lt.s32.totalorder %v289, 2
    %vm310 = vcmp.lt.s32.totalorder %v289, 3
    %vm311 = vcmp.lt.s32.totalorder %v289, 4
    %v312 = vsel %vm308, %v292, %v295
    %v313 = vsel %vm311, %v301, 2102212464
    %v314 = vsel %vm310, %v298, %v313
    %v315 = vsel %vm309, %v312, %v314
    %v316 = vsel %vm308, %v295, %v298
    %v317 = vsel %vm311, %v304, 920167782
    %v318 = vsel %vm310, %v301, %v317
    %v319 = vsel %vm309, %v316, %v318
    %v320 = vsel %vm308, %v298, %v301
    %v321 = vsel %vm311, %v307, 1326507024
    %v322 = vsel %vm310, %v304, %v321
    %v323 = vsel %vm309, %v320, %v322
    %v324 = vshll.u32 %v284, 8
    %v325 = vmul.u32.u64.compose %v324, %v323
    %v326 = vextract.low.u32 %v325
    %v327 = vextract.high.u32 %v325
    %v328 = vmul.u32.u64.compose %v324, %v319
    %v329 = vextract.low.u32 %v328
    %v330 = vextract.high.u32 %v328
    %v331 = vmul.u32 %v324, %v315
    %v332 = vadd.s32 %v327, %v329
    %vm333 = vc.u32 %v327, %v329
    %v334 = vadd.s32 %v330, 1
    %v335 = vsel %vm333, %v334, %v330
    %v336 = vadd.s32 %v331, %v335
    %v337 = vadd.s32 %v336, 536870912
    %v338 = vshrl.u32 %v337, 30
    %v339 = vshll.u32 %v338, 30
    %v340 = vsub.s32 %v336, %v339
    %vm341 = vcmp.lt.s32.totalorder %v340, 0
    %v342 = vsub.s32 0, %v340
    %v343 = vsel %vm341, %v342, %v340
    %v344 = vclz %v343
    %v345 = vsub.s32 %v344, 2
    %vm346 = vcmp.gt.s32.totalorder 0, %v345
    %v347 = vsel %vm346, 0, %v345
    %v348 = vsub.s32 32, %v347
    %v349 = vshll.u32 %v340, %v347
    %v350 = vshrl.u32 %v332, %v348
    %v351 = vor.u32 %v349, %v350
    %v352 = vsub.s32 4294967266, %v347
    %v353 = vadd.s32 %v352, 127
    %v354 = vshll.u32 %v353, 23
    %v355 = vor.u32 4788187, %v354
    %v356 = vand.u32 2147483647, %v355
    %v358 = vcvt.s32.f32 %v351
    %v359 = vmul.f32 %v358, %v356
    %v360 = vxor.u32 %v359, 2147483648
    %v361 = vsel %vm278, %v360, %v359
    %v362 = vsub.s32 4, %v338
    %v363 = vsel %vm278, %v362, %v338
    %v364 = vsel %vm277, %v260, %v361
    %v365 = vsel %vm277, 0, %v363
    %v366 = vcosq.f32.pop %v364
    %v367 = vsinq.f32.pop %v364
    %vm368 = vweird.f32 %v260
    %v369 = vadd.s32 %v365, 3
    %v370 = vand.u32 %v369, 3
    %vm371 = vcmp.lt.s32.totalorder %v370, 2
    %vm372 = vcmp.eq.s32.totalorder %v370, 0
    %v373 = vxor.u32 %v367, 2147483648
    %v374 = vsel %vm372, %v366, %v373
    %vm375 = vcmp.eq.s32.totalorder %v370, 2
    %v376 = vxor.u32 %v366, 2147483648
    %v377 = vsel %vm375, %v376, %v367
    %v378 = vsel %vm371, %v374, %v377
    %v379 = vsel %vm368, nan, %v378
    %v380 = vand.u32 2147483647, %v261
    %vm381 = vcmp.le.f32.partialorder %v380, 0.7853982
    %vm382 = vcmp.lt.s32.totalorder %v261, 0
    %v383 = vand.u32 %v261, 2139095040
    %v384 = vshrl.u32 %v383, 23
    %v385 = vsub.s32 %v384, 127
    %v386 = vand.u32 2147483647, %v261
    %v387 = vand.u32 %v386, 8388607
    %v388 = vor.u32 %v387, 8388608
    %v389 = vsub.s32 0, %v388
    %v390 = vadd.s32 %v385, 1
    %vm391 = vcmp.gt.s32.totalorder %v390, 0
    %v392 = vsel %vm391, %v390, 0
    %v393 = vshrl.u32 %v392, 5
    %v394 = vand.u32 %v392, 31
    %v395 = vsub.s32 32, %v394
    %v396 = vshrl.u32 683565275, %v395
    %v397 = vshll.u32 683565275, %v394
    %v398 = vshrl.u32 2475754826, %v395
    %v399 = vor.u32 %v397, %v398
    %v400 = vshll.u32 2475754826, %v394
    %v401 = vshrl.u32 2131351028, %v395
    %v402 = vor.u32 %v400, %v401
    %v403 = vshll.u32 2131351028, %v394
    %v404 = vshrl.u32 2102212464, %v395
    %v405 = vor.u32 %v403, %v404
    %v406 = vshll.u32 2102212464, %v394
    %v407 = vshrl.u32 920167782, %v395
    %v408 = vor.u32 %v406, %v407
    %v409 = vshll.u32 920167782, %v394
    %v410 = vshrl.u32 1326507024, %v395
    %v411 = vor.u32 %v409, %v410
    %vm412 = vcmp.lt.s32.totalorder %v393, 1
    %vm413 = vcmp.lt.s32.totalorder %v393, 2
    %vm414 = vcmp.lt.s32.totalorder %v393, 3
    %vm415 = vcmp.lt.s32.totalorder %v393, 4
    %v416 = vsel %vm412, %v396, %v399
    %v417 = vsel %vm415, %v405, 2102212464
    %v418 = vsel %vm414, %v402, %v417
    %v419 = vsel %vm413, %v416, %v418
    %v420 = vsel %vm412, %v399, %v402
    %v421 = vsel %vm415, %v408, 920167782
    %v422 = vsel %vm414, %v405, %v421
    %v423 = vsel %vm413, %v420, %v422
    %v424 = vsel %vm412, %v402, %v405
    %v425 = vsel %vm415, %v411, 1326507024
    %v426 = vsel %vm414, %v408, %v425
    %v427 = vsel %vm413, %v424, %v426
    %v428 = vshll.u32 %v388, 8
    %v429 = vmul.u32.u64.compose %v428, %v427
    %v430 = vextract.low.u32 %v429
    %v431 = vextract.high.u32 %v429
    %v432 = vmul.u32.u64.compose %v428, %v423
    %v433 = vextract.low.u32 %v432
    %v434 = vextract.high.u32 %v432
    %v435 = vmul.u32 %v428, %v419
    %v436 = vadd.s32 %v431, %v433
    %vm437 = vc.u32 %v431, %v433
    %v438 = vadd.s32 %v434, 1
    %v439 = vsel %vm437, %v438, %v434
    %v440 = vadd.s32 %v435, %v439
    %v441 = vadd.s32 %v440, 536870912
    %v442 = vshrl.u32 %v441, 30
    %v443 = vshll.u32 %v442, 30
    %v444 = vsub.s32 %v440, %v443
    %vm445 = vcmp.lt.s32.totalorder %v444, 0
    %v446 = vsub.s32 0, %v444
    %v447 = vsel %vm445, %v446, %v444
    %v448 = vclz %v447
    %v449 = vsub.s32 %v448, 2
    %vm450 = vcmp.gt.s32.totalorder 0, %v449
    %v451 = vsel %vm450, 0, %v449
    %v452 = vsub.s32 32, %v451
    %v453 = vshll.u32 %v444, %v451
    %v454 = vshrl.u32 %v436, %v452
    %v455 = vor.u32 %v453, %v454
    %v456 = vsub.s32 4294967266, %v451
    %v457 = vadd.s32 %v456, 127
    %v458 = vshll.u32 %v457, 23
    %v459 = vor.u32 4788187, %v458
    %v460 = vand.u32 2147483647, %v459
    %v462 = vcvt.s32.f32 %v455
    %v463 = vmul.f32 %v462, %v460
    %v464 = vxor.u32 %v463, 2147483648
    %v465 = vsel %vm382, %v464, %v463
    %v466 = vsub.s32 4, %v442
    %v467 = vsel %vm382, %v466, %v442
    %v468 = vsel %vm381, %v261, %v465
    %v469 = vsel %vm381, 0, %v467
    %v470 = vcosq.f32.pop %v468
    %v471 = vsinq.f32.pop %v468
    %vm472 = vweird.f32 %v261
    %v473 = vadd.s32 %v469, 3
    %v474 = vand.u32 %v473, 3
    %vm475 = vcmp.lt.s32.totalorder %v474, 2
    %vm476 = vcmp.eq.s32.totalorder %v474, 0
    %v477 = vxor.u32 %v471, 2147483648
    %v478 = vsel %vm476, %v470, %v477
    %vm479 = vcmp.eq.s32.totalorder %v474, 2
    %v480 = vxor.u32 %v470, 2147483648
    %v481 = vsel %vm479, %v480, %v471
    %v482 = vsel %vm475, %v478, %v481
    %v483 = vsel %vm472, nan, %v482
    %v484 = vand.u32 2147483647, %v262
    %vm485 = vcmp.le.f32.partialorder %v484, 0.7853982
    %vm486 = vcmp.lt.s32.totalorder %v262, 0
    %v487 = vand.u32 %v262, 2139095040
    %v488 = vshrl.u32 %v487, 23
    %v489 = vsub.s32 %v488, 127
    %v490 = vand.u32 2147483647, %v262
    %v491 = vand.u32 %v490, 8388607
    %v492 = vor.u32 %v491, 8388608
    %v493 = vsub.s32 0, %v492
    %v494 = vadd.s32 %v489, 1
    %vm495 = vcmp.gt.s32.totalorder %v494, 0
    %v496 = vsel %vm495, %v494, 0
    %v497 = vshrl.u32 %v496, 5
    %v498 = vand.u32 %v496, 31
    %v499 = vsub.s32 32, %v498
    %v500 = vshrl.u32 683565275, %v499
    %v501 = vshll.u32 683565275, %v498
    %v502 = vshrl.u32 2475754826, %v499
    %v503 = vor.u32 %v501, %v502
    %v504 = vshll.u32 2475754826, %v498
    %v505 = vshrl.u32 2131351028, %v499
    %v506 = vor.u32 %v504, %v505
    %v507 = vshll.u32 2131351028, %v498
    %v508 = vshrl.u32 2102212464, %v499
    %v509 = vor.u32 %v507, %v508
    %v510 = vshll.u32 2102212464, %v498
    %v511 = vshrl.u32 920167782, %v499
    %v512 = vor.u32 %v510, %v511
    %v513 = vshll.u32 920167782, %v498
    %v514 = vshrl.u32 1326507024, %v499
    %v515 = vor.u32 %v513, %v514
    %vm516 = vcmp.lt.s32.totalorder %v497, 1
    %vm517 = vcmp.lt.s32.totalorder %v497, 2
    %vm518 = vcmp.lt.s32.totalorder %v497, 3
    %vm519 = vcmp.lt.s32.totalorder %v497, 4
    %v520 = vsel %vm516, %v500, %v503
    %v521 = vsel %vm519, %v509, 2102212464
    %v522 = vsel %vm518, %v506, %v521
    %v523 = vsel %vm517, %v520, %v522
    %v524 = vsel %vm516, %v503, %v506
    %v525 = vsel %vm519, %v512, 920167782
    %v526 = vsel %vm518, %v509, %v525
    %v527 = vsel %vm517, %v524, %v526
    %v528 = vsel %vm516, %v506, %v509
    %v529 = vsel %vm519, %v515, 1326507024
    %v530 = vsel %vm518, %v512, %v529
    %v531 = vsel %vm517, %v528, %v530
    %v532 = vshll.u32 %v492, 8
    %v533 = vmul.u32.u64.compose %v532, %v531
    %v534 = vextract.low.u32 %v533
    %v535 = vextract.high.u32 %v533
    %v536 = vmul.u32.u64.compose %v532, %v527
    %v537 = vextract.low.u32 %v536
    %v538 = vextract.high.u32 %v536
    %v539 = vmul.u32 %v532, %v523
    %v540 = vadd.s32 %v535, %v537
    %vm541 = vc.u32 %v535, %v537
    %v542 = vadd.s32 %v538, 1
    %v543 = vsel %vm541, %v542, %v538
    %v544 = vadd.s32 %v539, %v543
    %v545 = vadd.s32 %v544, 536870912
    %v546 = vshrl.u32 %v545, 30
    %v547 = vshll.u32 %v546, 30
    %v548 = vsub.s32 %v544, %v547
    %vm549 = vcmp.lt.s32.totalorder %v548, 0
    %v550 = vsub.s32 0, %v548
    %v551 = vsel %vm549, %v550, %v548
    %v552 = vclz %v551
    %v553 = vsub.s32 %v552, 2
    %vm554 = vcmp.gt.s32.totalorder 0, %v553
    %v555 = vsel %vm554, 0, %v553
    %v556 = vsub.s32 32, %v555
    %v557 = vshll.u32 %v548, %v555
    %v558 = vshrl.u32 %v540, %v556
    %v559 = vor.u32 %v557, %v558
    %v560 = vsub.s32 4294967266, %v555
    %v561 = vadd.s32 %v560, 127
    %v562 = vshll.u32 %v561, 23
    %v563 = vor.u32 4788187, %v562
    %v564 = vand.u32 2147483647, %v563
    %v566 = vcvt.s32.f32 %v559
    %v567 = vmul.f32 %v566, %v564
    %v568 = vxor.u32 %v567, 2147483648
    %v569 = vsel %vm486, %v568, %v567
    %v570 = vsub.s32 4, %v546
    %v571 = vsel %vm486, %v570, %v546
    %v572 = vsel %vm485, %v262, %v569
    %v573 = vsel %vm485, 0, %v571
    %v574 = vcosq.f32.pop %v572
    %v575 = vsinq.f32.pop %v572
    %vm576 = vweird.f32 %v262
    %v577 = vadd.s32 %v573, 3
    %v578 = vand.u32 %v577, 3
    %vm579 = vcmp.lt.s32.totalorder %v578, 2
    %vm580 = vcmp.eq.s32.totalorder %v578, 0
    %v581 = vxor.u32 %v575, 2147483648
    %v582 = vsel %vm580, %v574, %v581
    %vm583 = vcmp.eq.s32.totalorder %v578, 2
    %v584 = vxor.u32 %v574, 2147483648
    %v585 = vsel %vm583, %v584, %v575
    %v586 = vsel %vm579, %v582, %v585
    %v587 = vsel %vm576, nan, %v586
    %v588 = vand.u32 2147483647, %v263
    %vm589 = vcmp.le.f32.partialorder %v588, 0.7853982
    %vm590 = vcmp.lt.s32.totalorder %v263, 0
    %v591 = vand.u32 %v263, 2139095040
    %v592 = vshrl.u32 %v591, 23
    %v593 = vsub.s32 %v592, 127
    %v594 = vand.u32 2147483647, %v263
    %v595 = vand.u32 %v594, 8388607
    %v596 = vor.u32 %v595, 8388608
    %v597 = vsub.s32 0, %v596
    %v598 = vadd.s32 %v593, 1
    %vm599 = vcmp.gt.s32.totalorder %v598, 0
    %v600 = vsel %vm599, %v598, 0
    %v601 = vshrl.u32 %v600, 5
    %v602 = vand.u32 %v600, 31
    %v603 = vsub.s32 32, %v602
    %v604 = vshrl.u32 683565275, %v603
    %v605 = vshll.u32 683565275, %v602
    %v606 = vshrl.u32 2475754826, %v603
    %v607 = vor.u32 %v605, %v606
    %v608 = vshll.u32 2475754826, %v602
    %v609 = vshrl.u32 2131351028, %v603
    %v610 = vor.u32 %v608, %v609
    %v611 = vshll.u32 2131351028, %v602
    %v612 = vshrl.u32 2102212464, %v603
    %v613 = vor.u32 %v611, %v612
    %v614 = vshll.u32 2102212464, %v602
    %v615 = vshrl.u32 920167782, %v603
    %v616 = vor.u32 %v614, %v615
    %v617 = vshll.u32 920167782, %v602
    %v618 = vshrl.u32 1326507024, %v603
    %v619 = vor.u32 %v617, %v618
    %vm620 = vcmp.lt.s32.totalorder %v601, 1
    %vm621 = vcmp.lt.s32.totalorder %v601, 2
    %vm622 = vcmp.lt.s32.totalorder %v601, 3
    %vm623 = vcmp.lt.s32.totalorder %v601, 4
    %v624 = vsel %vm620, %v604, %v607
    %v625 = vsel %vm623, %v613, 2102212464
    %v626 = vsel %vm622, %v610, %v625
    %v627 = vsel %vm621, %v624, %v626
    %v628 = vsel %vm620, %v607, %v610
    %v629 = vsel %vm623, %v616, 920167782
    %v630 = vsel %vm622, %v613, %v629
    %v631 = vsel %vm621, %v628, %v630
    %v632 = vsel %vm620, %v610, %v613
    %v633 = vsel %vm623, %v619, 1326507024
    %v634 = vsel %vm622, %v616, %v633
    %v635 = vsel %vm621, %v632, %v634
    %v636 = vshll.u32 %v596, 8
    %v637 = vmul.u32.u64.compose %v636, %v635
    %v638 = vextract.low.u32 %v637
    %v639 = vextract.high.u32 %v637
    %v640 = vmul.u32.u64.compose %v636, %v631
    %v641 = vextract.low.u32 %v640
    %v642 = vextract.high.u32 %v640
    %v643 = vmul.u32 %v636, %v627
    %v644 = vadd.s32 %v639, %v641
    %vm645 = vc.u32 %v639, %v641
    %v646 = vadd.s32 %v642, 1
    %v647 = vsel %vm645, %v646, %v642
    %v648 = vadd.s32 %v643, %v647
    %v649 = vadd.s32 %v648, 536870912
    %v650 = vshrl.u32 %v649, 30
    %v651 = vshll.u32 %v650, 30
    %v652 = vsub.s32 %v648, %v651
    %vm653 = vcmp.lt.s32.totalorder %v652, 0
    %v654 = vsub.s32 0, %v652
    %v655 = vsel %vm653, %v654, %v652
    %v656 = vclz %v655
    %v657 = vsub.s32 %v656, 2
    %vm658 = vcmp.gt.s32.totalorder 0, %v657
    %v659 = vsel %vm658, 0, %v657
    %v660 = vsub.s32 32, %v659
    %v661 = vshll.u32 %v652, %v659
    %v662 = vshrl.u32 %v644, %v660
    %v663 = vor.u32 %v661, %v662
    %v664 = vsub.s32 4294967266, %v659
    %v665 = vadd.s32 %v664, 127
    %v666 = vshll.u32 %v665, 23
    %v667 = vor.u32 4788187, %v666
    %v668 = vand.u32 2147483647, %v667
    %v670 = vcvt.s32.f32 %v663
    %v671 = vmul.f32 %v670, %v668
    %v672 = vxor.u32 %v671, 2147483648
    %v673 = vsel %vm590, %v672, %v671
    %v674 = vsub.s32 4, %v650
    %v675 = vsel %vm590, %v674, %v650
    %v676 = vsel %vm589, %v263, %v673
    %v677 = vsel %vm589, 0, %v675
    %v678 = vcosq.f32.pop %v676
    %v679 = vsinq.f32.pop %v676
    %vm680 = vweird.f32 %v263
    %v681 = vadd.s32 %v677, 3
    %v682 = vand.u32 %v681, 3
    %vm683 = vcmp.lt.s32.totalorder %v682, 2
    %vm684 = vcmp.eq.s32.totalorder %v682, 0
    %v685 = vxor.u32 %v679, 2147483648
    %v686 = vsel %vm684, %v678, %v685
    %vm687 = vcmp.eq.s32.totalorder %v682, 2
    %v688 = vxor.u32 %v678, 2147483648
    %v689 = vsel %vm687, %v688, %v679
    %v690 = vsel %vm683, %v686, %v689
    %v691 = vsel %vm680, nan, %v690
    %v692 = vand.u32 2147483647, %v264
    %vm693 = vcmp.le.f32.partialorder %v692, 0.7853982
    %vm694 = vcmp.lt.s32.totalorder %v264, 0
    %v695 = vand.u32 %v264, 2139095040
    %v696 = vshrl.u32 %v695, 23
    %v697 = vsub.s32 %v696, 127
    %v698 = vand.u32 2147483647, %v264
    %v699 = vand.u32 %v698, 8388607
    %v700 = vor.u32 %v699, 8388608
    %v701 = vsub.s32 0, %v700
    %v702 = vadd.s32 %v697, 1
    %vm703 = vcmp.gt.s32.totalorder %v702, 0
    %v704 = vsel %vm703, %v702, 0
    %v705 = vshrl.u32 %v704, 5
    %v706 = vand.u32 %v704, 31
    %v707 = vsub.s32 32, %v706
    %v708 = vshrl.u32 683565275, %v707
    %v709 = vshll.u32 683565275, %v706
    %v710 = vshrl.u32 2475754826, %v707
    %v711 = vor.u32 %v709, %v710
    %v712 = vshll.u32 2475754826, %v706
    %v713 = vshrl.u32 2131351028, %v707
    %v714 = vor.u32 %v712, %v713
    %v715 = vshll.u32 2131351028, %v706
    %v716 = vshrl.u32 2102212464, %v707
    %v717 = vor.u32 %v715, %v716
    %v718 = vshll.u32 2102212464, %v706
    %v719 = vshrl.u32 920167782, %v707
    %v720 = vor.u32 %v718, %v719
    %v721 = vshll.u32 920167782, %v706
    %v722 = vshrl.u32 1326507024, %v707
    %v723 = vor.u32 %v721, %v722
    %vm724 = vcmp.lt.s32.totalorder %v705, 1
    %vm725 = vcmp.lt.s32.totalorder %v705, 2
    %vm726 = vcmp.lt.s32.totalorder %v705, 3
    %vm727 = vcmp.lt.s32.totalorder %v705, 4
    %v728 = vsel %vm724, %v708, %v711
    %v729 = vsel %vm727, %v717, 2102212464
    %v730 = vsel %vm726, %v714, %v729
    %v731 = vsel %vm725, %v728, %v730
    %v732 = vsel %vm724, %v711, %v714
    %v733 = vsel %vm727, %v720, 920167782
    %v734 = vsel %vm726, %v717, %v733
    %v735 = vsel %vm725, %v732, %v734
    %v736 = vsel %vm724, %v714, %v717
    %v737 = vsel %vm727, %v723, 1326507024
    %v738 = vsel %vm726, %v720, %v737
    %v739 = vsel %vm725, %v736, %v738
    %v740 = vshll.u32 %v700, 8
    %v741 = vmul.u32.u64.compose %v740, %v739
    %v742 = vextract.low.u32 %v741
    %v743 = vextract.high.u32 %v741
    %v744 = vmul.u32.u64.compose %v740, %v735
    %v745 = vextract.low.u32 %v744
    %v746 = vextract.high.u32 %v744
    %v747 = vmul.u32 %v740, %v731
    %v748 = vadd.s32 %v743, %v745
    %vm749 = vc.u32 %v743, %v745
    %v750 = vadd.s32 %v746, 1
    %v751 = vsel %vm749, %v750, %v746
    %v752 = vadd.s32 %v747, %v751
    %v753 = vadd.s32 %v752, 536870912
    %v754 = vshrl.u32 %v753, 30
    %v755 = vshll.u32 %v754, 30
    %v756 = vsub.s32 %v752, %v755
    %vm757 = vcmp.lt.s32.totalorder %v756, 0
    %v758 = vsub.s32 0, %v756
    %v759 = vsel %vm757, %v758, %v756
    %v760 = vclz %v759
    %v761 = vsub.s32 %v760, 2
    %vm762 = vcmp.gt.s32.totalorder 0, %v761
    %v763 = vsel %vm762, 0, %v761
    %v764 = vsub.s32 32, %v763
    %v765 = vshll.u32 %v756, %v763
    %v766 = vshrl.u32 %v748, %v764
    %v767 = vor.u32 %v765, %v766
    %v768 = vsub.s32 4294967266, %v763
    %v769 = vadd.s32 %v768, 127
    %v770 = vshll.u32 %v769, 23
    %v771 = vor.u32 4788187, %v770
    %v772 = vand.u32 2147483647, %v771
    %v774 = vcvt.s32.f32 %v767
    %v775 = vmul.f32 %v774, %v772
    %v776 = vxor.u32 %v775, 2147483648
    %v777 = vsel %vm694, %v776, %v775
    %v778 = vsub.s32 4, %v754
    %v779 = vsel %vm694, %v778, %v754
    %v780 = vsel %vm693, %v264, %v777
    %v781 = vsel %vm693, 0, %v779
    %v782 = vcosq.f32.pop %v780
    %v783 = vsinq.f32.pop %v780
    %vm784 = vweird.f32 %v264
    %v785 = vadd.s32 %v781, 3
    %v786 = vand.u32 %v785, 3
    %vm787 = vcmp.lt.s32.totalorder %v786, 2
    %vm788 = vcmp.eq.s32.totalorder %v786, 0
    %v789 = vxor.u32 %v783, 2147483648
    %v790 = vsel %vm788, %v782, %v789
    %vm791 = vcmp.eq.s32.totalorder %v786, 2
    %v792 = vxor.u32 %v782, 2147483648
    %v793 = vsel %vm791, %v792, %v783
    %v794 = vsel %vm787, %v790, %v793
    %v795 = vsel %vm784, nan, %v794
    %v796 = vand.u32 2147483647, %v265
    %vm797 = vcmp.le.f32.partialorder %v796, 0.7853982
    %vm798 = vcmp.lt.s32.totalorder %v265, 0
    %v799 = vand.u32 %v265, 2139095040
    %v800 = vshrl.u32 %v799, 23
    %v801 = vsub.s32 %v800, 127
    %v802 = vand.u32 2147483647, %v265
    %v803 = vand.u32 %v802, 8388607
    %v804 = vor.u32 %v803, 8388608
    %v805 = vsub.s32 0, %v804
    %v806 = vadd.s32 %v801, 1
    %vm807 = vcmp.gt.s32.totalorder %v806, 0
    %v808 = vsel %vm807, %v806, 0
    %v809 = vshrl.u32 %v808, 5
    %v810 = vand.u32 %v808, 31
    %v811 = vsub.s32 32, %v810
    %v812 = vshrl.u32 683565275, %v811
    %v813 = vshll.u32 683565275, %v810
    %v814 = vshrl.u32 2475754826, %v811
    %v815 = vor.u32 %v813, %v814
    %v816 = vshll.u32 2475754826, %v810
    %v817 = vshrl.u32 2131351028, %v811
    %v818 = vor.u32 %v816, %v817
    %v819 = vshll.u32 2131351028, %v810
    %v820 = vshrl.u32 2102212464, %v811
    %v821 = vor.u32 %v819, %v820
    %v822 = vshll.u32 2102212464, %v810
    %v823 = vshrl.u32 920167782, %v811
    %v824 = vor.u32 %v822, %v823
    %v825 = vshll.u32 920167782, %v810
    %v826 = vshrl.u32 1326507024, %v811
    %v827 = vor.u32 %v825, %v826
    %vm828 = vcmp.lt.s32.totalorder %v809, 1
    %vm829 = vcmp.lt.s32.totalorder %v809, 2
    %vm830 = vcmp.lt.s32.totalorder %v809, 3
    %vm831 = vcmp.lt.s32.totalorder %v809, 4
    %v832 = vsel %vm828, %v812, %v815
    %v833 = vsel %vm831, %v821, 2102212464
    %v834 = vsel %vm830, %v818, %v833
    %v835 = vsel %vm829, %v832, %v834
    %v836 = vsel %vm828, %v815, %v818
    %v837 = vsel %vm831, %v824, 920167782
    %v838 = vsel %vm830, %v821, %v837
    %v839 = vsel %vm829, %v836, %v838
    %v840 = vsel %vm828, %v818, %v821
    %v841 = vsel %vm831, %v827, 1326507024
    %v842 = vsel %vm830, %v824, %v841
    %v843 = vsel %vm829, %v840, %v842
    %v844 = vshll.u32 %v804, 8
    %v845 = vmul.u32.u64.compose %v844, %v843
    %v846 = vextract.low.u32 %v845
    %v847 = vextract.high.u32 %v845
    %v848 = vmul.u32.u64.compose %v844, %v839
    %v849 = vextract.low.u32 %v848
    %v850 = vextract.high.u32 %v848
    %v851 = vmul.u32 %v844, %v835
    %v852 = vadd.s32 %v847, %v849
    %vm853 = vc.u32 %v847, %v849
    %v854 = vadd.s32 %v850, 1
    %v855 = vsel %vm853, %v854, %v850
    %v856 = vadd.s32 %v851, %v855
    %v857 = vadd.s32 %v856, 536870912
    %v858 = vshrl.u32 %v857, 30
    %v859 = vshll.u32 %v858, 30
    %v860 = vsub.s32 %v856, %v859
    %vm861 = vcmp.lt.s32.totalorder %v860, 0
    %v862 = vsub.s32 0, %v860
    %v863 = vsel %vm861, %v862, %v860
    %v864 = vclz %v863
    %v865 = vsub.s32 %v864, 2
    %vm866 = vcmp.gt.s32.totalorder 0, %v865
    %v867 = vsel %vm866, 0, %v865
    %v868 = vsub.s32 32, %v867
    %v869 = vshll.u32 %v860, %v867
    %v870 = vshrl.u32 %v852, %v868
    %v871 = vor.u32 %v869, %v870
    %v872 = vsub.s32 4294967266, %v867
    %v873 = vadd.s32 %v872, 127
    %v874 = vshll.u32 %v873, 23
    %v875 = vor.u32 4788187, %v874
    %v876 = vand.u32 2147483647, %v875
    %v878 = vcvt.s32.f32 %v871
    %v879 = vmul.f32 %v878, %v876
    %v880 = vxor.u32 %v879, 2147483648
    %v881 = vsel %vm798, %v880, %v879
    %v882 = vsub.s32 4, %v858
    %v883 = vsel %vm798, %v882, %v858
    %v884 = vsel %vm797, %v265, %v881
    %v885 = vsel %vm797, 0, %v883
    %v886 = vcosq.f32.pop %v884
    %v887 = vsinq.f32.pop %v884
    %vm888 = vweird.f32 %v265
    %v889 = vadd.s32 %v885, 3
    %v890 = vand.u32 %v889, 3
    %vm891 = vcmp.lt.s32.totalorder %v890, 2
    %vm892 = vcmp.eq.s32.totalorder %v890, 0
    %v893 = vxor.u32 %v887, 2147483648
    %v894 = vsel %vm892, %v886, %v893
    %vm895 = vcmp.eq.s32.totalorder %v890, 2
    %v896 = vxor.u32 %v886, 2147483648
    %v897 = vsel %vm895, %v896, %v887
    %v898 = vsel %vm891, %v894, %v897
    %v899 = vsel %vm888, nan, %v898
    %v900 = vand.u32 2147483647, %v266
    %vm901 = vcmp.le.f32.partialorder %v900, 0.7853982
    %vm902 = vcmp.lt.s32.totalorder %v266, 0
    %v903 = vand.u32 %v266, 2139095040
    %v904 = vshrl.u32 %v903, 23
    %v905 = vsub.s32 %v904, 127
    %v906 = vand.u32 2147483647, %v266
    %v907 = vand.u32 %v906, 8388607
    %v908 = vor.u32 %v907, 8388608
    %v909 = vsub.s32 0, %v908
    %v910 = vadd.s32 %v905, 1
    %vm911 = vcmp.gt.s32.totalorder %v910, 0
    %v912 = vsel %vm911, %v910, 0
    %v913 = vshrl.u32 %v912, 5
    %v914 = vand.u32 %v912, 31
    %v915 = vsub.s32 32, %v914
    %v916 = vshrl.u32 683565275, %v915
    %v917 = vshll.u32 683565275, %v914
    %v918 = vshrl.u32 2475754826, %v915
    %v919 = vor.u32 %v917, %v918
    %v920 = vshll.u32 2475754826, %v914
    %v921 = vshrl.u32 2131351028, %v915
    %v922 = vor.u32 %v920, %v921
    %v923 = vshll.u32 2131351028, %v914
    %v924 = vshrl.u32 2102212464, %v915
    %v925 = vor.u32 %v923, %v924
    %v926 = vshll.u32 2102212464, %v914
    %v927 = vshrl.u32 920167782, %v915
    %v928 = vor.u32 %v926, %v927
    %v929 = vshll.u32 920167782, %v914
    %v930 = vshrl.u32 1326507024, %v915
    %v931 = vor.u32 %v929, %v930
    %vm932 = vcmp.lt.s32.totalorder %v913, 1
    %vm933 = vcmp.lt.s32.totalorder %v913, 2
    %vm934 = vcmp.lt.s32.totalorder %v913, 3
    %vm935 = vcmp.lt.s32.totalorder %v913, 4
    %v936 = vsel %vm932, %v916, %v919
    %v937 = vsel %vm935, %v925, 2102212464
    %v938 = vsel %vm934, %v922, %v937
    %v939 = vsel %vm933, %v936, %v938
    %v940 = vsel %vm932, %v919, %v922
    %v941 = vsel %vm935, %v928, 920167782
    %v942 = vsel %vm934, %v925, %v941
    %v943 = vsel %vm933, %v940, %v942
    %v944 = vsel %vm932, %v922, %v925
    %v945 = vsel %vm935, %v931, 1326507024
    %v946 = vsel %vm934, %v928, %v945
    %v947 = vsel %vm933, %v944, %v946
    %v948 = vshll.u32 %v908, 8
    %v949 = vmul.u32.u64.compose %v948, %v947
    %v950 = vextract.low.u32 %v949
    %v951 = vextract.high.u32 %v949
    %v952 = vmul.u32.u64.compose %v948, %v943
    %v953 = vextract.low.u32 %v952
    %v954 = vextract.high.u32 %v952
    %v955 = vmul.u32 %v948, %v939
    %v956 = vadd.s32 %v951, %v953
    %vm957 = vc.u32 %v951, %v953
    %v958 = vadd.s32 %v954, 1
    %v959 = vsel %vm957, %v958, %v954
    %v960 = vadd.s32 %v955, %v959
    %v961 = vadd.s32 %v960, 536870912
    %v962 = vshrl.u32 %v961, 30
    %v963 = vshll.u32 %v962, 30
    %v964 = vsub.s32 %v960, %v963
    %vm965 = vcmp.lt.s32.totalorder %v964, 0
    %v966 = vsub.s32 0, %v964
    %v967 = vsel %vm965, %v966, %v964
    %v968 = vclz %v967
    %v969 = vsub.s32 %v968, 2
    %vm970 = vcmp.gt.s32.totalorder 0, %v969
    %v971 = vsel %vm970, 0, %v969
    %v972 = vsub.s32 32, %v971
    %v973 = vshll.u32 %v964, %v971
    %v974 = vshrl.u32 %v956, %v972
    %v975 = vor.u32 %v973, %v974
    %v976 = vsub.s32 4294967266, %v971
    %v977 = vadd.s32 %v976, 127
    %v978 = vshll.u32 %v977, 23
    %v979 = vor.u32 4788187, %v978
    %v980 = vand.u32 2147483647, %v979
    %v982 = vcvt.s32.f32 %v975
    %v983 = vmul.f32 %v982, %v980
    %v984 = vxor.u32 %v983, 2147483648
    %v985 = vsel %vm902, %v984, %v983
    %v986 = vsub.s32 4, %v962
    %v987 = vsel %vm902, %v986, %v962
    %v988 = vsel %vm901, %v266, %v985
    %v989 = vsel %vm901, 0, %v987
    %v990 = vcosq.f32.pop %v988
    %v991 = vsinq.f32.pop %v988
    %vm992 = vweird.f32 %v266
    %v993 = vadd.s32 %v989, 3
    %v994 = vand.u32 %v993, 3
    %vm995 = vcmp.lt.s32.totalorder %v994, 2
    %vm996 = vcmp.eq.s32.totalorder %v994, 0
    %v997 = vxor.u32 %v991, 2147483648
    %v998 = vsel %vm996, %v990, %v997
    %vm999 = vcmp.eq.s32.totalorder %v994, 2
    %v1000 = vxor.u32 %v990, 2147483648
    %v1001 = vsel %vm999, %v1000, %v991
    %v1002 = vsel %vm995, %v998, %v1001
    %v1003 = vsel %vm992, nan, %v1002
    %v1004 = vand.u32 2147483647, %v267
    %vm1005 = vcmp.le.f32.partialorder %v1004, 0.7853982
    %vm1006 = vcmp.lt.s32.totalorder %v267, 0
    %v1007 = vand.u32 %v267, 2139095040
    %v1008 = vshrl.u32 %v1007, 23
    %v1009 = vsub.s32 %v1008, 127
    %v1010 = vand.u32 2147483647, %v267
    %v1011 = vand.u32 %v1010, 8388607
    %v1012 = vor.u32 %v1011, 8388608
    %v1013 = vsub.s32 0, %v1012
    %v1014 = vadd.s32 %v1009, 1
    %vm1015 = vcmp.gt.s32.totalorder %v1014, 0
    %v1016 = vsel %vm1015, %v1014, 0
    %v1017 = vshrl.u32 %v1016, 5
    %v1018 = vand.u32 %v1016, 31
    %v1019 = vsub.s32 32, %v1018
    %v1020 = vshrl.u32 683565275, %v1019
    %v1021 = vshll.u32 683565275, %v1018
    %v1022 = vshrl.u32 2475754826, %v1019
    %v1023 = vor.u32 %v1021, %v1022
    %v1024 = vshll.u32 2475754826, %v1018
    %v1025 = vshrl.u32 2131351028, %v1019
    %v1026 = vor.u32 %v1024, %v1025
    %v1027 = vshll.u32 2131351028, %v1018
    %v1028 = vshrl.u32 2102212464, %v1019
    %v1029 = vor.u32 %v1027, %v1028
    %v1030 = vshll.u32 2102212464, %v1018
    %v1031 = vshrl.u32 920167782, %v1019
    %v1032 = vor.u32 %v1030, %v1031
    %v1033 = vshll.u32 920167782, %v1018
    %v1034 = vshrl.u32 1326507024, %v1019
    %v1035 = vor.u32 %v1033, %v1034
    %vm1036 = vcmp.lt.s32.totalorder %v1017, 1
    %vm1037 = vcmp.lt.s32.totalorder %v1017, 2
    %vm1038 = vcmp.lt.s32.totalorder %v1017, 3
    %vm1039 = vcmp.lt.s32.totalorder %v1017, 4
    %v1040 = vsel %vm1036, %v1020, %v1023
    %v1041 = vsel %vm1039, %v1029, 2102212464
    %v1042 = vsel %vm1038, %v1026, %v1041
    %v1043 = vsel %vm1037, %v1040, %v1042
    %v1044 = vsel %vm1036, %v1023, %v1026
    %v1045 = vsel %vm1039, %v1032, 920167782
    %v1046 = vsel %vm1038, %v1029, %v1045
    %v1047 = vsel %vm1037, %v1044, %v1046
    %v1048 = vsel %vm1036, %v1026, %v1029
    %v1049 = vsel %vm1039, %v1035, 1326507024
    %v1050 = vsel %vm1038, %v1032, %v1049
    %v1051 = vsel %vm1037, %v1048, %v1050
    %v1052 = vshll.u32 %v1012, 8
    %v1053 = vmul.u32.u64.compose %v1052, %v1051
    %v1054 = vextract.low.u32 %v1053
    %v1055 = vextract.high.u32 %v1053
    %v1056 = vmul.u32.u64.compose %v1052, %v1047
    %v1057 = vextract.low.u32 %v1056
    %v1058 = vextract.high.u32 %v1056
    %v1059 = vmul.u32 %v1052, %v1043
    %v1060 = vadd.s32 %v1055, %v1057
    %vm1061 = vc.u32 %v1055, %v1057
    %v1062 = vadd.s32 %v1058, 1
    %v1063 = vsel %vm1061, %v1062, %v1058
    %v1064 = vadd.s32 %v1059, %v1063
    %v1065 = vadd.s32 %v1064, 536870912
    %v1066 = vshrl.u32 %v1065, 30
    %v1067 = vshll.u32 %v1066, 30
    %v1068 = vsub.s32 %v1064, %v1067
    %vm1069 = vcmp.lt.s32.totalorder %v1068, 0
    %v1070 = vsub.s32 0, %v1068
    %v1071 = vsel %vm1069, %v1070, %v1068
    %v1072 = vclz %v1071
    %v1073 = vsub.s32 %v1072, 2
    %vm1074 = vcmp.gt.s32.totalorder 0, %v1073
    %v1075 = vsel %vm1074, 0, %v1073
    %v1076 = vsub.s32 32, %v1075
    %v1077 = vshll.u32 %v1068, %v1075
    %v1078 = vshrl.u32 %v1060, %v1076
    %v1079 = vor.u32 %v1077, %v1078
    %v1080 = vsub.s32 4294967266, %v1075
    %v1081 = vadd.s32 %v1080, 127
    %v1082 = vshll.u32 %v1081, 23
    %v1083 = vor.u32 4788187, %v1082
    %v1084 = vand.u32 2147483647, %v1083
    %v1086 = vcvt.s32.f32 %v1079
    %v1087 = vmul.f32 %v1086, %v1084
    %v1088 = vxor.u32 %v1087, 2147483648
    %v1089 = vsel %vm1006, %v1088, %v1087
    %v1090 = vsub.s32 4, %v1066
    %v1091 = vsel %vm1006, %v1090, %v1066
    %v1092 = vsel %vm1005, %v267, %v1089
    %v1093 = vsel %vm1005, 0, %v1091
    %v1094 = vcosq.f32.pop %v1092
    %v1095 = vsinq.f32.pop %v1092
    %vm1096 = vweird.f32 %v267
    %v1097 = vadd.s32 %v1093, 3
    %v1098 = vand.u32 %v1097, 3
    %vm1099 = vcmp.lt.s32.totalorder %v1098, 2
    %vm1100 = vcmp.eq.s32.totalorder %v1098, 0
    %v1101 = vxor.u32 %v1095, 2147483648
    %v1102 = vsel %vm1100, %v1094, %v1101
    %vm1103 = vcmp.eq.s32.totalorder %v1098, 2
    %v1104 = vxor.u32 %v1094, 2147483648
    %v1105 = vsel %vm1103, %v1104, %v1095
    %v1106 = vsel %vm1099, %v1102, %v1105
    %v1107 = vsel %vm1096, nan, %v1106
    %v1108 = vand.u32 2147483647, %v268
    %vm1109 = vcmp.le.f32.partialorder %v1108, 0.7853982
    %vm1110 = vcmp.lt.s32.totalorder %v268, 0
    %v1111 = vand.u32 %v268, 2139095040
    %v1112 = vshrl.u32 %v1111, 23
    %v1113 = vsub.s32 %v1112, 127
    %v1114 = vand.u32 2147483647, %v268
    %v1115 = vand.u32 %v1114, 8388607
    %v1116 = vor.u32 %v1115, 8388608
    %v1117 = vsub.s32 0, %v1116
    %v1118 = vadd.s32 %v1113, 1
    %vm1119 = vcmp.gt.s32.totalorder %v1118, 0
    %v1120 = vsel %vm1119, %v1118, 0
    %v1121 = vshrl.u32 %v1120, 5
    %v1122 = vand.u32 %v1120, 31
    %v1123 = vsub.s32 32, %v1122
    %v1124 = vshrl.u32 683565275, %v1123
    %v1125 = vshll.u32 683565275, %v1122
    %v1126 = vshrl.u32 2475754826, %v1123
    %v1127 = vor.u32 %v1125, %v1126
    %v1128 = vshll.u32 2475754826, %v1122
    %v1129 = vshrl.u32 2131351028, %v1123
    %v1130 = vor.u32 %v1128, %v1129
    %v1131 = vshll.u32 2131351028, %v1122
    %v1132 = vshrl.u32 2102212464, %v1123
    %v1133 = vor.u32 %v1131, %v1132
    %v1134 = vshll.u32 2102212464, %v1122
    %v1135 = vshrl.u32 920167782, %v1123
    %v1136 = vor.u32 %v1134, %v1135
    %v1137 = vshll.u32 920167782, %v1122
    %v1138 = vshrl.u32 1326507024, %v1123
    %v1139 = vor.u32 %v1137, %v1138
    %vm1140 = vcmp.lt.s32.totalorder %v1121, 1
    %vm1141 = vcmp.lt.s32.totalorder %v1121, 2
    %vm1142 = vcmp.lt.s32.totalorder %v1121, 3
    %vm1143 = vcmp.lt.s32.totalorder %v1121, 4
    %v1144 = vsel %vm1140, %v1124, %v1127
    %v1145 = vsel %vm1143, %v1133, 2102212464
    %v1146 = vsel %vm1142, %v1130, %v1145
    %v1147 = vsel %vm1141, %v1144, %v1146
    %v1148 = vsel %vm1140, %v1127, %v1130
    %v1149 = vsel %vm1143, %v1136, 920167782
    %v1150 = vsel %vm1142, %v1133, %v1149
    %v1151 = vsel %vm1141, %v1148, %v1150
    %v1152 = vsel %vm1140, %v1130, %v1133
    %v1153 = vsel %vm1143, %v1139, 1326507024
    %v1154 = vsel %vm1142, %v1136, %v1153
    %v1155 = vsel %vm1141, %v1152, %v1154
    %v1156 = vshll.u32 %v1116, 8
    %v1157 = vmul.u32.u64.compose %v1156, %v1155
    %v1158 = vextract.low.u32 %v1157
    %v1159 = vextract.high.u32 %v1157
    %v1160 = vmul.u32.u64.compose %v1156, %v1151
    %v1161 = vextract.low.u32 %v1160
    %v1162 = vextract.high.u32 %v1160
    %v1163 = vmul.u32 %v1156, %v1147
    %v1164 = vadd.s32 %v1159, %v1161
    %vm1165 = vc.u32 %v1159, %v1161
    %v1166 = vadd.s32 %v1162, 1
    %v1167 = vsel %vm1165, %v1166, %v1162
    %v1168 = vadd.s32 %v1163, %v1167
    %v1169 = vadd.s32 %v1168, 536870912
    %v1170 = vshrl.u32 %v1169, 30
    %v1171 = vshll.u32 %v1170, 30
    %v1172 = vsub.s32 %v1168, %v1171
    %vm1173 = vcmp.lt.s32.totalorder %v1172, 0
    %v1174 = vsub.s32 0, %v1172
    %v1175 = vsel %vm1173, %v1174, %v1172
    %v1176 = vclz %v1175
    %v1177 = vsub.s32 %v1176, 2
    %vm1178 = vcmp.gt.s32.totalorder 0, %v1177
    %v1179 = vsel %vm1178, 0, %v1177
    %v1180 = vsub.s32 32, %v1179
    %v1181 = vshll.u32 %v1172, %v1179
    %v1182 = vshrl.u32 %v1164, %v1180
    %v1183 = vor.u32 %v1181, %v1182
    %v1184 = vsub.s32 4294967266, %v1179
    %v1185 = vadd.s32 %v1184, 127
    %v1186 = vshll.u32 %v1185, 23
    %v1187 = vor.u32 4788187, %v1186
    %v1188 = vand.u32 2147483647, %v1187
    %v1190 = vcvt.s32.f32 %v1183
    %v1191 = vmul.f32 %v1190, %v1188
    %v1192 = vxor.u32 %v1191, 2147483648
    %v1193 = vsel %vm1110, %v1192, %v1191
    %v1194 = vsub.s32 4, %v1170
    %v1195 = vsel %vm1110, %v1194, %v1170
    %v1196 = vsel %vm1109, %v268, %v1193
    %v1197 = vsel %vm1109, 0, %v1195
    %v1198 = vcosq.f32.pop %v1196
    %v1199 = vsinq.f32.pop %v1196
    %vm1200 = vweird.f32 %v268
    %v1201 = vadd.s32 %v1197, 3
    %v1202 = vand.u32 %v1201, 3
    %vm1203 = vcmp.lt.s32.totalorder %v1202, 2
    %vm1204 = vcmp.eq.s32.totalorder %v1202, 0
    %v1205 = vxor.u32 %v1199, 2147483648
    %v1206 = vsel %vm1204, %v1198, %v1205
    %vm1207 = vcmp.eq.s32.totalorder %v1202, 2
    %v1208 = vxor.u32 %v1198, 2147483648
    %v1209 = vsel %vm1207, %v1208, %v1199
    %v1210 = vsel %vm1203, %v1206, %v1209
    %v1211 = vsel %vm1200, nan, %v1210
    %v1212 = vand.u32 2147483647, %v269
    %vm1213 = vcmp.le.f32.partialorder %v1212, 0.7853982
    %vm1214 = vcmp.lt.s32.totalorder %v269, 0
    %v1215 = vand.u32 %v269, 2139095040
    %v1216 = vshrl.u32 %v1215, 23
    %v1217 = vsub.s32 %v1216, 127
    %v1218 = vand.u32 2147483647, %v269
    %v1219 = vand.u32 %v1218, 8388607
    %v1220 = vor.u32 %v1219, 8388608
    %v1221 = vsub.s32 0, %v1220
    %v1222 = vadd.s32 %v1217, 1
    %vm1223 = vcmp.gt.s32.totalorder %v1222, 0
    %v1224 = vsel %vm1223, %v1222, 0
    %v1225 = vshrl.u32 %v1224, 5
    %v1226 = vand.u32 %v1224, 31
    %v1227 = vsub.s32 32, %v1226
    %v1228 = vshrl.u32 683565275, %v1227
    %v1229 = vshll.u32 683565275, %v1226
    %v1230 = vshrl.u32 2475754826, %v1227
    %v1231 = vor.u32 %v1229, %v1230
    %v1232 = vshll.u32 2475754826, %v1226
    %v1233 = vshrl.u32 2131351028, %v1227
    %v1234 = vor.u32 %v1232, %v1233
    %v1235 = vshll.u32 2131351028, %v1226
    %v1236 = vshrl.u32 2102212464, %v1227
    %v1237 = vor.u32 %v1235, %v1236
    %v1238 = vshll.u32 2102212464, %v1226
    %v1239 = vshrl.u32 920167782, %v1227
    %v1240 = vor.u32 %v1238, %v1239
    %v1241 = vshll.u32 920167782, %v1226
    %v1242 = vshrl.u32 1326507024, %v1227
    %v1243 = vor.u32 %v1241, %v1242
    %vm1244 = vcmp.lt.s32.totalorder %v1225, 1
    %vm1245 = vcmp.lt.s32.totalorder %v1225, 2
    %vm1246 = vcmp.lt.s32.totalorder %v1225, 3
    %vm1247 = vcmp.lt.s32.totalorder %v1225, 4
    %v1248 = vsel %vm1244, %v1228, %v1231
    %v1249 = vsel %vm1247, %v1237, 2102212464
    %v1250 = vsel %vm1246, %v1234, %v1249
    %v1251 = vsel %vm1245, %v1248, %v1250
    %v1252 = vsel %vm1244, %v1231, %v1234
    %v1253 = vsel %vm1247, %v1240, 920167782
    %v1254 = vsel %vm1246, %v1237, %v1253
    %v1255 = vsel %vm1245, %v1252, %v1254
    %v1256 = vsel %vm1244, %v1234, %v1237
    %v1257 = vsel %vm1247, %v1243, 1326507024
    %v1258 = vsel %vm1246, %v1240, %v1257
    %v1259 = vsel %vm1245, %v1256, %v1258
    %v1260 = vshll.u32 %v1220, 8
    %v1261 = vmul.u32.u64.compose %v1260, %v1259
    %v1262 = vextract.low.u32 %v1261
    %v1263 = vextract.high.u32 %v1261
    %v1264 = vmul.u32.u64.compose %v1260, %v1255
    %v1265 = vextract.low.u32 %v1264
    %v1266 = vextract.high.u32 %v1264
    %v1267 = vmul.u32 %v1260, %v1251
    %v1268 = vadd.s32 %v1263, %v1265
    %vm1269 = vc.u32 %v1263, %v1265
    %v1270 = vadd.s32 %v1266, 1
    %v1271 = vsel %vm1269, %v1270, %v1266
    %v1272 = vadd.s32 %v1267, %v1271
    %v1273 = vadd.s32 %v1272, 536870912
    %v1274 = vshrl.u32 %v1273, 30
    %v1275 = vshll.u32 %v1274, 30
    %v1276 = vsub.s32 %v1272, %v1275
    %vm1277 = vcmp.lt.s32.totalorder %v1276, 0
    %v1278 = vsub.s32 0, %v1276
    %v1279 = vsel %vm1277, %v1278, %v1276
    %v1280 = vclz %v1279
    %v1281 = vsub.s32 %v1280, 2
    %vm1282 = vcmp.gt.s32.totalorder 0, %v1281
    %v1283 = vsel %vm1282, 0, %v1281
    %v1284 = vsub.s32 32, %v1283
    %v1285 = vshll.u32 %v1276, %v1283
    %v1286 = vshrl.u32 %v1268, %v1284
    %v1287 = vor.u32 %v1285, %v1286
    %v1288 = vsub.s32 4294967266, %v1283
    %v1289 = vadd.s32 %v1288, 127
    %v1290 = vshll.u32 %v1289, 23
    %v1291 = vor.u32 4788187, %v1290
    %v1292 = vand.u32 2147483647, %v1291
    %v1294 = vcvt.s32.f32 %v1287
    %v1295 = vmul.f32 %v1294, %v1292
    %v1296 = vxor.u32 %v1295, 2147483648
    %v1297 = vsel %vm1214, %v1296, %v1295
    %v1298 = vsub.s32 4, %v1274
    %v1299 = vsel %vm1214, %v1298, %v1274
    %v1300 = vsel %vm1213, %v269, %v1297
    %v1301 = vsel %vm1213, 0, %v1299
    %v1302 = vcosq.f32.pop %v1300
    %v1303 = vsinq.f32.pop %v1300
    %vm1304 = vweird.f32 %v269
    %v1305 = vadd.s32 %v1301, 3
    %v1306 = vand.u32 %v1305, 3
    %vm1307 = vcmp.lt.s32.totalorder %v1306, 2
    %vm1308 = vcmp.eq.s32.totalorder %v1306, 0
    %v1309 = vxor.u32 %v1303, 2147483648
    %v1310 = vsel %vm1308, %v1302, %v1309
    %vm1311 = vcmp.eq.s32.totalorder %v1306, 2
    %v1312 = vxor.u32 %v1302, 2147483648
    %v1313 = vsel %vm1311, %v1312, %v1303
    %v1314 = vsel %vm1307, %v1310, %v1313
    %v1315 = vsel %vm1304, nan, %v1314
    %v1316 = vand.u32 2147483647, %v270
    %vm1317 = vcmp.le.f32.partialorder %v1316, 0.7853982
    %vm1318 = vcmp.lt.s32.totalorder %v270, 0
    %v1319 = vand.u32 %v270, 2139095040
    %v1320 = vshrl.u32 %v1319, 23
    %v1321 = vsub.s32 %v1320, 127
    %v1322 = vand.u32 2147483647, %v270
    %v1323 = vand.u32 %v1322, 8388607
    %v1324 = vor.u32 %v1323, 8388608
    %v1325 = vsub.s32 0, %v1324
    %v1326 = vadd.s32 %v1321, 1
    %vm1327 = vcmp.gt.s32.totalorder %v1326, 0
    %v1328 = vsel %vm1327, %v1326, 0
    %v1329 = vshrl.u32 %v1328, 5
    %v1330 = vand.u32 %v1328, 31
    %v1331 = vsub.s32 32, %v1330
    %v1332 = vshrl.u32 683565275, %v1331
    %v1333 = vshll.u32 683565275, %v1330
    %v1334 = vshrl.u32 2475754826, %v1331
    %v1335 = vor.u32 %v1333, %v1334
    %v1336 = vshll.u32 2475754826, %v1330
    %v1337 = vshrl.u32 2131351028, %v1331
    %v1338 = vor.u32 %v1336, %v1337
    %v1339 = vshll.u32 2131351028, %v1330
    %v1340 = vshrl.u32 2102212464, %v1331
    %v1341 = vor.u32 %v1339, %v1340
    %v1342 = vshll.u32 2102212464, %v1330
    %v1343 = vshrl.u32 920167782, %v1331
    %v1344 = vor.u32 %v1342, %v1343
    %v1345 = vshll.u32 920167782, %v1330
    %v1346 = vshrl.u32 1326507024, %v1331
    %v1347 = vor.u32 %v1345, %v1346
    %vm1348 = vcmp.lt.s32.totalorder %v1329, 1
    %vm1349 = vcmp.lt.s32.totalorder %v1329, 2
    %vm1350 = vcmp.lt.s32.totalorder %v1329, 3
    %vm1351 = vcmp.lt.s32.totalorder %v1329, 4
    %v1352 = vsel %vm1348, %v1332, %v1335
    %v1353 = vsel %vm1351, %v1341, 2102212464
    %v1354 = vsel %vm1350, %v1338, %v1353
    %v1355 = vsel %vm1349, %v1352, %v1354
    %v1356 = vsel %vm1348, %v1335, %v1338
    %v1357 = vsel %vm1351, %v1344, 920167782
    %v1358 = vsel %vm1350, %v1341, %v1357
    %v1359 = vsel %vm1349, %v1356, %v1358
    %v1360 = vsel %vm1348, %v1338, %v1341
    %v1361 = vsel %vm1351, %v1347, 1326507024
    %v1362 = vsel %vm1350, %v1344, %v1361
    %v1363 = vsel %vm1349, %v1360, %v1362
    %v1364 = vshll.u32 %v1324, 8
    %v1365 = vmul.u32.u64.compose %v1364, %v1363
    %v1366 = vextract.low.u32 %v1365
    %v1367 = vextract.high.u32 %v1365
    %v1368 = vmul.u32.u64.compose %v1364, %v1359
    %v1369 = vextract.low.u32 %v1368
    %v1370 = vextract.high.u32 %v1368
    %v1371 = vmul.u32 %v1364, %v1355
    %v1372 = vadd.s32 %v1367, %v1369
    %vm1373 = vc.u32 %v1367, %v1369
    %v1374 = vadd.s32 %v1370, 1
    %v1375 = vsel %vm1373, %v1374, %v1370
    %v1376 = vadd.s32 %v1371, %v1375
    %v1377 = vadd.s32 %v1376, 536870912
    %v1378 = vshrl.u32 %v1377, 30
    %v1379 = vshll.u32 %v1378, 30
    %v1380 = vsub.s32 %v1376, %v1379
    %vm1381 = vcmp.lt.s32.totalorder %v1380, 0
    %v1382 = vsub.s32 0, %v1380
    %v1383 = vsel %vm1381, %v1382, %v1380
    %v1384 = vclz %v1383
    %v1385 = vsub.s32 %v1384, 2
    %vm1386 = vcmp.gt.s32.totalorder 0, %v1385
    %v1387 = vsel %vm1386, 0, %v1385
    %v1388 = vsub.s32 32, %v1387
    %v1389 = vshll.u32 %v1380, %v1387
    %v1390 = vshrl.u32 %v1372, %v1388
    %v1391 = vor.u32 %v1389, %v1390
    %v1392 = vsub.s32 4294967266, %v1387
    %v1393 = vadd.s32 %v1392, 127
    %v1394 = vshll.u32 %v1393, 23
    %v1395 = vor.u32 4788187, %v1394
    %v1396 = vand.u32 2147483647, %v1395
    %v1398 = vcvt.s32.f32 %v1391
    %v1399 = vmul.f32 %v1398, %v1396
    %v1400 = vxor.u32 %v1399, 2147483648
    %v1401 = vsel %vm1318, %v1400, %v1399
    %v1402 = vsub.s32 4, %v1378
    %v1403 = vsel %vm1318, %v1402, %v1378
    %v1404 = vsel %vm1317, %v270, %v1401
    %v1405 = vsel %vm1317, 0, %v1403
    %v1406 = vcosq.f32.pop %v1404
    %v1407 = vsinq.f32.pop %v1404
    %vm1408 = vweird.f32 %v270
    %v1409 = vadd.s32 %v1405, 3
    %v1410 = vand.u32 %v1409, 3
    %vm1411 = vcmp.lt.s32.totalorder %v1410, 2
    %vm1412 = vcmp.eq.s32.totalorder %v1410, 0
    %v1413 = vxor.u32 %v1407, 2147483648
    %v1414 = vsel %vm1412, %v1406, %v1413
    %vm1415 = vcmp.eq.s32.totalorder %v1410, 2
    %v1416 = vxor.u32 %v1406, 2147483648
    %v1417 = vsel %vm1415, %v1416, %v1407
    %v1418 = vsel %vm1411, %v1414, %v1417
    %v1419 = vsel %vm1408, nan, %v1418
    %v1420 = vand.u32 2147483647, %v271
    %vm1421 = vcmp.le.f32.partialorder %v1420, 0.7853982
    %vm1422 = vcmp.lt.s32.totalorder %v271, 0
    %v1423 = vand.u32 %v271, 2139095040
    %v1424 = vshrl.u32 %v1423, 23
    %v1425 = vsub.s32 %v1424, 127
    %v1426 = vand.u32 2147483647, %v271
    %v1427 = vand.u32 %v1426, 8388607
    %v1428 = vor.u32 %v1427, 8388608
    %v1429 = vsub.s32 0, %v1428
    %v1430 = vadd.s32 %v1425, 1
    %vm1431 = vcmp.gt.s32.totalorder %v1430, 0
    %v1432 = vsel %vm1431, %v1430, 0
    %v1433 = vshrl.u32 %v1432, 5
    %v1434 = vand.u32 %v1432, 31
    %v1435 = vsub.s32 32, %v1434
    %v1436 = vshrl.u32 683565275, %v1435
    %v1437 = vshll.u32 683565275, %v1434
    %v1438 = vshrl.u32 2475754826, %v1435
    %v1439 = vor.u32 %v1437, %v1438
    %v1440 = vshll.u32 2475754826, %v1434
    %v1441 = vshrl.u32 2131351028, %v1435
    %v1442 = vor.u32 %v1440, %v1441
    %v1443 = vshll.u32 2131351028, %v1434
    %v1444 = vshrl.u32 2102212464, %v1435
    %v1445 = vor.u32 %v1443, %v1444
    %v1446 = vshll.u32 2102212464, %v1434
    %v1447 = vshrl.u32 920167782, %v1435
    %v1448 = vor.u32 %v1446, %v1447
    %v1449 = vshll.u32 920167782, %v1434
    %v1450 = vshrl.u32 1326507024, %v1435
    %v1451 = vor.u32 %v1449, %v1450
    %vm1452 = vcmp.lt.s32.totalorder %v1433, 1
    %vm1453 = vcmp.lt.s32.totalorder %v1433, 2
    %vm1454 = vcmp.lt.s32.totalorder %v1433, 3
    %vm1455 = vcmp.lt.s32.totalorder %v1433, 4
    %v1456 = vsel %vm1452, %v1436, %v1439
    %v1457 = vsel %vm1455, %v1445, 2102212464
    %v1458 = vsel %vm1454, %v1442, %v1457
    %v1459 = vsel %vm1453, %v1456, %v1458
    %v1460 = vsel %vm1452, %v1439, %v1442
    %v1461 = vsel %vm1455, %v1448, 920167782
    %v1462 = vsel %vm1454, %v1445, %v1461
    %v1463 = vsel %vm1453, %v1460, %v1462
    %v1464 = vsel %vm1452, %v1442, %v1445
    %v1465 = vsel %vm1455, %v1451, 1326507024
    %v1466 = vsel %vm1454, %v1448, %v1465
    %v1467 = vsel %vm1453, %v1464, %v1466
    %v1468 = vshll.u32 %v1428, 8
    %v1469 = vmul.u32.u64.compose %v1468, %v1467
    %v1470 = vextract.low.u32 %v1469
    %v1471 = vextract.high.u32 %v1469
    %v1472 = vmul.u32.u64.compose %v1468, %v1463
    %v1473 = vextract.low.u32 %v1472
    %v1474 = vextract.high.u32 %v1472
    %v1475 = vmul.u32 %v1468, %v1459
    %v1476 = vadd.s32 %v1471, %v1473
    %vm1477 = vc.u32 %v1471, %v1473
    %v1478 = vadd.s32 %v1474, 1
    %v1479 = vsel %vm1477, %v1478, %v1474
    %v1480 = vadd.s32 %v1475, %v1479
    %v1481 = vadd.s32 %v1480, 536870912
    %v1482 = vshrl.u32 %v1481, 30
    %v1483 = vshll.u32 %v1482, 30
    %v1484 = vsub.s32 %v1480, %v1483
    %vm1485 = vcmp.lt.s32.totalorder %v1484, 0
    %v1486 = vsub.s32 0, %v1484
    %v1487 = vsel %vm1485, %v1486, %v1484
    %v1488 = vclz %v1487
    %v1489 = vsub.s32 %v1488, 2
    %vm1490 = vcmp.gt.s32.totalorder 0, %v1489
    %v1491 = vsel %vm1490, 0, %v1489
    %v1492 = vsub.s32 32, %v1491
    %v1493 = vshll.u32 %v1484, %v1491
    %v1494 = vshrl.u32 %v1476, %v1492
    %v1495 = vor.u32 %v1493, %v1494
    %v1496 = vsub.s32 4294967266, %v1491
    %v1497 = vadd.s32 %v1496, 127
    %v1498 = vshll.u32 %v1497, 23
    %v1499 = vor.u32 4788187, %v1498
    %v1500 = vand.u32 2147483647, %v1499
    %v1502 = vcvt.s32.f32 %v1495
    %v1503 = vmul.f32 %v1502, %v1500
    %v1504 = vxor.u32 %v1503, 2147483648
    %v1505 = vsel %vm1422, %v1504, %v1503
    %v1506 = vsub.s32 4, %v1482
    %v1507 = vsel %vm1422, %v1506, %v1482
    %v1508 = vsel %vm1421, %v271, %v1505
    %v1509 = vsel %vm1421, 0, %v1507
    %v1510 = vcosq.f32.pop %v1508
    %v1511 = vsinq.f32.pop %v1508
    %vm1512 = vweird.f32 %v271
    %v1513 = vadd.s32 %v1509, 3
    %v1514 = vand.u32 %v1513, 3
    %vm1515 = vcmp.lt.s32.totalorder %v1514, 2
    %vm1516 = vcmp.eq.s32.totalorder %v1514, 0
    %v1517 = vxor.u32 %v1511, 2147483648
    %v1518 = vsel %vm1516, %v1510, %v1517
    %vm1519 = vcmp.eq.s32.totalorder %v1514, 2
    %v1520 = vxor.u32 %v1510, 2147483648
    %v1521 = vsel %vm1519, %v1520, %v1511
    %v1522 = vsel %vm1515, %v1518, %v1521
    %v1523 = vsel %vm1512, nan, %v1522
    %v1524 = vand.u32 2147483647, %v272
    %vm1525 = vcmp.le.f32.partialorder %v1524, 0.7853982
    %vm1526 = vcmp.lt.s32.totalorder %v272, 0
    %v1527 = vand.u32 %v272, 2139095040
    %v1528 = vshrl.u32 %v1527, 23
    %v1529 = vsub.s32 %v1528, 127
    %v1530 = vand.u32 2147483647, %v272
    %v1531 = vand.u32 %v1530, 8388607
    %v1532 = vor.u32 %v1531, 8388608
    %v1533 = vsub.s32 0, %v1532
    %v1534 = vadd.s32 %v1529, 1
    %vm1535 = vcmp.gt.s32.totalorder %v1534, 0
    %v1536 = vsel %vm1535, %v1534, 0
    %v1537 = vshrl.u32 %v1536, 5
    %v1538 = vand.u32 %v1536, 31
    %v1539 = vsub.s32 32, %v1538
    %v1540 = vshrl.u32 683565275, %v1539
    %v1541 = vshll.u32 683565275, %v1538
    %v1542 = vshrl.u32 2475754826, %v1539
    %v1543 = vor.u32 %v1541, %v1542
    %v1544 = vshll.u32 2475754826, %v1538
    %v1545 = vshrl.u32 2131351028, %v1539
    %v1546 = vor.u32 %v1544, %v1545
    %v1547 = vshll.u32 2131351028, %v1538
    %v1548 = vshrl.u32 2102212464, %v1539
    %v1549 = vor.u32 %v1547, %v1548
    %v1550 = vshll.u32 2102212464, %v1538
    %v1551 = vshrl.u32 920167782, %v1539
    %v1552 = vor.u32 %v1550, %v1551
    %v1553 = vshll.u32 920167782, %v1538
    %v1554 = vshrl.u32 1326507024, %v1539
    %v1555 = vor.u32 %v1553, %v1554
    %vm1556 = vcmp.lt.s32.totalorder %v1537, 1
    %vm1557 = vcmp.lt.s32.totalorder %v1537, 2
    %vm1558 = vcmp.lt.s32.totalorder %v1537, 3
    %vm1559 = vcmp.lt.s32.totalorder %v1537, 4
    %v1560 = vsel %vm1556, %v1540, %v1543
    %v1561 = vsel %vm1559, %v1549, 2102212464
    %v1562 = vsel %vm1558, %v1546, %v1561
    %v1563 = vsel %vm1557, %v1560, %v1562
    %v1564 = vsel %vm1556, %v1543, %v1546
    %v1565 = vsel %vm1559, %v1552, 920167782
    %v1566 = vsel %vm1558, %v1549, %v1565
    %v1567 = vsel %vm1557, %v1564, %v1566
    %v1568 = vsel %vm1556, %v1546, %v1549
    %v1569 = vsel %vm1559, %v1555, 1326507024
    %v1570 = vsel %vm1558, %v1552, %v1569
    %v1571 = vsel %vm1557, %v1568, %v1570
    %v1572 = vshll.u32 %v1532, 8
    %v1573 = vmul.u32.u64.compose %v1572, %v1571
    %v1574 = vextract.low.u32 %v1573
    %v1575 = vextract.high.u32 %v1573
    %v1576 = vmul.u32.u64.compose %v1572, %v1567
    %v1577 = vextract.low.u32 %v1576
    %v1578 = vextract.high.u32 %v1576
    %v1579 = vmul.u32 %v1572, %v1563
    %v1580 = vadd.s32 %v1575, %v1577
    %vm1581 = vc.u32 %v1575, %v1577
    %v1582 = vadd.s32 %v1578, 1
    %v1583 = vsel %vm1581, %v1582, %v1578
    %v1584 = vadd.s32 %v1579, %v1583
    %v1585 = vadd.s32 %v1584, 536870912
    %v1586 = vshrl.u32 %v1585, 30
    %v1587 = vshll.u32 %v1586, 30
    %v1588 = vsub.s32 %v1584, %v1587
    %vm1589 = vcmp.lt.s32.totalorder %v1588, 0
    %v1590 = vsub.s32 0, %v1588
    %v1591 = vsel %vm1589, %v1590, %v1588
    %v1592 = vclz %v1591
    %v1593 = vsub.s32 %v1592, 2
    %vm1594 = vcmp.gt.s32.totalorder 0, %v1593
    %v1595 = vsel %vm1594, 0, %v1593
    %v1596 = vsub.s32 32, %v1595
    %v1597 = vshll.u32 %v1588, %v1595
    %v1598 = vshrl.u32 %v1580, %v1596
    %v1599 = vor.u32 %v1597, %v1598
    %v1600 = vsub.s32 4294967266, %v1595
    %v1601 = vadd.s32 %v1600, 127
    %v1602 = vshll.u32 %v1601, 23
    %v1603 = vor.u32 4788187, %v1602
    %v1604 = vand.u32 2147483647, %v1603
    %v1606 = vcvt.s32.f32 %v1599
    %v1607 = vmul.f32 %v1606, %v1604
    %v1608 = vxor.u32 %v1607, 2147483648
    %v1609 = vsel %vm1526, %v1608, %v1607
    %v1610 = vsub.s32 4, %v1586
    %v1611 = vsel %vm1526, %v1610, %v1586
    %v1612 = vsel %vm1525, %v272, %v1609
    %v1613 = vsel %vm1525, 0, %v1611
    %v1614 = vcosq.f32.pop %v1612
    %v1615 = vsinq.f32.pop %v1612
    %vm1616 = vweird.f32 %v272
    %v1617 = vadd.s32 %v1613, 3
    %v1618 = vand.u32 %v1617, 3
    %vm1619 = vcmp.lt.s32.totalorder %v1618, 2
    %vm1620 = vcmp.eq.s32.totalorder %v1618, 0
    %v1621 = vxor.u32 %v1615, 2147483648
    %v1622 = vsel %vm1620, %v1614, %v1621
    %vm1623 = vcmp.eq.s32.totalorder %v1618, 2
    %v1624 = vxor.u32 %v1614, 2147483648
    %v1625 = vsel %vm1623, %v1624, %v1615
    %v1626 = vsel %vm1619, %v1622, %v1625
    %v1627 = vsel %vm1616, nan, %v1626
    %v1628 = vand.u32 2147483647, %v273
    %vm1629 = vcmp.le.f32.partialorder %v1628, 0.7853982
    %vm1630 = vcmp.lt.s32.totalorder %v273, 0
    %v1631 = vand.u32 %v273, 2139095040
    %v1632 = vshrl.u32 %v1631, 23
    %v1633 = vsub.s32 %v1632, 127
    %v1634 = vand.u32 2147483647, %v273
    %v1635 = vand.u32 %v1634, 8388607
    %v1636 = vor.u32 %v1635, 8388608
    %v1637 = vsub.s32 0, %v1636
    %v1638 = vadd.s32 %v1633, 1
    %vm1639 = vcmp.gt.s32.totalorder %v1638, 0
    %v1640 = vsel %vm1639, %v1638, 0
    %v1641 = vshrl.u32 %v1640, 5
    %v1642 = vand.u32 %v1640, 31
    %v1643 = vsub.s32 32, %v1642
    %v1644 = vshrl.u32 683565275, %v1643
    %v1645 = vshll.u32 683565275, %v1642
    %v1646 = vshrl.u32 2475754826, %v1643
    %v1647 = vor.u32 %v1645, %v1646
    %v1648 = vshll.u32 2475754826, %v1642
    %v1649 = vshrl.u32 2131351028, %v1643
    %v1650 = vor.u32 %v1648, %v1649
    %v1651 = vshll.u32 2131351028, %v1642
    %v1652 = vshrl.u32 2102212464, %v1643
    %v1653 = vor.u32 %v1651, %v1652
    %v1654 = vshll.u32 2102212464, %v1642
    %v1655 = vshrl.u32 920167782, %v1643
    %v1656 = vor.u32 %v1654, %v1655
    %v1657 = vshll.u32 920167782, %v1642
    %v1658 = vshrl.u32 1326507024, %v1643
    %v1659 = vor.u32 %v1657, %v1658
    %vm1660 = vcmp.lt.s32.totalorder %v1641, 1
    %vm1661 = vcmp.lt.s32.totalorder %v1641, 2
    %vm1662 = vcmp.lt.s32.totalorder %v1641, 3
    %vm1663 = vcmp.lt.s32.totalorder %v1641, 4
    %v1664 = vsel %vm1660, %v1644, %v1647
    %v1665 = vsel %vm1663, %v1653, 2102212464
    %v1666 = vsel %vm1662, %v1650, %v1665
    %v1667 = vsel %vm1661, %v1664, %v1666
    %v1668 = vsel %vm1660, %v1647, %v1650
    %v1669 = vsel %vm1663, %v1656, 920167782
    %v1670 = vsel %vm1662, %v1653, %v1669
    %v1671 = vsel %vm1661, %v1668, %v1670
    %v1672 = vsel %vm1660, %v1650, %v1653
    %v1673 = vsel %vm1663, %v1659, 1326507024
    %v1674 = vsel %vm1662, %v1656, %v1673
    %v1675 = vsel %vm1661, %v1672, %v1674
    %v1676 = vshll.u32 %v1636, 8
    %v1677 = vmul.u32.u64.compose %v1676, %v1675
    %v1678 = vextract.low.u32 %v1677
    %v1679 = vextract.high.u32 %v1677
    %v1680 = vmul.u32.u64.compose %v1676, %v1671
    %v1681 = vextract.low.u32 %v1680
    %v1682 = vextract.high.u32 %v1680
    %v1683 = vmul.u32 %v1676, %v1667
    %v1684 = vadd.s32 %v1679, %v1681
    %vm1685 = vc.u32 %v1679, %v1681
    %v1686 = vadd.s32 %v1682, 1
    %v1687 = vsel %vm1685, %v1686, %v1682
    %v1688 = vadd.s32 %v1683, %v1687
    %v1689 = vadd.s32 %v1688, 536870912
    %v1690 = vshrl.u32 %v1689, 30
    %v1691 = vshll.u32 %v1690, 30
    %v1692 = vsub.s32 %v1688, %v1691
    %vm1693 = vcmp.lt.s32.totalorder %v1692, 0
    %v1694 = vsub.s32 0, %v1692
    %v1695 = vsel %vm1693, %v1694, %v1692
    %v1696 = vclz %v1695
    %v1697 = vsub.s32 %v1696, 2
    %vm1698 = vcmp.gt.s32.totalorder 0, %v1697
    %v1699 = vsel %vm1698, 0, %v1697
    %v1700 = vsub.s32 32, %v1699
    %v1701 = vshll.u32 %v1692, %v1699
    %v1702 = vshrl.u32 %v1684, %v1700
    %v1703 = vor.u32 %v1701, %v1702
    %v1704 = vsub.s32 4294967266, %v1699
    %v1705 = vadd.s32 %v1704, 127
    %v1706 = vshll.u32 %v1705, 23
    %v1707 = vor.u32 4788187, %v1706
    %v1708 = vand.u32 2147483647, %v1707
    %v1710 = vcvt.s32.f32 %v1703
    %v1711 = vmul.f32 %v1710, %v1708
    %v1712 = vxor.u32 %v1711, 2147483648
    %v1713 = vsel %vm1630, %v1712, %v1711
    %v1714 = vsub.s32 4, %v1690
    %v1715 = vsel %vm1630, %v1714, %v1690
    %v1716 = vsel %vm1629, %v273, %v1713
    %v1717 = vsel %vm1629, 0, %v1715
    %v1718 = vcosq.f32.pop %v1716
    %v1719 = vsinq.f32.pop %v1716
    %vm1720 = vweird.f32 %v273
    %v1721 = vadd.s32 %v1717, 3
    %v1722 = vand.u32 %v1721, 3
    %vm1723 = vcmp.lt.s32.totalorder %v1722, 2
    %vm1724 = vcmp.eq.s32.totalorder %v1722, 0
    %v1725 = vxor.u32 %v1719, 2147483648
    %v1726 = vsel %vm1724, %v1718, %v1725
    %vm1727 = vcmp.eq.s32.totalorder %v1722, 2
    %v1728 = vxor.u32 %v1718, 2147483648
    %v1729 = vsel %vm1727, %v1728, %v1719
    %v1730 = vsel %vm1723, %v1726, %v1729
    %v1731 = vsel %vm1720, nan, %v1730
    %v1732 = vand.u32 2147483647, %v274
    %vm1733 = vcmp.le.f32.partialorder %v1732, 0.7853982
    %vm1734 = vcmp.lt.s32.totalorder %v274, 0
    %v1735 = vand.u32 %v274, 2139095040
    %v1736 = vshrl.u32 %v1735, 23
    %v1737 = vsub.s32 %v1736, 127
    %v1738 = vand.u32 2147483647, %v274
    %v1739 = vand.u32 %v1738, 8388607
    %v1740 = vor.u32 %v1739, 8388608
    %v1741 = vsub.s32 0, %v1740
    %v1742 = vadd.s32 %v1737, 1
    %vm1743 = vcmp.gt.s32.totalorder %v1742, 0
    %v1744 = vsel %vm1743, %v1742, 0
    %v1745 = vshrl.u32 %v1744, 5
    %v1746 = vand.u32 %v1744, 31
    %v1747 = vsub.s32 32, %v1746
    %v1748 = vshrl.u32 683565275, %v1747
    %v1749 = vshll.u32 683565275, %v1746
    %v1750 = vshrl.u32 2475754826, %v1747
    %v1751 = vor.u32 %v1749, %v1750
    %v1752 = vshll.u32 2475754826, %v1746
    %v1753 = vshrl.u32 2131351028, %v1747
    %v1754 = vor.u32 %v1752, %v1753
    %v1755 = vshll.u32 2131351028, %v1746
    %v1756 = vshrl.u32 2102212464, %v1747
    %v1757 = vor.u32 %v1755, %v1756
    %v1758 = vshll.u32 2102212464, %v1746
    %v1759 = vshrl.u32 920167782, %v1747
    %v1760 = vor.u32 %v1758, %v1759
    %v1761 = vshll.u32 920167782, %v1746
    %v1762 = vshrl.u32 1326507024, %v1747
    %v1763 = vor.u32 %v1761, %v1762
    %vm1764 = vcmp.lt.s32.totalorder %v1745, 1
    %vm1765 = vcmp.lt.s32.totalorder %v1745, 2
    %vm1766 = vcmp.lt.s32.totalorder %v1745, 3
    %vm1767 = vcmp.lt.s32.totalorder %v1745, 4
    %v1768 = vsel %vm1764, %v1748, %v1751
    %v1769 = vsel %vm1767, %v1757, 2102212464
    %v1770 = vsel %vm1766, %v1754, %v1769
    %v1771 = vsel %vm1765, %v1768, %v1770
    %v1772 = vsel %vm1764, %v1751, %v1754
    %v1773 = vsel %vm1767, %v1760, 920167782
    %v1774 = vsel %vm1766, %v1757, %v1773
    %v1775 = vsel %vm1765, %v1772, %v1774
    %v1776 = vsel %vm1764, %v1754, %v1757
    %v1777 = vsel %vm1767, %v1763, 1326507024
    %v1778 = vsel %vm1766, %v1760, %v1777
    %v1779 = vsel %vm1765, %v1776, %v1778
    %v1780 = vshll.u32 %v1740, 8
    %v1781 = vmul.u32.u64.compose %v1780, %v1779
    %v1782 = vextract.low.u32 %v1781
    %v1783 = vextract.high.u32 %v1781
    %v1784 = vmul.u32.u64.compose %v1780, %v1775
    %v1785 = vextract.low.u32 %v1784
    %v1786 = vextract.high.u32 %v1784
    %v1787 = vmul.u32 %v1780, %v1771
    %v1788 = vadd.s32 %v1783, %v1785
    %vm1789 = vc.u32 %v1783, %v1785
    %v1790 = vadd.s32 %v1786, 1
    %v1791 = vsel %vm1789, %v1790, %v1786
    %v1792 = vadd.s32 %v1787, %v1791
    %v1793 = vadd.s32 %v1792, 536870912
    %v1794 = vshrl.u32 %v1793, 30
    %v1795 = vshll.u32 %v1794, 30
    %v1796 = vsub.s32 %v1792, %v1795
    %vm1797 = vcmp.lt.s32.totalorder %v1796, 0
    %v1798 = vsub.s32 0, %v1796
    %v1799 = vsel %vm1797, %v1798, %v1796
    %v1800 = vclz %v1799
    %v1801 = vsub.s32 %v1800, 2
    %vm1802 = vcmp.gt.s32.totalorder 0, %v1801
    %v1803 = vsel %vm1802, 0, %v1801
    %v1804 = vsub.s32 32, %v1803
    %v1805 = vshll.u32 %v1796, %v1803
    %v1806 = vshrl.u32 %v1788, %v1804
    %v1807 = vor.u32 %v1805, %v1806
    %v1808 = vsub.s32 4294967266, %v1803
    %v1809 = vadd.s32 %v1808, 127
    %v1810 = vshll.u32 %v1809, 23
    %v1811 = vor.u32 4788187, %v1810
    %v1812 = vand.u32 2147483647, %v1811
    %v1814 = vcvt.s32.f32 %v1807
    %v1815 = vmul.f32 %v1814, %v1812
    %v1816 = vxor.u32 %v1815, 2147483648
    %v1817 = vsel %vm1734, %v1816, %v1815
    %v1818 = vsub.s32 4, %v1794
    %v1819 = vsel %vm1734, %v1818, %v1794
    %v1820 = vsel %vm1733, %v274, %v1817
    %v1821 = vsel %vm1733, 0, %v1819
    %v1822 = vcosq.f32.pop %v1820
    %v1823 = vsinq.f32.pop %v1820
    %vm1824 = vweird.f32 %v274
    %v1825 = vadd.s32 %v1821, 3
    %v1826 = vand.u32 %v1825, 3
    %vm1827 = vcmp.lt.s32.totalorder %v1826, 2
    %vm1828 = vcmp.eq.s32.totalorder %v1826, 0
    %v1829 = vxor.u32 %v1823, 2147483648
    %v1830 = vsel %vm1828, %v1822, %v1829
    %vm1831 = vcmp.eq.s32.totalorder %v1826, 2
    %v1832 = vxor.u32 %v1822, 2147483648
    %v1833 = vsel %vm1831, %v1832, %v1823
    %v1834 = vsel %vm1827, %v1830, %v1833
    %v1835 = vsel %vm1824, nan, %v1834
    %v1836 = vand.u32 2147483647, %v275
    %vm1837 = vcmp.le.f32.partialorder %v1836, 0.7853982
    %vm1838 = vcmp.lt.s32.totalorder %v275, 0
    %v1839 = vand.u32 %v275, 2139095040
    %v1840 = vshrl.u32 %v1839, 23
    %v1841 = vsub.s32 %v1840, 127
    %v1842 = vand.u32 2147483647, %v275
    %v1843 = vand.u32 %v1842, 8388607
    %v1844 = vor.u32 %v1843, 8388608
    %v1845 = vsub.s32 0, %v1844
    %v1846 = vadd.s32 %v1841, 1
    %vm1847 = vcmp.gt.s32.totalorder %v1846, 0
    %v1848 = vsel %vm1847, %v1846, 0
    %v1849 = vshrl.u32 %v1848, 5
    %v1850 = vand.u32 %v1848, 31
    %v1851 = vsub.s32 32, %v1850
    %v1852 = vshrl.u32 683565275, %v1851
    %v1853 = vshll.u32 683565275, %v1850
    %v1854 = vshrl.u32 2475754826, %v1851
    %v1855 = vor.u32 %v1853, %v1854
    %v1856 = vshll.u32 2475754826, %v1850
    %v1857 = vshrl.u32 2131351028, %v1851
    %v1858 = vor.u32 %v1856, %v1857
    %v1859 = vshll.u32 2131351028, %v1850
    %v1860 = vshrl.u32 2102212464, %v1851
    %v1861 = vor.u32 %v1859, %v1860
    %v1862 = vshll.u32 2102212464, %v1850
    %v1863 = vshrl.u32 920167782, %v1851
    %v1864 = vor.u32 %v1862, %v1863
    %v1865 = vshll.u32 920167782, %v1850
    %v1866 = vshrl.u32 1326507024, %v1851
    %v1867 = vor.u32 %v1865, %v1866
    %vm1868 = vcmp.lt.s32.totalorder %v1849, 1
    %vm1869 = vcmp.lt.s32.totalorder %v1849, 2
    %vm1870 = vcmp.lt.s32.totalorder %v1849, 3
    %vm1871 = vcmp.lt.s32.totalorder %v1849, 4
    %v1872 = vsel %vm1868, %v1852, %v1855
    %v1873 = vsel %vm1871, %v1861, 2102212464
    %v1874 = vsel %vm1870, %v1858, %v1873
    %v1875 = vsel %vm1869, %v1872, %v1874
    %v1876 = vsel %vm1868, %v1855, %v1858
    %v1877 = vsel %vm1871, %v1864, 920167782
    %v1878 = vsel %vm1870, %v1861, %v1877
    %v1879 = vsel %vm1869, %v1876, %v1878
    %v1880 = vsel %vm1868, %v1858, %v1861
    %v1881 = vsel %vm1871, %v1867, 1326507024
    %v1882 = vsel %vm1870, %v1864, %v1881
    %v1883 = vsel %vm1869, %v1880, %v1882
    %v1884 = vshll.u32 %v1844, 8
    %v1885 = vmul.u32.u64.compose %v1884, %v1883
    %v1886 = vextract.low.u32 %v1885
    %v1887 = vextract.high.u32 %v1885
    %v1888 = vmul.u32.u64.compose %v1884, %v1879
    %v1889 = vextract.low.u32 %v1888
    %v1890 = vextract.high.u32 %v1888
    %v1891 = vmul.u32 %v1884, %v1875
    %v1892 = vadd.s32 %v1887, %v1889
    %vm1893 = vc.u32 %v1887, %v1889
    %v1894 = vadd.s32 %v1890, 1
    %v1895 = vsel %vm1893, %v1894, %v1890
    %v1896 = vadd.s32 %v1891, %v1895
    %v1897 = vadd.s32 %v1896, 536870912
    %v1898 = vshrl.u32 %v1897, 30
    %v1899 = vshll.u32 %v1898, 30
    %v1900 = vsub.s32 %v1896, %v1899
    %vm1901 = vcmp.lt.s32.totalorder %v1900, 0
    %v1902 = vsub.s32 0, %v1900
    %v1903 = vsel %vm1901, %v1902, %v1900
    %v1904 = vclz %v1903
    %v1905 = vsub.s32 %v1904, 2
    %vm1906 = vcmp.gt.s32.totalorder 0, %v1905
    %v1907 = vsel %vm1906, 0, %v1905
    %v1908 = vsub.s32 32, %v1907
    %v1909 = vshll.u32 %v1900, %v1907
    %v1910 = vshrl.u32 %v1892, %v1908
    %v1911 = vor.u32 %v1909, %v1910
    %v1912 = vsub.s32 4294967266, %v1907
    %v1913 = vadd.s32 %v1912, 127
    %v1914 = vshll.u32 %v1913, 23
    %v1915 = vor.u32 4788187, %v1914
    %v1916 = vand.u32 2147483647, %v1915
    %v1918 = vcvt.s32.f32 %v1911
    %v1919 = vmul.f32 %v1918, %v1916
    %v1920 = vxor.u32 %v1919, 2147483648
    %v1921 = vsel %vm1838, %v1920, %v1919
    %v1922 = vsub.s32 4, %v1898
    %v1923 = vsel %vm1838, %v1922, %v1898
    %v1924 = vsel %vm1837, %v275, %v1921
    %v1925 = vsel %vm1837, 0, %v1923
    %v1926 = vcosq.f32.pop %v1924
    %v1927 = vsinq.f32.pop %v1924
    %vm1928 = vweird.f32 %v275
    %v1929 = vadd.s32 %v1925, 3
    %v1930 = vand.u32 %v1929, 3
    %vm1931 = vcmp.lt.s32.totalorder %v1930, 2
    %vm1932 = vcmp.eq.s32.totalorder %v1930, 0
    %v1933 = vxor.u32 %v1927, 2147483648
    %v1934 = vsel %vm1932, %v1926, %v1933
    %vm1935 = vcmp.eq.s32.totalorder %v1930, 2
    %v1936 = vxor.u32 %v1926, 2147483648
    %v1937 = vsel %vm1935, %v1936, %v1927
    %v1938 = vsel %vm1931, %v1934, %v1937
    %v1939 = vsel %vm1928, nan, %v1938
    %v1940 = vadd.f32 %v220, %v379
    %v1941 = vadd.f32 %v221, %v483
    %v1942 = vadd.f32 %v222, %v587
    %v1943 = vadd.f32 %v223, %v691
    %v1944 = vadd.f32 %v224, %v795
    %v1945 = vadd.f32 %v225, %v899
    %v1946 = vadd.f32 %v226, %v1003
    %v1947 = vadd.f32 %v227, %v1107
    %v1948 = vadd.f32 %v228, %v1211
    %v1949 = vadd.f32 %v229, %v1315
    %v1950 = vadd.f32 %v230, %v1419
    %v1951 = vadd.f32 %v231, %v1523
    %v1952 = vadd.f32 %v232, %v1627
    %v1953 = vadd.f32 %v233, %v1731
    %v1954 = vadd.f32 %v234, %v1835
    %v1955 = vadd.f32 %v235, %v1939
    %v1956 = vadd.f32 %v51, %v67
    %v1957 = vadd.f32 %v52, %v68
    %v1958 = vadd.f32 %v53, %v69
    %v1959 = vadd.f32 %v54, %v70
    %v1960 = vadd.f32 %v55, %v71
    %v1961 = vadd.f32 %v56, %v72
    %v1962 = vadd.f32 %v57, %v73
    %v1963 = vadd.f32 %v58, %v74
    %v1964 = vadd.f32 %v59, %v75
    %v1965 = vadd.f32 %v60, %v76
    %v1966 = vadd.f32 %v61, %v77
    %v1967 = vadd.f32 %v62, %v78
    %v1968 = vadd.f32 %v63, %v79
    %v1969 = vadd.f32 %v64, %v80
    %v1970 = vadd.f32 %v65, %v81
    %v1971 = vadd.f32 %v66, %v82
    %v1972 = vadd.f32 %v1956, %v1940
    %v1973 = vadd.f32 %v1957, %v1941
    %v1974 = vadd.f32 %v1958, %v1942
    %v1975 = vadd.f32 %v1959, %v1943
    %v1976 = vadd.f32 %v1960, %v1944
    %v1977 = vadd.f32 %v1961, %v1945
    %v1978 = vadd.f32 %v1962, %v1946
    %v1979 = vadd.f32 %v1963, %v1947
    %v1980 = vadd.f32 %v1964, %v1948
    %v1981 = vadd.f32 %v1965, %v1949
    %v1982 = vadd.f32 %v1966, %v1950
    %v1983 = vadd.f32 %v1967, %v1951
    %v1984 = vadd.f32 %v1968, %v1952
    %v1985 = vadd.f32 %v1969, %v1953
    %v1986 = vadd.f32 %v1970, %v1954
    %v1987 = vadd.f32 %v1971, %v1955
    %v1988 = vpack.c.bf16 %v52, %v51
    %v1989 = vpack.c.bf16 %v68, %v67
    %v1990 = vpack.c.bf16 %v84, %v83
    %v1991 = vpack.c.bf16 %v1941, %v1940
    %v1992 = vpack.c.bf16 %v54, %v53
    %v1993 = vpack.c.bf16 %v70, %v69
    %v1994 = vpack.c.bf16 %v86, %v85
    %v1995 = vpack.c.bf16 %v1943, %v1942
    %v1996 = vpack.c.bf16 %v56, %v55
    %v1997 = vpack.c.bf16 %v72, %v71
    %v1998 = vpack.c.bf16 %v88, %v87
    %v1999 = vpack.c.bf16 %v1945, %v1944
    %v2000 = vpack.c.bf16 %v58, %v57
    %v2001 = vpack.c.bf16 %v74, %v73
    %v2002 = vpack.c.bf16 %v90, %v89
    %v2003 = vpack.c.bf16 %v1947, %v1946
    %v2004 = vpack.c.bf16 %v60, %v59
    %v2005 = vpack.c.bf16 %v76, %v75
    %v2006 = vpack.c.bf16 %v92, %v91
    %v2007 = vpack.c.bf16 %v1949, %v1948
    %v2008 = vpack.c.bf16 %v62, %v61
    %v2009 = vpack.c.bf16 %v78, %v77
    %v2010 = vpack.c.bf16 %v94, %v93
    %v2011 = vpack.c.bf16 %v1951, %v1950
    %v2012 = vpack.c.bf16 %v64, %v63
    %v2013 = vpack.c.bf16 %v80, %v79
    %v2014 = vpack.c.bf16 %v96, %v95
    %v2015 = vpack.c.bf16 %v1953, %v1952
    %v2016 = vpack.c.bf16 %v66, %v65
    %v2017 = vpack.c.bf16 %v82, %v81
    %v2018 = vpack.c.bf16 %v98, %v97
    %v2019 = vpack.c.bf16 %v1955, %v1954
    %v2020 = vld [vmem:[%s6] sm:$0xf]
    %v2021 = vld [vmem:[%s6 + $0x4] sm:$0xf]
    %v2022 = vld [vmem:[%s6 + $0x8] sm:$0xf]
    %v2023 = vld [vmem:[%s6 + $0xc] sm:$0xf]
    %v2024 = vld [vmem:[%s6 + $0x10] sm:$0xf]
    %v2025 = vld [vmem:[%s6 + $0x14] sm:$0xf]
    %v2026 = vld [vmem:[%s6 + $0x18] sm:$0xf]
    %v2027 = vld [vmem:[%s6 + $0x1c] sm:$0xf]
    %v2028 = vld [vmem:[%s6 + $0x20] sm:$0xf]
    %v2029 = vld [vmem:[%s6 + $0x24] sm:$0xf]
    %v2030 = vld [vmem:[%s6 + $0x28] sm:$0xf]
    %v2031 = vld [vmem:[%s6 + $0x2c] sm:$0xf]
    %v2032 = vld [vmem:[%s6 + $0x30] sm:$0xf]
    %v2033 = vld [vmem:[%s6 + $0x34] sm:$0xf]
    %v2034 = vld [vmem:[%s6 + $0x38] sm:$0xf]
    %v2035 = vld [vmem:[%s6 + $0x3c] sm:$0xf]
    %v2036 = vld [vmem:[%s6 + $0x40] sm:$0xf]
    %v2037 = vld [vmem:[%s6 + $0x44] sm:$0xf]
    %v2038 = vld [vmem:[%s6 + $0x48] sm:$0xf]
    %v2039 = vld [vmem:[%s6 + $0x4c] sm:$0xf]
    %v2040 = vld [vmem:[%s6 + $0x50] sm:$0xf]
    %v2041 = vld [vmem:[%s6 + $0x54] sm:$0xf]
    %v2042 = vld [vmem:[%s6 + $0x58] sm:$0xf]
    %v2043 = vld [vmem:[%s6 + $0x5c] sm:$0xf]
    %v2044 = vld [vmem:[%s6 + $0x60] sm:$0xf]
    %v2045 = vld [vmem:[%s6 + $0x64] sm:$0xf]
    %v2046 = vld [vmem:[%s6 + $0x68] sm:$0xf]
    %v2047 = vld [vmem:[%s6 + $0x6c] sm:$0xf]
    %v2048 = vld [vmem:[%s6 + $0x70] sm:$0xf]
    %v2049 = vld [vmem:[%s6 + $0x74] sm:$0xf]
    %v2050 = vld [vmem:[%s6 + $0x78] sm:$0xf]
    %v2051 = vld [vmem:[%s6 + $0x7c] sm:$0xf]
    %v2052 = vld [vmem:[%s6 + $0x80] sm:$0xf]
    %v2053 = vld [vmem:[%s6 + $0x84] sm:$0xf]
    %v2054 = vld [vmem:[%s6 + $0x88] sm:$0xf]
    %v2055 = vld [vmem:[%s6 + $0x8c] sm:$0xf]
    %v2056 = vld [vmem:[%s6 + $0x90] sm:$0xf]
    %v2057 = vld [vmem:[%s6 + $0x94] sm:$0xf]
    %v2058 = vld [vmem:[%s6 + $0x98] sm:$0xf]
    %v2059 = vld [vmem:[%s6 + $0x9c] sm:$0xf]
    %v2060 = vld [vmem:[%s6 + $0xa0] sm:$0xf]
    %v2061 = vld [vmem:[%s6 + $0xa4] sm:$0xf]
    %v2062 = vld [vmem:[%s6 + $0xa8] sm:$0xf]
    %v2063 = vld [vmem:[%s6 + $0xac] sm:$0xf]
    %v2064 = vld [vmem:[%s6 + $0xb0] sm:$0xf]
    %v2065 = vld [vmem:[%s6 + $0xb4] sm:$0xf]
    %v2066 = vld [vmem:[%s6 + $0xb8] sm:$0xf]
    %v2067 = vld [vmem:[%s6 + $0xbc] sm:$0xf]
    %v2068 = vld [vmem:[%s6 + $0xc0] sm:$0xf]
    %v2069 = vld [vmem:[%s6 + $0xc4] sm:$0xf]
    %v2070 = vld [vmem:[%s6 + $0xc8] sm:$0xf]
    %v2071 = vld [vmem:[%s6 + $0xcc] sm:$0xf]
    %v2072 = vld [vmem:[%s6 + $0xd0] sm:$0xf]
    %v2073 = vld [vmem:[%s6 + $0xd4] sm:$0xf]
    %v2074 = vld [vmem:[%s6 + $0xd8] sm:$0xf]
    %v2075 = vld [vmem:[%s6 + $0xdc] sm:$0xf]
    %v2076 = vld [vmem:[%s6 + $0xe0] sm:$0xf]
    %v2077 = vld [vmem:[%s6 + $0xe4] sm:$0xf]
    %v2078 = vld [vmem:[%s6 + $0xe8] sm:$0xf]
    %v2079 = vld [vmem:[%s6 + $0xec] sm:$0xf]
    %v2080 = vld [vmem:[%s6 + $0xf0] sm:$0xf]
    %v2081 = vld [vmem:[%s6 + $0xf4] sm:$0xf]
    %v2082 = vld [vmem:[%s6 + $0xf8] sm:$0xf]
    %v2083 = vld [vmem:[%s6 + $0xfc] sm:$0xf]
    %v2084 = vlaneseq
    %v2085 = vshrl.u32 %v2084, 7
    %v2086 = vsub.s32 4, %v2085
    %v2087 = vrot.slane %v115, %v2086
    %v2152 = vunpack.c.l.b16 %v2020
    %v2153 = vunpack.c.l.b16 %v2021
    %v2154 = vunpack.c.l.b16 %v2022
    %v2155 = vunpack.c.l.b16 %v2023
    %v2156 = vunpack.c.l.b16 %v2024
    %v2157 = vunpack.c.l.b16 %v2025
    %v2158 = vunpack.c.l.b16 %v2026
    %v2159 = vunpack.c.l.b16 %v2027
    %v2160 = vunpack.c.l.b16 %v2028
    %v2161 = vunpack.c.l.b16 %v2029
    %v2162 = vunpack.c.l.b16 %v2030
    %v2163 = vunpack.c.l.b16 %v2031
    %v2164 = vunpack.c.l.b16 %v2032
    %v2165 = vunpack.c.l.b16 %v2033
    %v2166 = vunpack.c.l.b16 %v2034
    %v2167 = vunpack.c.l.b16 %v2035
    %v2168 = vunpack.c.l.b16 %v2036
    %v2169 = vunpack.c.l.b16 %v2037
    %v2170 = vunpack.c.l.b16 %v2038
    %v2171 = vunpack.c.l.b16 %v2039
    %v2172 = vunpack.c.l.b16 %v2040
    %v2173 = vunpack.c.l.b16 %v2041
    %v2174 = vunpack.c.l.b16 %v2042
    %v2175 = vunpack.c.l.b16 %v2043
    %v2176 = vunpack.c.l.b16 %v2044
    %v2177 = vunpack.c.l.b16 %v2045
    %v2178 = vunpack.c.l.b16 %v2046
    %v2179 = vunpack.c.l.b16 %v2047
    %v2180 = vunpack.c.l.b16 %v2048
    %v2181 = vunpack.c.l.b16 %v2049
    %v2182 = vunpack.c.l.b16 %v2050
    %v2183 = vunpack.c.l.b16 %v2051
    %v2184 = vunpack.c.l.b16 %v2052
    %v2185 = vunpack.c.l.b16 %v2053
    %v2186 = vunpack.c.l.b16 %v2054
    %v2187 = vunpack.c.l.b16 %v2055
    %v2188 = vunpack.c.l.b16 %v2056
    %v2189 = vunpack.c.l.b16 %v2057
    %v2190 = vunpack.c.l.b16 %v2058
    %v2191 = vunpack.c.l.b16 %v2059
    %v2192 = vunpack.c.l.b16 %v2060
    %v2193 = vunpack.c.l.b16 %v2061
    %v2194 = vunpack.c.l.b16 %v2062
    %v2195 = vunpack.c.l.b16 %v2063
    %v2196 = vunpack.c.l.b16 %v2064
    %v2197 = vunpack.c.l.b16 %v2065
    %v2198 = vunpack.c.l.b16 %v2066
    %v2199 = vunpack.c.l.b16 %v2067
    %v2200 = vunpack.c.l.b16 %v2068
    %v2201 = vunpack.c.l.b16 %v2069
    %v2202 = vunpack.c.l.b16 %v2070
    %v2203 = vunpack.c.l.b16 %v2071
    %v2204 = vunpack.c.l.b16 %v2072
    %v2205 = vunpack.c.l.b16 %v2073
    %v2206 = vunpack.c.l.b16 %v2074
    %v2207 = vunpack.c.l.b16 %v2075
    %v2208 = vunpack.c.l.b16 %v2076
    %v2209 = vunpack.c.l.b16 %v2077
    %v2210 = vunpack.c.l.b16 %v2078
    %v2211 = vunpack.c.l.b16 %v2079
    %v2212 = vunpack.c.l.b16 %v2080
    %v2213 = vunpack.c.l.b16 %v2081
    %v2214 = vunpack.c.l.b16 %v2082
    %v2215 = vunpack.c.l.b16 %v2083
    %v2216 = vpack.c.b16 %v2153, %v2152
    %v2217 = vpack.c.b16 %v2155, %v2154
    %v2218 = vpack.c.b16 %v2157, %v2156
    %v2219 = vpack.c.b16 %v2159, %v2158
    %v2220 = vpack.c.b16 %v2161, %v2160
    %v2221 = vpack.c.b16 %v2163, %v2162
    %v2222 = vpack.c.b16 %v2165, %v2164
    %v2223 = vpack.c.b16 %v2167, %v2166
    %v2224 = vpack.c.b16 %v2169, %v2168
    %v2225 = vpack.c.b16 %v2171, %v2170
    %v2226 = vpack.c.b16 %v2173, %v2172
    %v2227 = vpack.c.b16 %v2175, %v2174
    %v2228 = vpack.c.b16 %v2177, %v2176
    %v2229 = vpack.c.b16 %v2179, %v2178
    %v2230 = vpack.c.b16 %v2181, %v2180
    %v2231 = vpack.c.b16 %v2183, %v2182
    %v2232 = vpack.c.b16 %v2185, %v2184
    %v2233 = vpack.c.b16 %v2187, %v2186
    %v2234 = vpack.c.b16 %v2189, %v2188
    %v2235 = vpack.c.b16 %v2191, %v2190
    %v2236 = vpack.c.b16 %v2193, %v2192
    %v2237 = vpack.c.b16 %v2195, %v2194
    %v2238 = vpack.c.b16 %v2197, %v2196
    %v2239 = vpack.c.b16 %v2199, %v2198
    %v2240 = vpack.c.b16 %v2201, %v2200
    %v2241 = vpack.c.b16 %v2203, %v2202
    %v2242 = vpack.c.b16 %v2205, %v2204
    %v2243 = vpack.c.b16 %v2207, %v2206
    %v2244 = vpack.c.b16 %v2209, %v2208
    %v2245 = vpack.c.b16 %v2211, %v2210
    %v2246 = vpack.c.b16 %v2213, %v2212
    %v2247 = vpack.c.b16 %v2215, %v2214
    %2280 = vmatprep.subr.bf16.mxu0 0
    %2281 = vmatpush1.bf16.msra.mxu0 %v2216
    %2282 = vmatprep.subr.bf16.mxu0 0
    %2283 = vmatpush1.bf16.msra.mxu0 %v2217
    %2284 = vmatprep.subr.bf16.mxu0 0
    %2285 = vmatpush1.bf16.msra.mxu0 %v2218
    %2286 = vmatprep.subr.bf16.mxu0 0
    %2287 = vmatpush1.bf16.msra.mxu0 %v2219
    %2288 = vmatprep.subr.bf16.mxu0 0
    %2289 = vmatpush1.bf16.msra.mxu0 %v2220
    %2290 = vmatprep.subr.bf16.mxu0 0
    %2291 = vmatpush1.bf16.msra.mxu0 %v2221
    %2292 = vmatprep.subr.bf16.mxu0 0
    %2293 = vmatpush1.bf16.msra.mxu0 %v2222
    %2294 = vmatprep.subr.bf16.mxu0 0
    %2295 = vmatpush1.bf16.msra.mxu0 %v2223
    %2296 = vmatprep.subr.bf16.mxu0 0
    %2297 = vmatpush1.bf16.msra.mxu0 %v2224
    %2298 = vmatprep.subr.bf16.mxu0 0
    %2299 = vmatpush1.bf16.msra.mxu0 %v2225
    %2300 = vmatprep.subr.bf16.mxu0 0
    %2301 = vmatpush1.bf16.msra.mxu0 %v2226
    %2302 = vmatprep.subr.bf16.mxu0 0
    %2303 = vmatpush1.bf16.msra.mxu0 %v2227
    %2304 = vmatprep.subr.bf16.mxu0 0
    %2305 = vmatpush1.bf16.msra.mxu0 %v2228
    %2306 = vmatprep.subr.bf16.mxu0 0
    %2307 = vmatpush1.bf16.msra.mxu0 %v2229
    %2308 = vmatprep.subr.bf16.mxu0 0
    %2309 = vmatpush1.bf16.msra.mxu0 %v2230
    %2310 = vmatprep.subr.bf16.mxu0 0
    %2311 = vmatpush1.bf16.msra.mxu0 %v2231
    %2312 = vmatprep.mubr.bf16.mxu0 %v1989
    %2313 = vmatmul.mubr.bf16.gmra.mrb[0].mxu0 %v1988
    %v2314 = vpop.f32.mrb[0].mxu0
    %v2315 = vadd.f32 %v2087, %v2314
    %v2316 = vpop.f32.mrb[0].mxu0
    %v2317 = vpop.f32.mrb[0].mxu0
    %v2318 = vadd.f32 %v2087, %v2317
    %v2319 = vpop.f32.mrb[0].mxu0
    %2320 = vmatprep.mubr.bf16.mxu0 %v1993
    %2321 = vmatmul.mubr.bf16.gmra.mrb[0].mxu0 %v1992
    %v2322 = vpop.f32.mrb[0].mxu0
    %v2323 = vadd.f32 %v2087, %v2322
    %v2324 = vpop.f32.mrb[0].mxu0
    %v2325 = vpop.f32.mrb[0].mxu0
    %v2326 = vadd.f32 %v2087, %v2325
    %v2327 = vpop.f32.mrb[0].mxu0
    %2328 = vmatprep.mubr.bf16.mxu0 %v1997
    %2329 = vmatmul.mubr.bf16.gmra.mrb[0].mxu0 %v1996
    %v2330 = vpop.f32.mrb[0].mxu0
    %v2331 = vadd.f32 %v2087, %v2330
    %v2332 = vpop.f32.mrb[0].mxu0
    %v2333 = vpop.f32.mrb[0].mxu0
    %v2334 = vadd.f32 %v2087, %v2333
    %v2335 = vpop.f32.mrb[0].mxu0
    %2336 = vmatprep.mubr.bf16.mxu0 %v2001
    %2337 = vmatmul.mubr.bf16.gmra.mrb[0].mxu0 %v2000
    %v2338 = vpop.f32.mrb[0].mxu0
    %v2339 = vadd.f32 %v2087, %v2338
    %v2340 = vpop.f32.mrb[0].mxu0
    %v2341 = vpop.f32.mrb[0].mxu0
    %v2342 = vadd.f32 %v2087, %v2341
    %v2343 = vpop.f32.mrb[0].mxu0
    %2344 = vmatprep.mubr.bf16.mxu0 %v2005
    %2345 = vmatmul.mubr.bf16.gmra.mrb[0].mxu0 %v2004
    %v2346 = vpop.f32.mrb[0].mxu0
    %v2347 = vadd.f32 %v2087, %v2346
    %v2348 = vpop.f32.mrb[0].mxu0
    %v2349 = vpop.f32.mrb[0].mxu0
    %v2350 = vadd.f32 %v2087, %v2349
    %v2351 = vpop.f32.mrb[0].mxu0
    %2352 = vmatprep.mubr.bf16.mxu0 %v2009
    %2353 = vmatmul.mubr.bf16.gmra.mrb[0].mxu0 %v2008
    %v2354 = vpop.f32.mrb[0].mxu0
    %v2355 = vadd.f32 %v2087, %v2354
    %v2356 = vpop.f32.mrb[0].mxu0
    %v2357 = vpop.f32.mrb[0].mxu0
    %v2358 = vadd.f32 %v2087, %v2357
    %v2359 = vpop.f32.mrb[0].mxu0
    %2360 = vmatprep.mubr.bf16.mxu0 %v2013
    %2361 = vmatmul.mubr.bf16.gmra.mrb[0].mxu0 %v2012
    %v2362 = vpop.f32.mrb[0].mxu0
    %v2363 = vadd.f32 %v2087, %v2362
    %v2364 = vpop.f32.mrb[0].mxu0
    %v2365 = vpop.f32.mrb[0].mxu0
    %v2366 = vadd.f32 %v2087, %v2365
    %v2367 = vpop.f32.mrb[0].mxu0
    %2368 = vmatprep.mubr.bf16.mxu0 %v2017
    %2369 = vmatmul.mubr.bf16.gmra.mrb[0].mxu0 %v2016
    %v2370 = vpop.f32.mrb[0].mxu0
    %v2371 = vadd.f32 %v2087, %v2370
    %v2372 = vpop.f32.mrb[0].mxu0
    %v2373 = vpop.f32.mrb[0].mxu0
    %v2374 = vadd.f32 %v2087, %v2373
    %v2375 = vpop.f32.mrb[0].mxu0
    %2376 = vdwg.mxu0
    %2377 = vmatprep.subr.bf16.mxu0 0
    %2378 = vmatpush1.bf16.msra.mxu0 %v2232
    %2379 = vmatprep.subr.bf16.mxu0 0
    %2380 = vmatpush1.bf16.msra.mxu0 %v2233
    %2381 = vmatprep.subr.bf16.mxu0 0
    %2382 = vmatpush1.bf16.msra.mxu0 %v2234
    %2383 = vmatprep.subr.bf16.mxu0 0
    %2384 = vmatpush1.bf16.msra.mxu0 %v2235
    %2385 = vmatprep.subr.bf16.mxu0 0
    %2386 = vmatpush1.bf16.msra.mxu0 %v2236
    %2387 = vmatprep.subr.bf16.mxu0 0
    %2388 = vmatpush1.bf16.msra.mxu0 %v2237
    %2389 = vmatprep.subr.bf16.mxu0 0
    %2390 = vmatpush1.bf16.msra.mxu0 %v2238
    %2391 = vmatprep.subr.bf16.mxu0 0
    %2392 = vmatpush1.bf16.msra.mxu0 %v2239
    %2393 = vmatprep.subr.bf16.mxu0 0
    %2394 = vmatpush1.bf16.msra.mxu0 %v2240
    %2395 = vmatprep.subr.bf16.mxu0 0
    %2396 = vmatpush1.bf16.msra.mxu0 %v2241
    %2397 = vmatprep.subr.bf16.mxu0 0
    %2398 = vmatpush1.bf16.msra.mxu0 %v2242
    %2399 = vmatprep.subr.bf16.mxu0 0
    %2400 = vmatpush1.bf16.msra.mxu0 %v2243
    %2401 = vmatprep.subr.bf16.mxu0 0
    %2402 = vmatpush1.bf16.msra.mxu0 %v2244
    %2403 = vmatprep.subr.bf16.mxu0 0
    %2404 = vmatpush1.bf16.msra.mxu0 %v2245
    %2405 = vmatprep.subr.bf16.mxu0 0
    %2406 = vmatpush1.bf16.msra.mxu0 %v2246
    %2407 = vmatprep.subr.bf16.mxu0 0
    %2408 = vmatpush1.bf16.msra.mxu0 %v2247
    %2409 = vmatprep.mubr.bf16.mxu0 %v1991
    %2410 = vmatmul.mubr.bf16.gmra.mrb[0].mxu0 %v1990
    %v2411 = vpop.f32.mrb[0].mxu0
    %v2412 = vadd.f32 %v2315, %v2411
    %v2413 = vpop.f32.mrb[0].mxu0
    %v2414 = vpop.f32.mrb[0].mxu0
    %v2415 = vadd.f32 %v2318, %v2414
    %v2416 = vpop.f32.mrb[0].mxu0
    %2417 = vmatprep.mubr.bf16.mxu0 %v1995
    %2418 = vmatmul.mubr.bf16.gmra.mrb[0].mxu0 %v1994
    %v2419 = vpop.f32.mrb[0].mxu0
    %v2420 = vadd.f32 %v2323, %v2419
    %v2421 = vpop.f32.mrb[0].mxu0
    %v2422 = vpop.f32.mrb[0].mxu0
    %v2423 = vadd.f32 %v2326, %v2422
    %v2424 = vpop.f32.mrb[0].mxu0
    %2425 = vmatprep.mubr.bf16.mxu0 %v1999
    %2426 = vmatmul.mubr.bf16.gmra.mrb[0].mxu0 %v1998
    %v2427 = vpop.f32.mrb[0].mxu0
    %v2428 = vadd.f32 %v2331, %v2427
    %v2429 = vpop.f32.mrb[0].mxu0
    %v2430 = vpop.f32.mrb[0].mxu0
    %v2431 = vadd.f32 %v2334, %v2430
    %v2432 = vpop.f32.mrb[0].mxu0
    %2433 = vmatprep.mubr.bf16.mxu0 %v2003
    %2434 = vmatmul.mubr.bf16.gmra.mrb[0].mxu0 %v2002
    %v2435 = vpop.f32.mrb[0].mxu0
    %v2436 = vadd.f32 %v2339, %v2435
    %v2437 = vpop.f32.mrb[0].mxu0
    %v2438 = vpop.f32.mrb[0].mxu0
    %v2439 = vadd.f32 %v2342, %v2438
    %v2440 = vpop.f32.mrb[0].mxu0
    %2441 = vmatprep.mubr.bf16.mxu0 %v2007
    %2442 = vmatmul.mubr.bf16.gmra.mrb[0].mxu0 %v2006
    %v2443 = vpop.f32.mrb[0].mxu0
    %v2444 = vadd.f32 %v2347, %v2443
    %v2445 = vpop.f32.mrb[0].mxu0
    %v2446 = vpop.f32.mrb[0].mxu0
    %v2447 = vadd.f32 %v2350, %v2446
    %v2448 = vpop.f32.mrb[0].mxu0
    %2449 = vmatprep.mubr.bf16.mxu0 %v2011
    %2450 = vmatmul.mubr.bf16.gmra.mrb[0].mxu0 %v2010
    %v2451 = vpop.f32.mrb[0].mxu0
    %v2452 = vadd.f32 %v2355, %v2451
    %v2453 = vpop.f32.mrb[0].mxu0
    %v2454 = vpop.f32.mrb[0].mxu0
    %v2455 = vadd.f32 %v2358, %v2454
    %v2456 = vpop.f32.mrb[0].mxu0
    %2457 = vmatprep.mubr.bf16.mxu0 %v2015
    %2458 = vmatmul.mubr.bf16.gmra.mrb[0].mxu0 %v2014
    %v2459 = vpop.f32.mrb[0].mxu0
    %v2460 = vadd.f32 %v2363, %v2459
    %v2461 = vpop.f32.mrb[0].mxu0
    %v2462 = vpop.f32.mrb[0].mxu0
    %v2463 = vadd.f32 %v2366, %v2462
    %v2464 = vpop.f32.mrb[0].mxu0
    %2465 = vmatprep.mubr.bf16.mxu0 %v2019
    %2466 = vmatmul.mubr.bf16.gmra.mrb[0].mxu0 %v2018
    %v2467 = vpop.f32.mrb[0].mxu0
    %v2468 = vadd.f32 %v2371, %v2467
    %v2469 = vpop.f32.mrb[0].mxu0
    %v2470 = vpop.f32.mrb[0].mxu0
    %v2471 = vadd.f32 %v2374, %v2470
    %v2472 = vpop.f32.mrb[0].mxu0
    %2473 = vdwg.mxu0
    %v2474 = vmax.f32 %v2412, 0.0
    %v2475 = vmax.f32 %v2415, 0.0
    %v2476 = vmax.f32 %v2420, 0.0
    %v2477 = vmax.f32 %v2423, 0.0
    %v2478 = vmax.f32 %v2428, 0.0
    %v2479 = vmax.f32 %v2431, 0.0
    %v2480 = vmax.f32 %v2436, 0.0
    %v2481 = vmax.f32 %v2439, 0.0
    %v2482 = vmax.f32 %v2444, 0.0
    %v2483 = vmax.f32 %v2447, 0.0
    %v2484 = vmax.f32 %v2452, 0.0
    %v2485 = vmax.f32 %v2455, 0.0
    %v2486 = vmax.f32 %v2460, 0.0
    %v2487 = vmax.f32 %v2463, 0.0
    %v2488 = vmax.f32 %v2468, 0.0
    %v2489 = vmax.f32 %v2471, 0.0
    %v2490 = vlaneseq
    %v2491 = vshrl.u32 %v2490, 7
    %v2492 = vsub.s32 5, %v2491
    %v2493 = vrot.slane %v115, %v2492
    %v2494 = vmul.f32 %v2474, %v2493
    %v2495 = vmul.f32 %v2475, %v2493
    %v2496 = vmul.f32 %v2476, %v2493
    %v2497 = vmul.f32 %v2477, %v2493
    %v2498 = vmul.f32 %v2478, %v2493
    %v2499 = vmul.f32 %v2479, %v2493
    %v2500 = vmul.f32 %v2480, %v2493
    %v2501 = vmul.f32 %v2481, %v2493
    %v2502 = vmul.f32 %v2482, %v2493
    %v2503 = vmul.f32 %v2483, %v2493
    %v2504 = vmul.f32 %v2484, %v2493
    %v2505 = vmul.f32 %v2485, %v2493
    %v2506 = vmul.f32 %v2486, %v2493
    %v2507 = vmul.f32 %v2487, %v2493
    %v2508 = vmul.f32 %v2488, %v2493
    %v2509 = vmul.f32 %v2489, %v2493
    %2510 = vadd.xlane.f32.xlu0 %v2494
    %v2511 = vpop.xlane.xlu0 %2510
    %2512 = vadd.xlane.f32.xlu0 %v2495
    %v2513 = vpop.xlane.xlu0 %2512
    %2514 = vadd.xlane.f32.xlu0 %v2496
    %v2515 = vpop.xlane.xlu0 %2514
    %2516 = vadd.xlane.f32.xlu0 %v2497
    %v2517 = vpop.xlane.xlu0 %2516
    %2518 = vadd.xlane.f32.xlu0 %v2498
    %v2519 = vpop.xlane.xlu0 %2518
    %2520 = vadd.xlane.f32.xlu0 %v2499
    %v2521 = vpop.xlane.xlu0 %2520
    %2522 = vadd.xlane.f32.xlu0 %v2500
    %v2523 = vpop.xlane.xlu0 %2522
    %2524 = vadd.xlane.f32.xlu0 %v2501
    %v2525 = vpop.xlane.xlu0 %2524
    %2526 = vadd.xlane.f32.xlu0 %v2502
    %v2527 = vpop.xlane.xlu0 %2526
    %2528 = vadd.xlane.f32.xlu0 %v2503
    %v2529 = vpop.xlane.xlu0 %2528
    %2530 = vadd.xlane.f32.xlu0 %v2504
    %v2531 = vpop.xlane.xlu0 %2530
    %2532 = vadd.xlane.f32.xlu0 %v2505
    %v2533 = vpop.xlane.xlu0 %2532
    %2534 = vadd.xlane.f32.xlu0 %v2506
    %v2535 = vpop.xlane.xlu0 %2534
    %2536 = vadd.xlane.f32.xlu0 %v2507
    %v2537 = vpop.xlane.xlu0 %2536
    %2538 = vadd.xlane.f32.xlu0 %v2508
    %v2539 = vpop.xlane.xlu0 %2538
    %2540 = vadd.xlane.f32.xlu0 %v2509
    %v2541 = vpop.xlane.xlu0 %2540
    %v2542 = vlaneseq
    %v2543 = vshrl.u32 %v2542, 7
    %v2544 = vsub.s32 7, %v2543
    %v2545 = vrot.slane %v115, %v2544
    %v2546 = vadd.f32 %v2511, %v2545
    %v2547 = vadd.f32 %v2513, %v2545
    %v2548 = vadd.f32 %v2515, %v2545
    %v2549 = vadd.f32 %v2517, %v2545
    %v2550 = vadd.f32 %v2519, %v2545
    %v2551 = vadd.f32 %v2521, %v2545
    %v2552 = vadd.f32 %v2523, %v2545
    %v2553 = vadd.f32 %v2525, %v2545
    %v2554 = vadd.f32 %v2527, %v2545
    %v2555 = vadd.f32 %v2529, %v2545
    %v2556 = vadd.f32 %v2531, %v2545
    %v2557 = vadd.f32 %v2533, %v2545
    %v2558 = vadd.f32 %v2535, %v2545
    %v2559 = vadd.f32 %v2537, %v2545
    %v2560 = vadd.f32 %v2539, %v2545
    %v2561 = vadd.f32 %v2541, %v2545
    %v2562 = vxor.u32 %v2546, 2147483648
    %v2563 = vxor.u32 %v2547, 2147483648
    %v2564 = vxor.u32 %v2548, 2147483648
    %v2565 = vxor.u32 %v2549, 2147483648
    %v2566 = vxor.u32 %v2550, 2147483648
    %v2567 = vxor.u32 %v2551, 2147483648
    %v2568 = vxor.u32 %v2552, 2147483648
    %v2569 = vxor.u32 %v2553, 2147483648
    %v2570 = vxor.u32 %v2554, 2147483648
    %v2571 = vxor.u32 %v2555, 2147483648
    %v2572 = vxor.u32 %v2556, 2147483648
    %v2573 = vxor.u32 %v2557, 2147483648
    %v2574 = vxor.u32 %v2558, 2147483648
    %v2575 = vxor.u32 %v2559, 2147483648
    %v2576 = vxor.u32 %v2560, 2147483648
    %v2577 = vxor.u32 %v2561, 2147483648
    %v2578 = vmul.f32 %v2562, 1.442695
    %v2579 = vpow.pop %v2578
    %v2580 = vmul.f32 %v2563, 1.442695
    %v2581 = vpow.pop %v2580
    %v2582 = vmul.f32 %v2564, 1.442695
    %v2583 = vpow.pop %v2582
    %v2584 = vmul.f32 %v2565, 1.442695
    %v2585 = vpow.pop %v2584
    %v2586 = vmul.f32 %v2566, 1.442695
    %v2587 = vpow.pop %v2586
    %v2588 = vmul.f32 %v2567, 1.442695
    %v2589 = vpow.pop %v2588
    %v2590 = vmul.f32 %v2568, 1.442695
    %v2591 = vpow.pop %v2590
    %v2592 = vmul.f32 %v2569, 1.442695
    %v2593 = vpow.pop %v2592
    %v2594 = vmul.f32 %v2570, 1.442695
    %v2595 = vpow.pop %v2594
    %v2596 = vmul.f32 %v2571, 1.442695
    %v2597 = vpow.pop %v2596
    %v2598 = vmul.f32 %v2572, 1.442695
    %v2599 = vpow.pop %v2598
    %v2600 = vmul.f32 %v2573, 1.442695
    %v2601 = vpow.pop %v2600
    %v2602 = vmul.f32 %v2574, 1.442695
    %v2603 = vpow.pop %v2602
    %v2604 = vmul.f32 %v2575, 1.442695
    %v2605 = vpow.pop %v2604
    %v2606 = vmul.f32 %v2576, 1.442695
    %v2607 = vpow.pop %v2606
    %v2608 = vmul.f32 %v2577, 1.442695
    %v2609 = vpow.pop %v2608
    %v2610 = vadd.f32 %v2579, 1.0
    %v2611 = vadd.f32 %v2581, 1.0
    %v2612 = vadd.f32 %v2583, 1.0
    %v2613 = vadd.f32 %v2585, 1.0
    %v2614 = vadd.f32 %v2587, 1.0
    %v2615 = vadd.f32 %v2589, 1.0
    %v2616 = vadd.f32 %v2591, 1.0
    %v2617 = vadd.f32 %v2593, 1.0
    %v2618 = vadd.f32 %v2595, 1.0
    %v2619 = vadd.f32 %v2597, 1.0
    %v2620 = vadd.f32 %v2599, 1.0
    %v2621 = vadd.f32 %v2601, 1.0
    %v2622 = vadd.f32 %v2603, 1.0
    %v2623 = vadd.f32 %v2605, 1.0
    %v2624 = vadd.f32 %v2607, 1.0
    %v2625 = vadd.f32 %v2609, 1.0
    %v2626 = vrcp.pop %v2610
    %v2627 = vmul.f32 1.0, %v2626
    %v2628 = vrcp.pop %v2611
    %v2629 = vmul.f32 1.0, %v2628
    %v2630 = vrcp.pop %v2612
    %v2631 = vmul.f32 1.0, %v2630
    %v2632 = vrcp.pop %v2613
    %v2633 = vmul.f32 1.0, %v2632
    %v2634 = vrcp.pop %v2614
    %v2635 = vmul.f32 1.0, %v2634
    %v2636 = vrcp.pop %v2615
    %v2637 = vmul.f32 1.0, %v2636
    %v2638 = vrcp.pop %v2616
    %v2639 = vmul.f32 1.0, %v2638
    %v2640 = vrcp.pop %v2617
    %v2641 = vmul.f32 1.0, %v2640
    %v2642 = vrcp.pop %v2618
    %v2643 = vmul.f32 1.0, %v2642
    %v2644 = vrcp.pop %v2619
    %v2645 = vmul.f32 1.0, %v2644
    %v2646 = vrcp.pop %v2620
    %v2647 = vmul.f32 1.0, %v2646
    %v2648 = vrcp.pop %v2621
    %v2649 = vmul.f32 1.0, %v2648
    %v2650 = vrcp.pop %v2622
    %v2651 = vmul.f32 1.0, %v2650
    %v2652 = vrcp.pop %v2623
    %v2653 = vmul.f32 1.0, %v2652
    %v2654 = vrcp.pop %v2624
    %v2655 = vmul.f32 1.0, %v2654
    %v2656 = vrcp.pop %v2625
    %v2657 = vmul.f32 1.0, %v2656
    %2659 = vset.pattern.permute.xlu0 0
    %2660 = vperm.xlu0 %2659, %v2627
    %v2661 = vpop.permute.xlu0 %2660
    %2664 = vset.pattern.permute.xlu0 0
    %2665 = vperm.xlu0 %2664, %v2629
    %v2666 = vpop.permute.xlu0 %2665
    %2669 = vset.pattern.permute.xlu0 0
    %2670 = vperm.xlu0 %2669, %v2631
    %v2671 = vpop.permute.xlu0 %2670
    %2674 = vset.pattern.permute.xlu0 0
    %2675 = vperm.xlu0 %2674, %v2633
    %v2676 = vpop.permute.xlu0 %2675
    %2679 = vset.pattern.permute.xlu0 0
    %2680 = vperm.xlu0 %2679, %v2635
    %v2681 = vpop.permute.xlu0 %2680
    %2684 = vset.pattern.permute.xlu0 0
    %2685 = vperm.xlu0 %2684, %v2637
    %v2686 = vpop.permute.xlu0 %2685
    %2689 = vset.pattern.permute.xlu0 0
    %2690 = vperm.xlu0 %2689, %v2639
    %v2691 = vpop.permute.xlu0 %2690
    %2694 = vset.pattern.permute.xlu0 0
    %2695 = vperm.xlu0 %2694, %v2641
    %v2696 = vpop.permute.xlu0 %2695
    %2699 = vset.pattern.permute.xlu0 0
    %2700 = vperm.xlu0 %2699, %v2643
    %v2701 = vpop.permute.xlu0 %2700
    %2704 = vset.pattern.permute.xlu0 0
    %2705 = vperm.xlu0 %2704, %v2645
    %v2706 = vpop.permute.xlu0 %2705
    %2709 = vset.pattern.permute.xlu0 0
    %2710 = vperm.xlu0 %2709, %v2647
    %v2711 = vpop.permute.xlu0 %2710
    %2714 = vset.pattern.permute.xlu0 0
    %2715 = vperm.xlu0 %2714, %v2649
    %v2716 = vpop.permute.xlu0 %2715
    %2719 = vset.pattern.permute.xlu0 0
    %2720 = vperm.xlu0 %2719, %v2651
    %v2721 = vpop.permute.xlu0 %2720
    %2724 = vset.pattern.permute.xlu0 0
    %2725 = vperm.xlu0 %2724, %v2653
    %v2726 = vpop.permute.xlu0 %2725
    %2729 = vset.pattern.permute.xlu0 0
    %2730 = vperm.xlu0 %2729, %v2655
    %v2731 = vpop.permute.xlu0 %2730
    %2734 = vset.pattern.permute.xlu0 0
    %2735 = vperm.xlu0 %2734, %v2657
    %v2736 = vpop.permute.xlu0 %2735
    %v2738 = vmul.f32 %v2661, %v1972
    %v2739 = vmul.f32 %v2666, %v1973
    %v2740 = vmul.f32 %v2671, %v1974
    %v2741 = vmul.f32 %v2676, %v1975
    %v2742 = vmul.f32 %v2681, %v1976
    %v2743 = vmul.f32 %v2686, %v1977
    %v2744 = vmul.f32 %v2691, %v1978
    %v2745 = vmul.f32 %v2696, %v1979
    %v2746 = vmul.f32 %v2701, %v1980
    %v2747 = vmul.f32 %v2706, %v1981
    %v2748 = vmul.f32 %v2711, %v1982
    %v2749 = vmul.f32 %v2716, %v1983
    %v2750 = vmul.f32 %v2721, %v1984
    %v2751 = vmul.f32 %v2726, %v1985
    %v2752 = vmul.f32 %v2731, %v1986
    %v2753 = vmul.f32 %v2736, %v1987
    %v2754 = vpack.c.bf16 %v2739, %v2738
    %v2755 = vpack.c.bf16 %v2741, %v2740
    %v2756 = vpack.c.bf16 %v2743, %v2742
    %v2757 = vpack.c.bf16 %v2745, %v2744
    %v2758 = vpack.c.bf16 %v2747, %v2746
    %v2759 = vpack.c.bf16 %v2749, %v2748
    %v2760 = vpack.c.bf16 %v2751, %v2750
    %v2761 = vpack.c.bf16 %v2753, %v2752
    %v2762 = vlaneseq
    %v2763 = vshrl.u32 %v2762, 7
    %v2764 = vadd.s32 %v2763, 8
    %v2765 = vld [vmem:[%s4] sm:$0x1]
    %v2766 = vlaneseq
    %v2767 = vshrl.u32 %v2766, 7
    %v2768 = vsub.s32 0, %v2767
    %v2769 = vrot.slane %v2765, %v2768
    %vm2770 = vcmp.eq.s32.totalorder %v2763, %v2769
    %vm2771 = vcmp.eq.s32.totalorder %v2764, %v2769
    %v2772 = vsel %vm2770, 1, 0
    %v2773 = vsel %vm2771, 1, 0
    %v2774 = vcvt.s32.f32 %v2772
    %v2775 = vcvt.s32.f32 %v2773
    %v2776 = vpack.c.bf16 %v2775, %v2774
    %v2777 = vld [vmem:[#allocation2] sm:$0xff]
    %v2778 = vld [vmem:[#allocation2 + $0x8] sm:$0xff]
    %2779 = vmatprep.subr.bf16.mxu0 0
    %2780 = vmatpush1.bf16.msra.mxu0 %v2754
    %2781 = vmatprep.subr.bf16.mxu0 0
    %2782 = vmatpush1.bf16.msra.mxu0 %v2755
    %2783 = vmatprep.subr.bf16.mxu0 0
    %2784 = vmatpush1.bf16.msra.mxu0 %v2756
    %2785 = vmatprep.subr.bf16.mxu0 0
    %2786 = vmatpush1.bf16.msra.mxu0 %v2757
    %2787 = vmatprep.subr.bf16.mxu0 0
    %2788 = vmatpush1.bf16.msra.mxu0 %v2758
    %2789 = vmatprep.subr.bf16.mxu0 0
    %2790 = vmatpush1.bf16.msra.mxu0 %v2759
    %2791 = vmatprep.subr.bf16.mxu0 0
    %2792 = vmatpush1.bf16.msra.mxu0 %v2760
    %2793 = vmatprep.subr.bf16.mxu0 0
    %2794 = vmatpush1.bf16.msra.mxu0 %v2761
    %2795 = vmatprep.subr.bf16.mxu0 0
    %2796 = vmatpush1.bf16.msra.mxu0 0
    %2797 = vmatprep.subr.bf16.mxu0 0
    %2798 = vmatpush1.bf16.msra.mxu0 0
    %2799 = vmatprep.subr.bf16.mxu0 0
    %2800 = vmatpush1.bf16.msra.mxu0 0
    %2801 = vmatprep.subr.bf16.mxu0 0
    %2802 = vmatpush1.bf16.msra.mxu0 0
    %2803 = vmatprep.subr.bf16.mxu0 0
    %2804 = vmatpush1.bf16.msra.mxu0 0
    %2805 = vmatprep.subr.bf16.mxu0 0
    %2806 = vmatpush1.bf16.msra.mxu0 0
    %2807 = vmatprep.subr.bf16.mxu0 0
    %2808 = vmatpush1.bf16.msra.mxu0 0
    %2809 = vmatprep.subr.bf16.mxu0 0
    %2810 = vmatpush1.bf16.msra.mxu0 0
    %2811 = vmatprep.mubr.bf16.mxu0 0
    %2812 = vmatmul.mubr.bf16.gmra.mrb[0].mxu0 %v2776
    %v2813 = vpop.f32.mrb[0].mxu0
    %v2814 = vadd.f32 0.0, %v2813
    %v2815 = vpop.f32.mrb[0].mxu0
    %v2816 = vpop.f32.mrb[0].mxu0
    %v2817 = vadd.f32 0.0, %v2816
    %v2818 = vpop.f32.mrb[0].mxu0
    %2819 = vdwg.mxu0
    %v2820 = vadd.f32 %v2777, %v2814
    %v2821 = vadd.f32 %v2778, %v2817
    %2822 = vst [vmem:[#allocation2] sm:$0xff] %v2820
    %2823 = vst [vmem:[#allocation2 + $0x8] sm:$0xff] %v2821
    // Predicated region
    $region54: #{tpar_forward.2} parent=1 // pred_check
      %p2824 = pneg %p45
    $region55: #{tpar_forward.2} parent=1 // pred_check_branch
      %2826 = sbr.rel (%p2824) target = $region57
    $region56: #{tpar_forward.2} parent=1 // pred_region
      %v2827 = vld [vmem:[#allocation2] sm:$0xff]
      %v2828 = vld [vmem:[#allocation2 + $0x8] sm:$0xff]
      %v2829 = vpack.c.bf16 %v2828, %v2827
      %v2830 = vld [vmem:[%s7] sm:$0xf]
      %v2831 = vld [vmem:[%s7 + $0x4] sm:$0xf]
      %v2832 = vld [vmem:[%s7 + $0x8] sm:$0xf]
      %v2833 = vld [vmem:[%s7 + $0xc] sm:$0xf]
      %v2834 = vld [vmem:[%s7 + $0x10] sm:$0xf]
      %v2835 = vld [vmem:[%s7 + $0x14] sm:$0xf]
      %v2836 = vld [vmem:[%s7 + $0x18] sm:$0xf]
      %v2837 = vld [vmem:[%s7 + $0x1c] sm:$0xf]
      %v2838 = vld [vmem:[%s7 + $0x20] sm:$0xf]
      %v2839 = vld [vmem:[%s7 + $0x24] sm:$0xf]
      %v2840 = vld [vmem:[%s7 + $0x28] sm:$0xf]
      %v2841 = vld [vmem:[%s7 + $0x2c] sm:$0xf]
      %v2842 = vld [vmem:[%s7 + $0x30] sm:$0xf]
      %v2843 = vld [vmem:[%s7 + $0x34] sm:$0xf]
      %v2844 = vld [vmem:[%s7 + $0x38] sm:$0xf]
      %v2845 = vld [vmem:[%s7 + $0x3c] sm:$0xf]
      %v2862 = vunpack.c.l.b16 %v2830
      %v2863 = vunpack.c.l.b16 %v2831
      %v2864 = vunpack.c.l.b16 %v2832
      %v2865 = vunpack.c.l.b16 %v2833
      %v2866 = vunpack.c.l.b16 %v2834
      %v2867 = vunpack.c.l.b16 %v2835
      %v2868 = vunpack.c.l.b16 %v2836
      %v2869 = vunpack.c.l.b16 %v2837
      %v2870 = vunpack.c.l.b16 %v2838
      %v2871 = vunpack.c.l.b16 %v2839
      %v2872 = vunpack.c.l.b16 %v2840
      %v2873 = vunpack.c.l.b16 %v2841
      %v2874 = vunpack.c.l.b16 %v2842
      %v2875 = vunpack.c.l.b16 %v2843
      %v2876 = vunpack.c.l.b16 %v2844
      %v2877 = vunpack.c.l.b16 %v2845
      %v2878 = vpack.c.b16 %v2863, %v2862
      %v2879 = vpack.c.b16 %v2865, %v2864
      %v2880 = vpack.c.b16 %v2867, %v2866
      %v2881 = vpack.c.b16 %v2869, %v2868
      %v2882 = vpack.c.b16 %v2871, %v2870
      %v2883 = vpack.c.b16 %v2873, %v2872
      %v2884 = vpack.c.b16 %v2875, %v2874
      %v2885 = vpack.c.b16 %v2877, %v2876
      %2894 = vmatprep.subr.bf16.mxu0 0
      %2895 = vmatpush1.bf16.msra.mxu0 %v2878
      %2896 = vmatprep.subr.bf16.mxu0 0
      %2897 = vmatpush1.bf16.msra.mxu0 %v2879
      %2898 = vmatprep.subr.bf16.mxu0 0
      %2899 = vmatpush1.bf16.msra.mxu0 %v2880
      %2900 = vmatprep.subr.bf16.mxu0 0
      %2901 = vmatpush1.bf16.msra.mxu0 %v2881
      %2902 = vmatprep.subr.bf16.mxu0 0
      %2903 = vmatpush1.bf16.msra.mxu0 %v2882
      %2904 = vmatprep.subr.bf16.mxu0 0
      %2905 = vmatpush1.bf16.msra.mxu0 %v2883
      %2906 = vmatprep.subr.bf16.mxu0 0
      %2907 = vmatpush1.bf16.msra.mxu0 %v2884
      %2908 = vmatprep.subr.bf16.mxu0 0
      %2909 = vmatpush1.bf16.msra.mxu0 %v2885
      %2910 = vmatprep.subr.bf16.mxu0 0
      %2911 = vmatpush1.bf16.msra.mxu0 0
      %2912 = vmatprep.subr.bf16.mxu0 0
      %2913 = vmatpush1.bf16.msra.mxu0 0
      %2914 = vmatprep.subr.bf16.mxu0 0
      %2915 = vmatpush1.bf16.msra.mxu0 0
      %2916 = vmatprep.subr.bf16.mxu0 0
      %2917 = vmatpush1.bf16.msra.mxu0 0
      %2918 = vmatprep.subr.bf16.mxu0 0
      %2919 = vmatpush1.bf16.msra.mxu0 0
      %2920 = vmatprep.subr.bf16.mxu0 0
      %2921 = vmatpush1.bf16.msra.mxu0 0
      %2922 = vmatprep.subr.bf16.mxu0 0
      %2923 = vmatpush1.bf16.msra.mxu0 0
      %2924 = vmatprep.subr.bf16.mxu0 0
      %2925 = vmatpush1.bf16.msra.mxu0 0
      %2926 = vmatprep.mubr.bf16.mxu0 0
      %2927 = vmatmul.mubr.bf16.gmra.mrb[0].mxu0 %v2829
      %v2928 = vpop.f32.mrb[0].mxu0
      %v2929 = vadd.f32 0.0, %v2928
      %v2930 = vpop.f32.mrb[0].mxu0
      %v2931 = vpop.f32.mrb[0].mxu0
      %v2932 = vadd.f32 0.0, %v2931
      %v2933 = vpop.f32.mrb[0].mxu0
      %2934 = vdwg.mxu0
      %v2935 = vmax.f32 %v2929, 0.0
      %v2936 = vmax.f32 %v2932, 0.0
      %v2937 = vld [vmem:[%s5] sm:$0xff]
      %v2938 = vld [vmem:[%s5 + $0x8] sm:$0xff]
      %v2939 = vld [vmem:[%s10] sm:$0x3f]
      %v2940 = vpack.c.bf16 %v2936, %v2935
      %v2941 = vld [vmem:[%s8] sm:$0xff]
      %v2942 = vld [vmem:[%s8 + $0x8] sm:$0xf]
      %v2943 = vld [vmem:[%s8 + $0xc] sm:$0xff]
      %v2944 = vld [vmem:[%s8 + $0x14] sm:$0xf]
      %v2945 = vld [vmem:[%s8 + $0x18] sm:$0xff]
      %v2946 = vld [vmem:[%s8 + $0x20] sm:$0xf]
      %v2947 = vld [vmem:[%s8 + $0x24] sm:$0xff]
      %v2948 = vld [vmem:[%s8 + $0x2c] sm:$0xf]
      %v2949 = vld [vmem:[%s8 + $0x30] sm:$0xff]
      %v2950 = vld [vmem:[%s8 + $0x38] sm:$0xf]
      %v2951 = vld [vmem:[%s8 + $0x3c] sm:$0xff]
      %v2952 = vld [vmem:[%s8 + $0x44] sm:$0xf]
      %v2953 = vld [vmem:[%s8 + $0x48] sm:$0xff]
      %v2954 = vld [vmem:[%s8 + $0x50] sm:$0xf]
      %v2955 = vld [vmem:[%s8 + $0x54] sm:$0xff]
      %v2956 = vld [vmem:[%s8 + $0x5c] sm:$0xf]
      %v2957 = vld [vmem:[%s8 + $0x60] sm:$0xff]
      %v2958 = vld [vmem:[%s8 + $0x68] sm:$0xf]
      %v2959 = vld [vmem:[%s8 + $0x6c] sm:$0xff]
      %v2960 = vld [vmem:[%s8 + $0x74] sm:$0xf]
      %v2961 = vld [vmem:[%s8 + $0x78] sm:$0xff]
      %v2962 = vld [vmem:[%s8 + $0x80] sm:$0xf]
      %v2963 = vld [vmem:[%s8 + $0x84] sm:$0xff]
      %v2964 = vld [vmem:[%s8 + $0x8c] sm:$0xf]
      %v2965 = vld [vmem:[%s8 + $0x90] sm:$0xff]
      %v2966 = vld [vmem:[%s8 + $0x98] sm:$0xf]
      %v2967 = vld [vmem:[%s8 + $0x9c] sm:$0xff]
      %v2968 = vld [vmem:[%s8 + $0xa4] sm:$0xf]
      %v2969 = vld [vmem:[%s8 + $0xa8] sm:$0xff]
      %v2970 = vld [vmem:[%s8 + $0xb0] sm:$0xf]
      %v2971 = vld [vmem:[%s8 + $0xb4] sm:$0xff]
      %v2972 = vld [vmem:[%s8 + $0xbc] sm:$0xf]
      %v2974 = vlaneseq
      %v2975 = vshrl.u32 %v2974, 7
      %v2976 = vsub.s32 0, %v2975
      %v2977 = vrot.slane %v2939, %v2976
      %v2978 = vlaneseq
      %v2979 = vshrl.u32 %v2978, 7
      %v2980 = vsub.s32 2, %v2979
      %v2981 = vrot.slane %v2939, %v2980
      %v2982 = vlaneseq
      %v2983 = vshrl.u32 %v2982, 7
      %v2984 = vsub.s32 4, %v2983
      %v2985 = vrot.slane %v2939, %v2984
      %v2989 = vlaneseq
      %v2990 = vshrl.u32 %v2989, 7
      %v2991 = vsub.s32 0, %v2990
      %v2992 = vrot.slane %v2977, %v2991
      %v2993 = vlaneseq
      %v2994 = vshrl.u32 %v2993, 7
      %v2995 = vsub.s32 0, %v2994
      %v2996 = vrot.slane %v2981, %v2995
      %v2997 = vlaneseq
      %v2998 = vshrl.u32 %v2997, 7
      %v2999 = vsub.s32 0, %v2998
      %v3000 = vrot.slane %v2985, %v2999
      %v3033 = vunpack.c.l.b16 %v2941
      %v3034 = vunpack.c.h.b16 %v2941
      %v3035 = vunpack.c.l.b16 %v2942
      %v3036 = vunpack.c.l.b16 %v2943
      %v3037 = vunpack.c.h.b16 %v2943
      %v3038 = vunpack.c.l.b16 %v2944
      %v3039 = vunpack.c.l.b16 %v2945
      %v3040 = vunpack.c.h.b16 %v2945
      %v3041 = vunpack.c.l.b16 %v2946
      %v3042 = vunpack.c.l.b16 %v2947
      %v3043 = vunpack.c.h.b16 %v2947
      %v3044 = vunpack.c.l.b16 %v2948
      %v3045 = vunpack.c.l.b16 %v2949
      %v3046 = vunpack.c.h.b16 %v2949
      %v3047 = vunpack.c.l.b16 %v2950
      %v3048 = vunpack.c.l.b16 %v2951
      %v3049 = vunpack.c.h.b16 %v2951
      %v3050 = vunpack.c.l.b16 %v2952
      %v3051 = vunpack.c.l.b16 %v2953
      %v3052 = vunpack.c.h.b16 %v2953
      %v3053 = vunpack.c.l.b16 %v2954
      %v3054 = vunpack.c.l.b16 %v2955
      %v3055 = vunpack.c.h.b16 %v2955
      %v3056 = vunpack.c.l.b16 %v2956
      %v3057 = vunpack.c.l.b16 %v2957
      %v3058 = vunpack.c.h.b16 %v2957
      %v3059 = vunpack.c.l.b16 %v2958
      %v3060 = vunpack.c.l.b16 %v2959
      %v3061 = vunpack.c.h.b16 %v2959
      %v3062 = vunpack.c.l.b16 %v2960
      %v3063 = vunpack.c.l.b16 %v2961
      %v3064 = vunpack.c.h.b16 %v2961
      %v3065 = vunpack.c.l.b16 %v2962
      %v3066 = vunpack.c.l.b16 %v2963
      %v3067 = vunpack.c.h.b16 %v2963
      %v3068 = vunpack.c.l.b16 %v2964
      %v3069 = vunpack.c.l.b16 %v2965
      %v3070 = vunpack.c.h.b16 %v2965
      %v3071 = vunpack.c.l.b16 %v2966
      %v3072 = vunpack.c.l.b16 %v2967
      %v3073 = vunpack.c.h.b16 %v2967
      %v3074 = vunpack.c.l.b16 %v2968
      %v3075 = vunpack.c.l.b16 %v2969
      %v3076 = vunpack.c.h.b16 %v2969
      %v3077 = vunpack.c.l.b16 %v2970
      %v3078 = vunpack.c.l.b16 %v2971
      %v3079 = vunpack.c.h.b16 %v2971
      %v3080 = vunpack.c.l.b16 %v2972
      %v3081 = vpack.c.b16 %v3036, %v3033
      %v3082 = vpack.c.b16 %v3037, %v3034
      %v3083 = vpack.c.b16 %v3038, %v3035
      %v3084 = vpack.c.b16 %v3042, %v3039
      %v3085 = vpack.c.b16 %v3043, %v3040
      %v3086 = vpack.c.b16 %v3044, %v3041
      %v3087 = vpack.c.b16 %v3048, %v3045
      %v3088 = vpack.c.b16 %v3049, %v3046
      %v3089 = vpack.c.b16 %v3050, %v3047
      %v3090 = vpack.c.b16 %v3054, %v3051
      %v3091 = vpack.c.b16 %v3055, %v3052
      %v3092 = vpack.c.b16 %v3056, %v3053
      %v3093 = vpack.c.b16 %v3060, %v3057
      %v3094 = vpack.c.b16 %v3061, %v3058
      %v3095 = vpack.c.b16 %v3062, %v3059
      %v3096 = vpack.c.b16 %v3066, %v3063
      %v3097 = vpack.c.b16 %v3067, %v3064
      %v3098 = vpack.c.b16 %v3068, %v3065
      %v3099 = vpack.c.b16 %v3072, %v3069
      %v3100 = vpack.c.b16 %v3073, %v3070
      %v3101 = vpack.c.b16 %v3074, %v3071
      %v3102 = vpack.c.b16 %v3078, %v3075
      %v3103 = vpack.c.b16 %v3079, %v3076
      %v3104 = vpack.c.b16 %v3080, %v3077
      %3129 = vmatprep.subr.bf16.mxu0 %v3082
      %3130 = vmatpush1.bf16.msra.mxu0 %v3081
      %3131 = vmatprep.subr.bf16.mxu0 %v3085
      %3132 = vmatpush1.bf16.msra.mxu0 %v3084
      %3133 = vmatprep.subr.bf16.mxu0 %v3088
      %3134 = vmatpush1.bf16.msra.mxu0 %v3087
      %3135 = vmatprep.subr.bf16.mxu0 %v3091
      %3136 = vmatpush1.bf16.msra.mxu0 %v3090
      %3137 = vmatprep.subr.bf16.mxu0 %v3094
      %3138 = vmatpush1.bf16.msra.mxu0 %v3093
      %3139 = vmatprep.subr.bf16.mxu0 %v3097
      %3140 = vmatpush1.bf16.msra.mxu0 %v3096
      %3141 = vmatprep.subr.bf16.mxu0 %v3100
      %3142 = vmatpush1.bf16.msra.mxu0 %v3099
      %3143 = vmatprep.subr.bf16.mxu0 %v3103
      %3144 = vmatpush1.bf16.msra.mxu0 %v3102
      %3145 = vmatprep.subr.bf16.mxu0 0
      %3146 = vmatpush1.bf16.msra.mxu0 0
      %3147 = vmatprep.subr.bf16.mxu0 0
      %3148 = vmatpush1.bf16.msra.mxu0 0
      %3149 = vmatprep.subr.bf16.mxu0 0
      %3150 = vmatpush1.bf16.msra.mxu0 0
      %3151 = vmatprep.subr.bf16.mxu0 0
      %3152 = vmatpush1.bf16.msra.mxu0 0
      %3153 = vmatprep.subr.bf16.mxu0 0
      %3154 = vmatpush1.bf16.msra.mxu0 0
      %3155 = vmatprep.subr.bf16.mxu0 0
      %3156 = vmatpush1.bf16.msra.mxu0 0
      %3157 = vmatprep.subr.bf16.mxu0 0
      %3158 = vmatpush1.bf16.msra.mxu0 0
      %3159 = vmatprep.subr.bf16.mxu0 0
      %3160 = vmatpush1.bf16.msra.mxu0 0
      %3161 = vmatprep.mubr.bf16.mxu0 0
      %3162 = vmatmul.mubr.bf16.gmra.mrb[0].mxu0 %v2940
      %v3163 = vpop.f32.mrb[0].mxu0
      %v3164 = vadd.f32 %v2992, %v3163
      %v3165 = vpop.f32.mrb[0].mxu0
      %v3166 = vadd.f32 %v2996, %v3165
      %v3167 = vpop.f32.mrb[0].mxu0
      %v3168 = vadd.f32 %v2992, %v3167
      %v3169 = vpop.f32.mrb[0].mxu0
      %v3170 = vadd.f32 %v2996, %v3169
      %3171 = vdwg.mxu0
      %3172 = vmatprep.subr.bf16.mxu0 0
      %3173 = vmatpush1.bf16.msra.mxu0 %v3083
      %3174 = vmatprep.subr.bf16.mxu0 0
      %3175 = vmatpush1.bf16.msra.mxu0 %v3086
      %3176 = vmatprep.subr.bf16.mxu0 0
      %3177 = vmatpush1.bf16.msra.mxu0 %v3089
      %3178 = vmatprep.subr.bf16.mxu0 0
      %3179 = vmatpush1.bf16.msra.mxu0 %v3092
      %3180 = vmatprep.subr.bf16.mxu0 0
      %3181 = vmatpush1.bf16.msra.mxu0 %v3095
      %3182 = vmatprep.subr.bf16.mxu0 0
      %3183 = vmatpush1.bf16.msra.mxu0 %v3098
      %3184 = vmatprep.subr.bf16.mxu0 0
      %3185 = vmatpush1.bf16.msra.mxu0 %v3101
      %3186 = vmatprep.subr.bf16.mxu0 0
      %3187 = vmatpush1.bf16.msra.mxu0 %v3104
      %3188 = vmatprep.subr.bf16.mxu0 0
      %3189 = vmatpush1.bf16.msra.mxu0 0
      %3190 = vmatprep.subr.bf16.mxu0 0
      %3191 = vmatpush1.bf16.msra.mxu0 0
      %3192 = vmatprep.subr.bf16.mxu0 0
      %3193 = vmatpush1.bf16.msra.mxu0 0
      %3194 = vmatprep.subr.bf16.mxu0 0
      %3195 = vmatpush1.bf16.msra.mxu0 0
      %3196 = vmatprep.subr.bf16.mxu0 0
      %3197 = vmatpush1.bf16.msra.mxu0 0
      %3198 = vmatprep.subr.bf16.mxu0 0
      %3199 = vmatpush1.bf16.msra.mxu0 0
      %3200 = vmatprep.subr.bf16.mxu0 0
      %3201 = vmatpush1.bf16.msra.mxu0 0
      %3202 = vmatprep.subr.bf16.mxu0 0
      %3203 = vmatpush1.bf16.msra.mxu0 0
      %3204 = vmatprep.mubr.bf16.mxu0 0
      %3205 = vmatmul.mubr.bf16.gmra.mrb[0].mxu0 %v2940
      %v3206 = vpop.f32.mrb[0].mxu0
      %v3207 = vadd.f32 %v3000, %v3206
      %v3208 = vpop.f32.mrb[0].mxu0
      %v3209 = vpop.f32.mrb[0].mxu0
      %v3210 = vadd.f32 %v3000, %v3209
      %v3211 = vpop.f32.mrb[0].mxu0
      %3212 = vdwg.mxu0
      %v3213 = vpack.c.bf16 %v2938, %v2937
      %v3214 = vld [vmem:[%s9] sm:$0xff]
      %v3215 = vld [vmem:[%s9 + $0x8] sm:$0xf]
      %v3216 = vld [vmem:[%s9 + $0xc] sm:$0xff]
      %v3217 = vld [vmem:[%s9 + $0x14] sm:$0xf]
      %v3218 = vld [vmem:[%s9 + $0x18] sm:$0xff]
      %v3219 = vld [vmem:[%s9 + $0x20] sm:$0xf]
      %v3220 = vld [vmem:[%s9 + $0x24] sm:$0xff]
      %v3221 = vld [vmem:[%s9 + $0x2c] sm:$0xf]
      %v3222 = vld [vmem:[%s9 + $0x30] sm:$0xff]
      %v3223 = vld [vmem:[%s9 + $0x38] sm:$0xf]
      %v3224 = vld [vmem:[%s9 + $0x3c] sm:$0xff]
      %v3225 = vld [vmem:[%s9 + $0x44] sm:$0xf]
      %v3226 = vld [vmem:[%s9 + $0x48] sm:$0xff]
      %v3227 = vld [vmem:[%s9 + $0x50] sm:$0xf]
      %v3228 = vld [vmem:[%s9 + $0x54] sm:$0xff]
      %v3229 = vld [vmem:[%s9 + $0x5c] sm:$0xf]
      %v3230 = vld [vmem:[%s9 + $0x60] sm:$0xff]
      %v3231 = vld [vmem:[%s9 + $0x68] sm:$0xf]
      %v3232 = vld [vmem:[%s9 + $0x6c] sm:$0xff]
      %v3233 = vld [vmem:[%s9 + $0x74] sm:$0xf]
      %v3234 = vld [vmem:[%s9 + $0x78] sm:$0xff]
      %v3235 = vld [vmem:[%s9 + $0x80] sm:$0xf]
      %v3236 = vld [vmem:[%s9 + $0x84] sm:$0xff]
      %v3237 = vld [vmem:[%s9 + $0x8c] sm:$0xf]
      %v3238 = vld [vmem:[%s9 + $0x90] sm:$0xff]
      %v3239 = vld [vmem:[%s9 + $0x98] sm:$0xf]
      %v3240 = vld [vmem:[%s9 + $0x9c] sm:$0xff]
      %v3241 = vld [vmem:[%s9 + $0xa4] sm:$0xf]
      %v3242 = vld [vmem:[%s9 + $0xa8] sm:$0xff]
      %v3243 = vld [vmem:[%s9 + $0xb0] sm:$0xf]
      %v3244 = vld [vmem:[%s9 + $0xb4] sm:$0xff]
      %v3245 = vld [vmem:[%s9 + $0xbc] sm:$0xf]
      %v3246 = vlaneseq
      %v3247 = vshrl.u32 %v3246, 7
      %v3248 = vsub.s32 1, %v3247
      %v3249 = vrot.slane %v2939, %v3248
      %v3250 = vlaneseq
      %v3251 = vshrl.u32 %v3250, 7
      %v3252 = vsub.s32 3, %v3251
      %v3253 = vrot.slane %v2939, %v3252
      %v3254 = vlaneseq
      %v3255 = vshrl.u32 %v3254, 7
      %v3256 = vsub.s32 5, %v3255
      %v3257 = vrot.slane %v2939, %v3256
      %v3261 = vlaneseq
      %v3262 = vshrl.u32 %v3261, 7
      %v3263 = vsub.s32 1, %v3262
      %v3264 = vrot.slane %v3249, %v3263
      %v3265 = vlaneseq
      %v3266 = vshrl.u32 %v3265, 7
      %v3267 = vsub.s32 1, %v3266
      %v3268 = vrot.slane %v3253, %v3267
      %v3269 = vlaneseq
      %v3270 = vshrl.u32 %v3269, 7
      %v3271 = vsub.s32 1, %v3270
      %v3272 = vrot.slane %v3257, %v3271
      %v3305 = vunpack.c.l.b16 %v3214
      %v3306 = vunpack.c.h.b16 %v3214
      %v3307 = vunpack.c.l.b16 %v3215
      %v3308 = vunpack.c.l.b16 %v3216
      %v3309 = vunpack.c.h.b16 %v3216
      %v3310 = vunpack.c.l.b16 %v3217
      %v3311 = vunpack.c.l.b16 %v3218
      %v3312 = vunpack.c.h.b16 %v3218
      %v3313 = vunpack.c.l.b16 %v3219
      %v3314 = vunpack.c.l.b16 %v3220
      %v3315 = vunpack.c.h.b16 %v3220
      %v3316 = vunpack.c.l.b16 %v3221
      %v3317 = vunpack.c.l.b16 %v3222
      %v3318 = vunpack.c.h.b16 %v3222
      %v3319 = vunpack.c.l.b16 %v3223
      %v3320 = vunpack.c.l.b16 %v3224
      %v3321 = vunpack.c.h.b16 %v3224
      %v3322 = vunpack.c.l.b16 %v3225
      %v3323 = vunpack.c.l.b16 %v3226
      %v3324 = vunpack.c.h.b16 %v3226
      %v3325 = vunpack.c.l.b16 %v3227
      %v3326 = vunpack.c.l.b16 %v3228
      %v3327 = vunpack.c.h.b16 %v3228
      %v3328 = vunpack.c.l.b16 %v3229
      %v3329 = vunpack.c.l.b16 %v3230
      %v3330 = vunpack.c.h.b16 %v3230
      %v3331 = vunpack.c.l.b16 %v3231
      %v3332 = vunpack.c.l.b16 %v3232
      %v3333 = vunpack.c.h.b16 %v3232
      %v3334 = vunpack.c.l.b16 %v3233
      %v3335 = vunpack.c.l.b16 %v3234
      %v3336 = vunpack.c.h.b16 %v3234
      %v3337 = vunpack.c.l.b16 %v3235
      %v3338 = vunpack.c.l.b16 %v3236
      %v3339 = vunpack.c.h.b16 %v3236
      %v3340 = vunpack.c.l.b16 %v3237
      %v3341 = vunpack.c.l.b16 %v3238
      %v3342 = vunpack.c.h.b16 %v3238
      %v3343 = vunpack.c.l.b16 %v3239
      %v3344 = vunpack.c.l.b16 %v3240
      %v3345 = vunpack.c.h.b16 %v3240
      %v3346 = vunpack.c.l.b16 %v3241
      %v3347 = vunpack.c.l.b16 %v3242
      %v3348 = vunpack.c.h.b16 %v3242
      %v3349 = vunpack.c.l.b16 %v3243
      %v3350 = vunpack.c.l.b16 %v3244
      %v3351 = vunpack.c.h.b16 %v3244
      %v3352 = vunpack.c.l.b16 %v3245
      %v3353 = vpack.c.b16 %v3308, %v3305
      %v3354 = vpack.c.b16 %v3309, %v3306
      %v3355 = vpack.c.b16 %v3310, %v3307
      %v3356 = vpack.c.b16 %v3314, %v3311
      %v3357 = vpack.c.b16 %v3315, %v3312
      %v3358 = vpack.c.b16 %v3316, %v3313
      %v3359 = vpack.c.b16 %v3320, %v3317
      %v3360 = vpack.c.b16 %v3321, %v3318
      %v3361 = vpack.c.b16 %v3322, %v3319
      %v3362 = vpack.c.b16 %v3326, %v3323
      %v3363 = vpack.c.b16 %v3327, %v3324
      %v3364 = vpack.c.b16 %v3328, %v3325
      %v3365 = vpack.c.b16 %v3332, %v3329
      %v3366 = vpack.c.b16 %v3333, %v3330
      %v3367 = vpack.c.b16 %v3334, %v3331
      %v3368 = vpack.c.b16 %v3338, %v3335
      %v3369 = vpack.c.b16 %v3339, %v3336
      %v3370 = vpack.c.b16 %v3340, %v3337
      %v3371 = vpack.c.b16 %v3344, %v3341
      %v3372 = vpack.c.b16 %v3345, %v3342
      %v3373 = vpack.c.b16 %v3346, %v3343
      %v3374 = vpack.c.b16 %v3350, %v3347
      %v3375 = vpack.c.b16 %v3351, %v3348
      %v3376 = vpack.c.b16 %v3352, %v3349
      %3401 = vmatprep.subr.bf16.mxu0 %v3354
      %3402 = vmatpush1.bf16.msra.mxu0 %v3353
      %3403 = vmatprep.subr.bf16.mxu0 %v3357
      %3404 = vmatpush1.bf16.msra.mxu0 %v3356
      %3405 = vmatprep.subr.bf16.mxu0 %v3360
      %3406 = vmatpush1.bf16.msra.mxu0 %v3359
      %3407 = vmatprep.subr.bf16.mxu0 %v3363
      %3408 = vmatpush1.bf16.msra.mxu0 %v3362
      %3409 = vmatprep.subr.bf16.mxu0 %v3366
      %3410 = vmatpush1.bf16.msra.mxu0 %v3365
      %3411 = vmatprep.subr.bf16.mxu0 %v3369
      %3412 = vmatpush1.bf16.msra.mxu0 %v3368
      %3413 = vmatprep.subr.bf16.mxu0 %v3372
      %3414 = vmatpush1.bf16.msra.mxu0 %v3371
      %3415 = vmatprep.subr.bf16.mxu0 %v3375
      %3416 = vmatpush1.bf16.msra.mxu0 %v3374
      %3417 = vmatprep.subr.bf16.mxu0 0
      %3418 = vmatpush1.bf16.msra.mxu0 0
      %3419 = vmatprep.subr.bf16.mxu0 0
      %3420 = vmatpush1.bf16.msra.mxu0 0
      %3421 = vmatprep.subr.bf16.mxu0 0
      %3422 = vmatpush1.bf16.msra.mxu0 0
      %3423 = vmatprep.subr.bf16.mxu0 0
      %3424 = vmatpush1.bf16.msra.mxu0 0
      %3425 = vmatprep.subr.bf16.mxu0 0
      %3426 = vmatpush1.bf16.msra.mxu0 0
      %3427 = vmatprep.subr.bf16.mxu0 0
      %3428 = vmatpush1.bf16.msra.mxu0 0
      %3429 = vmatprep.subr.bf16.mxu0 0
      %3430 = vmatpush1.bf16.msra.mxu0 0
      %3431 = vmatprep.subr.bf16.mxu0 0
      %3432 = vmatpush1.bf16.msra.mxu0 0
      %3433 = vmatprep.mubr.bf16.mxu0 0
      %3434 = vmatmul.mubr.bf16.gmra.mrb[0].mxu0 %v3213
      %v3435 = vpop.f32.mrb[0].mxu0
      %v3436 = vadd.f32 %v3264, %v3435
      %v3437 = vpop.f32.mrb[0].mxu0
      %v3438 = vadd.f32 %v3268, %v3437
      %v3439 = vpop.f32.mrb[0].mxu0
      %v3440 = vadd.f32 %v3264, %v3439
      %v3441 = vpop.f32.mrb[0].mxu0
      %v3442 = vadd.f32 %v3268, %v3441
      %3443 = vdwg.mxu0
      %3444 = vmatprep.subr.bf16.mxu0 0
      %3445 = vmatpush1.bf16.msra.mxu0 %v3355
      %3446 = vmatprep.subr.bf16.mxu0 0
      %3447 = vmatpush1.bf16.msra.mxu0 %v3358
      %3448 = vmatprep.subr.bf16.mxu0 0
      %3449 = vmatpush1.bf16.msra.mxu0 %v3361
      %3450 = vmatprep.subr.bf16.mxu0 0
      %3451 = vmatpush1.bf16.msra.mxu0 %v3364
      %3452 = vmatprep.subr.bf16.mxu0 0
      %3453 = vmatpush1.bf16.msra.mxu0 %v3367
      %3454 = vmatprep.subr.bf16.mxu0 0
      %3455 = vmatpush1.bf16.msra.mxu0 %v3370
      %3456 = vmatprep.subr.bf16.mxu0 0
      %3457 = vmatpush1.bf16.msra.mxu0 %v3373
      %3458 = vmatprep.subr.bf16.mxu0 0
      %3459 = vmatpush1.bf16.msra.mxu0 %v3376
      %3460 = vmatprep.subr.bf16.mxu0 0
      %3461 = vmatpush1.bf16.msra.mxu0 0
      %3462 = vmatprep.subr.bf16.mxu0 0
      %3463 = vmatpush1.bf16.msra.mxu0 0
      %3464 = vmatprep.subr.bf16.mxu0 0
      %3465 = vmatpush1.bf16.msra.mxu0 0
      %3466 = vmatprep.subr.bf16.mxu0 0
      %3467 = vmatpush1.bf16.msra.mxu0 0
      %3468 = vmatprep.subr.bf16.mxu0 0
      %3469 = vmatpush1.bf16.msra.mxu0 0
      %3470 = vmatprep.subr.bf16.mxu0 0
      %3471 = vmatpush1.bf16.msra.mxu0 0
      %3472 = vmatprep.subr.bf16.mxu0 0
      %3473 = vmatpush1.bf16.msra.mxu0 0
      %3474 = vmatprep.subr.bf16.mxu0 0
      %3475 = vmatpush1.bf16.msra.mxu0 0
      %3476 = vmatprep.mubr.bf16.mxu0 0
      %3477 = vmatmul.mubr.bf16.gmra.mrb[0].mxu0 %v3213
      %v3478 = vpop.f32.mrb[0].mxu0
      %v3479 = vadd.f32 %v3272, %v3478
      %v3480 = vpop.f32.mrb[0].mxu0
      %v3481 = vpop.f32.mrb[0].mxu0
      %v3482 = vadd.f32 %v3272, %v3481
      %v3483 = vpop.f32.mrb[0].mxu0
      %3484 = vdwg.mxu0
      %v3485 = vadd.f32 %v3164, %v3436
      %v3486 = vadd.f32 %v3168, %v3440
      %v3487 = vxor.u32 %v3485, 2147483648
      %v3488 = vxor.u32 %v3486, 2147483648
      %v3489 = vmul.f32 %v3487, 1.442695
      %v3490 = vpow.pop %v3489
      %v3491 = vmul.f32 %v3488, 1.442695
      %v3492 = vpow.pop %v3491
      %v3493 = vadd.f32 %v3490, 1.0
      %v3494 = vadd.f32 %v3492, 1.0
      %v3495 = vrcp.pop %v3493
      %v3496 = vmul.f32 1.0, %v3495
      %v3497 = vrcp.pop %v3494
      %v3498 = vmul.f32 1.0, %v3497
      %v3499 = vadd.f32 %v3166, %v3438
      %v3500 = vadd.f32 %v3170, %v3442
      %v3501 = vxor.u32 %v3499, 2147483648
      %v3502 = vxor.u32 %v3500, 2147483648
      %v3503 = vmul.f32 %v3501, 1.442695
      %v3504 = vpow.pop %v3503
      %v3505 = vmul.f32 %v3502, 1.442695
      %v3506 = vpow.pop %v3505
      %v3507 = vadd.f32 %v3504, 1.0
      %v3508 = vadd.f32 %v3506, 1.0
      %v3509 = vrcp.pop %v3507
      %v3510 = vmul.f32 1.0, %v3509
      %v3511 = vrcp.pop %v3508
      %v3512 = vmul.f32 1.0, %v3511
      %v3513 = vmul.f32 %v3496, %v3479
      %v3514 = vmul.f32 %v3498, %v3482
      %v3515 = vadd.f32 %v3207, %v3513
      %v3516 = vadd.f32 %v3210, %v3514
      %v3517 = vtanh.pop %v3515
      %v3518 = vtanh.pop %v3516
      %v3519 = vsub.f32 1.0, %v3510
      %v3520 = vsub.f32 1.0, %v3512
      %v3521 = vmul.f32 %v3519, %v3517
      %v3522 = vmul.f32 %v3520, %v3518
      %v3523 = vmul.f32 %v3510, %v2937
      %v3524 = vmul.f32 %v3512, %v2938
      %v3525 = vadd.f32 %v3521, %v3523
      %v3526 = vadd.f32 %v3522, %v3524
      %3527 = vst [vmem:[%s12] sm:$0xff] %v3525
      %3528 = vst [vmem:[%s12 + $0x8] sm:$0xff] %v3526
      %v3529 = vlaneseq
      %v3530 = vshrl.u32 %v3529, 7
      %v3531 = vsub.s32 6, %v3530
      %v3532 = vrot.slane %v115, %v3531
      %v3533 = vmul.f32 %v3525, %v3532
      %v3534 = vmul.f32 %v3526, %v3532
      %3535 = vadd.xlane.f32.xlu0 %v3533
      %v3536 = vpop.xlane.xlu0 %3535
      %3537 = vadd.xlane.f32.xlu0 %v3534
      %v3538 = vpop.xlane.xlu0 %3537
      %vm3539 = vcmask 7168
      %3540 = vst.msk [vmem:[#allocation3] sm:$0xff] %vm3539, %v3536
      %3541 = vst.msk [vmem:[#allocation3 + $0x8] sm:$0xff] %vm3539, %v3538
    $region57: #{tpar_forward.2} parent=1 // pred_fallthru
      _
    // Predicated region
    $region58: #{tpar_forward.2} parent=1 // pred_check
      _
    $region59: #{tpar_forward.2} parent=1 // pred_check_branch
      %3543 = sbr.rel (0) target = $region61
    $region60: #{tpar_forward.2} parent=1 // pred_region
      _
    $region61: #{tpar_forward.2} parent=1 // pred_fallthru
      _
    // Predicated region
    $region62: #{tpar_forward.2} parent=1 // pred_check
      _
    $region63: #{tpar_forward.2} parent=1 // pred_check_branch
      %3545 = sbr.rel (0) target = $region65
    $region64: #{tpar_forward.2} parent=1 // pred_region
      %s3547 = ssub.s32 256, 256
      %3548 = vsyncadd [#allocation4], %s3547
      %s3549 = sshll.u32 [#allocation3], 4
      %s3550 = int_to_ptr.vmem [resolvable:$true] %s3549
      %3555 = dma.vmem_to_hbm [thread:$0]  %s3550, 256, %s13, [#allocation4], 128, 128, 8
    $region65: #{tpar_forward.2} parent=1 // pred_fallthru
      _
    // Predicated region
    $region66: #{tpar_forward.2} parent=1 // pred_check
      _
    $region67: #{tpar_forward.2} parent=1 // pred_check_branch
      %3557 = sbr.rel (0) target = $region69
    $region68: #{tpar_forward.2} parent=1 // pred_region
      _
    $region69: #{tpar_forward.2} parent=1 // pred_fallthru
      _
    // Predicated region
    $region70: #{tpar_forward.2} parent=1 // pred_check
      _
    $region71: #{tpar_forward.2} parent=1 // pred_check_branch
      %3559 = sbr.rel (0) target = $region73
    $region72: #{tpar_forward.2} parent=1 // pred_region
      %3560 = dma.done [#allocation4], 256
    $region73: #{tpar_forward.2} parent=1 // pred_fallthru
      _
    %3561 = vsyncpa [#allocation4], 1

// kernel: tpar_forward.3
$region0: #{tpar_forward.3}
  #allocation0 [shape = 'u32[]', space=smem, size = 0x4, offset = 0x4, fixed_abs, tag = 'smem constant byte address 0x4 - core index']
  #allocation1 [shape = 'u32[144,128]{1,0:T(1,128)}', space=vmem, size = 0x12000, scoped, tag = 'internal scratch']
  #allocation2 [shape = 'f32[16,128]{1,0:T(8,128)}', space=vmem, size = 0x2000, scoped, tag = 'scratch operand']
  %s0 = inlined_call_operand.vmem [shape: f32[128,128], index: 0, kind: input, shape index: {}]
  %s1 = inlined_call_operand.vmem [shape: f32[128,128], index: 1, kind: input, shape index: {}]
  %s2 = inlined_call_operand.vmem [shape: f32[128,128], index: 2, kind: input, shape index: {}]
  %s3 = inlined_call_operand.vmem [shape: f32[128,1], index: 3, kind: input, shape index: {}]
  %s4 = inlined_call_operand.vmem [shape: s32[1,128], index: 4, kind: input, shape index: {}]
  %s5 = inlined_call_operand.vmem [shape: f32[16,128], index: 5, kind: input, shape index: {}]
  %s6 = inlined_call_operand.vmem [shape: bf16[512,128], index: 6, kind: input, shape index: {}]
  %s7 = inlined_call_operand.vmem [shape: bf16[128,128], index: 7, kind: input, shape index: {}]
  %s8 = inlined_call_operand.vmem [shape: bf16[128,384], index: 8, kind: input, shape index: {}]
  %s9 = inlined_call_operand.vmem [shape: bf16[128,384], index: 9, kind: input, shape index: {}]
  %s10 = inlined_call_operand.vmem [shape: f32[2,384], index: 10, kind: input, shape index: {}]
  %s11 = inlined_call_operand.vmem [shape: f32[8,128], index: 11, kind: input, shape index: {}]
  %s12 = inlined_call_operand.hbm [shape: f32[16,128], index: 12, kind: output, shape index: {0}]
  %s13 = inlined_call_operand.vmem [shape: f32[16,1], index: 13, kind: output, shape index: {1}]
  %14 = xla_tuple %s12, %s13
  %s15 = sld [smem:[#allocation0]]
  $region74: #{tpar_forward.3} parent=0
    _
  %s17 = ssub.s32 1, %s15
  %s18 = scalar_select 0, %s17, %s15
  $region1: #{tpar_forward.3} parent=0
    #allocation3 [shape = 'u8[8192]{0}', space=vmem, size = 0x2000, scoped, tag = 'output window, operand 0, single buffered']
    #allocation4 [shape = 's32[1]{0}', space=sflag, size = 0x4, scoped, tag = 'scoped memory for tpar_forward.3']
    %19 = vsyncpa [#allocation4], 0
    // Predicated region
    $region2: #{tpar_forward.3} parent=1 // pred_check
      _
    $region3: #{tpar_forward.3} parent=1 // pred_check_branch
      %21 = sbr.rel (0) target = $region5
    $region4: #{tpar_forward.3} parent=1 // pred_region
      _
    $region5: #{tpar_forward.3} parent=1 // pred_fallthru
      _
    // Predicated region
    $region6: #{tpar_forward.3} parent=1 // pred_check
      _
    $region7: #{tpar_forward.3} parent=1 // pred_check_branch
      %23 = sbr.rel (0) target = $region9
    $region8: #{tpar_forward.3} parent=1 // pred_region
      _
    $region9: #{tpar_forward.3} parent=1 // pred_fallthru
      _
    // Predicated region
    $region10: #{tpar_forward.3} parent=1 // pred_check
      _
    $region11: #{tpar_forward.3} parent=1 // pred_check_branch
      %25 = sbr.rel (0) target = $region13
    $region12: #{tpar_forward.3} parent=1 // pred_region
      _
    $region13: #{tpar_forward.3} parent=1 // pred_fallthru
      _
    // Predicated region
    $region14: #{tpar_forward.3} parent=1 // pred_check
      _
    $region15: #{tpar_forward.3} parent=1 // pred_check_branch
      %27 = sbr.rel (0) target = $region17
    $region16: #{tpar_forward.3} parent=1 // pred_region
      _
    $region17: #{tpar_forward.3} parent=1 // pred_fallthru
      _
    // Predicated region
    $region18: #{tpar_forward.3} parent=1 // pred_check
      _
    $region19: #{tpar_forward.3} parent=1 // pred_check_branch
      %29 = sbr.rel (0) target = $region21
    $region20: #{tpar_forward.3} parent=1 // pred_region
      _
    $region21: #{tpar_forward.3} parent=1 // pred_fallthru
      _
    // Predicated region
    $region22: #{tpar_forward.3} parent=1 // pred_check
      _
    $region23: #{tpar_forward.3} parent=1 // pred_check_branch
      %31 = sbr.rel (0) target = $region25
    $region24: #{tpar_forward.3} parent=1 // pred_region
      _
    $region25: #{tpar_forward.3} parent=1 // pred_fallthru
      _
    // Predicated region
    $region26: #{tpar_forward.3} parent=1 // pred_check
      _
    $region27: #{tpar_forward.3} parent=1 // pred_check_branch
      %33 = sbr.rel (0) target = $region29
    $region28: #{tpar_forward.3} parent=1 // pred_region
      _
    $region29: #{tpar_forward.3} parent=1 // pred_fallthru
      _
    // Predicated region
    $region30: #{tpar_forward.3} parent=1 // pred_check
      _
    $region31: #{tpar_forward.3} parent=1 // pred_check_branch
      %35 = sbr.rel (0) target = $region33
    $region32: #{tpar_forward.3} parent=1 // pred_region
      _
    $region33: #{tpar_forward.3} parent=1 // pred_fallthru
      _
    // Predicated region
    $region34: #{tpar_forward.3} parent=1 // pred_check
      _
    $region35: #{tpar_forward.3} parent=1 // pred_check_branch
      %37 = sbr.rel (0) target = $region37
    $region36: #{tpar_forward.3} parent=1 // pred_region
      _
    $region37: #{tpar_forward.3} parent=1 // pred_fallthru
      _
    // Predicated region
    $region38: #{tpar_forward.3} parent=1 // pred_check
      _
    $region39: #{tpar_forward.3} parent=1 // pred_check_branch
      %39 = sbr.rel (0) target = $region41
    $region40: #{tpar_forward.3} parent=1 // pred_region
      _
    $region41: #{tpar_forward.3} parent=1 // pred_fallthru
      _
    // Predicated region
    $region42: #{tpar_forward.3} parent=1 // pred_check
      _
    $region43: #{tpar_forward.3} parent=1 // pred_check_branch
      %41 = sbr.rel (0) target = $region45
    $region44: #{tpar_forward.3} parent=1 // pred_region
      _
    $region45: #{tpar_forward.3} parent=1 // pred_fallthru
      _
    // Predicated region
    $region46: #{tpar_forward.3} parent=1 // pred_check
      _
    $region47: #{tpar_forward.3} parent=1 // pred_check_branch
      %43 = sbr.rel (0) target = $region49
    $region48: #{tpar_forward.3} parent=1 // pred_region
      _
    $region49: #{tpar_forward.3} parent=1 // pred_fallthru
      _
    %p45 = scmp.eq.s32.totalorder 0, 0
    // Predicated region
    $region50: #{tpar_forward.3} parent=1 // pred_check
      %p46 = pneg %p45
    $region51: #{tpar_forward.3} parent=1 // pred_check_branch
      %48 = sbr.rel (%p46) target = $region53
    $region52: #{tpar_forward.3} parent=1 // pred_region
      %49 = vst [vmem:[#allocation2] sm:$0xff] 0.0
      %50 = vst [vmem:[#allocation2 + $0x8] sm:$0xff] 0.0
    $region53: #{tpar_forward.3} parent=1 // pred_fallthru
      _
    %v51 = vld [vmem:[%s0] sm:$0xff]
    %v52 = vld [vmem:[%s0 + $0x8] sm:$0xff]
    %v53 = vld [vmem:[%s0 + $0x10] sm:$0xff]
    %v54 = vld [vmem:[%s0 + $0x18] sm:$0xff]
    %v55 = vld [vmem:[%s0 + $0x20] sm:$0xff]
    %v56 = vld [vmem:[%s0 + $0x28] sm:$0xff]
    %v57 = vld [vmem:[%s0 + $0x30] sm:$0xff]
    %v58 = vld [vmem:[%s0 + $0x38] sm:$0xff]
    %v59 = vld [vmem:[%s0 + $0x40] sm:$0xff]
    %v60 = vld [vmem:[%s0 + $0x48] sm:$0xff]
    %v61 = vld [vmem:[%s0 + $0x50] sm:$0xff]
    %v62 = vld [vmem:[%s0 + $0x58] sm:$0xff]
    %v63 = vld [vmem:[%s0 + $0x60] sm:$0xff]
    %v64 = vld [vmem:[%s0 + $0x68] sm:$0xff]
    %v65 = vld [vmem:[%s0 + $0x70] sm:$0xff]
    %v66 = vld [vmem:[%s0 + $0x78] sm:$0xff]
    %v67 = vld [vmem:[%s1] sm:$0xff]
    %v68 = vld [vmem:[%s1 + $0x8] sm:$0xff]
    %v69 = vld [vmem:[%s1 + $0x10] sm:$0xff]
    %v70 = vld [vmem:[%s1 + $0x18] sm:$0xff]
    %v71 = vld [vmem:[%s1 + $0x20] sm:$0xff]
    %v72 = vld [vmem:[%s1 + $0x28] sm:$0xff]
    %v73 = vld [vmem:[%s1 + $0x30] sm:$0xff]
    %v74 = vld [vmem:[%s1 + $0x38] sm:$0xff]
    %v75 = vld [vmem:[%s1 + $0x40] sm:$0xff]
    %v76 = vld [vmem:[%s1 + $0x48] sm:$0xff]
    %v77 = vld [vmem:[%s1 + $0x50] sm:$0xff]
    %v78 = vld [vmem:[%s1 + $0x58] sm:$0xff]
    %v79 = vld [vmem:[%s1 + $0x60] sm:$0xff]
    %v80 = vld [vmem:[%s1 + $0x68] sm:$0xff]
    %v81 = vld [vmem:[%s1 + $0x70] sm:$0xff]
    %v82 = vld [vmem:[%s1 + $0x78] sm:$0xff]
    %v83 = vld [vmem:[%s2] sm:$0xff]
    %v84 = vld [vmem:[%s2 + $0x8] sm:$0xff]
    %v85 = vld [vmem:[%s2 + $0x10] sm:$0xff]
    %v86 = vld [vmem:[%s2 + $0x18] sm:$0xff]
    %v87 = vld [vmem:[%s2 + $0x20] sm:$0xff]
    %v88 = vld [vmem:[%s2 + $0x28] sm:$0xff]
    %v89 = vld [vmem:[%s2 + $0x30] sm:$0xff]
    %v90 = vld [vmem:[%s2 + $0x38] sm:$0xff]
    %v91 = vld [vmem:[%s2 + $0x40] sm:$0xff]
    %v92 = vld [vmem:[%s2 + $0x48] sm:$0xff]
    %v93 = vld [vmem:[%s2 + $0x50] sm:$0xff]
    %v94 = vld [vmem:[%s2 + $0x58] sm:$0xff]
    %v95 = vld [vmem:[%s2 + $0x60] sm:$0xff]
    %v96 = vld [vmem:[%s2 + $0x68] sm:$0xff]
    %v97 = vld [vmem:[%s2 + $0x70] sm:$0xff]
    %v98 = vld [vmem:[%s2 + $0x78] sm:$0xff]
    %v99 = vld [vmem:[%s3] sm:$0xff]
    %v100 = vld [vmem:[%s3 + $0x8] sm:$0xff]
    %v101 = vld [vmem:[%s3 + $0x10] sm:$0xff]
    %v102 = vld [vmem:[%s3 + $0x18] sm:$0xff]
    %v103 = vld [vmem:[%s3 + $0x20] sm:$0xff]
    %v104 = vld [vmem:[%s3 + $0x28] sm:$0xff]
    %v105 = vld [vmem:[%s3 + $0x30] sm:$0xff]
    %v106 = vld [vmem:[%s3 + $0x38] sm:$0xff]
    %v107 = vld [vmem:[%s3 + $0x40] sm:$0xff]
    %v108 = vld [vmem:[%s3 + $0x48] sm:$0xff]
    %v109 = vld [vmem:[%s3 + $0x50] sm:$0xff]
    %v110 = vld [vmem:[%s3 + $0x58] sm:$0xff]
    %v111 = vld [vmem:[%s3 + $0x60] sm:$0xff]
    %v112 = vld [vmem:[%s3 + $0x68] sm:$0xff]
    %v113 = vld [vmem:[%s3 + $0x70] sm:$0xff]
    %v114 = vld [vmem:[%s3 + $0x78] sm:$0xff]
    %v115 = vld [vmem:[%s11] sm:$0xff]
    %v116 = vlaneseq
    %v117 = vshrl.u32 %v116, 7
    %v118 = vsub.s32 0, %v117
    %v119 = vrot.slane %v115, %v118
    %121 = vset.pattern.permute.xlu0 0
    %122 = vperm.xlu0 %121, %v99
    %v123 = vpop.permute.xlu0 %122
    %126 = vset.pattern.permute.xlu0 0
    %127 = vperm.xlu0 %126, %v100
    %v128 = vpop.permute.xlu0 %127
    %131 = vset.pattern.permute.xlu0 0
    %132 = vperm.xlu0 %131, %v101
    %v133 = vpop.permute.xlu0 %132
    %136 = vset.pattern.permute.xlu0 0
    %137 = vperm.xlu0 %136, %v102
    %v138 = vpop.permute.xlu0 %137
    %141 = vset.pattern.permute.xlu0 0
    %142 = vperm.xlu0 %141, %v103
    %v143 = vpop.permute.xlu0 %142
    %146 = vset.pattern.permute.xlu0 0
    %147 = vperm.xlu0 %146, %v104
    %v148 = vpop.permute.xlu0 %147
    %151 = vset.pattern.permute.xlu0 0
    %152 = vperm.xlu0 %151, %v105
    %v153 = vpop.permute.xlu0 %152
    %156 = vset.pattern.permute.xlu0 0
    %157 = vperm.xlu0 %156, %v106
    %v158 = vpop.permute.xlu0 %157
    %161 = vset.pattern.permute.xlu0 0
    %162 = vperm.xlu0 %161, %v107
    %v163 = vpop.permute.xlu0 %162
    %166 = vset.pattern.permute.xlu0 0
    %167 = vperm.xlu0 %166, %v108
    %v168 = vpop.permute.xlu0 %167
    %171 = vset.pattern.permute.xlu0 0
    %172 = vperm.xlu0 %171, %v109
    %v173 = vpop.permute.xlu0 %172
    %176 = vset.pattern.permute.xlu0 0
    %177 = vperm.xlu0 %176, %v110
    %v178 = vpop.permute.xlu0 %177
    %181 = vset.pattern.permute.xlu0 0
    %182 = vperm.xlu0 %181, %v111
    %v183 = vpop.permute.xlu0 %182
    %186 = vset.pattern.permute.xlu0 0
    %187 = vperm.xlu0 %186, %v112
    %v188 = vpop.permute.xlu0 %187
    %191 = vset.pattern.permute.xlu0 0
    %192 = vperm.xlu0 %191, %v113
    %v193 = vpop.permute.xlu0 %192
    %196 = vset.pattern.permute.xlu0 0
    %197 = vperm.xlu0 %196, %v114
    %v198 = vpop.permute.xlu0 %197
    %v200 = vmul.f32 %v119, %v123
    %v201 = vmul.f32 %v119, %v128
    %v202 = vmul.f32 %v119, %v133
    %v203 = vmul.f32 %v119, %v138
    %v204 = vmul.f32 %v119, %v143
    %v205 = vmul.f32 %v119, %v148
    %v206 = vmul.f32 %v119, %v153
    %v207 = vmul.f32 %v119, %v158
    %v208 = vmul.f32 %v119, %v163
    %v209 = vmul.f32 %v119, %v168
    %v210 = vmul.f32 %v119, %v173
    %v211 = vmul.f32 %v119, %v178
    %v212 = vmul.f32 %v119, %v183
    %v213 = vmul.f32 %v119, %v188
    %v214 = vmul.f32 %v119, %v193
    %v215 = vmul.f32 %v119, %v198
    %v216 = vlaneseq
    %v217 = vshrl.u32 %v216, 7
    %v218 = vsub.s32 1, %v217
    %v219 = vrot.slane %v115, %v218
    %v220 = vadd.f32 %v200, %v219
    %v221 = vadd.f32 %v201, %v219
    %v222 = vadd.f32 %v202, %v219
    %v223 = vadd.f32 %v203, %v219
    %v224 = vadd.f32 %v204, %v219
    %v225 = vadd.f32 %v205, %v219
    %v226 = vadd.f32 %v206, %v219
    %v227 = vadd.f32 %v207, %v219
    %v228 = vadd.f32 %v208, %v219
    %v229 = vadd.f32 %v209, %v219
    %v230 = vadd.f32 %v210, %v219
    %v231 = vadd.f32 %v211, %v219
    %v232 = vadd.f32 %v212, %v219
    %v233 = vadd.f32 %v213, %v219
    %v234 = vadd.f32 %v214, %v219
    %v235 = vadd.f32 %v215, %v219
    %v236 = vlaneseq
    %v237 = vshrl.u32 %v236, 7
    %v238 = vsub.s32 2, %v237
    %v239 = vrot.slane %v115, %v238
    %v240 = vmul.f32 %v239, %v123
    %v241 = vmul.f32 %v239, %v128
    %v242 = vmul.f32 %v239, %v133
    %v243 = vmul.f32 %v239, %v138
    %v244 = vmul.f32 %v239, %v143
    %v245 = vmul.f32 %v239, %v148
    %v246 = vmul.f32 %v239, %v153
    %v247 = vmul.f32 %v239, %v158
    %v248 = vmul.f32 %v239, %v163
    %v249 = vmul.f32 %v239, %v168
    %v250 = vmul.f32 %v239, %v173
    %v251 = vmul.f32 %v239, %v178
    %v252 = vmul.f32 %v239, %v183
    %v253 = vmul.f32 %v239, %v188
    %v254 = vmul.f32 %v239, %v193
    %v255 = vmul.f32 %v239, %v198
    %v256 = vlaneseq
    %v257 = vshrl.u32 %v256, 7
    %v258 = vsub.s32 3, %v257
    %v259 = vrot.slane %v115, %v258
    %v260 = vadd.f32 %v240, %v259
    %v261 = vadd.f32 %v241, %v259
    %v262 = vadd.f32 %v242, %v259
    %v263 = vadd.f32 %v243, %v259
    %v264 = vadd.f32 %v244, %v259
    %v265 = vadd.f32 %v245, %v259
    %v266 = vadd.f32 %v246, %v259
    %v267 = vadd.f32 %v247, %v259
    %v268 = vadd.f32 %v248, %v259
    %v269 = vadd.f32 %v249, %v259
    %v270 = vadd.f32 %v250, %v259
    %v271 = vadd.f32 %v251, %v259
    %v272 = vadd.f32 %v252, %v259
    %v273 = vadd.f32 %v253, %v259
    %v274 = vadd.f32 %v254, %v259
    %v275 = vadd.f32 %v255, %v259
    %v276 = vand.u32 2147483647, %v260
    %vm277 = vcmp.le.f32.partialorder %v276, 0.7853982
    %vm278 = vcmp.lt.s32.totalorder %v260, 0
    %v279 = vand.u32 %v260, 2139095040
    %v280 = vshrl.u32 %v279, 23
    %v281 = vsub.s32 %v280, 127
    %v282 = vand.u32 2147483647, %v260
    %v283 = vand.u32 %v282, 8388607
    %v284 = vor.u32 %v283, 8388608
    %v285 = vsub.s32 0, %v284
    %v286 = vadd.s32 %v281, 1
    %vm287 = vcmp.gt.s32.totalorder %v286, 0
    %v288 = vsel %vm287, %v286, 0
    %v289 = vshrl.u32 %v288, 5
    %v290 = vand.u32 %v288, 31
    %v291 = vsub.s32 32, %v290
    %v292 = vshrl.u32 683565275, %v291
    %v293 = vshll.u32 683565275, %v290
    %v294 = vshrl.u32 2475754826, %v291
    %v295 = vor.u32 %v293, %v294
    %v296 = vshll.u32 2475754826, %v290
    %v297 = vshrl.u32 2131351028, %v291
    %v298 = vor.u32 %v296, %v297
    %v299 = vshll.u32 2131351028, %v290
    %v300 = vshrl.u32 2102212464, %v291
    %v301 = vor.u32 %v299, %v300
    %v302 = vshll.u32 2102212464, %v290
    %v303 = vshrl.u32 920167782, %v291
    %v304 = vor.u32 %v302, %v303
    %v305 = vshll.u32 920167782, %v290
    %v306 = vshrl.u32 1326507024, %v291
    %v307 = vor.u32 %v305, %v306
    %vm308 = vcmp.lt.s32.totalorder %v289, 1
    %vm309 = vcmp.lt.s32.totalorder %v289, 2
    %vm310 = vcmp.lt.s32.totalorder %v289, 3
    %vm311 = vcmp.lt.s32.totalorder %v289, 4
    %v312 = vsel %vm308, %v292, %v295
    %v313 = vsel %vm311, %v301, 2102212464
    %v314 = vsel %vm310, %v298, %v313
    %v315 = vsel %vm309, %v312, %v314
    %v316 = vsel %vm308, %v295, %v298
    %v317 = vsel %vm311, %v304, 920167782
    %v318 = vsel %vm310, %v301, %v317
    %v319 = vsel %vm309, %v316, %v318
    %v320 = vsel %vm308, %v298, %v301
    %v321 = vsel %vm311, %v307, 1326507024
    %v322 = vsel %vm310, %v304, %v321
    %v323 = vsel %vm309, %v320, %v322
    %v324 = vshll.u32 %v284, 8
    %v325 = vmul.u32.u64.compose %v324, %v323
    %v326 = vextract.low.u32 %v325
    %v327 = vextract.high.u32 %v325
    %v328 = vmul.u32.u64.compose %v324, %v319
    %v329 = vextract.low.u32 %v328
    %v330 = vextract.high.u32 %v328
    %v331 = vmul.u32 %v324, %v315
    %v332 = vadd.s32 %v327, %v329
    %vm333 = vc.u32 %v327, %v329
    %v334 = vadd.s32 %v330, 1
    %v335 = vsel %vm333, %v334, %v330
    %v336 = vadd.s32 %v331, %v335
    %v337 = vadd.s32 %v336, 536870912
    %v338 = vshrl.u32 %v337, 30
    %v339 = vshll.u32 %v338, 30
    %v340 = vsub.s32 %v336, %v339
    %vm341 = vcmp.lt.s32.totalorder %v340, 0
    %v342 = vsub.s32 0, %v340
    %v343 = vsel %vm341, %v342, %v340
    %v344 = vclz %v343
    %v345 = vsub.s32 %v344, 2
    %vm346 = vcmp.gt.s32.totalorder 0, %v345
    %v347 = vsel %vm346, 0, %v345
    %v348 = vsub.s32 32, %v347
    %v349 = vshll.u32 %v340, %v347
    %v350 = vshrl.u32 %v332, %v348
    %v351 = vor.u32 %v349, %v350
    %v352 = vsub.s32 4294967266, %v347
    %v353 = vadd.s32 %v352, 127
    %v354 = vshll.u32 %v353, 23
    %v355 = vor.u32 4788187, %v354
    %v356 = vand.u32 2147483647, %v355
    %v358 = vcvt.s32.f32 %v351
    %v359 = vmul.f32 %v358, %v356
    %v360 = vxor.u32 %v359, 2147483648
    %v361 = vsel %vm278, %v360, %v359
    %v362 = vsub.s32 4, %v338
    %v363 = vsel %vm278, %v362, %v338
    %v364 = vsel %vm277, %v260, %v361
    %v365 = vsel %vm277, 0, %v363
    %v366 = vcosq.f32.pop %v364
    %v367 = vsinq.f32.pop %v364
    %vm368 = vweird.f32 %v260
    %v369 = vadd.s32 %v365, 3
    %v370 = vand.u32 %v369, 3
    %vm371 = vcmp.lt.s32.totalorder %v370, 2
    %vm372 = vcmp.eq.s32.totalorder %v370, 0
    %v373 = vxor.u32 %v367, 2147483648
    %v374 = vsel %vm372, %v366, %v373
    %vm375 = vcmp.eq.s32.totalorder %v370, 2
    %v376 = vxor.u32 %v366, 2147483648
    %v377 = vsel %vm375, %v376, %v367
    %v378 = vsel %vm371, %v374, %v377
    %v379 = vsel %vm368, nan, %v378
    %v380 = vand.u32 2147483647, %v261
    %vm381 = vcmp.le.f32.partialorder %v380, 0.7853982
    %vm382 = vcmp.lt.s32.totalorder %v261, 0
    %v383 = vand.u32 %v261, 2139095040
    %v384 = vshrl.u32 %v383, 23
    %v385 = vsub.s32 %v384, 127
    %v386 = vand.u32 2147483647, %v261
    %v387 = vand.u32 %v386, 8388607
    %v388 = vor.u32 %v387, 8388608
    %v389 = vsub.s32 0, %v388
    %v390 = vadd.s32 %v385, 1
    %vm391 = vcmp.gt.s32.totalorder %v390, 0
    %v392 = vsel %vm391, %v390, 0
    %v393 = vshrl.u32 %v392, 5
    %v394 = vand.u32 %v392, 31
    %v395 = vsub.s32 32, %v394
    %v396 = vshrl.u32 683565275, %v395
    %v397 = vshll.u32 683565275, %v394
    %v398 = vshrl.u32 2475754826, %v395
    %v399 = vor.u32 %v397, %v398
    %v400 = vshll.u32 2475754826, %v394
    %v401 = vshrl.u32 2131351028, %v395
    %v402 = vor.u32 %v400, %v401
    %v403 = vshll.u32 2131351028, %v394
    %v404 = vshrl.u32 2102212464, %v395
    %v405 = vor.u32 %v403, %v404
    %v406 = vshll.u32 2102212464, %v394
    %v407 = vshrl.u32 920167782, %v395
    %v408 = vor.u32 %v406, %v407
    %v409 = vshll.u32 920167782, %v394
    %v410 = vshrl.u32 1326507024, %v395
    %v411 = vor.u32 %v409, %v410
    %vm412 = vcmp.lt.s32.totalorder %v393, 1
    %vm413 = vcmp.lt.s32.totalorder %v393, 2
    %vm414 = vcmp.lt.s32.totalorder %v393, 3
    %vm415 = vcmp.lt.s32.totalorder %v393, 4
    %v416 = vsel %vm412, %v396, %v399
    %v417 = vsel %vm415, %v405, 2102212464
    %v418 = vsel %vm414, %v402, %v417
    %v419 = vsel %vm413, %v416, %v418
    %v420 = vsel %vm412, %v399, %v402
    %v421 = vsel %vm415, %v408, 920167782
    %v422 = vsel %vm414, %v405, %v421
    %v423 = vsel %vm413, %v420, %v422
    %v424 = vsel %vm412, %v402, %v405
    %v425 = vsel %vm415, %v411, 1326507024
    %v426 = vsel %vm414, %v408, %v425
    %v427 = vsel %vm413, %v424, %v426
    %v428 = vshll.u32 %v388, 8
    %v429 = vmul.u32.u64.compose %v428, %v427
    %v430 = vextract.low.u32 %v429
    %v431 = vextract.high.u32 %v429
    %v432 = vmul.u32.u64.compose %v428, %v423
    %v433 = vextract.low.u32 %v432
    %v434 = vextract.high.u32 %v432
    %v435 = vmul.u32 %v428, %v419
    %v436 = vadd.s32 %v431, %v433
    %vm437 = vc.u32 %v431, %v433
    %v438 = vadd.s32 %v434, 1
    %v439 = vsel %vm437, %v438, %v434
    %v440 = vadd.s32 %v435, %v439
    %v441 = vadd.s32 %v440, 536870912
    %v442 = vshrl.u32 %v441, 30
    %v443 = vshll.u32 %v442, 30
    %v444 = vsub.s32 %v440, %v443
    %vm445 = vcmp.lt.s32.totalorder %v444, 0
    %v446 = vsub.s32 0, %v444
    %v447 = vsel %vm445, %v446, %v444
    %v448 = vclz %v447
    %v449 = vsub.s32 %v448, 2
    %vm450 = vcmp.gt.s32.totalorder 0, %v449
    %v451 = vsel %vm450, 0, %v449
    %v452 = vsub.s32 32, %v451
    %v453 = vshll.u32 %v444, %v451
    %v454 = vshrl.u32 %v436, %v452
    %v455 = vor.u32 %v453, %v454
    %v456 = vsub.s32 4294967266, %v451
    %v457 = vadd.s32 %v456, 127
    %v458 = vshll.u32 %v457, 23
    %v459 = vor.u32 4788187, %v458
    %v460 = vand.u32 2147483647, %v459
    %v462 = vcvt.s32.f32 %v455
    %v463 = vmul.f32 %v462, %v460
    %v464 = vxor.u32 %v463, 2147483648
    %v465 = vsel %vm382, %v464, %v463
    %v466 = vsub.s32 4, %v442
    %v467 = vsel %vm382, %v466, %v442
    %v468 = vsel %vm381, %v261, %v465
    %v469 = vsel %vm381, 0, %v467
    %v470 = vcosq.f32.pop %v468
    %v471 = vsinq.f32.pop %v468
    %vm472 = vweird.f32 %v261
    %v473 = vadd.s32 %v469, 3
    %v474 = vand.u32 %v473, 3
    %vm475 = vcmp.lt.s32.totalorder %v474, 2
    %vm476 = vcmp.eq.s32.totalorder %v474, 0
    %v477 = vxor.u32 %v471, 2147483648
    %v478 = vsel %vm476, %v470, %v477
    %vm479 = vcmp.eq.s32.totalorder %v474, 2
    %v480 = vxor.u32 %v470, 2147483648
    %v481 = vsel %vm479, %v480, %v471
    %v482 = vsel %vm475, %v478, %v481
    %v483 = vsel %vm472, nan, %v482
    %v484 = vand.u32 2147483647, %v262
    %vm485 = vcmp.le.f32.partialorder %v484, 0.7853982
    %vm486 = vcmp.lt.s32.totalorder %v262, 0
    %v487 = vand.u32 %v262, 2139095040
    %v488 = vshrl.u32 %v487, 23
    %v489 = vsub.s32 %v488, 127
    %v490 = vand.u32 2147483647, %v262
    %v491 = vand.u32 %v490, 8388607
    %v492 = vor.u32 %v491, 8388608
    %v493 = vsub.s32 0, %v492
    %v494 = vadd.s32 %v489, 1
    %vm495 = vcmp.gt.s32.totalorder %v494, 0
    %v496 = vsel %vm495, %v494, 0
    %v497 = vshrl.u32 %v496, 5
    %v498 = vand.u32 %v496, 31
    %v499 = vsub.s32 32, %v498
    %v500 = vshrl.u32 683565275, %v499
    %v501 = vshll.u32 683565275, %v498
    %v502 = vshrl.u32 2475754826, %v499
    %v503 = vor.u32 %v501, %v502
    %v504 = vshll.u32 2475754826, %v498
    %v505 = vshrl.u32 2131351028, %v499
    %v506 = vor.u32 %v504, %v505
    %v507 = vshll.u32 2131351028, %v498
    %v508 = vshrl.u32 2102212464, %v499
    %v509 = vor.u32 %v507, %v508
    %v510 = vshll.u32 2102212464, %v498
    %v511 = vshrl.u32 920167782, %v499
    %v512 = vor.u32 %v510, %v511
    %v513 = vshll.u32 920167782, %v498
    %v514 = vshrl.u32 1326507024, %v499
    %v515 = vor.u32 %v513, %v514
    %vm516 = vcmp.lt.s32.totalorder %v497, 1
    %vm517 = vcmp.lt.s32.totalorder %v497, 2
    %vm518 = vcmp.lt.s32.totalorder %v497, 3
    %vm519 = vcmp.lt.s32.totalorder %v497, 4
    %v520 = vsel %vm516, %v500, %v503
    %v521 = vsel %vm519, %v509, 2102212464
    %v522 = vsel %vm518, %v506, %v521
    %v523 = vsel %vm517, %v520, %v522
    %v524 = vsel %vm516, %v503, %v506
    %v525 = vsel %vm519, %v512, 920167782
    %v526 = vsel %vm518, %v509, %v525
    %v527 = vsel %vm517, %v524, %v526
    %v528 = vsel %vm516, %v506, %v509
    %v529 = vsel %vm519, %v515, 1326507024
    %v530 = vsel %vm518, %v512, %v529
    %v531 = vsel %vm517, %v528, %v530
    %v532 = vshll.u32 %v492, 8
    %v533 = vmul.u32.u64.compose %v532, %v531
    %v534 = vextract.low.u32 %v533
    %v535 = vextract.high.u32 %v533
    %v536 = vmul.u32.u64.compose %v532, %v527
    %v537 = vextract.low.u32 %v536
    %v538 = vextract.high.u32 %v536
    %v539 = vmul.u32 %v532, %v523
    %v540 = vadd.s32 %v535, %v537
    %vm541 = vc.u32 %v535, %v537
    %v542 = vadd.s32 %v538, 1
    %v543 = vsel %vm541, %v542, %v538
    %v544 = vadd.s32 %v539, %v543
    %v545 = vadd.s32 %v544, 536870912
    %v546 = vshrl.u32 %v545, 30
    %v547 = vshll.u32 %v546, 30
    %v548 = vsub.s32 %v544, %v547
    %vm549 = vcmp.lt.s32.totalorder %v548, 0
    %v550 = vsub.s32 0, %v548
    %v551 = vsel %vm549, %v550, %v548
    %v552 = vclz %v551
    %v553 = vsub.s32 %v552, 2
    %vm554 = vcmp.gt.s32.totalorder 0, %v553
    %v555 = vsel %vm554, 0, %v553
    %v556 = vsub.s32 32, %v555
    %v557 = vshll.u32 %v548, %v555
    %v558 = vshrl.u32 %v540, %v556
    %v559 = vor.u32 %v557, %v558
    %v560 = vsub.s32 4294967266, %v555
    %v561 = vadd.s32 %v560, 127
    %v562 = vshll.u32 %v561, 23
    %v563 = vor.u32 4788187, %v562
    %v564 = vand.u32 2147483647, %v563
    %v566 = vcvt.s32.f32 %v559
    %v567 = vmul.f32 %v566, %v564
    %v568 = vxor.u32 %v567, 2147483648
    %v569 = vsel %vm486, %v568, %v567
    %v570 = vsub.s32 4, %v546
    %v571 = vsel %vm486, %v570, %v546
    %v572 = vsel %vm485, %v262, %v569
    %v573 = vsel %vm485, 0, %v571
    %v574 = vcosq.f32.pop %v572
    %v575 = vsinq.f32.pop %v572
    %vm576 = vweird.f32 %v262
    %v577 = vadd.s32 %v573, 3
    %v578 = vand.u32 %v577, 3
    %vm579 = vcmp.lt.s32.totalorder %v578, 2
    %vm580 = vcmp.eq.s32.totalorder %v578, 0
    %v581 = vxor.u32 %v575, 2147483648
    %v582 = vsel %vm580, %v574, %v581
    %vm583 = vcmp.eq.s32.totalorder %v578, 2
    %v584 = vxor.u32 %v574, 2147483648
    %v585 = vsel %vm583, %v584, %v575
    %v586 = vsel %vm579, %v582, %v585
    %v587 = vsel %vm576, nan, %v586
    %v588 = vand.u32 2147483647, %v263
    %vm589 = vcmp.le.f32.partialorder %v588, 0.7853982
    %vm590 = vcmp.lt.s32.totalorder %v263, 0
    %v591 = vand.u32 %v263, 2139095040
    %v592 = vshrl.u32 %v591, 23
    %v593 = vsub.s32 %v592, 127
    %v594 = vand.u32 2147483647, %v263
    %v595 = vand.u32 %v594, 8388607
    %v596 = vor.u32 %v595, 8388608
    %v597 = vsub.s32 0, %v596
    %v598 = vadd.s32 %v593, 1
    %vm599 = vcmp.gt.s32.totalorder %v598, 0
    %v600 = vsel %vm599, %v598, 0
    %v601 = vshrl.u32 %v600, 5
    %v602 = vand.u32 %v600, 31
    %v603 = vsub.s32 32, %v602
    %v604 = vshrl.u32 683565275, %v603
    %v605 = vshll.u32 683565275, %v602
    %v606 = vshrl.u32 2475754826, %v603
    %v607 = vor.u32 %v605, %v606
    %v608 = vshll.u32 2475754826, %v602
    %v609 = vshrl.u32 2131351028, %v603
    %v610 = vor.u32 %v608, %v609
    %v611 = vshll.u32 2131351028, %v602
    %v612 = vshrl.u32 2102212464, %v603
    %v613 = vor.u32 %v611, %v612
    %v614 = vshll.u32 2102212464, %v602
    %v615 = vshrl.u32 920167782, %v603
    %v616 = vor.u32 %v614, %v615
    %v617 = vshll.u32 920167782, %v602
    %v618 = vshrl.u32 1326507024, %v603
    %v619 = vor.u32 %v617, %v618
    %vm620 = vcmp.lt.s32.totalorder %v601, 1
    %vm621 = vcmp.lt.s32.totalorder %v601, 2
    %vm622 = vcmp.lt.s32.totalorder %v601, 3
    %vm623 = vcmp.lt.s32.totalorder %v601, 4
    %v624 = vsel %vm620, %v604, %v607
    %v625 = vsel %vm623, %v613, 2102212464
    %v626 = vsel %vm622, %v610, %v625
    %v627 = vsel %vm621, %v624, %v626
    %v628 = vsel %vm620, %v607, %v610
    %v629 = vsel %vm623, %v616, 920167782
    %v630 = vsel %vm622, %v613, %v629
    %v631 = vsel %vm621, %v628, %v630
    %v632 = vsel %vm620, %v610, %v613
    %v633 = vsel %vm623, %v619, 1326507024
    %v634 = vsel %vm622, %v616, %v633
    %v635 = vsel %vm621, %v632, %v634
    %v636 = vshll.u32 %v596, 8
    %v637 = vmul.u32.u64.compose %v636, %v635
    %v638 = vextract.low.u32 %v637
    %v639 = vextract.high.u32 %v637
    %v640 = vmul.u32.u64.compose %v636, %v631
    %v641 = vextract.low.u32 %v640
    %v642 = vextract.high.u32 %v640
    %v643 = vmul.u32 %v636, %v627
    %v644 = vadd.s32 %v639, %v641
    %vm645 = vc.u32 %v639, %v641
    %v646 = vadd.s32 %v642, 1
    %v647 = vsel %vm645, %v646, %v642
    %v648 = vadd.s32 %v643, %v647
    %v649 = vadd.s32 %v648, 536870912
    %v650 = vshrl.u32 %v649, 30
    %v651 = vshll.u32 %v650, 30
    %v652 = vsub.s32 %v648, %v651
    %vm653 = vcmp.lt.s32.totalorder %v652, 0
    %v654 = vsub.s32 0, %v652
    %v655 = vsel %vm653, %v654, %v652
    %v656 = vclz %v655
    %v657 = vsub.s32 %v656, 2
    %vm658 = vcmp.gt.s32.totalorder 0, %v657
    %v659 = vsel %vm658, 0, %v657
    %v660 = vsub.s32 32, %v659
    %v661 = vshll.u32 %v652, %v659
    %v662 = vshrl.u32 %v644, %v660
    %v663 = vor.u32 %v661, %v662
    %v664 = vsub.s32 4294967266, %v659
    %v665 = vadd.s32 %v664, 127
    %v666 = vshll.u32 %v665, 23
    %v667 = vor.u32 4788187, %v666
    %v668 = vand.u32 2147483647, %v667
    %v670 = vcvt.s32.f32 %v663
    %v671 = vmul.f32 %v670, %v668
    %v672 = vxor.u32 %v671, 2147483648
    %v673 = vsel %vm590, %v672, %v671
    %v674 = vsub.s32 4, %v650
    %v675 = vsel %vm590, %v674, %v650
    %v676 = vsel %vm589, %v263, %v673
    %v677 = vsel %vm589, 0, %v675
    %v678 = vcosq.f32.pop %v676
    %v679 = vsinq.f32.pop %v676
    %vm680 = vweird.f32 %v263
    %v681 = vadd.s32 %v677, 3
    %v682 = vand.u32 %v681, 3
    %vm683 = vcmp.lt.s32.totalorder %v682, 2
    %vm684 = vcmp.eq.s32.totalorder %v682, 0
    %v685 = vxor.u32 %v679, 2147483648
    %v686 = vsel %vm684, %v678, %v685
    %vm687 = vcmp.eq.s32.totalorder %v682, 2
    %v688 = vxor.u32 %v678, 2147483648
    %v689 = vsel %vm687, %v688, %v679
    %v690 = vsel %vm683, %v686, %v689
    %v691 = vsel %vm680, nan, %v690
    %v692 = vand.u32 2147483647, %v264
    %vm693 = vcmp.le.f32.partialorder %v692, 0.7853982
    %vm694 = vcmp.lt.s32.totalorder %v264, 0
    %v695 = vand.u32 %v264, 2139095040
    %v696 = vshrl.u32 %v695, 23
    %v697 = vsub.s32 %v696, 127
    %v698 = vand.u32 2147483647, %v264
    %v699 = vand.u32 %v698, 8388607
    %v700 = vor.u32 %v699, 8388608
    %v701 = vsub.s32 0, %v700
    %v702 = vadd.s32 %v697, 1
    %vm703 = vcmp.gt.s32.totalorder %v702, 0
    %v704 = vsel %vm703, %v702, 0
    %v705 = vshrl.u32 %v704, 5
    %v706 = vand.u32 %v704, 31
    %v707 = vsub.s32 32, %v706
    %v708 = vshrl.u32 683565275, %v707
    %v709 = vshll.u32 683565275, %v706
    %v710 = vshrl.u32 2475754826, %v707
    %v711 = vor.u32 %v709, %v710
    %v712 = vshll.u32 2475754826, %v706
    %v713 = vshrl.u32 2131351028, %v707
    %v714 = vor.u32 %v712, %v713
    %v715 = vshll.u32 2131351028, %v706
    %v716 = vshrl.u32 2102212464, %v707
    %v717 = vor.u32 %v715, %v716
    %v718 = vshll.u32 2102212464, %v706
    %v719 = vshrl.u32 920167782, %v707
    %v720 = vor.u32 %v718, %v719
    %v721 = vshll.u32 920167782, %v706
    %v722 = vshrl.u32 1326507024, %v707
    %v723 = vor.u32 %v721, %v722
    %vm724 = vcmp.lt.s32.totalorder %v705, 1
    %vm725 = vcmp.lt.s32.totalorder %v705, 2
    %vm726 = vcmp.lt.s32.totalorder %v705, 3
    %vm727 = vcmp.lt.s32.totalorder %v705, 4
    %v728 = vsel %vm724, %v708, %v711
    %v729 = vsel %vm727, %v717, 2102212464
    %v730 = vsel %vm726, %v714, %v729
    %v731 = vsel %vm725, %v728, %v730
    %v732 = vsel %vm724, %v711, %v714
    %v733 = vsel %vm727, %v720, 920167782
    %v734 = vsel %vm726, %v717, %v733
    %v735 = vsel %vm725, %v732, %v734
    %v736 = vsel %vm724, %v714, %v717
    %v737 = vsel %vm727, %v723, 1326507024
    %v738 = vsel %vm726, %v720, %v737
    %v739 = vsel %vm725, %v736, %v738
    %v740 = vshll.u32 %v700, 8
    %v741 = vmul.u32.u64.compose %v740, %v739
    %v742 = vextract.low.u32 %v741
    %v743 = vextract.high.u32 %v741
    %v744 = vmul.u32.u64.compose %v740, %v735
    %v745 = vextract.low.u32 %v744
    %v746 = vextract.high.u32 %v744
    %v747 = vmul.u32 %v740, %v731
    %v748 = vadd.s32 %v743, %v745
    %vm749 = vc.u32 %v743, %v745
    %v750 = vadd.s32 %v746, 1
    %v751 = vsel %vm749, %v750, %v746
    %v752 = vadd.s32 %v747, %v751
    %v753 = vadd.s32 %v752, 536870912
    %v754 = vshrl.u32 %v753, 30
    %v755 = vshll.u32 %v754, 30
    %v756 = vsub.s32 %v752, %v755
    %vm757 = vcmp.lt.s32.totalorder %v756, 0
    %v758 = vsub.s32 0, %v756
    %v759 = vsel %vm757, %v758, %v756
    %v760 = vclz %v759
    %v761 = vsub.s32 %v760, 2
    %vm762 = vcmp.gt.s32.totalorder 0, %v761
    %v763 = vsel %vm762, 0, %v761
    %v764 = vsub.s32 32, %v763
    %v765 = vshll.u32 %v756, %v763
    %v766 = vshrl.u32 %v748, %v764
    %v767 = vor.u32 %v765, %v766
    %v768 = vsub.s32 4294967266, %v763
    %v769 = vadd.s32 %v768, 127
    %v770 = vshll.u32 %v769, 23
    %v771 = vor.u32 4788187, %v770
    %v772 = vand.u32 2147483647, %v771
    %v774 = vcvt.s32.f32 %v767
    %v775 = vmul.f32 %v774, %v772
    %v776 = vxor.u32 %v775, 2147483648
    %v777 = vsel %vm694, %v776, %v775
    %v778 = vsub.s32 4, %v754
    %v779 = vsel %vm694, %v778, %v754
    %v780 = vsel %vm693, %v264, %v777
    %v781 = vsel %vm693, 0, %v779
    %v782 = vcosq.f32.pop %v780
    %v783 = vsinq.f32.pop %v780
    %vm784 = vweird.f32 %v264
    %v785 = vadd.s32 %v781, 3
    %v786 = vand.u32 %v785, 3
    %vm787 = vcmp.lt.s32.totalorder %v786, 2
    %vm788 = vcmp.eq.s32.totalorder %v786, 0
    %v789 = vxor.u32 %v783, 2147483648
    %v790 = vsel %vm788, %v782, %v789
    %vm791 = vcmp.eq.s32.totalorder %v786, 2
    %v792 = vxor.u32 %v782, 2147483648
    %v793 = vsel %vm791, %v792, %v783
    %v794 = vsel %vm787, %v790, %v793
    %v795 = vsel %vm784, nan, %v794
    %v796 = vand.u32 2147483647, %v265
    %vm797 = vcmp.le.f32.partialorder %v796, 0.7853982
    %vm798 = vcmp.lt.s32.totalorder %v265, 0
    %v799 = vand.u32 %v265, 2139095040
    %v800 = vshrl.u32 %v799, 23
    %v801 = vsub.s32 %v800, 127
    %v802 = vand.u32 2147483647, %v265
    %v803 = vand.u32 %v802, 8388607
    %v804 = vor.u32 %v803, 8388608
    %v805 = vsub.s32 0, %v804
    %v806 = vadd.s32 %v801, 1
    %vm807 = vcmp.gt.s32.totalorder %v806, 0
    %v808 = vsel %vm807, %v806, 0
    %v809 = vshrl.u32 %v808, 5
    %v810 = vand.u32 %v808, 31
    %v811 = vsub.s32 32, %v810
    %v812 = vshrl.u32 683565275, %v811
    %v813 = vshll.u32 683565275, %v810
    %v814 = vshrl.u32 2475754826, %v811
    %v815 = vor.u32 %v813, %v814
    %v816 = vshll.u32 2475754826, %v810
    %v817 = vshrl.u32 2131351028, %v811
    %v818 = vor.u32 %v816, %v817
    %v819 = vshll.u32 2131351028, %v810
    %v820 = vshrl.u32 2102212464, %v811
    %v821 = vor.u32 %v819, %v820
    %v822 = vshll.u32 2102212464, %v810
    %v823 = vshrl.u32 920167782, %v811
    %v824 = vor.u32 %v822, %v823
    %v825 = vshll.u32 920167782, %v810
    %v826 = vshrl.u32 1326507024, %v811
    %v827 = vor.u32 %v825, %v826
    %vm828 = vcmp.lt.s32.totalorder %v809, 1
    %vm829 = vcmp.lt.s32.totalorder %v809, 2
    %vm830 = vcmp.lt.s32.totalorder %v809, 3
    %vm831 = vcmp.lt.s32.totalorder %v809, 4
    %v832 = vsel %vm828, %v812, %v815
    %v833 = vsel %vm831, %v821, 2102212464
    %v834 = vsel %vm830, %v818, %v833
    %v835 = vsel %vm829, %v832, %v834
    %v836 = vsel %vm828, %v815, %v818
    %v837 = vsel %vm831, %v824, 920167782
    %v838 = vsel %vm830, %v821, %v837
    %v839 = vsel %vm829, %v836, %v838
    %v840 = vsel %vm828, %v818, %v821
    %v841 = vsel %vm831, %v827, 1326507024
    %v842 = vsel %vm830, %v824, %v841
    %v843 = vsel %vm829, %v840, %v842
    %v844 = vshll.u32 %v804, 8
    %v845 = vmul.u32.u64.compose %v844, %v843
    %v846 = vextract.low.u32 %v845
    %v847 = vextract.high.u32 %v845
    %v848 = vmul.u32.u64.compose %v844, %v839
    %v849 = vextract.low.u32 %v848
    %v850 = vextract.high.u32 %v848
    %v851 = vmul.u32 %v844, %v835
    %v852 = vadd.s32 %v847, %v849
    %vm853 = vc.u32 %v847, %v849
    %v854 = vadd.s32 %v850, 1
    %v855 = vsel %vm853, %v854, %v850
    %v856 = vadd.s32 %v851, %v855
    %v857 = vadd.s32 %v856, 536870912
    %v858 = vshrl.u32 %v857, 30
    %v859 = vshll.u32 %v858, 30
    %v860 = vsub.s32 %v856, %v859
    %vm861 = vcmp.lt.s32.totalorder %v860, 0
    %v862 = vsub.s32 0, %v860
    %v863 = vsel %vm861, %v862, %v860
    %v864 = vclz %v863
    %v865 = vsub.s32 %v864, 2
    %vm866 = vcmp.gt.s32.totalorder 0, %v865
    %v867 = vsel %vm866, 0, %v865
    %v868 = vsub.s32 32, %v867
    %v869 = vshll.u32 %v860, %v867
    %v870 = vshrl.u32 %v852, %v868
    %v871 = vor.u32 %v869, %v870
    %v872 = vsub.s32 4294967266, %v867
    %v873 = vadd.s32 %v872, 127
    %v874 = vshll.u32 %v873, 23
    %v875 = vor.u32 4788187, %v874
    %v876 = vand.u32 2147483647, %v875
    %v878 = vcvt.s32.f32 %v871
    %v879 = vmul.f32 %v878, %v876
    %v880 = vxor.u32 %v879, 2147483648
    %v881 = vsel %vm798, %v880, %v879
    %v882 = vsub.s32 4, %v858
    %v883 = vsel %vm798, %v882, %v858
    %v884 = vsel %vm797, %v265, %v881
    %v885 = vsel %vm797, 0, %v883
    %v886 = vcosq.f32.pop %v884
    %v887 = vsinq.f32.pop %v884
    %vm888 = vweird.f32 %v265
    %v889 = vadd.s32 %v885, 3
    %v890 = vand.u32 %v889, 3
    %vm891 = vcmp.lt.s32.totalorder %v890, 2
    %vm892 = vcmp.eq.s32.totalorder %v890, 0
    %v893 = vxor.u32 %v887, 2147483648
    %v894 = vsel %vm892, %v886, %v893
    %vm895 = vcmp.eq.s32.totalorder %v890, 2
    %v896 = vxor.u32 %v886, 2147483648
    %v897 = vsel %vm895, %v896, %v887
    %v898 = vsel %vm891, %v894, %v897
    %v899 = vsel %vm888, nan, %v898
    %v900 = vand.u32 2147483647, %v266
    %vm901 = vcmp.le.f32.partialorder %v900, 0.7853982
    %vm902 = vcmp.lt.s32.totalorder %v266, 0
    %v903 = vand.u32 %v266, 2139095040
    %v904 = vshrl.u32 %v903, 23
    %v905 = vsub.s32 %v904, 127
    %v906 = vand.u32 2147483647, %v266
    %v907 = vand.u32 %v906, 8388607
    %v908 = vor.u32 %v907, 8388608
    %v909 = vsub.s32 0, %v908
    %v910 = vadd.s32 %v905, 1
    %vm911 = vcmp.gt.s32.totalorder %v910, 0
    %v912 = vsel %vm911, %v910, 0
    %v913 = vshrl.u32 %v912, 5
    %v914 = vand.u32 %v912, 31
    %v915 = vsub.s32 32, %v914
    %v916 = vshrl.u32 683565275, %v915
    %v917 = vshll.u32 683565275, %v914
    %v918 = vshrl.u32 2475754826, %v915
    %v919 = vor.u32 %v917, %v918
    %v920 = vshll.u32 2475754826, %v914
    %v921 = vshrl.u32 2131351028, %v915
    %v922 = vor.u32 %v920, %v921
    %v923 = vshll.u32 2131351028, %v914
    %v924 = vshrl.u32 2102212464, %v915
    %v925 = vor.u32 %v923, %v924
    %v926 = vshll.u32 2102212464, %v914
    %v927 = vshrl.u32 920167782, %v915
    %v928 = vor.u32 %v926, %v927
    %v929 = vshll.u32 920167782, %v914
    %v930 = vshrl.u32 1326507024, %v915
    %v931 = vor.u32 %v929, %v930
    %vm932 = vcmp.lt.s32.totalorder %v913, 1
    %vm933 = vcmp.lt.s32.totalorder %v913, 2
    %vm934 = vcmp.lt.s32.totalorder %v913, 3
    %vm935 = vcmp.lt.s32.totalorder %v913, 4
    %v936 = vsel %vm932, %v916, %v919
    %v937 = vsel %vm935, %v925, 2102212464
    %v938 = vsel %vm934, %v922, %v937
    %v939 = vsel %vm933, %v936, %v938
    %v940 = vsel %vm932, %v919, %v922
    %v941 = vsel %vm935, %v928, 920167782
    %v942 = vsel %vm934, %v925, %v941
    %v943 = vsel %vm933, %v940, %v942
    %v944 = vsel %vm932, %v922, %v925
    %v945 = vsel %vm935, %v931, 1326507024
    %v946 = vsel %vm934, %v928, %v945
    %v947 = vsel %vm933, %v944, %v946
    %v948 = vshll.u32 %v908, 8
    %v949 = vmul.u32.u64.compose %v948, %v947
    %v950 = vextract.low.u32 %v949
    %v951 = vextract.high.u32 %v949
    %v952 = vmul.u32.u64.compose %v948, %v943
    %v953 = vextract.low.u32 %v952
    %v954 = vextract.high.u32 %v952
    %v955 = vmul.u32 %v948, %v939
    %v956 = vadd.s32 %v951, %v953
    %vm957 = vc.u32 %v951, %v953
    %v958 = vadd.s32 %v954, 1
    %v959 = vsel %vm957, %v958, %v954
    %v960 = vadd.s32 %v955, %v959
    %v961 = vadd.s32 %v960, 536870912
    %v962 = vshrl.u32 %v961, 30
    %v963 = vshll.u32 %v962, 30
    %v964 = vsub.s32 %v960, %v963
    %vm965 = vcmp.lt.s32.totalorder %v964, 0
    %v966 = vsub.s32 0, %v964
    %v967 = vsel %vm965, %v966, %v964
    %v968 = vclz %v967
    %v969 = vsub.s32 %v968, 2
    %vm970 = vcmp.gt.s32.totalorder 0, %v969
    %v971 = vsel %vm970, 0, %v969
    %v972 = vsub.s32 32, %v971
    %v973 = vshll.u32 %v964, %v971
    %v974 = vshrl.u32 %v956, %v972
    %v975 = vor.u32 %v973, %v974
    %v976 = vsub.s32 4294967266, %v971
    %v977 = vadd.s32 %v976, 127
    %v978 = vshll.u32 %v977, 23
    %v979 = vor.u32 4788187, %v978
    %v980 = vand.u32 2147483647, %v979
    %v982 = vcvt.s32.f32 %v975
    %v983 = vmul.f32 %v982, %v980
    %v984 = vxor.u32 %v983, 2147483648
    %v985 = vsel %vm902, %v984, %v983
    %v986 = vsub.s32 4, %v962
    %v987 = vsel %vm902, %v986, %v962
    %v988 = vsel %vm901, %v266, %v985
    %v989 = vsel %vm901, 0, %v987
    %v990 = vcosq.f32.pop %v988
    %v991 = vsinq.f32.pop %v988
    %vm992 = vweird.f32 %v266
    %v993 = vadd.s32 %v989, 3
    %v994 = vand.u32 %v993, 3
    %vm995 = vcmp.lt.s32.totalorder %v994, 2
    %vm996 = vcmp.eq.s32.totalorder %v994, 0
    %v997 = vxor.u32 %v991, 2147483648
    %v998 = vsel %vm996, %v990, %v997
    %vm999 = vcmp.eq.s32.totalorder %v994, 2
    %v1000 = vxor.u32 %v990, 2147483648
    %v1001 = vsel %vm999, %v1000, %v991
    %v1002 = vsel %vm995, %v998, %v1001
    %v1003 = vsel %vm992, nan, %v1002
    %v1004 = vand.u32 2147483647, %v267
    %vm1005 = vcmp.le.f32.partialorder %v1004, 0.7853982
    %vm1006 = vcmp.lt.s32.totalorder %v267, 0
    %v1007 = vand.u32 %v267, 2139095040
    %v1008 = vshrl.u32 %v1007, 23
    %v1009 = vsub.s32 %v1008, 127
    %v1010 = vand.u32 2147483647, %v267
    %v1011 = vand.u32 %v1010, 8388607
    %v1012 = vor.u32 %v1011, 8388608
    %v1013 = vsub.s32 0, %v1012
    %v1014 = vadd.s32 %v1009, 1
    %vm1015 = vcmp.gt.s32.totalorder %v1014, 0
    %v1016 = vsel %vm1015, %v1014, 0
    %v1017 = vshrl.u32 %v1016, 5
    %v1018 = vand.u32 %v1016, 31
    %v1019 = vsub.s32 32, %v1018
    %v1020 = vshrl.u32 683565275, %v1019
    %v1021 = vshll.u32 683565275, %v1018
    %v1022 = vshrl.u32 2475754826, %v1019
    %v1023 = vor.u32 %v1021, %v1022
    %v1024 = vshll.u32 2475754826, %v1018
    %v1025 = vshrl.u32 2131351028, %v1019
    %v1026 = vor.u32 %v1024, %v1025
    %v1027 = vshll.u32 2131351028, %v1018
    %v1028 = vshrl.u32 2102212464, %v1019
    %v1029 = vor.u32 %v1027, %v1028
    %v1030 = vshll.u32 2102212464, %v1018
    %v1031 = vshrl.u32 920167782, %v1019
    %v1032 = vor.u32 %v1030, %v1031
    %v1033 = vshll.u32 920167782, %v1018
    %v1034 = vshrl.u32 1326507024, %v1019
    %v1035 = vor.u32 %v1033, %v1034
    %vm1036 = vcmp.lt.s32.totalorder %v1017, 1
    %vm1037 = vcmp.lt.s32.totalorder %v1017, 2
    %vm1038 = vcmp.lt.s32.totalorder %v1017, 3
    %vm1039 = vcmp.lt.s32.totalorder %v1017, 4
    %v1040 = vsel %vm1036, %v1020, %v1023
    %v1041 = vsel %vm1039, %v1029, 2102212464
    %v1042 = vsel %vm1038, %v1026, %v1041
    %v1043 = vsel %vm1037, %v1040, %v1042
    %v1044 = vsel %vm1036, %v1023, %v1026
    %v1045 = vsel %vm1039, %v1032, 920167782
    %v1046 = vsel %vm1038, %v1029, %v1045
    %v1047 = vsel %vm1037, %v1044, %v1046
    %v1048 = vsel %vm1036, %v1026, %v1029
    %v1049 = vsel %vm1039, %v1035, 1326507024
    %v1050 = vsel %vm1038, %v1032, %v1049
    %v1051 = vsel %vm1037, %v1048, %v1050
    %v1052 = vshll.u32 %v1012, 8
    %v1053 = vmul.u32.u64.compose %v1052, %v1051
    %v1054 = vextract.low.u32 %v1053
    %v1055 = vextract.high.u32 %v1053
    %v1056 = vmul.u32.u64.compose %v1052, %v1047
    %v1057 = vextract.low.u32 %v1056
    %v1058 = vextract.high.u32 %v1056
    %v1059 = vmul.u32 %v1052, %v1043
    %v1060 = vadd.s32 %v1055, %v1057
    %vm1061 = vc.u32 %v1055, %v1057
    %v1062 = vadd.s32 %v1058, 1
    %v1063 = vsel %vm1061, %v1062, %v1058
    %v1064 = vadd.s32 %v1059, %v1063
    %v1065 = vadd.s32 %v1064, 536870912
    %v1066 = vshrl.u32 %v1065, 30
    %v1067 = vshll.u32 %v1066, 30
    %v1068 = vsub.s32 %v1064, %v1067
    %vm1069 = vcmp.lt.s32.totalorder %v1068, 0
    %v1070 = vsub.s32 0, %v1068
    %v1071 = vsel %vm1069, %v1070, %v1068
    %v1072 = vclz %v1071
    %v1073 = vsub.s32 %v1072, 2
    %vm1074 = vcmp.gt.s32.totalorder 0, %v1073
    %v1075 = vsel %vm1074, 0, %v1073
    %v1076 = vsub.s32 32, %v1075
    %v1077 = vshll.u32 %v1068, %v1075
    %v1078 = vshrl.u32 %v1060, %v1076
    %v1079 = vor.u32 %v1077, %v1078
    %v1080 = vsub.s32 4294967266, %v1075
    %v1081 = vadd.s32 %v1080, 127
    %v1082 = vshll.u32 %v1081, 23
    %v1083 = vor.u32 4788187, %v1082
    %v1084 = vand.u32 2147483647, %v1083
    %v1086 = vcvt.s32.f32 %v1079
    %v1087 = vmul.f32 %v1086, %v1084
    %v1088 = vxor.u32 %v1087, 2147483648
    %v1089 = vsel %vm1006, %v1088, %v1087
    %v1090 = vsub.s32 4, %v1066
    %v1091 = vsel %vm1006, %v1090, %v1066
    %v1092 = vsel %vm1005, %v267, %v1089
    %v1093 = vsel %vm1005, 0, %v1091
    %v1094 = vcosq.f32.pop %v1092
    %v1095 = vsinq.f32.pop %v1092
    %vm1096 = vweird.f32 %v267
    %v1097 = vadd.s32 %v1093, 3
    %v1098 = vand.u32 %v1097, 3
    %vm1099 = vcmp.lt.s32.totalorder %v1098, 2
    %vm1100 = vcmp.eq.s32.totalorder %v1098, 0
    %v1101 = vxor.u32 %v1095, 2147483648
    %v1102 = vsel %vm1100, %v1094, %v1101
    %vm1103 = vcmp.eq.s32.totalorder %v1098, 2
    %v1104 = vxor.u32 %v1094, 2147483648
    %v1105 = vsel %vm1103, %v1104, %v1095
    %v1106 = vsel %vm1099, %v1102, %v1105
    %v1107 = vsel %vm1096, nan, %v1106
    %v1108 = vand.u32 2147483647, %v268
    %vm1109 = vcmp.le.f32.partialorder %v1108, 0.7853982
    %vm1110 = vcmp.lt.s32.totalorder %v268, 0
    %v1111 = vand.u32 %v268, 2139095040
    %v1112 = vshrl.u32 %v1111, 23
    %v1113 = vsub.s32 %v1112, 127
    %v1114 = vand.u32 2147483647, %v268
    %v1115 = vand.u32 %v1114, 8388607
    %v1116 = vor.u32 %v1115, 8388608
    %v1117 = vsub.s32 0, %v1116
    %v1118 = vadd.s32 %v1113, 1
    %vm1119 = vcmp.gt.s32.totalorder %v1118, 0
    %v1120 = vsel %vm1119, %v1118, 0
    %v1121 = vshrl.u32 %v1120, 5
    %v1122 = vand.u32 %v1120, 31
    %v1123 = vsub.s32 32, %v1122
    %v1124 = vshrl.u32 683565275, %v1123
    %v1125 = vshll.u32 683565275, %v1122
    %v1126 = vshrl.u32 2475754826, %v1123
    %v1127 = vor.u32 %v1125, %v1126
    %v1128 = vshll.u32 2475754826, %v1122
    %v1129 = vshrl.u32 2131351028, %v1123
    %v1130 = vor.u32 %v1128, %v1129
    %v1131 = vshll.u32 2131351028, %v1122
    %v1132 = vshrl.u32 2102212464, %v1123
    %v1133 = vor.u32 %v1131, %v1132
    %v1134 = vshll.u32 2102212464, %v1122
    %v1135 = vshrl.u32 920167782, %v1123
    %v1136 = vor.u32 %v1134, %v1135
    %v1137 = vshll.u32 920167782, %v1122
    %v1138 = vshrl.u32 1326507024, %v1123
    %v1139 = vor.u32 %v1137, %v1138
    %vm1140 = vcmp.lt.s32.totalorder %v1121, 1
    %vm1141 = vcmp.lt.s32.totalorder %v1121, 2
    %vm1142 = vcmp.lt.s32.totalorder %v1121, 3
    %vm1143 = vcmp.lt.s32.totalorder %v1121, 4
    %v1144 = vsel %vm1140, %v1124, %v1127
    %v1145 = vsel %vm1143, %v1133, 2102212464
    %v1146 = vsel %vm1142, %v1130, %v1145
    %v1147 = vsel %vm1141, %v1144, %v1146
    %v1148 = vsel %vm1140, %v1127, %v1130
    %v1149 = vsel %vm1143, %v1136, 920167782
    %v1150 = vsel %vm1142, %v1133, %v1149
    %v1151 = vsel %vm1141, %v1148, %v1150
    %v1152 = vsel %vm1140, %v1130, %v1133
    %v1153 = vsel %vm1143, %v1139, 1326507024
    %v1154 = vsel %vm1142, %v1136, %v1153
    %v1155 = vsel %vm1141, %v1152, %v1154
    %v1156 = vshll.u32 %v1116, 8
    %v1157 = vmul.u32.u64.compose %v1156, %v1155
    %v1158 = vextract.low.u32 %v1157
    %v1159 = vextract.high.u32 %v1157
    %v1160 = vmul.u32.u64.compose %v1156, %v1151
    %v1161 = vextract.low.u32 %v1160
    %v1162 = vextract.high.u32 %v1160
    %v1163 = vmul.u32 %v1156, %v1147
    %v1164 = vadd.s32 %v1159, %v1161
    %vm1165 = vc.u32 %v1159, %v1161
    %v1166 = vadd.s32 %v1162, 1
    %v1167 = vsel %vm1165, %v1166, %v1162
    %v1168 = vadd.s32 %v1163, %v1167
    %v1169 = vadd.s32 %v1168, 536870912
    %v1170 = vshrl.u32 %v1169, 30
    %v1171 = vshll.u32 %v1170, 30
    %v1172 = vsub.s32 %v1168, %v1171
    %vm1173 = vcmp.lt.s32.totalorder %v1172, 0
    %v1174 = vsub.s32 0, %v1172
    %v1175 = vsel %vm1173, %v1174, %v1172
    %v1176 = vclz %v1175
    %v1177 = vsub.s32 %v1176, 2
    %vm1178 = vcmp.gt.s32.totalorder 0, %v1177
    %v1179 = vsel %vm1178, 0, %v1177
    %v1180 = vsub.s32 32, %v1179
    %v1181 = vshll.u32 %v1172, %v1179
    %v1182 = vshrl.u32 %v1164, %v1180
    %v1183 = vor.u32 %v1181, %v1182
    %v1184 = vsub.s32 4294967266, %v1179
    %v1185 = vadd.s32 %v1184, 127
    %v1186 = vshll.u32 %v1185, 23
    %v1187 = vor.u32 4788187, %v1186
    %v1188 = vand.u32 2147483647, %v1187
    %v1190 = vcvt.s32.f32 %v1183
    %v1191 = vmul.f32 %v1190, %v1188
    %v1192 = vxor.u32 %v1191, 2147483648
    %v1193 = vsel %vm1110, %v1192, %v1191
    %v1194 = vsub.s32 4, %v1170
    %v1195 = vsel %vm1110, %v1194, %v1170
    %v1196 = vsel %vm1109, %v268, %v1193
    %v1197 = vsel %vm1109, 0, %v1195
    %v1198 = vcosq.f32.pop %v1196
    %v1199 = vsinq.f32.pop %v1196
    %vm1200 = vweird.f32 %v268
    %v1201 = vadd.s32 %v1197, 3
    %v1202 = vand.u32 %v1201, 3
    %vm1203 = vcmp.lt.s32.totalorder %v1202, 2
    %vm1204 = vcmp.eq.s32.totalorder %v1202, 0
    %v1205 = vxor.u32 %v1199, 2147483648
    %v1206 = vsel %vm1204, %v1198, %v1205
    %vm1207 = vcmp.eq.s32.totalorder %v1202, 2
    %v1208 = vxor.u32 %v1198, 2147483648
    %v1209 = vsel %vm1207, %v1208, %v1199
    %v1210 = vsel %vm1203, %v1206, %v1209
    %v1211 = vsel %vm1200, nan, %v1210
    %v1212 = vand.u32 2147483647, %v269
    %vm1213 = vcmp.le.f32.partialorder %v1212, 0.7853982
    %vm1214 = vcmp.lt.s32.totalorder %v269, 0
    %v1215 = vand.u32 %v269, 2139095040
    %v1216 = vshrl.u32 %v1215, 23
    %v1217 = vsub.s32 %v1216, 127
    %v1218 = vand.u32 2147483647, %v269
    %v1219 = vand.u32 %v1218, 8388607
    %v1220 = vor.u32 %v1219, 8388608
    %v1221 = vsub.s32 0, %v1220
    %v1222 = vadd.s32 %v1217, 1
    %vm1223 = vcmp.gt.s32.totalorder %v1222, 0
    %v1224 = vsel %vm1223, %v1222, 0
    %v1225 = vshrl.u32 %v1224, 5
    %v1226 = vand.u32 %v1224, 31
    %v1227 = vsub.s32 32, %v1226
    %v1228 = vshrl.u32 683565275, %v1227
    %v1229 = vshll.u32 683565275, %v1226
    %v1230 = vshrl.u32 2475754826, %v1227
    %v1231 = vor.u32 %v1229, %v1230
    %v1232 = vshll.u32 2475754826, %v1226
    %v1233 = vshrl.u32 2131351028, %v1227
    %v1234 = vor.u32 %v1232, %v1233
    %v1235 = vshll.u32 2131351028, %v1226
    %v1236 = vshrl.u32 2102212464, %v1227
    %v1237 = vor.u32 %v1235, %v1236
    %v1238 = vshll.u32 2102212464, %v1226
    %v1239 = vshrl.u32 920167782, %v1227
    %v1240 = vor.u32 %v1238, %v1239
    %v1241 = vshll.u32 920167782, %v1226
    %v1242 = vshrl.u32 1326507024, %v1227
    %v1243 = vor.u32 %v1241, %v1242
    %vm1244 = vcmp.lt.s32.totalorder %v1225, 1
    %vm1245 = vcmp.lt.s32.totalorder %v1225, 2
    %vm1246 = vcmp.lt.s32.totalorder %v1225, 3
    %vm1247 = vcmp.lt.s32.totalorder %v1225, 4
    %v1248 = vsel %vm1244, %v1228, %v1231
    %v1249 = vsel %vm1247, %v1237, 2102212464
    %v1250 = vsel %vm1246, %v1234, %v1249
    %v1251 = vsel %vm1245, %v1248, %v1250
    %v1252 = vsel %vm1244, %v1231, %v1234
    %v1253 = vsel %vm1247, %v1240, 920167782
    %v1254 = vsel %vm1246, %v1237, %v1253
    %v1255 = vsel %vm1245, %v1252, %v1254
    %v1256 = vsel %vm1244, %v1234, %v1237
    %v1257 = vsel %vm1247, %v1243, 1326507024
    %v1258 = vsel %vm1246, %v1240, %v1257
    %v1259 = vsel %vm1245, %v1256, %v1258
    %v1260 = vshll.u32 %v1220, 8
    %v1261 = vmul.u32.u64.compose %v1260, %v1259
    %v1262 = vextract.low.u32 %v1261
    %v1263 = vextract.high.u32 %v1261
    %v1264 = vmul.u32.u64.compose %v1260, %v1255
    %v1265 = vextract.low.u32 %v1264
    %v1266 = vextract.high.u32 %v1264
    %v1267 = vmul.u32 %v1260, %v1251
    %v1268 = vadd.s32 %v1263, %v1265
    %vm1269 = vc.u32 %v1263, %v1265
    %v1270 = vadd.s32 %v1266, 1
    %v1271 = vsel %vm1269, %v1270, %v1266
    %v1272 = vadd.s32 %v1267, %v1271
    %v1273 = vadd.s32 %v1272, 536870912
    %v1274 = vshrl.u32 %v1273, 30
    %v1275 = vshll.u32 %v1274, 30
    %v1276 = vsub.s32 %v1272, %v1275
    %vm1277 = vcmp.lt.s32.totalorder %v1276, 0
    %v1278 = vsub.s32 0, %v1276
    %v1279 = vsel %vm1277, %v1278, %v1276
    %v1280 = vclz %v1279
    %v1281 = vsub.s32 %v1280, 2
    %vm1282 = vcmp.gt.s32.totalorder 0, %v1281
    %v1283 = vsel %vm1282, 0, %v1281
    %v1284 = vsub.s32 32, %v1283
    %v1285 = vshll.u32 %v1276, %v1283
    %v1286 = vshrl.u32 %v1268, %v1284
    %v1287 = vor.u32 %v1285, %v1286
    %v1288 = vsub.s32 4294967266, %v1283
    %v1289 = vadd.s32 %v1288, 127
    %v1290 = vshll.u32 %v1289, 23
    %v1291 = vor.u32 4788187, %v1290
    %v1292 = vand.u32 2147483647, %v1291
    %v1294 = vcvt.s32.f32 %v1287
    %v1295 = vmul.f32 %v1294, %v1292
    %v1296 = vxor.u32 %v1295, 2147483648
    %v1297 = vsel %vm1214, %v1296, %v1295
    %v1298 = vsub.s32 4, %v1274
    %v1299 = vsel %vm1214, %v1298, %v1274
    %v1300 = vsel %vm1213, %v269, %v1297
    %v1301 = vsel %vm1213, 0, %v1299
    %v1302 = vcosq.f32.pop %v1300
    %v1303 = vsinq.f32.pop %v1300
    %vm1304 = vweird.f32 %v269
    %v1305 = vadd.s32 %v1301, 3
    %v1306 = vand.u32 %v1305, 3
    %vm1307 = vcmp.lt.s32.totalorder %v1306, 2
    %vm1308 = vcmp.eq.s32.totalorder %v1306, 0
    %v1309 = vxor.u32 %v1303, 2147483648
    %v1310 = vsel %vm1308, %v1302, %v1309
    %vm1311 = vcmp.eq.s32.totalorder %v1306, 2
    %v1312 = vxor.u32 %v1302, 2147483648
    %v1313 = vsel %vm1311, %v1312, %v1303
    %v1314 = vsel %vm1307, %v1310, %v1313
    %v1315 = vsel %vm1304, nan, %v1314
    %v1316 = vand.u32 2147483647, %v270
    %vm1317 = vcmp.le.f32.partialorder %v1316, 0.7853982
    %vm1318 = vcmp.lt.s32.totalorder %v270, 0
    %v1319 = vand.u32 %v270, 2139095040
    %v1320 = vshrl.u32 %v1319, 23
    %v1321 = vsub.s32 %v1320, 127
    %v1322 = vand.u32 2147483647, %v270
    %v1323 = vand.u32 %v1322, 8388607
    %v1324 = vor.u32 %v1323, 8388608
    %v1325 = vsub.s32 0, %v1324
    %v1326 = vadd.s32 %v1321, 1
    %vm1327 = vcmp.gt.s32.totalorder %v1326, 0
    %v1328 = vsel %vm1327, %v1326, 0
    %v1329 = vshrl.u32 %v1328, 5
    %v1330 = vand.u32 %v1328, 31
    %v1331 = vsub.s32 32, %v1330
    %v1332 = vshrl.u32 683565275, %v1331
    %v1333 = vshll.u32 683565275, %v1330
    %v1334 = vshrl.u32 2475754826, %v1331
    %v1335 = vor.u32 %v1333, %v1334
    %v1336 = vshll.u32 2475754826, %v1330
    %v1337 = vshrl.u32 2131351028, %v1331
    %v1338 = vor.u32 %v1336, %v1337
    %v1339 = vshll.u32 2131351028, %v1330
    %v1340 = vshrl.u32 2102212464, %v1331
    %v1341 = vor.u32 %v1339, %v1340
    %v1342 = vshll.u32 2102212464, %v1330
    %v1343 = vshrl.u32 920167782, %v1331
    %v1344 = vor.u32 %v1342, %v1343
    %v1345 = vshll.u32 920167782, %v1330
    %v1346 = vshrl.u32 1326507024, %v1331
    %v1347 = vor.u32 %v1345, %v1346
    %vm1348 = vcmp.lt.s32.totalorder %v1329, 1
    %vm1349 = vcmp.lt.s32.totalorder %v1329, 2
    %vm1350 = vcmp.lt.s32.totalorder %v1329, 3
    %vm1351 = vcmp.lt.s32.totalorder %v1329, 4
    %v1352 = vsel %vm1348, %v1332, %v1335
    %v1353 = vsel %vm1351, %v1341, 2102212464
    %v1354 = vsel %vm1350, %v1338, %v1353
    %v1355 = vsel %vm1349, %v1352, %v1354
    %v1356 = vsel %vm1348, %v1335, %v1338
    %v1357 = vsel %vm1351, %v1344, 920167782
    %v1358 = vsel %vm1350, %v1341, %v1357
    %v1359 = vsel %vm1349, %v1356, %v1358
    %v1360 = vsel %vm1348, %v1338, %v1341
    %v1361 = vsel %vm1351, %v1347, 1326507024
    %v1362 = vsel %vm1350, %v1344, %v1361
    %v1363 = vsel %vm1349, %v1360, %v1362
    %v1364 = vshll.u32 %v1324, 8
    %v1365 = vmul.u32.u64.compose %v1364, %v1363
    %v1366 = vextract.low.u32 %v1365
    %v1367 = vextract.high.u32 %v1365
    %v1368 = vmul.u32.u64.compose %v1364, %v1359
    %v1369 = vextract.low.u32 %v1368
    %v1370 = vextract.high.u32 %v1368
    %v1371 = vmul.u32 %v1364, %v1355
    %v1372 = vadd.s32 %v1367, %v1369
    %vm1373 = vc.u32 %v1367, %v1369
    %v1374 = vadd.s32 %v1370, 1
    %v1375 = vsel %vm1373, %v1374, %v1370
    %v1376 = vadd.s32 %v1371, %v1375
    %v1377 = vadd.s32 %v1376, 536870912
    %v1378 = vshrl.u32 %v1377, 30
    %v1379 = vshll.u32 %v1378, 30
    %v1380 = vsub.s32 %v1376, %v1379
    %vm1381 = vcmp.lt.s32.totalorder %v1380, 0
    %v1382 = vsub.s32 0, %v1380
    %v1383 = vsel %vm1381, %v1382, %v1380
    %v1384 = vclz %v1383
    %v1385 = vsub.s32 %v1384, 2
    %vm1386 = vcmp.gt.s32.totalorder 0, %v1385
    %v1387 = vsel %vm1386, 0, %v1385
    %v1388 = vsub.s32 32, %v1387
    %v1389 = vshll.u32 %v1380, %v1387
    %v1390 = vshrl.u32 %v1372, %v1388
    %v1391 = vor.u32 %v1389, %v1390
    %v1392 = vsub.s32 4294967266, %v1387
    %v1393 = vadd.s32 %v1392, 127
    %v1394 = vshll.u32 %v1393, 23
    %v1395 = vor.u32 4788187, %v1394
    %v1396 = vand.u32 2147483647, %v1395
    %v1398 = vcvt.s32.f32 %v1391
    %v1399 = vmul.f32 %v1398, %v1396
    %v1400 = vxor.u32 %v1399, 2147483648
    %v1401 = vsel %vm1318, %v1400, %v1399
    %v1402 = vsub.s32 4, %v1378
    %v1403 = vsel %vm1318, %v1402, %v1378
    %v1404 = vsel %vm1317, %v270, %v1401
    %v1405 = vsel %vm1317, 0, %v1403
    %v1406 = vcosq.f32.pop %v1404
    %v1407 = vsinq.f32.pop %v1404
    %vm1408 = vweird.f32 %v270
    %v1409 = vadd.s32 %v1405, 3
    %v1410 = vand.u32 %v1409, 3
    %vm1411 = vcmp.lt.s32.totalorder %v1410, 2
    %vm1412 = vcmp.eq.s32.totalorder %v1410, 0
    %v1413 = vxor.u32 %v1407, 2147483648
    %v1414 = vsel %vm1412, %v1406, %v1413
    %vm1415 = vcmp.eq.s32.totalorder %v1410, 2
    %v1416 = vxor.u32 %v1406, 2147483648
    %v1417 = vsel %vm1415, %v1416, %v1407
    %v1418 = vsel %vm1411, %v1414, %v1417
    %v1419 = vsel %vm1408, nan, %v1418
    %v1420 = vand.u32 2147483647, %v271
    %vm1421 = vcmp.le.f32.partialorder %v1420, 0.7853982
    %vm1422 = vcmp.lt.s32.totalorder %v271, 0
    %v1423 = vand.u32 %v271, 2139095040
    %v1424 = vshrl.u32 %v1423, 23
    %v1425 = vsub.s32 %v1424, 127
    %v1426 = vand.u32 2147483647, %v271
    %v1427 = vand.u32 %v1426, 8388607
    %v1428 = vor.u32 %v1427, 8388608
    %v1429 = vsub.s32 0, %v1428
    %v1430 = vadd.s32 %v1425, 1
    %vm1431 = vcmp.gt.s32.totalorder %v1430, 0
    %v1432 = vsel %vm1431, %v1430, 0
    %v1433 = vshrl.u32 %v1432, 5
    %v1434 = vand.u32 %v1432, 31
    %v1435 = vsub.s32 32, %v1434
    %v1436 = vshrl.u32 683565275, %v1435
    %v1437 = vshll.u32 683565275, %v1434
    %v1438 = vshrl.u32 2475754826, %v1435
    %v1439 = vor.u32 %v1437, %v1438
    %v1440 = vshll.u32 2475754826, %v1434
    %v1441 = vshrl.u32 2131351028, %v1435
    %v1442 = vor.u32 %v1440, %v1441
    %v1443 = vshll.u32 2131351028, %v1434
    %v1444 = vshrl.u32 2102212464, %v1435
    %v1445 = vor.u32 %v1443, %v1444
    %v1446 = vshll.u32 2102212464, %v1434
    %v1447 = vshrl.u32 920167782, %v1435
    %v1448 = vor.u32 %v1446, %v1447
    %v1449 = vshll.u32 920167782, %v1434
    %v1450 = vshrl.u32 1326507024, %v1435
    %v1451 = vor.u32 %v1449, %v1450
    %vm1452 = vcmp.lt.s32.totalorder %v1433, 1
    %vm1453 = vcmp.lt.s32.totalorder %v1433, 2
    %vm1454 = vcmp.lt.s32.totalorder %v1433, 3
    %vm1455 = vcmp.lt.s32.totalorder %v1433, 4
    %v1456 = vsel %vm1452, %v1436, %v1439
    %v1457 = vsel %vm1455, %v1445, 2102212464
    %v1458 = vsel %vm1454, %v1442, %v1457
    %v1459 = vsel %vm1453, %v1456, %v1458
    %v1460 = vsel %vm1452, %v1439, %v1442
    %v1461 = vsel %vm1455, %v1448, 920167782
    %v1462 = vsel %vm1454, %v1445, %v1461
    %v1463 = vsel %vm1453, %v1460, %v1462
    %v1464 = vsel %vm1452, %v1442, %v1445
    %v1465 = vsel %vm1455, %v1451, 1326507024
    %v1466 = vsel %vm1454, %v1448, %v1465
    %v1467 = vsel %vm1453, %v1464, %v1466
    %v1468 = vshll.u32 %v1428, 8
    %v1469 = vmul.u32.u64.compose %v1468, %v1467
    %v1470 = vextract.low.u32 %v1469
    %v1471 = vextract.high.u32 %v1469
    %v1472 = vmul.u32.u64.compose %v1468, %v1463
    %v1473 = vextract.low.u32 %v1472
    %v1474 = vextract.high.u32 %v1472
    %v1475 = vmul.u32 %v1468, %v1459
    %v1476 = vadd.s32 %v1471, %v1473
    %vm1477 = vc.u32 %v1471, %v1473
    %v1478 = vadd.s32 %v1474, 1
    %v1479 = vsel %vm1477, %v1478, %v1474
    %v1480 = vadd.s32 %v1475, %v1479
    %v1481 = vadd.s32 %v1480, 536870912
    %v1482 = vshrl.u32 %v1481, 30
    %v1483 = vshll.u32 %v1482, 30
    %v1484 = vsub.s32 %v1480, %v1483
    %vm1485 = vcmp.lt.s32.totalorder %v1484, 0
    %v1486 = vsub.s32 0, %v1484
    %v1487 = vsel %vm1485, %v1486, %v1484
    %v1488 = vclz %v1487
    %v1489 = vsub.s32 %v1488, 2
    %vm1490 = vcmp.gt.s32.totalorder 0, %v1489
    %v1491 = vsel %vm1490, 0, %v1489
    %v1492 = vsub.s32 32, %v1491
    %v1493 = vshll.u32 %v1484, %v1491
    %v1494 = vshrl.u32 %v1476, %v1492
    %v1495 = vor.u32 %v1493, %v1494
    %v1496 = vsub.s32 4294967266, %v1491
    %v1497 = vadd.s32 %v1496, 127
    %v1498 = vshll.u32 %v1497, 23
    %v1499 = vor.u32 4788187, %v1498
    %v1500 = vand.u32 2147483647, %v1499
    %v1502 = vcvt.s32.f32 %v1495
    %v1503 = vmul.f32 %v1502, %v1500
    %v1504 = vxor.u32 %v1503, 2147483648
    %v1505 = vsel %vm1422, %v1504, %v1503
    %v1506 = vsub.s32 4, %v1482
    %v1507 = vsel %vm1422, %v1506, %v1482
    %v1508 = vsel %vm1421, %v271, %v1505
    %v1509 = vsel %vm1421, 0, %v1507
    %v1510 = vcosq.f32.pop %v1508
    %v1511 = vsinq.f32.pop %v1508
    %vm1512 = vweird.f32 %v271
    %v1513 = vadd.s32 %v1509, 3
    %v1514 = vand.u32 %v1513, 3
    %vm1515 = vcmp.lt.s32.totalorder %v1514, 2
    %vm1516 = vcmp.eq.s32.totalorder %v1514, 0
    %v1517 = vxor.u32 %v1511, 2147483648
    %v1518 = vsel %vm1516, %v1510, %v1517
    %vm1519 = vcmp.eq.s32.totalorder %v1514, 2
    %v1520 = vxor.u32 %v1510, 2147483648
    %v1521 = vsel %vm1519, %v1520, %v1511
    %v1522 = vsel %vm1515, %v1518, %v1521
    %v1523 = vsel %vm1512, nan, %v1522
    %v1524 = vand.u32 2147483647, %v272
    %vm1525 = vcmp.le.f32.partialorder %v1524, 0.7853982
    %vm1526 = vcmp.lt.s32.totalorder %v272, 0
    %v1527 = vand.u32 %v272, 2139095040
    %v1528 = vshrl.u32 %v1527, 23
    %v1529 = vsub.s32 %v1528, 127
    %v1530 = vand.u32 2147483647, %v272
    %v1531 = vand.u32 %v1530, 8388607
    %v1532 = vor.u32 %v1531, 8388608
    %v1533 = vsub.s32 0, %v1532
    %v1534 = vadd.s32 %v1529, 1
    %vm1535 = vcmp.gt.s32.totalorder %v1534, 0
    %v1536 = vsel %vm1535, %v1534, 0
    %v1537 = vshrl.u32 %v1536, 5
    %v1538 = vand.u32 %v1536, 31
    %v1539 = vsub.s32 32, %v1538
    %v1540 = vshrl.u32 683565275, %v1539
    %v1541 = vshll.u32 683565275, %v1538
    %v1542 = vshrl.u32 2475754826, %v1539
    %v1543 = vor.u32 %v1541, %v1542
    %v1544 = vshll.u32 2475754826, %v1538
    %v1545 = vshrl.u32 2131351028, %v1539
    %v1546 = vor.u32 %v1544, %v1545
    %v1547 = vshll.u32 2131351028, %v1538
    %v1548 = vshrl.u32 2102212464, %v1539
    %v1549 = vor.u32 %v1547, %v1548
    %v1550 = vshll.u32 2102212464, %v1538
    %v1551 = vshrl.u32 920167782, %v1539
    %v1552 = vor.u32 %v1550, %v1551
    %v1553 = vshll.u32 920167782, %v1538
    %v1554 = vshrl.u32 1326507024, %v1539
    %v1555 = vor.u32 %v1553, %v1554
    %vm1556 = vcmp.lt.s32.totalorder %v1537, 1
    %vm1557 = vcmp.lt.s32.totalorder %v1537, 2
    %vm1558 = vcmp.lt.s32.totalorder %v1537, 3
    %vm1559 = vcmp.lt.s32.totalorder %v1537, 4
    %v1560 = vsel %vm1556, %v1540, %v1543
    %v1561 = vsel %vm1559, %v1549, 2102212464
    %v1562 = vsel %vm1558, %v1546, %v1561
    %v1563 = vsel %vm1557, %v1560, %v1562
    %v1564 = vsel %vm1556, %v1543, %v1546
    %v1565 = vsel %vm1559, %v1552, 920167782
    %v1566 = vsel %vm1558, %v1549, %v1565
    %v1567 = vsel %vm1557, %v1564, %v1566
    %v1568 = vsel %vm1556, %v1546, %v1549
    %v1569 = vsel %vm1559, %v1555, 1326507024
    %v1570 = vsel %vm1558, %v1552, %v1569
    %v1571 = vsel %vm1557, %v1568, %v1570
    %v1572 = vshll.u32 %v1532, 8
    %v1573 = vmul.u32.u64.compose %v1572, %v1571
    %v1574 = vextract.low.u32 %v1573
    %v1575 = vextract.high.u32 %v1573
    %v1576 = vmul.u32.u64.compose %v1572, %v1567
    %v1577 = vextract.low.u32 %v1576
    %v1578 = vextract.high.u32 %v1576
    %v1579 = vmul.u32 %v1572, %v1563
    %v1580 = vadd.s32 %v1575, %v1577
    %vm1581 = vc.u32 %v1575, %v1577
    %v1582 = vadd.s32 %v1578, 1
    %v1583 = vsel %vm1581, %v1582, %v1578
    %v1584 = vadd.s32 %v1579, %v1583
    %v1585 = vadd.s32 %v1584, 536870912
    %v1586 = vshrl.u32 %v1585, 30
    %v1587 = vshll.u32 %v1586, 30
    %v1588 = vsub.s32 %v1584, %v1587
    %vm1589 = vcmp.lt.s32.totalorder %v1588, 0
    %v1590 = vsub.s32 0, %v1588
    %v1591 = vsel %vm1589, %v1590, %v1588
    %v1592 = vclz %v1591
    %v1593 = vsub.s32 %v1592, 2
    %vm1594 = vcmp.gt.s32.totalorder 0, %v1593
    %v1595 = vsel %vm1594, 0, %v1593
    %v1596 = vsub.s32 32, %v1595
    %v1597 = vshll.u32 %v1588, %v1595
    %v1598 = vshrl.u32 %v1580, %v1596
    %v1599 = vor.u32 %v1597, %v1598
    %v1600 = vsub.s32 4294967266, %v1595
    %v1601 = vadd.s32 %v1600, 127
    %v1602 = vshll.u32 %v1601, 23
    %v1603 = vor.u32 4788187, %v1602
    %v1604 = vand.u32 2147483647, %v1603
    %v1606 = vcvt.s32.f32 %v1599
    %v1607 = vmul.f32 %v1606, %v1604
    %v1608 = vxor.u32 %v1607, 2147483648
    %v1609 = vsel %vm1526, %v1608, %v1607
    %v1610 = vsub.s32 4, %v1586
    %v1611 = vsel %vm1526, %v1610, %v1586
    %v1612 = vsel %vm1525, %v272, %v1609
    %v1613 = vsel %vm1525, 0, %v1611
    %v1614 = vcosq.f32.pop %v1612
    %v1615 = vsinq.f32.pop %v1612
    %vm1616 = vweird.f32 %v272
    %v1617 = vadd.s32 %v1613, 3
    %v1618 = vand.u32 %v1617, 3
    %vm1619 = vcmp.lt.s32.totalorder %v1618, 2
    %vm1620 = vcmp.eq.s32.totalorder %v1618, 0
    %v1621 = vxor.u32 %v1615, 2147483648
    %v1622 = vsel %vm1620, %v1614, %v1621
    %vm1623 = vcmp.eq.s32.totalorder %v1618, 2
    %v1624 = vxor.u32 %v1614, 2147483648
    %v1625 = vsel %vm1623, %v1624, %v1615
    %v1626 = vsel %vm1619, %v1622, %v1625
    %v1627 = vsel %vm1616, nan, %v1626
    %v1628 = vand.u32 2147483647, %v273
    %vm1629 = vcmp.le.f32.partialorder %v1628, 0.7853982
    %vm1630 = vcmp.lt.s32.totalorder %v273, 0
    %v1631 = vand.u32 %v273, 2139095040
    %v1632 = vshrl.u32 %v1631, 23
    %v1633 = vsub.s32 %v1632, 127
    %v1634 = vand.u32 2147483647, %v273
    %v1635 = vand.u32 %v1634, 8388607
    %v1636 = vor.u32 %v1635, 8388608
    %v1637 = vsub.s32 0, %v1636
    %v1638 = vadd.s32 %v1633, 1
    %vm1639 = vcmp.gt.s32.totalorder %v1638, 0
    %v1640 = vsel %vm1639, %v1638, 0
    %v1641 = vshrl.u32 %v1640, 5
    %v1642 = vand.u32 %v1640, 31
    %v1643 = vsub.s32 32, %v1642
    %v1644 = vshrl.u32 683565275, %v1643
    %v1645 = vshll.u32 683565275, %v1642
    %v1646 = vshrl.u32 2475754826, %v1643
    %v1647 = vor.u32 %v1645, %v1646
    %v1648 = vshll.u32 2475754826, %v1642
    %v1649 = vshrl.u32 2131351028, %v1643
    %v1650 = vor.u32 %v1648, %v1649
    %v1651 = vshll.u32 2131351028, %v1642
    %v1652 = vshrl.u32 2102212464, %v1643
    %v1653 = vor.u32 %v1651, %v1652
    %v1654 = vshll.u32 2102212464, %v1642
    %v1655 = vshrl.u32 920167782, %v1643
    %v1656 = vor.u32 %v1654, %v1655
    %v1657 = vshll.u32 920167782, %v1642
    %v1658 = vshrl.u32 1326507024, %v1643
    %v1659 = vor.u32 %v1657, %v1658
    %vm1660 = vcmp.lt.s32.totalorder %v1641, 1
    %vm1661 = vcmp.lt.s32.totalorder %v1641, 2
    %vm1662 = vcmp.lt.s32.totalorder %v1641, 3
    %vm1663 = vcmp.lt.s32.totalorder %v1641, 4
    %v1664 = vsel %vm1660, %v1644, %v1647
    %v1665 = vsel %vm1663, %v1653, 2102212464
    %v1666 = vsel %vm1662, %v1650, %v1665
    %v1667 = vsel %vm1661, %v1664, %v1666
    %v1668 = vsel %vm1660, %v1647, %v1650
    %v1669 = vsel %vm1663, %v1656, 920167782
    %v1670 = vsel %vm1662, %v1653, %v1669
    %v1671 = vsel %vm1661, %v1668, %v1670
    %v1672 = vsel %vm1660, %v1650, %v1653
    %v1673 = vsel %vm1663, %v1659, 1326507024
    %v1674 = vsel %vm1662, %v1656, %v1673
    %v1675 = vsel %vm1661, %v1672, %v1674
    %v1676 = vshll.u32 %v1636, 8
    %v1677 = vmul.u32.u64.compose %v1676, %v1675
    %v1678 = vextract.low.u32 %v1677
    %v1679 = vextract.high.u32 %v1677
    %v1680 = vmul.u32.u64.compose %v1676, %v1671
    %v1681 = vextract.low.u32 %v1680
    %v1682 = vextract.high.u32 %v1680
    %v1683 = vmul.u32 %v1676, %v1667
    %v1684 = vadd.s32 %v1679, %v1681
    %vm1685 = vc.u32 %v1679, %v1681
    %v1686 = vadd.s32 %v1682, 1
    %v1687 = vsel %vm1685, %v1686, %v1682
    %v1688 = vadd.s32 %v1683, %v1687
    %v1689 = vadd.s32 %v1688, 536870912
    %v1690 = vshrl.u32 %v1689, 30
    %v1691 = vshll.u32 %v1690, 30
    %v1692 = vsub.s32 %v1688, %v1691
    %vm1693 = vcmp.lt.s32.totalorder %v1692, 0
    %v1694 = vsub.s32 0, %v1692
    %v1695 = vsel %vm1693, %v1694, %v1692
    %v1696 = vclz %v1695
    %v1697 = vsub.s32 %v1696, 2
    %vm1698 = vcmp.gt.s32.totalorder 0, %v1697
    %v1699 = vsel %vm1698, 0, %v1697
    %v1700 = vsub.s32 32, %v1699
    %v1701 = vshll.u32 %v1692, %v1699
    %v1702 = vshrl.u32 %v1684, %v1700
    %v1703 = vor.u32 %v1701, %v1702
    %v1704 = vsub.s32 4294967266, %v1699
    %v1705 = vadd.s32 %v1704, 127
    %v1706 = vshll.u32 %v1705, 23
    %v1707 = vor.u32 4788187, %v1706
    %v1708 = vand.u32 2147483647, %v1707
    %v1710 = vcvt.s32.f32 %v1703
    %v1711 = vmul.f32 %v1710, %v1708
    %v1712 = vxor.u32 %v1711, 2147483648
    %v1713 = vsel %vm1630, %v1712, %v1711
    %v1714 = vsub.s32 4, %v1690
    %v1715 = vsel %vm1630, %v1714, %v1690
    %v1716 = vsel %vm1629, %v273, %v1713
    %v1717 = vsel %vm1629, 0, %v1715
    %v1718 = vcosq.f32.pop %v1716
    %v1719 = vsinq.f32.pop %v1716
    %vm1720 = vweird.f32 %v273
    %v1721 = vadd.s32 %v1717, 3
    %v1722 = vand.u32 %v1721, 3
    %vm1723 = vcmp.lt.s32.totalorder %v1722, 2
    %vm1724 = vcmp.eq.s32.totalorder %v1722, 0
    %v1725 = vxor.u32 %v1719, 2147483648
    %v1726 = vsel %vm1724, %v1718, %v1725
    %vm1727 = vcmp.eq.s32.totalorder %v1722, 2
    %v1728 = vxor.u32 %v1718, 2147483648
    %v1729 = vsel %vm1727, %v1728, %v1719
    %v1730 = vsel %vm1723, %v1726, %v1729
    %v1731 = vsel %vm1720, nan, %v1730
    %v1732 = vand.u32 2147483647, %v274
    %vm1733 = vcmp.le.f32.partialorder %v1732, 0.7853982
    %vm1734 = vcmp.lt.s32.totalorder %v274, 0
    %v1735 = vand.u32 %v274, 2139095040
    %v1736 = vshrl.u32 %v1735, 23
    %v1737 = vsub.s32 %v1736, 127
    %v1738 = vand.u32 2147483647, %v274
    %v1739 = vand.u32 %v1738, 8388607
    %v1740 = vor.u32 %v1739, 8388608
    %v1741 = vsub.s32 0, %v1740
    %v1742 = vadd.s32 %v1737, 1
    %vm1743 = vcmp.gt.s32.totalorder %v1742, 0
    %v1744 = vsel %vm1743, %v1742, 0
    %v1745 = vshrl.u32 %v1744, 5
    %v1746 = vand.u32 %v1744, 31
    %v1747 = vsub.s32 32, %v1746
    %v1748 = vshrl.u32 683565275, %v1747
    %v1749 = vshll.u32 683565275, %v1746
    %v1750 = vshrl.u32 2475754826, %v1747
    %v1751 = vor.u32 %v1749, %v1750
    %v1752 = vshll.u32 2475754826, %v1746
    %v1753 = vshrl.u32 2131351028, %v1747
    %v1754 = vor.u32 %v1752, %v1753
    %v1755 = vshll.u32 2131351028, %v1746
    %v1756 = vshrl.u32 2102212464, %v1747
    %v1757 = vor.u32 %v1755, %v1756
    %v1758 = vshll.u32 2102212464, %v1746
    %v1759 = vshrl.u32 920167782, %v1747
    %v1760 = vor.u32 %v1758, %v1759
    %v1761 = vshll.u32 920167782, %v1746
    %v1762 = vshrl.u32 1326507024, %v1747
    %v1763 = vor.u32 %v1761, %v1762
    %vm1764 = vcmp.lt.s32.totalorder %v1745, 1
    %vm1765 = vcmp.lt.s32.totalorder %v1745, 2
    %vm1766 = vcmp.lt.s32.totalorder %v1745, 3
    %vm1767 = vcmp.lt.s32.totalorder %v1745, 4
    %v1768 = vsel %vm1764, %v1748, %v1751
    %v1769 = vsel %vm1767, %v1757, 2102212464
    %v1770 = vsel %vm1766, %v1754, %v1769
    %v1771 = vsel %vm1765, %v1768, %v1770
    %v1772 = vsel %vm1764, %v1751, %v1754
    %v1773 = vsel %vm1767, %v1760, 920167782
    %v1774 = vsel %vm1766, %v1757, %v1773
    %v1775 = vsel %vm1765, %v1772, %v1774
    %v1776 = vsel %vm1764, %v1754, %v1757
    %v1777 = vsel %vm1767, %v1763, 1326507024
    %v1778 = vsel %vm1766, %v1760, %v1777
    %v1779 = vsel %vm1765, %v1776, %v1778
    %v1780 = vshll.u32 %v1740, 8
    %v1781 = vmul.u32.u64.compose %v1780, %v1779
    %v1782 = vextract.low.u32 %v1781
    %v1783 = vextract.high.u32 %v1781
    %v1784 = vmul.u32.u64.compose %v1780, %v1775
    %v1785 = vextract.low.u32 %v1784
    %v1786 = vextract.high.u32 %v1784
    %v1787 = vmul.u32 %v1780, %v1771
    %v1788 = vadd.s32 %v1783, %v1785
    %vm1789 = vc.u32 %v1783, %v1785
    %v1790 = vadd.s32 %v1786, 1
    %v1791 = vsel %vm1789, %v1790, %v1786
    %v1792 = vadd.s32 %v1787, %v1791
    %v1793 = vadd.s32 %v1792, 536870912
    %v1794 = vshrl.u32 %v1793, 30
    %v1795 = vshll.u32 %v1794, 30
    %v1796 = vsub.s32 %v1792, %v1795
    %vm1797 = vcmp.lt.s32.totalorder %v1796, 0
    %v1798 = vsub.s32 0, %v1796
    %v1799 = vsel %vm1797, %v1798, %v1796
    %v1800 = vclz %v1799
    %v1801 = vsub.s32 %v1800, 2
    %vm1802 = vcmp.gt.s32.totalorder 0, %v1801
    %v1803 = vsel %vm1802, 0, %v1801
    %v1804 = vsub.s32 32, %v1803
    %v1805 = vshll.u32 %v1796, %v1803
    %v1806 = vshrl.u32 %v1788, %v1804
    %v1807 = vor.u32 %v1805, %v1806
    %v1808 = vsub.s32 4294967266, %v1803
    %v1809 = vadd.s32 %v1808, 127
    %v1810 = vshll.u32 %v1809, 23
    %v1811 = vor.u32 4788187, %v1810
    %v1812 = vand.u32 2147483647, %v1811
    %v1814 = vcvt.s32.f32 %v1807
    %v1815 = vmul.f32 %v1814, %v1812
    %v1816 = vxor.u32 %v1815, 2147483648
    %v1817 = vsel %vm1734, %v1816, %v1815
    %v1818 = vsub.s32 4, %v1794
    %v1819 = vsel %vm1734, %v1818, %v1794
    %v1820 = vsel %vm1733, %v274, %v1817
    %v1821 = vsel %vm1733, 0, %v1819
    %v1822 = vcosq.f32.pop %v1820
    %v1823 = vsinq.f32.pop %v1820
    %vm1824 = vweird.f32 %v274
    %v1825 = vadd.s32 %v1821, 3
    %v1826 = vand.u32 %v1825, 3
    %vm1827 = vcmp.lt.s32.totalorder %v1826, 2
    %vm1828 = vcmp.eq.s32.totalorder %v1826, 0
    %v1829 = vxor.u32 %v1823, 2147483648
    %v1830 = vsel %vm1828, %v1822, %v1829
    %vm1831 = vcmp.eq.s32.totalorder %v1826, 2
    %v1832 = vxor.u32 %v1822, 2147483648
    %v1833 = vsel %vm1831, %v1832, %v1823
    %v1834 = vsel %vm1827, %v1830, %v1833
    %v1835 = vsel %vm1824, nan, %v1834
    %v1836 = vand.u32 2147483647, %v275
    %vm1837 = vcmp.le.f32.partialorder %v1836, 0.7853982
    %vm1838 = vcmp.lt.s32.totalorder %v275, 0
    %v1839 = vand.u32 %v275, 2139095040
    %v1840 = vshrl.u32 %v1839, 23
    %v1841 = vsub.s32 %v1840, 127
    %v1842 = vand.u32 2147483647, %v275
    %v1843 = vand.u32 %v1842, 8388607
    %v1844 = vor.u32 %v1843, 8388608
    %v1845 = vsub.s32 0, %v1844
    %v1846 = vadd.s32 %v1841, 1
    %vm1847 = vcmp.gt.s32.totalorder %v1846, 0
    %v1848 = vsel %vm1847, %v1846, 0
    %v1849 = vshrl.u32 %v1848, 5
    %v1850 = vand.u32 %v1848, 31
    %v1851 = vsub.s32 32, %v1850
    %v1852 = vshrl.u32 683565275, %v1851
    %v1853 = vshll.u32 683565275, %v1850
    %v1854 = vshrl.u32 2475754826, %v1851
    %v1855 = vor.u32 %v1853, %v1854
    %v1856 = vshll.u32 2475754826, %v1850
    %v1857 = vshrl.u32 2131351028, %v1851
    %v1858 = vor.u32 %v1856, %v1857
    %v1859 = vshll.u32 2131351028, %v1850
    %v1860 = vshrl.u32 2102212464, %v1851
    %v1861 = vor.u32 %v1859, %v1860
    %v1862 = vshll.u32 2102212464, %v1850
    %v1863 = vshrl.u32 920167782, %v1851
    %v1864 = vor.u32 %v1862, %v1863
    %v1865 = vshll.u32 920167782, %v1850
    %v1866 = vshrl.u32 1326507024, %v1851
    %v1867 = vor.u32 %v1865, %v1866
    %vm1868 = vcmp.lt.s32.totalorder %v1849, 1
    %vm1869 = vcmp.lt.s32.totalorder %v1849, 2
    %vm1870 = vcmp.lt.s32.totalorder %v1849, 3
    %vm1871 = vcmp.lt.s32.totalorder %v1849, 4
    %v1872 = vsel %vm1868, %v1852, %v1855
    %v1873 = vsel %vm1871, %v1861, 2102212464
    %v1874 = vsel %vm1870, %v1858, %v1873
    %v1875 = vsel %vm1869, %v1872, %v1874
    %v1876 = vsel %vm1868, %v1855, %v1858
    %v1877 = vsel %vm1871, %v1864, 920167782
    %v1878 = vsel %vm1870, %v1861, %v1877
    %v1879 = vsel %vm1869, %v1876, %v1878
    %v1880 = vsel %vm1868, %v1858, %v1861
    %v1881 = vsel %vm1871, %v1867, 1326507024
    %v1882 = vsel %vm1870, %v1864, %v1881
    %v1883 = vsel %vm1869, %v1880, %v1882
    %v1884 = vshll.u32 %v1844, 8
    %v1885 = vmul.u32.u64.compose %v1884, %v1883
    %v1886 = vextract.low.u32 %v1885
    %v1887 = vextract.high.u32 %v1885
    %v1888 = vmul.u32.u64.compose %v1884, %v1879
    %v1889 = vextract.low.u32 %v1888
    %v1890 = vextract.high.u32 %v1888
    %v1891 = vmul.u32 %v1884, %v1875
    %v1892 = vadd.s32 %v1887, %v1889
    %vm1893 = vc.u32 %v1887, %v1889
    %v1894 = vadd.s32 %v1890, 1
    %v1895 = vsel %vm1893, %v1894, %v1890
    %v1896 = vadd.s32 %v1891, %v1895
    %v1897 = vadd.s32 %v1896, 536870912
    %v1898 = vshrl.u32 %v1897, 30
    %v1899 = vshll.u32 %v1898, 30
    %v1900 = vsub.s32 %v1896, %v1899
    %vm1901 = vcmp.lt.s32.totalorder %v1900, 0
    %v1902 = vsub.s32 0, %v1900
    %v1903 = vsel %vm1901, %v1902, %v1900
    %v1904 = vclz %v1903
    %v1905 = vsub.s32 %v1904, 2
    %vm1906 = vcmp.gt.s32.totalorder 0, %v1905
    %v1907 = vsel %vm1906, 0, %v1905
    %v1908 = vsub.s32 32, %v1907
    %v1909 = vshll.u32 %v1900, %v1907
    %v1910 = vshrl.u32 %v1892, %v1908
    %v1911 = vor.u32 %v1909, %v1910
    %v1912 = vsub.s32 4294967266, %v1907
    %v1913 = vadd.s32 %v1912, 127
    %v1914 = vshll.u32 %v1913, 23
    %v1915 = vor.u32 4788187, %v1914
    %v1916 = vand.u32 2147483647, %v1915
    %v1918 = vcvt.s32.f32 %v1911
    %v1919 = vmul.f32 %v1918, %v1916
    %v1920 = vxor.u32 %v1919, 2147483648
    %v1921 = vsel %vm1838, %v1920, %v1919
    %v1922 = vsub.s32 4, %v1898
    %v1923 = vsel %vm1838, %v1922, %v1898
    %v1924 = vsel %vm1837, %v275, %v1921
    %v1925 = vsel %vm1837, 0, %v1923
    %v1926 = vcosq.f32.pop %v1924
    %v1927 = vsinq.f32.pop %v1924
    %vm1928 = vweird.f32 %v275
    %v1929 = vadd.s32 %v1925, 3
    %v1930 = vand.u32 %v1929, 3
    %vm1931 = vcmp.lt.s32.totalorder %v1930, 2
    %vm1932 = vcmp.eq.s32.totalorder %v1930, 0
    %v1933 = vxor.u32 %v1927, 2147483648
    %v1934 = vsel %vm1932, %v1926, %v1933
    %vm1935 = vcmp.eq.s32.totalorder %v1930, 2
    %v1936 = vxor.u32 %v1926, 2147483648
    %v1937 = vsel %vm1935, %v1936, %v1927
    %v1938 = vsel %vm1931, %v1934, %v1937
    %v1939 = vsel %vm1928, nan, %v1938
    %v1940 = vadd.f32 %v220, %v379
    %v1941 = vadd.f32 %v221, %v483
    %v1942 = vadd.f32 %v222, %v587
    %v1943 = vadd.f32 %v223, %v691
    %v1944 = vadd.f32 %v224, %v795
    %v1945 = vadd.f32 %v225, %v899
    %v1946 = vadd.f32 %v226, %v1003
    %v1947 = vadd.f32 %v227, %v1107
    %v1948 = vadd.f32 %v228, %v1211
    %v1949 = vadd.f32 %v229, %v1315
    %v1950 = vadd.f32 %v230, %v1419
    %v1951 = vadd.f32 %v231, %v1523
    %v1952 = vadd.f32 %v232, %v1627
    %v1953 = vadd.f32 %v233, %v1731
    %v1954 = vadd.f32 %v234, %v1835
    %v1955 = vadd.f32 %v235, %v1939
    %v1956 = vadd.f32 %v51, %v67
    %v1957 = vadd.f32 %v52, %v68
    %v1958 = vadd.f32 %v53, %v69
    %v1959 = vadd.f32 %v54, %v70
    %v1960 = vadd.f32 %v55, %v71
    %v1961 = vadd.f32 %v56, %v72
    %v1962 = vadd.f32 %v57, %v73
    %v1963 = vadd.f32 %v58, %v74
    %v1964 = vadd.f32 %v59, %v75
    %v1965 = vadd.f32 %v60, %v76
    %v1966 = vadd.f32 %v61, %v77
    %v1967 = vadd.f32 %v62, %v78
    %v1968 = vadd.f32 %v63, %v79
    %v1969 = vadd.f32 %v64, %v80
    %v1970 = vadd.f32 %v65, %v81
    %v1971 = vadd.f32 %v66, %v82
    %v1972 = vadd.f32 %v1956, %v1940
    %v1973 = vadd.f32 %v1957, %v1941
    %v1974 = vadd.f32 %v1958, %v1942
    %v1975 = vadd.f32 %v1959, %v1943
    %v1976 = vadd.f32 %v1960, %v1944
    %v1977 = vadd.f32 %v1961, %v1945
    %v1978 = vadd.f32 %v1962, %v1946
    %v1979 = vadd.f32 %v1963, %v1947
    %v1980 = vadd.f32 %v1964, %v1948
    %v1981 = vadd.f32 %v1965, %v1949
    %v1982 = vadd.f32 %v1966, %v1950
    %v1983 = vadd.f32 %v1967, %v1951
    %v1984 = vadd.f32 %v1968, %v1952
    %v1985 = vadd.f32 %v1969, %v1953
    %v1986 = vadd.f32 %v1970, %v1954
    %v1987 = vadd.f32 %v1971, %v1955
    %v1988 = vpack.c.bf16 %v52, %v51
    %v1989 = vpack.c.bf16 %v68, %v67
    %v1990 = vpack.c.bf16 %v84, %v83
    %v1991 = vpack.c.bf16 %v1941, %v1940
    %v1992 = vpack.c.bf16 %v54, %v53
    %v1993 = vpack.c.bf16 %v70, %v69
    %v1994 = vpack.c.bf16 %v86, %v85
    %v1995 = vpack.c.bf16 %v1943, %v1942
    %v1996 = vpack.c.bf16 %v56, %v55
    %v1997 = vpack.c.bf16 %v72, %v71
    %v1998 = vpack.c.bf16 %v88, %v87
    %v1999 = vpack.c.bf16 %v1945, %v1944
    %v2000 = vpack.c.bf16 %v58, %v57
    %v2001 = vpack.c.bf16 %v74, %v73
    %v2002 = vpack.c.bf16 %v90, %v89
    %v2003 = vpack.c.bf16 %v1947, %v1946
    %v2004 = vpack.c.bf16 %v60, %v59
    %v2005 = vpack.c.bf16 %v76, %v75
    %v2006 = vpack.c.bf16 %v92, %v91
    %v2007 = vpack.c.bf16 %v1949, %v1948
    %v2008 = vpack.c.bf16 %v62, %v61
    %v2009 = vpack.c.bf16 %v78, %v77
    %v2010 = vpack.c.bf16 %v94, %v93
    %v2011 = vpack.c.bf16 %v1951, %v1950
    %v2012 = vpack.c.bf16 %v64, %v63
    %v2013 = vpack.c.bf16 %v80, %v79
    %v2014 = vpack.c.bf16 %v96, %v95
    %v2015 = vpack.c.bf16 %v1953, %v1952
    %v2016 = vpack.c.bf16 %v66, %v65
    %v2017 = vpack.c.bf16 %v82, %v81
    %v2018 = vpack.c.bf16 %v98, %v97
    %v2019 = vpack.c.bf16 %v1955, %v1954
    %v2020 = vld [vmem:[%s6] sm:$0xf]
    %v2021 = vld [vmem:[%s6 + $0x4] sm:$0xf]
    %v2022 = vld [vmem:[%s6 + $0x8] sm:$0xf]
    %v2023 = vld [vmem:[%s6 + $0xc] sm:$0xf]
    %v2024 = vld [vmem:[%s6 + $0x10] sm:$0xf]
    %v2025 = vld [vmem:[%s6 + $0x14] sm:$0xf]
    %v2026 = vld [vmem:[%s6 + $0x18] sm:$0xf]
    %v2027 = vld [vmem:[%s6 + $0x1c] sm:$0xf]
    %v2028 = vld [vmem:[%s6 + $0x20] sm:$0xf]
    %v2029 = vld [vmem:[%s6 + $0x24] sm:$0xf]
    %v2030 = vld [vmem:[%s6 + $0x28] sm:$0xf]
    %v2031 = vld [vmem:[%s6 + $0x2c] sm:$0xf]
    %v2032 = vld [vmem:[%s6 + $0x30] sm:$0xf]
    %v2033 = vld [vmem:[%s6 + $0x34] sm:$0xf]
    %v2034 = vld [vmem:[%s6 + $0x38] sm:$0xf]
    %v2035 = vld [vmem:[%s6 + $0x3c] sm:$0xf]
    %v2036 = vld [vmem:[%s6 + $0x40] sm:$0xf]
    %v2037 = vld [vmem:[%s6 + $0x44] sm:$0xf]
    %v2038 = vld [vmem:[%s6 + $0x48] sm:$0xf]
    %v2039 = vld [vmem:[%s6 + $0x4c] sm:$0xf]
    %v2040 = vld [vmem:[%s6 + $0x50] sm:$0xf]
    %v2041 = vld [vmem:[%s6 + $0x54] sm:$0xf]
    %v2042 = vld [vmem:[%s6 + $0x58] sm:$0xf]
    %v2043 = vld [vmem:[%s6 + $0x5c] sm:$0xf]
    %v2044 = vld [vmem:[%s6 + $0x60] sm:$0xf]
    %v2045 = vld [vmem:[%s6 + $0x64] sm:$0xf]
    %v2046 = vld [vmem:[%s6 + $0x68] sm:$0xf]
    %v2047 = vld [vmem:[%s6 + $0x6c] sm:$0xf]
    %v2048 = vld [vmem:[%s6 + $0x70] sm:$0xf]
    %v2049 = vld [vmem:[%s6 + $0x74] sm:$0xf]
    %v2050 = vld [vmem:[%s6 + $0x78] sm:$0xf]
    %v2051 = vld [vmem:[%s6 + $0x7c] sm:$0xf]
    %v2052 = vld [vmem:[%s6 + $0x80] sm:$0xf]
    %v2053 = vld [vmem:[%s6 + $0x84] sm:$0xf]
    %v2054 = vld [vmem:[%s6 + $0x88] sm:$0xf]
    %v2055 = vld [vmem:[%s6 + $0x8c] sm:$0xf]
    %v2056 = vld [vmem:[%s6 + $0x90] sm:$0xf]
    %v2057 = vld [vmem:[%s6 + $0x94] sm:$0xf]
    %v2058 = vld [vmem:[%s6 + $0x98] sm:$0xf]
    %v2059 = vld [vmem:[%s6 + $0x9c] sm:$0xf]
    %v2060 = vld [vmem:[%s6 + $0xa0] sm:$0xf]
    %v2061 = vld [vmem:[%s6 + $0xa4] sm:$0xf]
    %v2062 = vld [vmem:[%s6 + $0xa8] sm:$0xf]
    %v2063 = vld [vmem:[%s6 + $0xac] sm:$0xf]
    %v2064 = vld [vmem:[%s6 + $0xb0] sm:$0xf]
    %v2065 = vld [vmem:[%s6 + $0xb4] sm:$0xf]
    %v2066 = vld [vmem:[%s6 + $0xb8] sm:$0xf]
    %v2067 = vld [vmem:[%s6 + $0xbc] sm:$0xf]
    %v2068 = vld [vmem:[%s6 + $0xc0] sm:$0xf]
    %v2069 = vld [vmem:[%s6 + $0xc4] sm:$0xf]
    %v2070 = vld [vmem:[%s6 + $0xc8] sm:$0xf]
    %v2071 = vld [vmem:[%s6 + $0xcc] sm:$0xf]
    %v2072 = vld [vmem:[%s6 + $0xd0] sm:$0xf]
    %v2073 = vld [vmem:[%s6 + $0xd4] sm:$0xf]
    %v2074 = vld [vmem:[%s6 + $0xd8] sm:$0xf]
    %v2075 = vld [vmem:[%s6 + $0xdc] sm:$0xf]
    %v2076 = vld [vmem:[%s6 + $0xe0] sm:$0xf]
    %v2077 = vld [vmem:[%s6 + $0xe4] sm:$0xf]
    %v2078 = vld [vmem:[%s6 + $0xe8] sm:$0xf]
    %v2079 = vld [vmem:[%s6 + $0xec] sm:$0xf]
    %v2080 = vld [vmem:[%s6 + $0xf0] sm:$0xf]
    %v2081 = vld [vmem:[%s6 + $0xf4] sm:$0xf]
    %v2082 = vld [vmem:[%s6 + $0xf8] sm:$0xf]
    %v2083 = vld [vmem:[%s6 + $0xfc] sm:$0xf]
    %v2084 = vlaneseq
    %v2085 = vshrl.u32 %v2084, 7
    %v2086 = vsub.s32 4, %v2085
    %v2087 = vrot.slane %v115, %v2086
    %v2152 = vunpack.c.l.b16 %v2020
    %v2153 = vunpack.c.l.b16 %v2021
    %v2154 = vunpack.c.l.b16 %v2022
    %v2155 = vunpack.c.l.b16 %v2023
    %v2156 = vunpack.c.l.b16 %v2024
    %v2157 = vunpack.c.l.b16 %v2025
    %v2158 = vunpack.c.l.b16 %v2026
    %v2159 = vunpack.c.l.b16 %v2027
    %v2160 = vunpack.c.l.b16 %v2028
    %v2161 = vunpack.c.l.b16 %v2029
    %v2162 = vunpack.c.l.b16 %v2030
    %v2163 = vunpack.c.l.b16 %v2031
    %v2164 = vunpack.c.l.b16 %v2032
    %v2165 = vunpack.c.l.b16 %v2033
    %v2166 = vunpack.c.l.b16 %v2034
    %v2167 = vunpack.c.l.b16 %v2035
    %v2168 = vunpack.c.l.b16 %v2036
    %v2169 = vunpack.c.l.b16 %v2037
    %v2170 = vunpack.c.l.b16 %v2038
    %v2171 = vunpack.c.l.b16 %v2039
    %v2172 = vunpack.c.l.b16 %v2040
    %v2173 = vunpack.c.l.b16 %v2041
    %v2174 = vunpack.c.l.b16 %v2042
    %v2175 = vunpack.c.l.b16 %v2043
    %v2176 = vunpack.c.l.b16 %v2044
    %v2177 = vunpack.c.l.b16 %v2045
    %v2178 = vunpack.c.l.b16 %v2046
    %v2179 = vunpack.c.l.b16 %v2047
    %v2180 = vunpack.c.l.b16 %v2048
    %v2181 = vunpack.c.l.b16 %v2049
    %v2182 = vunpack.c.l.b16 %v2050
    %v2183 = vunpack.c.l.b16 %v2051
    %v2184 = vunpack.c.l.b16 %v2052
    %v2185 = vunpack.c.l.b16 %v2053
    %v2186 = vunpack.c.l.b16 %v2054
    %v2187 = vunpack.c.l.b16 %v2055
    %v2188 = vunpack.c.l.b16 %v2056
    %v2189 = vunpack.c.l.b16 %v2057
    %v2190 = vunpack.c.l.b16 %v2058
    %v2191 = vunpack.c.l.b16 %v2059
    %v2192 = vunpack.c.l.b16 %v2060
    %v2193 = vunpack.c.l.b16 %v2061
    %v2194 = vunpack.c.l.b16 %v2062
    %v2195 = vunpack.c.l.b16 %v2063
    %v2196 = vunpack.c.l.b16 %v2064
    %v2197 = vunpack.c.l.b16 %v2065
    %v2198 = vunpack.c.l.b16 %v2066
    %v2199 = vunpack.c.l.b16 %v2067
    %v2200 = vunpack.c.l.b16 %v2068
    %v2201 = vunpack.c.l.b16 %v2069
    %v2202 = vunpack.c.l.b16 %v2070
    %v2203 = vunpack.c.l.b16 %v2071
    %v2204 = vunpack.c.l.b16 %v2072
    %v2205 = vunpack.c.l.b16 %v2073
    %v2206 = vunpack.c.l.b16 %v2074
    %v2207 = vunpack.c.l.b16 %v2075
    %v2208 = vunpack.c.l.b16 %v2076
    %v2209 = vunpack.c.l.b16 %v2077
    %v2210 = vunpack.c.l.b16 %v2078
    %v2211 = vunpack.c.l.b16 %v2079
    %v2212 = vunpack.c.l.b16 %v2080
    %v2213 = vunpack.c.l.b16 %v2081
    %v2214 = vunpack.c.l.b16 %v2082
    %v2215 = vunpack.c.l.b16 %v2083
    %v2216 = vpack.c.b16 %v2153, %v2152
    %v2217 = vpack.c.b16 %v2155, %v2154
    %v2218 = vpack.c.b16 %v2157, %v2156
    %v2219 = vpack.c.b16 %v2159, %v2158
    %v2220 = vpack.c.b16 %v2161, %v2160
    %v2221 = vpack.c.b16 %v2163, %v2162
    %v2222 = vpack.c.b16 %v2165, %v2164
    %v2223 = vpack.c.b16 %v2167, %v2166
    %v2224 = vpack.c.b16 %v2169, %v2168
    %v2225 = vpack.c.b16 %v2171, %v2170
    %v2226 = vpack.c.b16 %v2173, %v2172
    %v2227 = vpack.c.b16 %v2175, %v2174
    %v2228 = vpack.c.b16 %v2177, %v2176
    %v2229 = vpack.c.b16 %v2179, %v2178
    %v2230 = vpack.c.b16 %v2181, %v2180
    %v2231 = vpack.c.b16 %v2183, %v2182
    %v2232 = vpack.c.b16 %v2185, %v2184
    %v2233 = vpack.c.b16 %v2187, %v2186
    %v2234 = vpack.c.b16 %v2189, %v2188
    %v2235 = vpack.c.b16 %v2191, %v2190
    %v2236 = vpack.c.b16 %v2193, %v2192
    %v2237 = vpack.c.b16 %v2195, %v2194
    %v2238 = vpack.c.b16 %v2197, %v2196
    %v2239 = vpack.c.b16 %v2199, %v2198
    %v2240 = vpack.c.b16 %v2201, %v2200
    %v2241 = vpack.c.b16 %v2203, %v2202
    %v2242 = vpack.c.b16 %v2205, %v2204
    %v2243 = vpack.c.b16 %v2207, %v2206
    %v2244 = vpack.c.b16 %v2209, %v2208
    %v2245 = vpack.c.b16 %v2211, %v2210
    %v2246 = vpack.c.b16 %v2213, %v2212
    %v2247 = vpack.c.b16 %v2215, %v2214
    %2280 = vmatprep.subr.bf16.mxu0 0
    %2281 = vmatpush1.bf16.msra.mxu0 %v2216
    %2282 = vmatprep.subr.bf16.mxu0 0
    %2283 = vmatpush1.bf16.msra.mxu0 %v2217
    %2284 = vmatprep.subr.bf16.mxu0 0
    %2285 = vmatpush1.bf16.msra.mxu0 %v2218
    %2286 = vmatprep.subr.bf16.mxu0 0
    %2287 = vmatpush1.bf16.msra.mxu0 %v2219
    %2288 = vmatprep.subr.bf16.mxu0 0
    %2289 = vmatpush1.bf16.msra.mxu0 %v2220
    %2290 = vmatprep.subr.bf16.mxu0 0
    %2291 = vmatpush1.bf16.msra.mxu0 %v2221
    %2292 = vmatprep.subr.bf16.mxu0 0
    %2293 = vmatpush1.bf16.msra.mxu0 %v2222
    %2294 = vmatprep.subr.bf16.mxu0 0
    %2295 = vmatpush1.bf16.msra.mxu0 %v2223
    %2296 = vmatprep.subr.bf16.mxu0 0
    %2297 = vmatpush1.bf16.msra.mxu0 %v2224
    %2298 = vmatprep.subr.bf16.mxu0 0
    %2299 = vmatpush1.bf16.msra.mxu0 %v2225
    %2300 = vmatprep.subr.bf16.mxu0 0
    %2301 = vmatpush1.bf16.msra.mxu0 %v2226
    %2302 = vmatprep.subr.bf16.mxu0 0
    %2303 = vmatpush1.bf16.msra.mxu0 %v2227
    %2304 = vmatprep.subr.bf16.mxu0 0
    %2305 = vmatpush1.bf16.msra.mxu0 %v2228
    %2306 = vmatprep.subr.bf16.mxu0 0
    %2307 = vmatpush1.bf16.msra.mxu0 %v2229
    %2308 = vmatprep.subr.bf16.mxu0 0
    %2309 = vmatpush1.bf16.msra.mxu0 %v2230
    %2310 = vmatprep.subr.bf16.mxu0 0
    %2311 = vmatpush1.bf16.msra.mxu0 %v2231
    %2312 = vmatprep.mubr.bf16.mxu0 %v1989
    %2313 = vmatmul.mubr.bf16.gmra.mrb[0].mxu0 %v1988
    %v2314 = vpop.f32.mrb[0].mxu0
    %v2315 = vadd.f32 %v2087, %v2314
    %v2316 = vpop.f32.mrb[0].mxu0
    %v2317 = vpop.f32.mrb[0].mxu0
    %v2318 = vadd.f32 %v2087, %v2317
    %v2319 = vpop.f32.mrb[0].mxu0
    %2320 = vmatprep.mubr.bf16.mxu0 %v1993
    %2321 = vmatmul.mubr.bf16.gmra.mrb[0].mxu0 %v1992
    %v2322 = vpop.f32.mrb[0].mxu0
    %v2323 = vadd.f32 %v2087, %v2322
    %v2324 = vpop.f32.mrb[0].mxu0
    %v2325 = vpop.f32.mrb[0].mxu0
    %v2326 = vadd.f32 %v2087, %v2325
    %v2327 = vpop.f32.mrb[0].mxu0
    %2328 = vmatprep.mubr.bf16.mxu0 %v1997
    %2329 = vmatmul.mubr.bf16.gmra.mrb[0].mxu0 %v1996
    %v2330 = vpop.f32.mrb[0].mxu0
    %v2331 = vadd.f32 %v2087, %v2330
    %v2332 = vpop.f32.mrb[0].mxu0
    %v2333 = vpop.f32.mrb[0].mxu0
    %v2334 = vadd.f32 %v2087, %v2333
    %v2335 = vpop.f32.mrb[0].mxu0
    %2336 = vmatprep.mubr.bf16.mxu0 %v2001
    %2337 = vmatmul.mubr.bf16.gmra.mrb[0].mxu0 %v2000
    %v2338 = vpop.f32.mrb[0].mxu0
    %v2339 = vadd.f32 %v2087, %v2338
    %v2340 = vpop.f32.mrb[0].mxu0
    %v2341 = vpop.f32.mrb[0].mxu0
    %v2342 = vadd.f32 %v2087, %v2341
    %v2343 = vpop.f32.mrb[0].mxu0
    %2344 = vmatprep.mubr.bf16.mxu0 %v2005
    %2345 = vmatmul.mubr.bf16.gmra.mrb[0].mxu0 %v2004
    %v2346 = vpop.f32.mrb[0].mxu0
    %v2347 = vadd.f32 %v2087, %v2346
    %v2348 = vpop.f32.mrb[0].mxu0
    %v2349 = vpop.f32.mrb[0].mxu0
    %v2350 = vadd.f32 %v2087, %v2349
    %v2351 = vpop.f32.mrb[0].mxu0
    %2352 = vmatprep.mubr.bf16.mxu0 %v2009
    %2353 = vmatmul.mubr.bf16.gmra.mrb[0].mxu0 %v2008
    %v2354 = vpop.f32.mrb[0].mxu0
    %v2355 = vadd.f32 %v2087, %v2354
    %v2356 = vpop.f32.mrb[0].mxu0
    %v2357 = vpop.f32.mrb[0].mxu0
    %v2358 = vadd.f32 %v2087, %v2357
    %v2359 = vpop.f32.mrb[0].mxu0
    %2360 = vmatprep.mubr.bf16.mxu0 %v2013
    %2361 = vmatmul.mubr.bf16.gmra.mrb[0].mxu0 %v2012
    %v2362 = vpop.f32.mrb[0].mxu0
    %v2363 = vadd.f32 %v2087, %v2362
    %v2364 = vpop.f32.mrb[0].mxu0
    %v2365 = vpop.f32.mrb[0].mxu0
    %v2366 = vadd.f32 %v2087, %v2365
    %v2367 = vpop.f32.mrb[0].mxu0
    %2368 = vmatprep.mubr.bf16.mxu0 %v2017
    %2369 = vmatmul.mubr.bf16.gmra.mrb[0].mxu0 %v2016
    %v2370 = vpop.f32.mrb[0].mxu0
    %v2371 = vadd.f32 %v2087, %v2370
    %v2372 = vpop.f32.mrb[0].mxu0
    %v2373 = vpop.f32.mrb[0].mxu0
    %v2374 = vadd.f32 %v2087, %v2373
    %v2375 = vpop.f32.mrb[0].mxu0
    %2376 = vdwg.mxu0
    %2377 = vmatprep.subr.bf16.mxu0 0
    %2378 = vmatpush1.bf16.msra.mxu0 %v2232
    %2379 = vmatprep.subr.bf16.mxu0 0
    %2380 = vmatpush1.bf16.msra.mxu0 %v2233
    %2381 = vmatprep.subr.bf16.mxu0 0
    %2382 = vmatpush1.bf16.msra.mxu0 %v2234
    %2383 = vmatprep.subr.bf16.mxu0 0
    %2384 = vmatpush1.bf16.msra.mxu0 %v2235
    %2385 = vmatprep.subr.bf16.mxu0 0
    %2386 = vmatpush1.bf16.msra.mxu0 %v2236
    %2387 = vmatprep.subr.bf16.mxu0 0
    %2388 = vmatpush1.bf16.msra.mxu0 %v2237
    %2389 = vmatprep.subr.bf16.mxu0 0
    %2390 = vmatpush1.bf16.msra.mxu0 %v2238
    %2391 = vmatprep.subr.bf16.mxu0 0
    %2392 = vmatpush1.bf16.msra.mxu0 %v2239
    %2393 = vmatprep.subr.bf16.mxu0 0
    %2394 = vmatpush1.bf16.msra.mxu0 %v2240
    %2395 = vmatprep.subr.bf16.mxu0 0
    %2396 = vmatpush1.bf16.msra.mxu0 %v2241
    %2397 = vmatprep.subr.bf16.mxu0 0
    %2398 = vmatpush1.bf16.msra.mxu0 %v2242
    %2399 = vmatprep.subr.bf16.mxu0 0
    %2400 = vmatpush1.bf16.msra.mxu0 %v2243
    %2401 = vmatprep.subr.bf16.mxu0 0
    %2402 = vmatpush1.bf16.msra.mxu0 %v2244
    %2403 = vmatprep.subr.bf16.mxu0 0
    %2404 = vmatpush1.bf16.msra.mxu0 %v2245
    %2405 = vmatprep.subr.bf16.mxu0 0
    %2406 = vmatpush1.bf16.msra.mxu0 %v2246
    %2407 = vmatprep.subr.bf16.mxu0 0
    %2408 = vmatpush1.bf16.msra.mxu0 %v2247
    %2409 = vmatprep.mubr.bf16.mxu0 %v1991
    %2410 = vmatmul.mubr.bf16.gmra.mrb[0].mxu0 %v1990
    %v2411 = vpop.f32.mrb[0].mxu0
    %v2412 = vadd.f32 %v2315, %v2411
    %v2413 = vpop.f32.mrb[0].mxu0
    %v2414 = vpop.f32.mrb[0].mxu0
    %v2415 = vadd.f32 %v2318, %v2414
    %v2416 = vpop.f32.mrb[0].mxu0
    %2417 = vmatprep.mubr.bf16.mxu0 %v1995
    %2418 = vmatmul.mubr.bf16.gmra.mrb[0].mxu0 %v1994
    %v2419 = vpop.f32.mrb[0].mxu0
    %v2420 = vadd.f32 %v2323, %v2419
    %v2421 = vpop.f32.mrb[0].mxu0
    %v2422 = vpop.f32.mrb[0].mxu0
    %v2423 = vadd.f32 %v2326, %v2422
    %v2424 = vpop.f32.mrb[0].mxu0
    %2425 = vmatprep.mubr.bf16.mxu0 %v1999
    %2426 = vmatmul.mubr.bf16.gmra.mrb[0].mxu0 %v1998
    %v2427 = vpop.f32.mrb[0].mxu0
    %v2428 = vadd.f32 %v2331, %v2427
    %v2429 = vpop.f32.mrb[0].mxu0
    %v2430 = vpop.f32.mrb[0].mxu0
    %v2431 = vadd.f32 %v2334, %v2430
    %v2432 = vpop.f32.mrb[0].mxu0
    %2433 = vmatprep.mubr.bf16.mxu0 %v2003
    %2434 = vmatmul.mubr.bf16.gmra.mrb[0].mxu0 %v2002
    %v2435 = vpop.f32.mrb[0].mxu0
    %v2436 = vadd.f32 %v2339, %v2435
    %v2437 = vpop.f32.mrb[0].mxu0
    %v2438 = vpop.f32.mrb[0].mxu0
    %v2439 = vadd.f32 %v2342, %v2438
    %v2440 = vpop.f32.mrb[0].mxu0
    %2441 = vmatprep.mubr.bf16.mxu0 %v2007
    %2442 = vmatmul.mubr.bf16.gmra.mrb[0].mxu0 %v2006
    %v2443 = vpop.f32.mrb[0].mxu0
    %v2444 = vadd.f32 %v2347, %v2443
    %v2445 = vpop.f32.mrb[0].mxu0
    %v2446 = vpop.f32.mrb[0].mxu0
    %v2447 = vadd.f32 %v2350, %v2446
    %v2448 = vpop.f32.mrb[0].mxu0
    %2449 = vmatprep.mubr.bf16.mxu0 %v2011
    %2450 = vmatmul.mubr.bf16.gmra.mrb[0].mxu0 %v2010
    %v2451 = vpop.f32.mrb[0].mxu0
    %v2452 = vadd.f32 %v2355, %v2451
    %v2453 = vpop.f32.mrb[0].mxu0
    %v2454 = vpop.f32.mrb[0].mxu0
    %v2455 = vadd.f32 %v2358, %v2454
    %v2456 = vpop.f32.mrb[0].mxu0
    %2457 = vmatprep.mubr.bf16.mxu0 %v2015
    %2458 = vmatmul.mubr.bf16.gmra.mrb[0].mxu0 %v2014
    %v2459 = vpop.f32.mrb[0].mxu0
    %v2460 = vadd.f32 %v2363, %v2459
    %v2461 = vpop.f32.mrb[0].mxu0
    %v2462 = vpop.f32.mrb[0].mxu0
    %v2463 = vadd.f32 %v2366, %v2462
    %v2464 = vpop.f32.mrb[0].mxu0
    %2465 = vmatprep.mubr.bf16.mxu0 %v2019
    %2466 = vmatmul.mubr.bf16.gmra.mrb[0].mxu0 %v2018
    %v2467 = vpop.f32.mrb[0].mxu0
    %v2468 = vadd.f32 %v2371, %v2467
    %v2469 = vpop.f32.mrb[0].mxu0
    %v2470 = vpop.f32.mrb[0].mxu0
    %v2471 = vadd.f32 %v2374, %v2470
    %v2472 = vpop.f32.mrb[0].mxu0
    %2473 = vdwg.mxu0
    %v2474 = vmax.f32 %v2412, 0.0
    %v2475 = vmax.f32 %v2415, 0.0
    %v2476 = vmax.f32 %v2420, 0.0
    %v2477 = vmax.f32 %v2423, 0.0
    %v2478 = vmax.f32 %v2428, 0.0
    %v2479 = vmax.f32 %v2431, 0.0
    %v2480 = vmax.f32 %v2436, 0.0
    %v2481 = vmax.f32 %v2439, 0.0
    %v2482 = vmax.f32 %v2444, 0.0
    %v2483 = vmax.f32 %v2447, 0.0
    %v2484 = vmax.f32 %v2452, 0.0
    %v2485 = vmax.f32 %v2455, 0.0
    %v2486 = vmax.f32 %v2460, 0.0
    %v2487 = vmax.f32 %v2463, 0.0
    %v2488 = vmax.f32 %v2468, 0.0
    %v2489 = vmax.f32 %v2471, 0.0
    %v2490 = vlaneseq
    %v2491 = vshrl.u32 %v2490, 7
    %v2492 = vsub.s32 5, %v2491
    %v2493 = vrot.slane %v115, %v2492
    %v2494 = vmul.f32 %v2474, %v2493
    %v2495 = vmul.f32 %v2475, %v2493
    %v2496 = vmul.f32 %v2476, %v2493
    %v2497 = vmul.f32 %v2477, %v2493
    %v2498 = vmul.f32 %v2478, %v2493
    %v2499 = vmul.f32 %v2479, %v2493
    %v2500 = vmul.f32 %v2480, %v2493
    %v2501 = vmul.f32 %v2481, %v2493
    %v2502 = vmul.f32 %v2482, %v2493
    %v2503 = vmul.f32 %v2483, %v2493
    %v2504 = vmul.f32 %v2484, %v2493
    %v2505 = vmul.f32 %v2485, %v2493
    %v2506 = vmul.f32 %v2486, %v2493
    %v2507 = vmul.f32 %v2487, %v2493
    %v2508 = vmul.f32 %v2488, %v2493
    %v2509 = vmul.f32 %v2489, %v2493
    %2510 = vadd.xlane.f32.xlu0 %v2494
    %v2511 = vpop.xlane.xlu0 %2510
    %2512 = vadd.xlane.f32.xlu0 %v2495
    %v2513 = vpop.xlane.xlu0 %2512
    %2514 = vadd.xlane.f32.xlu0 %v2496
    %v2515 = vpop.xlane.xlu0 %2514
    %2516 = vadd.xlane.f32.xlu0 %v2497
    %v2517 = vpop.xlane.xlu0 %2516
    %2518 = vadd.xlane.f32.xlu0 %v2498
    %v2519 = vpop.xlane.xlu0 %2518
    %2520 = vadd.xlane.f32.xlu0 %v2499
    %v2521 = vpop.xlane.xlu0 %2520
    %2522 = vadd.xlane.f32.xlu0 %v2500
    %v2523 = vpop.xlane.xlu0 %2522
    %2524 = vadd.xlane.f32.xlu0 %v2501
    %v2525 = vpop.xlane.xlu0 %2524
    %2526 = vadd.xlane.f32.xlu0 %v2502
    %v2527 = vpop.xlane.xlu0 %2526
    %2528 = vadd.xlane.f32.xlu0 %v2503
    %v2529 = vpop.xlane.xlu0 %2528
    %2530 = vadd.xlane.f32.xlu0 %v2504
    %v2531 = vpop.xlane.xlu0 %2530
    %2532 = vadd.xlane.f32.xlu0 %v2505
    %v2533 = vpop.xlane.xlu0 %2532
    %2534 = vadd.xlane.f32.xlu0 %v2506
    %v2535 = vpop.xlane.xlu0 %2534
    %2536 = vadd.xlane.f32.xlu0 %v2507
    %v2537 = vpop.xlane.xlu0 %2536
    %2538 = vadd.xlane.f32.xlu0 %v2508
    %v2539 = vpop.xlane.xlu0 %2538
    %2540 = vadd.xlane.f32.xlu0 %v2509
    %v2541 = vpop.xlane.xlu0 %2540
    %v2542 = vlaneseq
    %v2543 = vshrl.u32 %v2542, 7
    %v2544 = vsub.s32 7, %v2543
    %v2545 = vrot.slane %v115, %v2544
    %v2546 = vadd.f32 %v2511, %v2545
    %v2547 = vadd.f32 %v2513, %v2545
    %v2548 = vadd.f32 %v2515, %v2545
    %v2549 = vadd.f32 %v2517, %v2545
    %v2550 = vadd.f32 %v2519, %v2545
    %v2551 = vadd.f32 %v2521, %v2545
    %v2552 = vadd.f32 %v2523, %v2545
    %v2553 = vadd.f32 %v2525, %v2545
    %v2554 = vadd.f32 %v2527, %v2545
    %v2555 = vadd.f32 %v2529, %v2545
    %v2556 = vadd.f32 %v2531, %v2545
    %v2557 = vadd.f32 %v2533, %v2545
    %v2558 = vadd.f32 %v2535, %v2545
    %v2559 = vadd.f32 %v2537, %v2545
    %v2560 = vadd.f32 %v2539, %v2545
    %v2561 = vadd.f32 %v2541, %v2545
    %v2562 = vxor.u32 %v2546, 2147483648
    %v2563 = vxor.u32 %v2547, 2147483648
    %v2564 = vxor.u32 %v2548, 2147483648
    %v2565 = vxor.u32 %v2549, 2147483648
    %v2566 = vxor.u32 %v2550, 2147483648
    %v2567 = vxor.u32 %v2551, 2147483648
    %v2568 = vxor.u32 %v2552, 2147483648
    %v2569 = vxor.u32 %v2553, 2147483648
    %v2570 = vxor.u32 %v2554, 2147483648
    %v2571 = vxor.u32 %v2555, 2147483648
    %v2572 = vxor.u32 %v2556, 2147483648
    %v2573 = vxor.u32 %v2557, 2147483648
    %v2574 = vxor.u32 %v2558, 2147483648
    %v2575 = vxor.u32 %v2559, 2147483648
    %v2576 = vxor.u32 %v2560, 2147483648
    %v2577 = vxor.u32 %v2561, 2147483648
    %v2578 = vmul.f32 %v2562, 1.442695
    %v2579 = vpow.pop %v2578
    %v2580 = vmul.f32 %v2563, 1.442695
    %v2581 = vpow.pop %v2580
    %v2582 = vmul.f32 %v2564, 1.442695
    %v2583 = vpow.pop %v2582
    %v2584 = vmul.f32 %v2565, 1.442695
    %v2585 = vpow.pop %v2584
    %v2586 = vmul.f32 %v2566, 1.442695
    %v2587 = vpow.pop %v2586
    %v2588 = vmul.f32 %v2567, 1.442695
    %v2589 = vpow.pop %v2588
    %v2590 = vmul.f32 %v2568, 1.442695
    %v2591 = vpow.pop %v2590
    %v2592 = vmul.f32 %v2569, 1.442695
    %v2593 = vpow.pop %v2592
    %v2594 = vmul.f32 %v2570, 1.442695
    %v2595 = vpow.pop %v2594
    %v2596 = vmul.f32 %v2571, 1.442695
    %v2597 = vpow.pop %v2596
    %v2598 = vmul.f32 %v2572, 1.442695
    %v2599 = vpow.pop %v2598
    %v2600 = vmul.f32 %v2573, 1.442695
    %v2601 = vpow.pop %v2600
    %v2602 = vmul.f32 %v2574, 1.442695
    %v2603 = vpow.pop %v2602
    %v2604 = vmul.f32 %v2575, 1.442695
    %v2605 = vpow.pop %v2604
    %v2606 = vmul.f32 %v2576, 1.442695
    %v2607 = vpow.pop %v2606
    %v2608 = vmul.f32 %v2577, 1.442695
    %v2609 = vpow.pop %v2608
    %v2610 = vadd.f32 %v2579, 1.0
    %v2611 = vadd.f32 %v2581, 1.0
    %v2612 = vadd.f32 %v2583, 1.0
    %v2613 = vadd.f32 %v2585, 1.0
    %v2614 = vadd.f32 %v2587, 1.0
    %v2615 = vadd.f32 %v2589, 1.0
    %v2616 = vadd.f32 %v2591, 1.0
    %v2617 = vadd.f32 %v2593, 1.0
    %v2618 = vadd.f32 %v2595, 1.0
    %v2619 = vadd.f32 %v2597, 1.0
    %v2620 = vadd.f32 %v2599, 1.0
    %v2621 = vadd.f32 %v2601, 1.0
    %v2622 = vadd.f32 %v2603, 1.0
    %v2623 = vadd.f32 %v2605, 1.0
    %v2624 = vadd.f32 %v2607, 1.0
    %v2625 = vadd.f32 %v2609, 1.0
    %v2626 = vrcp.pop %v2610
    %v2627 = vmul.f32 1.0, %v2626
    %v2628 = vrcp.pop %v2611
    %v2629 = vmul.f32 1.0, %v2628
    %v2630 = vrcp.pop %v2612
    %v2631 = vmul.f32 1.0, %v2630
    %v2632 = vrcp.pop %v2613
    %v2633 = vmul.f32 1.0, %v2632
    %v2634 = vrcp.pop %v2614
    %v2635 = vmul.f32 1.0, %v2634
    %v2636 = vrcp.pop %v2615
    %v2637 = vmul.f32 1.0, %v2636
    %v2638 = vrcp.pop %v2616
    %v2639 = vmul.f32 1.0, %v2638
    %v2640 = vrcp.pop %v2617
    %v2641 = vmul.f32 1.0, %v2640
    %v2642 = vrcp.pop %v2618
    %v2643 = vmul.f32 1.0, %v2642
    %v2644 = vrcp.pop %v2619
    %v2645 = vmul.f32 1.0, %v2644
    %v2646 = vrcp.pop %v2620
    %v2647 = vmul.f32 1.0, %v2646
    %v2648 = vrcp.pop %v2621
    %v2649 = vmul.f32 1.0, %v2648
    %v2650 = vrcp.pop %v2622
    %v2651 = vmul.f32 1.0, %v2650
    %v2652 = vrcp.pop %v2623
    %v2653 = vmul.f32 1.0, %v2652
    %v2654 = vrcp.pop %v2624
    %v2655 = vmul.f32 1.0, %v2654
    %v2656 = vrcp.pop %v2625
    %v2657 = vmul.f32 1.0, %v2656
    %2659 = vset.pattern.permute.xlu0 0
    %2660 = vperm.xlu0 %2659, %v2627
    %v2661 = vpop.permute.xlu0 %2660
    %2664 = vset.pattern.permute.xlu0 0
    %2665 = vperm.xlu0 %2664, %v2629
    %v2666 = vpop.permute.xlu0 %2665
    %2669 = vset.pattern.permute.xlu0 0
    %2670 = vperm.xlu0 %2669, %v2631
    %v2671 = vpop.permute.xlu0 %2670
    %2674 = vset.pattern.permute.xlu0 0
    %2675 = vperm.xlu0 %2674, %v2633
    %v2676 = vpop.permute.xlu0 %2675
    %2679 = vset.pattern.permute.xlu0 0
    %2680 = vperm.xlu0 %2679, %v2635
    %v2681 = vpop.permute.xlu0 %2680
    %2684 = vset.pattern.permute.xlu0 0
    %2685 = vperm.xlu0 %2684, %v2637
    %v2686 = vpop.permute.xlu0 %2685
    %2689 = vset.pattern.permute.xlu0 0
    %2690 = vperm.xlu0 %2689, %v2639
    %v2691 = vpop.permute.xlu0 %2690
    %2694 = vset.pattern.permute.xlu0 0
    %2695 = vperm.xlu0 %2694, %v2641
    %v2696 = vpop.permute.xlu0 %2695
    %2699 = vset.pattern.permute.xlu0 0
    %2700 = vperm.xlu0 %2699, %v2643
    %v2701 = vpop.permute.xlu0 %2700
    %2704 = vset.pattern.permute.xlu0 0
    %2705 = vperm.xlu0 %2704, %v2645
    %v2706 = vpop.permute.xlu0 %2705
    %2709 = vset.pattern.permute.xlu0 0
    %2710 = vperm.xlu0 %2709, %v2647
    %v2711 = vpop.permute.xlu0 %2710
    %2714 = vset.pattern.permute.xlu0 0
    %2715 = vperm.xlu0 %2714, %v2649
    %v2716 = vpop.permute.xlu0 %2715
    %2719 = vset.pattern.permute.xlu0 0
    %2720 = vperm.xlu0 %2719, %v2651
    %v2721 = vpop.permute.xlu0 %2720
    %2724 = vset.pattern.permute.xlu0 0
    %2725 = vperm.xlu0 %2724, %v2653
    %v2726 = vpop.permute.xlu0 %2725
    %2729 = vset.pattern.permute.xlu0 0
    %2730 = vperm.xlu0 %2729, %v2655
    %v2731 = vpop.permute.xlu0 %2730
    %2734 = vset.pattern.permute.xlu0 0
    %2735 = vperm.xlu0 %2734, %v2657
    %v2736 = vpop.permute.xlu0 %2735
    %v2738 = vmul.f32 %v2661, %v1972
    %v2739 = vmul.f32 %v2666, %v1973
    %v2740 = vmul.f32 %v2671, %v1974
    %v2741 = vmul.f32 %v2676, %v1975
    %v2742 = vmul.f32 %v2681, %v1976
    %v2743 = vmul.f32 %v2686, %v1977
    %v2744 = vmul.f32 %v2691, %v1978
    %v2745 = vmul.f32 %v2696, %v1979
    %v2746 = vmul.f32 %v2701, %v1980
    %v2747 = vmul.f32 %v2706, %v1981
    %v2748 = vmul.f32 %v2711, %v1982
    %v2749 = vmul.f32 %v2716, %v1983
    %v2750 = vmul.f32 %v2721, %v1984
    %v2751 = vmul.f32 %v2726, %v1985
    %v2752 = vmul.f32 %v2731, %v1986
    %v2753 = vmul.f32 %v2736, %v1987
    %v2754 = vpack.c.bf16 %v2739, %v2738
    %v2755 = vpack.c.bf16 %v2741, %v2740
    %v2756 = vpack.c.bf16 %v2743, %v2742
    %v2757 = vpack.c.bf16 %v2745, %v2744
    %v2758 = vpack.c.bf16 %v2747, %v2746
    %v2759 = vpack.c.bf16 %v2749, %v2748
    %v2760 = vpack.c.bf16 %v2751, %v2750
    %v2761 = vpack.c.bf16 %v2753, %v2752
    %v2762 = vlaneseq
    %v2763 = vshrl.u32 %v2762, 7
    %v2764 = vadd.s32 %v2763, 8
    %v2765 = vld [vmem:[%s4] sm:$0x1]
    %v2766 = vlaneseq
    %v2767 = vshrl.u32 %v2766, 7
    %v2768 = vsub.s32 0, %v2767
    %v2769 = vrot.slane %v2765, %v2768
    %vm2770 = vcmp.eq.s32.totalorder %v2763, %v2769
    %vm2771 = vcmp.eq.s32.totalorder %v2764, %v2769
    %v2772 = vsel %vm2770, 1, 0
    %v2773 = vsel %vm2771, 1, 0
    %v2774 = vcvt.s32.f32 %v2772
    %v2775 = vcvt.s32.f32 %v2773
    %v2776 = vpack.c.bf16 %v2775, %v2774
    %v2777 = vld [vmem:[#allocation2] sm:$0xff]
    %v2778 = vld [vmem:[#allocation2 + $0x8] sm:$0xff]
    %2779 = vmatprep.subr.bf16.mxu0 0
    %2780 = vmatpush1.bf16.msra.mxu0 %v2754
    %2781 = vmatprep.subr.bf16.mxu0 0
    %2782 = vmatpush1.bf16.msra.mxu0 %v2755
    %2783 = vmatprep.subr.bf16.mxu0 0
    %2784 = vmatpush1.bf16.msra.mxu0 %v2756
    %2785 = vmatprep.subr.bf16.mxu0 0
    %2786 = vmatpush1.bf16.msra.mxu0 %v2757
    %2787 = vmatprep.subr.bf16.mxu0 0
    %2788 = vmatpush1.bf16.msra.mxu0 %v2758
    %2789 = vmatprep.subr.bf16.mxu0 0
    %2790 = vmatpush1.bf16.msra.mxu0 %v2759
    %2791 = vmatprep.subr.bf16.mxu0 0
    %2792 = vmatpush1.bf16.msra.mxu0 %v2760
    %2793 = vmatprep.subr.bf16.mxu0 0
    %2794 = vmatpush1.bf16.msra.mxu0 %v2761
    %2795 = vmatprep.subr.bf16.mxu0 0
    %2796 = vmatpush1.bf16.msra.mxu0 0
    %2797 = vmatprep.subr.bf16.mxu0 0
    %2798 = vmatpush1.bf16.msra.mxu0 0
    %2799 = vmatprep.subr.bf16.mxu0 0
    %2800 = vmatpush1.bf16.msra.mxu0 0
    %2801 = vmatprep.subr.bf16.mxu0 0
    %2802 = vmatpush1.bf16.msra.mxu0 0
    %2803 = vmatprep.subr.bf16.mxu0 0
    %2804 = vmatpush1.bf16.msra.mxu0 0
    %2805 = vmatprep.subr.bf16.mxu0 0
    %2806 = vmatpush1.bf16.msra.mxu0 0
    %2807 = vmatprep.subr.bf16.mxu0 0
    %2808 = vmatpush1.bf16.msra.mxu0 0
    %2809 = vmatprep.subr.bf16.mxu0 0
    %2810 = vmatpush1.bf16.msra.mxu0 0
    %2811 = vmatprep.mubr.bf16.mxu0 0
    %2812 = vmatmul.mubr.bf16.gmra.mrb[0].mxu0 %v2776
    %v2813 = vpop.f32.mrb[0].mxu0
    %v2814 = vadd.f32 0.0, %v2813
    %v2815 = vpop.f32.mrb[0].mxu0
    %v2816 = vpop.f32.mrb[0].mxu0
    %v2817 = vadd.f32 0.0, %v2816
    %v2818 = vpop.f32.mrb[0].mxu0
    %2819 = vdwg.mxu0
    %v2820 = vadd.f32 %v2777, %v2814
    %v2821 = vadd.f32 %v2778, %v2817
    %2822 = vst [vmem:[#allocation2] sm:$0xff] %v2820
    %2823 = vst [vmem:[#allocation2 + $0x8] sm:$0xff] %v2821
    // Predicated region
    $region54: #{tpar_forward.3} parent=1 // pred_check
      %p2824 = pneg %p45
    $region55: #{tpar_forward.3} parent=1 // pred_check_branch
      %2826 = sbr.rel (%p2824) target = $region57
    $region56: #{tpar_forward.3} parent=1 // pred_region
      %v2827 = vld [vmem:[#allocation2] sm:$0xff]
      %v2828 = vld [vmem:[#allocation2 + $0x8] sm:$0xff]
      %v2829 = vpack.c.bf16 %v2828, %v2827
      %v2830 = vld [vmem:[%s7] sm:$0xf]
      %v2831 = vld [vmem:[%s7 + $0x4] sm:$0xf]
      %v2832 = vld [vmem:[%s7 + $0x8] sm:$0xf]
      %v2833 = vld [vmem:[%s7 + $0xc] sm:$0xf]
      %v2834 = vld [vmem:[%s7 + $0x10] sm:$0xf]
      %v2835 = vld [vmem:[%s7 + $0x14] sm:$0xf]
      %v2836 = vld [vmem:[%s7 + $0x18] sm:$0xf]
      %v2837 = vld [vmem:[%s7 + $0x1c] sm:$0xf]
      %v2838 = vld [vmem:[%s7 + $0x20] sm:$0xf]
      %v2839 = vld [vmem:[%s7 + $0x24] sm:$0xf]
      %v2840 = vld [vmem:[%s7 + $0x28] sm:$0xf]
      %v2841 = vld [vmem:[%s7 + $0x2c] sm:$0xf]
      %v2842 = vld [vmem:[%s7 + $0x30] sm:$0xf]
      %v2843 = vld [vmem:[%s7 + $0x34] sm:$0xf]
      %v2844 = vld [vmem:[%s7 + $0x38] sm:$0xf]
      %v2845 = vld [vmem:[%s7 + $0x3c] sm:$0xf]
      %v2862 = vunpack.c.l.b16 %v2830
      %v2863 = vunpack.c.l.b16 %v2831
      %v2864 = vunpack.c.l.b16 %v2832
      %v2865 = vunpack.c.l.b16 %v2833
      %v2866 = vunpack.c.l.b16 %v2834
      %v2867 = vunpack.c.l.b16 %v2835
      %v2868 = vunpack.c.l.b16 %v2836
      %v2869 = vunpack.c.l.b16 %v2837
      %v2870 = vunpack.c.l.b16 %v2838
      %v2871 = vunpack.c.l.b16 %v2839
      %v2872 = vunpack.c.l.b16 %v2840
      %v2873 = vunpack.c.l.b16 %v2841
      %v2874 = vunpack.c.l.b16 %v2842
      %v2875 = vunpack.c.l.b16 %v2843
      %v2876 = vunpack.c.l.b16 %v2844
      %v2877 = vunpack.c.l.b16 %v2845
      %v2878 = vpack.c.b16 %v2863, %v2862
      %v2879 = vpack.c.b16 %v2865, %v2864
      %v2880 = vpack.c.b16 %v2867, %v2866
      %v2881 = vpack.c.b16 %v2869, %v2868
      %v2882 = vpack.c.b16 %v2871, %v2870
      %v2883 = vpack.c.b16 %v2873, %v2872
      %v2884 = vpack.c.b16 %v2875, %v2874
      %v2885 = vpack.c.b16 %v2877, %v2876
      %2894 = vmatprep.subr.bf16.mxu0 0
      %2895 = vmatpush1.bf16.msra.mxu0 %v2878
      %2896 = vmatprep.subr.bf16.mxu0 0
      %2897 = vmatpush1.bf16.msra.mxu0 %v2879
      %2898 = vmatprep.subr.bf16.mxu0 0
      %2899 = vmatpush1.bf16.msra.mxu0 %v2880
      %2900 = vmatprep.subr.bf16.mxu0 0
      %2901 = vmatpush1.bf16.msra.mxu0 %v2881
      %2902 = vmatprep.subr.bf16.mxu0 0
      %2903 = vmatpush1.bf16.msra.mxu0 %v2882
      %2904 = vmatprep.subr.bf16.mxu0 0
      %2905 = vmatpush1.bf16.msra.mxu0 %v2883
      %2906 = vmatprep.subr.bf16.mxu0 0
      %2907 = vmatpush1.bf16.msra.mxu0 %v2884
      %2908 = vmatprep.subr.bf16.mxu0 0
      %2909 = vmatpush1.bf16.msra.mxu0 %v2885
      %2910 = vmatprep.subr.bf16.mxu0 0
      %2911 = vmatpush1.bf16.msra.mxu0 0
      %2912 = vmatprep.subr.bf16.mxu0 0
      %2913 = vmatpush1.bf16.msra.mxu0 0
      %2914 = vmatprep.subr.bf16.mxu0 0
      %2915 = vmatpush1.bf16.msra.mxu0 0
      %2916 = vmatprep.subr.bf16.mxu0 0
      %2917 = vmatpush1.bf16.msra.mxu0 0
      %2918 = vmatprep.subr.bf16.mxu0 0
      %2919 = vmatpush1.bf16.msra.mxu0 0
      %2920 = vmatprep.subr.bf16.mxu0 0
      %2921 = vmatpush1.bf16.msra.mxu0 0
      %2922 = vmatprep.subr.bf16.mxu0 0
      %2923 = vmatpush1.bf16.msra.mxu0 0
      %2924 = vmatprep.subr.bf16.mxu0 0
      %2925 = vmatpush1.bf16.msra.mxu0 0
      %2926 = vmatprep.mubr.bf16.mxu0 0
      %2927 = vmatmul.mubr.bf16.gmra.mrb[0].mxu0 %v2829
      %v2928 = vpop.f32.mrb[0].mxu0
      %v2929 = vadd.f32 0.0, %v2928
      %v2930 = vpop.f32.mrb[0].mxu0
      %v2931 = vpop.f32.mrb[0].mxu0
      %v2932 = vadd.f32 0.0, %v2931
      %v2933 = vpop.f32.mrb[0].mxu0
      %2934 = vdwg.mxu0
      %v2935 = vmax.f32 %v2929, 0.0
      %v2936 = vmax.f32 %v2932, 0.0
      %v2937 = vld [vmem:[%s5] sm:$0xff]
      %v2938 = vld [vmem:[%s5 + $0x8] sm:$0xff]
      %v2939 = vld [vmem:[%s10] sm:$0x3f]
      %v2940 = vpack.c.bf16 %v2936, %v2935
      %v2941 = vld [vmem:[%s8] sm:$0xff]
      %v2942 = vld [vmem:[%s8 + $0x8] sm:$0xf]
      %v2943 = vld [vmem:[%s8 + $0xc] sm:$0xff]
      %v2944 = vld [vmem:[%s8 + $0x14] sm:$0xf]
      %v2945 = vld [vmem:[%s8 + $0x18] sm:$0xff]
      %v2946 = vld [vmem:[%s8 + $0x20] sm:$0xf]
      %v2947 = vld [vmem:[%s8 + $0x24] sm:$0xff]
      %v2948 = vld [vmem:[%s8 + $0x2c] sm:$0xf]
      %v2949 = vld [vmem:[%s8 + $0x30] sm:$0xff]
      %v2950 = vld [vmem:[%s8 + $0x38] sm:$0xf]
      %v2951 = vld [vmem:[%s8 + $0x3c] sm:$0xff]
      %v2952 = vld [vmem:[%s8 + $0x44] sm:$0xf]
      %v2953 = vld [vmem:[%s8 + $0x48] sm:$0xff]
      %v2954 = vld [vmem:[%s8 + $0x50] sm:$0xf]
      %v2955 = vld [vmem:[%s8 + $0x54] sm:$0xff]
      %v2956 = vld [vmem:[%s8 + $0x5c] sm:$0xf]
      %v2957 = vld [vmem:[%s8 + $0x60] sm:$0xff]
      %v2958 = vld [vmem:[%s8 + $0x68] sm:$0xf]
      %v2959 = vld [vmem:[%s8 + $0x6c] sm:$0xff]
      %v2960 = vld [vmem:[%s8 + $0x74] sm:$0xf]
      %v2961 = vld [vmem:[%s8 + $0x78] sm:$0xff]
      %v2962 = vld [vmem:[%s8 + $0x80] sm:$0xf]
      %v2963 = vld [vmem:[%s8 + $0x84] sm:$0xff]
      %v2964 = vld [vmem:[%s8 + $0x8c] sm:$0xf]
      %v2965 = vld [vmem:[%s8 + $0x90] sm:$0xff]
      %v2966 = vld [vmem:[%s8 + $0x98] sm:$0xf]
      %v2967 = vld [vmem:[%s8 + $0x9c] sm:$0xff]
      %v2968 = vld [vmem:[%s8 + $0xa4] sm:$0xf]
      %v2969 = vld [vmem:[%s8 + $0xa8] sm:$0xff]
      %v2970 = vld [vmem:[%s8 + $0xb0] sm:$0xf]
      %v2971 = vld [vmem:[%s8 + $0xb4] sm:$0xff]
      %v2972 = vld [vmem:[%s8 + $0xbc] sm:$0xf]
      %v2974 = vlaneseq
      %v2975 = vshrl.u32 %v2974, 7
      %v2976 = vsub.s32 0, %v2975
      %v2977 = vrot.slane %v2939, %v2976
      %v2978 = vlaneseq
      %v2979 = vshrl.u32 %v2978, 7
      %v2980 = vsub.s32 2, %v2979
      %v2981 = vrot.slane %v2939, %v2980
      %v2982 = vlaneseq
      %v2983 = vshrl.u32 %v2982, 7
      %v2984 = vsub.s32 4, %v2983
      %v2985 = vrot.slane %v2939, %v2984
      %v2989 = vlaneseq
      %v2990 = vshrl.u32 %v2989, 7
      %v2991 = vsub.s32 0, %v2990
      %v2992 = vrot.slane %v2977, %v2991
      %v2993 = vlaneseq
      %v2994 = vshrl.u32 %v2993, 7
      %v2995 = vsub.s32 0, %v2994
      %v2996 = vrot.slane %v2981, %v2995
      %v2997 = vlaneseq
      %v2998 = vshrl.u32 %v2997, 7
      %v2999 = vsub.s32 0, %v2998
      %v3000 = vrot.slane %v2985, %v2999
      %v3033 = vunpack.c.l.b16 %v2941
      %v3034 = vunpack.c.h.b16 %v2941
      %v3035 = vunpack.c.l.b16 %v2942
      %v3036 = vunpack.c.l.b16 %v2943
      %v3037 = vunpack.c.h.b16 %v2943
      %v3038 = vunpack.c.l.b16 %v2944
      %v3039 = vunpack.c.l.b16 %v2945
      %v3040 = vunpack.c.h.b16 %v2945
      %v3041 = vunpack.c.l.b16 %v2946
      %v3042 = vunpack.c.l.b16 %v2947
      %v3043 = vunpack.c.h.b16 %v2947
      %v3044 = vunpack.c.l.b16 %v2948
      %v3045 = vunpack.c.l.b16 %v2949
      %v3046 = vunpack.c.h.b16 %v2949
      %v3047 = vunpack.c.l.b16 %v2950
      %v3048 = vunpack.c.l.b16 %v2951
      %v3049 = vunpack.c.h.b16 %v2951
      %v3050 = vunpack.c.l.b16 %v2952
      %v3051 = vunpack.c.l.b16 %v2953
      %v3052 = vunpack.c.h.b16 %v2953
      %v3053 = vunpack.c.l.b16 %v2954
      %v3054 = vunpack.c.l.b16 %v2955
      %v3055 = vunpack.c.h.b16 %v2955
      %v3056 = vunpack.c.l.b16 %v2956
      %v3057 = vunpack.c.l.b16 %v2957
      %v3058 = vunpack.c.h.b16 %v2957
      %v3059 = vunpack.c.l.b16 %v2958
      %v3060 = vunpack.c.l.b16 %v2959
      %v3061 = vunpack.c.h.b16 %v2959
      %v3062 = vunpack.c.l.b16 %v2960
      %v3063 = vunpack.c.l.b16 %v2961
      %v3064 = vunpack.c.h.b16 %v2961
      %v3065 = vunpack.c.l.b16 %v2962
      %v3066 = vunpack.c.l.b16 %v2963
      %v3067 = vunpack.c.h.b16 %v2963
      %v3068 = vunpack.c.l.b16 %v2964
      %v3069 = vunpack.c.l.b16 %v2965
      %v3070 = vunpack.c.h.b16 %v2965
      %v3071 = vunpack.c.l.b16 %v2966
      %v3072 = vunpack.c.l.b16 %v2967
      %v3073 = vunpack.c.h.b16 %v2967
      %v3074 = vunpack.c.l.b16 %v2968
      %v3075 = vunpack.c.l.b16 %v2969
      %v3076 = vunpack.c.h.b16 %v2969
      %v3077 = vunpack.c.l.b16 %v2970
      %v3078 = vunpack.c.l.b16 %v2971
      %v3079 = vunpack.c.h.b16 %v2971
      %v3080 = vunpack.c.l.b16 %v2972
      %v3081 = vpack.c.b16 %v3036, %v3033
      %v3082 = vpack.c.b16 %v3037, %v3034
      %v3083 = vpack.c.b16 %v3038, %v3035
      %v3084 = vpack.c.b16 %v3042, %v3039
      %v3085 = vpack.c.b16 %v3043, %v3040
      %v3086 = vpack.c.b16 %v3044, %v3041
      %v3087 = vpack.c.b16 %v3048, %v3045
      %v3088 = vpack.c.b16 %v3049, %v3046
      %v3089 = vpack.c.b16 %v3050, %v3047
      %v3090 = vpack.c.b16 %v3054, %v3051
      %v3091 = vpack.c.b16 %v3055, %v3052
      %v3092 = vpack.c.b16 %v3056, %v3053
      %v3093 = vpack.c.b16 %v3060, %v3057
      %v3094 = vpack.c.b16 %v3061, %v3058
      %v3095 = vpack.c.b16 %v3062, %v3059
      %v3096 = vpack.c.b16 %v3066, %v3063
      %v3097 = vpack.c.b16 %v3067, %v3064
      %v3098 = vpack.c.b16 %v3068, %v3065
      %v3099 = vpack.c.b16 %v3072, %v3069
      %v3100 = vpack.c.b16 %v3073, %v3070
      %v3101 = vpack.c.b16 %v3074, %v3071
      %v3102 = vpack.c.b16 %v3078, %v3075
      %v3103 = vpack.c.b16 %v3079, %v3076
      %v3104 = vpack.c.b16 %v3080, %v3077
      %3129 = vmatprep.subr.bf16.mxu0 %v3082
      %3130 = vmatpush1.bf16.msra.mxu0 %v3081
      %3131 = vmatprep.subr.bf16.mxu0 %v3085
      %3132 = vmatpush1.bf16.msra.mxu0 %v3084
      %3133 = vmatprep.subr.bf16.mxu0 %v3088
      %3134 = vmatpush1.bf16.msra.mxu0 %v3087
      %3135 = vmatprep.subr.bf16.mxu0 %v3091
      %3136 = vmatpush1.bf16.msra.mxu0 %v3090
      %3137 = vmatprep.subr.bf16.mxu0 %v3094
      %3138 = vmatpush1.bf16.msra.mxu0 %v3093
      %3139 = vmatprep.subr.bf16.mxu0 %v3097
      %3140 = vmatpush1.bf16.msra.mxu0 %v3096
      %3141 = vmatprep.subr.bf16.mxu0 %v3100
      %3142 = vmatpush1.bf16.msra.mxu0 %v3099
      %3143 = vmatprep.subr.bf16.mxu0 %v3103
      %3144 = vmatpush1.bf16.msra.mxu0 %v3102
      %3145 = vmatprep.subr.bf16.mxu0 0
      %3146 = vmatpush1.bf16.msra.mxu0 0
      %3147 = vmatprep.subr.bf16.mxu0 0
      %3148 = vmatpush1.bf16.msra.mxu0 0
      %3149 = vmatprep.subr.bf16.mxu0 0
      %3150 = vmatpush1.bf16.msra.mxu0 0
      %3151 = vmatprep.subr.bf16.mxu0 0
      %3152 = vmatpush1.bf16.msra.mxu0 0
      %3153 = vmatprep.subr.bf16.mxu0 0
      %3154 = vmatpush1.bf16.msra.mxu0 0
      %3155 = vmatprep.subr.bf16.mxu0 0
      %3156 = vmatpush1.bf16.msra.mxu0 0
      %3157 = vmatprep.subr.bf16.mxu0 0
      %3158 = vmatpush1.bf16.msra.mxu0 0
      %3159 = vmatprep.subr.bf16.mxu0 0
      %3160 = vmatpush1.bf16.msra.mxu0 0
      %3161 = vmatprep.mubr.bf16.mxu0 0
      %3162 = vmatmul.mubr.bf16.gmra.mrb[0].mxu0 %v2940
      %v3163 = vpop.f32.mrb[0].mxu0
      %v3164 = vadd.f32 %v2992, %v3163
      %v3165 = vpop.f32.mrb[0].mxu0
      %v3166 = vadd.f32 %v2996, %v3165
      %v3167 = vpop.f32.mrb[0].mxu0
      %v3168 = vadd.f32 %v2992, %v3167
      %v3169 = vpop.f32.mrb[0].mxu0
      %v3170 = vadd.f32 %v2996, %v3169
      %3171 = vdwg.mxu0
      %3172 = vmatprep.subr.bf16.mxu0 0
      %3173 = vmatpush1.bf16.msra.mxu0 %v3083
      %3174 = vmatprep.subr.bf16.mxu0 0
      %3175 = vmatpush1.bf16.msra.mxu0 %v3086
      %3176 = vmatprep.subr.bf16.mxu0 0
      %3177 = vmatpush1.bf16.msra.mxu0 %v3089
      %3178 = vmatprep.subr.bf16.mxu0 0
      %3179 = vmatpush1.bf16.msra.mxu0 %v3092
      %3180 = vmatprep.subr.bf16.mxu0 0
      %3181 = vmatpush1.bf16.msra.mxu0 %v3095
      %3182 = vmatprep.subr.bf16.mxu0 0
      %3183 = vmatpush1.bf16.msra.mxu0 %v3098
      %3184 = vmatprep.subr.bf16.mxu0 0
      %3185 = vmatpush1.bf16.msra.mxu0 %v3101
      %3186 = vmatprep.subr.bf16.mxu0 0
      %3187 = vmatpush1.bf16.msra.mxu0 %v3104
      %3188 = vmatprep.subr.bf16.mxu0 0
      %3189 = vmatpush1.bf16.msra.mxu0 0
      %3190 = vmatprep.subr.bf16.mxu0 0
      %3191 = vmatpush1.bf16.msra.mxu0 0
      %3192 = vmatprep.subr.bf16.mxu0 0
      %3193 = vmatpush1.bf16.msra.mxu0 0
      %3194 = vmatprep.subr.bf16.mxu0 0
      %3195 = vmatpush1.bf16.msra.mxu0 0
      %3196 = vmatprep.subr.bf16.mxu0 0
      %3197 = vmatpush1.bf16.msra.mxu0 0
      %3198 = vmatprep.subr.bf16.mxu0 0
      %3199 = vmatpush1.bf16.msra.mxu0 0
      %3200 = vmatprep.subr.bf16.mxu0 0
      %3201 = vmatpush1.bf16.msra.mxu0 0
      %3202 = vmatprep.subr.bf16.mxu0 0
      %3203 = vmatpush1.bf16.msra.mxu0 0
      %3204 = vmatprep.mubr.bf16.mxu0 0
      %3205 = vmatmul.mubr.bf16.gmra.mrb[0].mxu0 %v2940
      %v3206 = vpop.f32.mrb[0].mxu0
      %v3207 = vadd.f32 %v3000, %v3206
      %v3208 = vpop.f32.mrb[0].mxu0
      %v3209 = vpop.f32.mrb[0].mxu0
      %v3210 = vadd.f32 %v3000, %v3209
      %v3211 = vpop.f32.mrb[0].mxu0
      %3212 = vdwg.mxu0
      %v3213 = vpack.c.bf16 %v2938, %v2937
      %v3214 = vld [vmem:[%s9] sm:$0xff]
      %v3215 = vld [vmem:[%s9 + $0x8] sm:$0xf]
      %v3216 = vld [vmem:[%s9 + $0xc] sm:$0xff]
      %v3217 = vld [vmem:[%s9 + $0x14] sm:$0xf]
      %v3218 = vld [vmem:[%s9 + $0x18] sm:$0xff]
      %v3219 = vld [vmem:[%s9 + $0x20] sm:$0xf]
      %v3220 = vld [vmem:[%s9 + $0x24] sm:$0xff]
      %v3221 = vld [vmem:[%s9 + $0x2c] sm:$0xf]
      %v3222 = vld [vmem:[%s9 + $0x30] sm:$0xff]
      %v3223 = vld [vmem:[%s9 + $0x38] sm:$0xf]
      %v3224 = vld [vmem:[%s9 + $0x3c] sm:$0xff]
      %v3225 = vld [vmem:[%s9 + $0x44] sm:$0xf]
      %v3226 = vld [vmem:[%s9 + $0x48] sm:$0xff]
      %v3227 = vld [vmem:[%s9 + $0x50] sm:$0xf]
      %v3228 = vld [vmem:[%s9 + $0x54] sm:$0xff]
      %v3229 = vld [vmem:[%s9 + $0x5c] sm:$0xf]
      %v3230 = vld [vmem:[%s9 + $0x60] sm:$0xff]
      %v3231 = vld [vmem:[%s9 + $0x68] sm:$0xf]
      %v3232 = vld [vmem:[%s9 + $0x6c] sm:$0xff]
      %v3233 = vld [vmem:[%s9 + $0x74] sm:$0xf]
      %v3234 = vld [vmem:[%s9 + $0x78] sm:$0xff]
      %v3235 = vld [vmem:[%s9 + $0x80] sm:$0xf]
      %v3236 = vld [vmem:[%s9 + $0x84] sm:$0xff]
      %v3237 = vld [vmem:[%s9 + $0x8c] sm:$0xf]
      %v3238 = vld [vmem:[%s9 + $0x90] sm:$0xff]
      %v3239 = vld [vmem:[%s9 + $0x98] sm:$0xf]
      %v3240 = vld [vmem:[%s9 + $0x9c] sm:$0xff]
      %v3241 = vld [vmem:[%s9 + $0xa4] sm:$0xf]
      %v3242 = vld [vmem:[%s9 + $0xa8] sm:$0xff]
      %v3243 = vld [vmem:[%s9 + $0xb0] sm:$0xf]
      %v3244 = vld [vmem:[%s9 + $0xb4] sm:$0xff]
      %v3245 = vld [vmem:[%s9 + $0xbc] sm:$0xf]
      %v3246 = vlaneseq
      %v3247 = vshrl.u32 %v3246, 7
      %v3248 = vsub.s32 1, %v3247
      %v3249 = vrot.slane %v2939, %v3248
      %v3250 = vlaneseq
      %v3251 = vshrl.u32 %v3250, 7
      %v3252 = vsub.s32 3, %v3251
      %v3253 = vrot.slane %v2939, %v3252
      %v3254 = vlaneseq
      %v3255 = vshrl.u32 %v3254, 7
      %v3256 = vsub.s32 5, %v3255
      %v3257 = vrot.slane %v2939, %v3256
      %v3261 = vlaneseq
      %v3262 = vshrl.u32 %v3261, 7
      %v3263 = vsub.s32 1, %v3262
      %v3264 = vrot.slane %v3249, %v3263
      %v3265 = vlaneseq
      %v3266 = vshrl.u32 %v3265, 7
      %v3267 = vsub.s32 1, %v3266
      %v3268 = vrot.slane %v3253, %v3267
      %v3269 = vlaneseq
      %v3270 = vshrl.u32 %v3269, 7
      %v3271 = vsub.s32 1, %v3270
      %v3272 = vrot.slane %v3257, %v3271
      %v3305 = vunpack.c.l.b16 %v3214
      %v3306 = vunpack.c.h.b16 %v3214
      %v3307 = vunpack.c.l.b16 %v3215
      %v3308 = vunpack.c.l.b16 %v3216
      %v3309 = vunpack.c.h.b16 %v3216
      %v3310 = vunpack.c.l.b16 %v3217
      %v3311 = vunpack.c.l.b16 %v3218
      %v3312 = vunpack.c.h.b16 %v3218
      %v3313 = vunpack.c.l.b16 %v3219
      %v3314 = vunpack.c.l.b16 %v3220
      %v3315 = vunpack.c.h.b16 %v3220
      %v3316 = vunpack.c.l.b16 %v3221
      %v3317 = vunpack.c.l.b16 %v3222
      %v3318 = vunpack.c.h.b16 %v3222
      %v3319 = vunpack.c.l.b16 %v3223
      %v3320 = vunpack.c.l.b16 %v3224
      %v3321 = vunpack.c.h.b16 %v3224
      %v3322 = vunpack.c.l.b16 %v3225
      %v3323 = vunpack.c.l.b16 %v3226
      %v3324 = vunpack.c.h.b16 %v3226
      %v3325 = vunpack.c.l.b16 %v3227
      %v3326 = vunpack.c.l.b16 %v3228
      %v3327 = vunpack.c.h.b16 %v3228
      %v3328 = vunpack.c.l.b16 %v3229
      %v3329 = vunpack.c.l.b16 %v3230
      %v3330 = vunpack.c.h.b16 %v3230
      %v3331 = vunpack.c.l.b16 %v3231
      %v3332 = vunpack.c.l.b16 %v3232
      %v3333 = vunpack.c.h.b16 %v3232
      %v3334 = vunpack.c.l.b16 %v3233
      %v3335 = vunpack.c.l.b16 %v3234
      %v3336 = vunpack.c.h.b16 %v3234
      %v3337 = vunpack.c.l.b16 %v3235
      %v3338 = vunpack.c.l.b16 %v3236
      %v3339 = vunpack.c.h.b16 %v3236
      %v3340 = vunpack.c.l.b16 %v3237
      %v3341 = vunpack.c.l.b16 %v3238
      %v3342 = vunpack.c.h.b16 %v3238
      %v3343 = vunpack.c.l.b16 %v3239
      %v3344 = vunpack.c.l.b16 %v3240
      %v3345 = vunpack.c.h.b16 %v3240
      %v3346 = vunpack.c.l.b16 %v3241
      %v3347 = vunpack.c.l.b16 %v3242
      %v3348 = vunpack.c.h.b16 %v3242
      %v3349 = vunpack.c.l.b16 %v3243
      %v3350 = vunpack.c.l.b16 %v3244
      %v3351 = vunpack.c.h.b16 %v3244
      %v3352 = vunpack.c.l.b16 %v3245
      %v3353 = vpack.c.b16 %v3308, %v3305
      %v3354 = vpack.c.b16 %v3309, %v3306
      %v3355 = vpack.c.b16 %v3310, %v3307
      %v3356 = vpack.c.b16 %v3314, %v3311
      %v3357 = vpack.c.b16 %v3315, %v3312
      %v3358 = vpack.c.b16 %v3316, %v3313
      %v3359 = vpack.c.b16 %v3320, %v3317
      %v3360 = vpack.c.b16 %v3321, %v3318
      %v3361 = vpack.c.b16 %v3322, %v3319
      %v3362 = vpack.c.b16 %v3326, %v3323
      %v3363 = vpack.c.b16 %v3327, %v3324
      %v3364 = vpack.c.b16 %v3328, %v3325
      %v3365 = vpack.c.b16 %v3332, %v3329
      %v3366 = vpack.c.b16 %v3333, %v3330
      %v3367 = vpack.c.b16 %v3334, %v3331
      %v3368 = vpack.c.b16 %v3338, %v3335
      %v3369 = vpack.c.b16 %v3339, %v3336
      %v3370 = vpack.c.b16 %v3340, %v3337
      %v3371 = vpack.c.b16 %v3344, %v3341
      %v3372 = vpack.c.b16 %v3345, %v3342
      %v3373 = vpack.c.b16 %v3346, %v3343
      %v3374 = vpack.c.b16 %v3350, %v3347
      %v3375 = vpack.c.b16 %v3351, %v3348
      %v3376 = vpack.c.b16 %v3352, %v3349
      %3401 = vmatprep.subr.bf16.mxu0 %v3354
      %3402 = vmatpush1.bf16.msra.mxu0 %v3353
      %3403 = vmatprep.subr.bf16.mxu0 %v3357
      %3404 = vmatpush1.bf16.msra.mxu0 %v3356
      %3405 = vmatprep.subr.bf16.mxu0 %v3360
      %3406 = vmatpush1.bf16.msra.mxu0 %v3359
      %3407 = vmatprep.subr.bf16.mxu0 %v3363
      %3408 = vmatpush1.bf16.msra.mxu0 %v3362
      %3409 = vmatprep.subr.bf16.mxu0 %v3366
      %3410 = vmatpush1.bf16.msra.mxu0 %v3365
      %3411 = vmatprep.subr.bf16.mxu0 %v3369
      %3412 = vmatpush1.bf16.msra.mxu0 %v3368
      %3413 = vmatprep.subr.bf16.mxu0 %v3372
      %3414 = vmatpush1.bf16.msra.mxu0 %v3371
      %3415 = vmatprep.subr.bf16.mxu0 %v3375
      %3416 = vmatpush1.bf16.msra.mxu0 %v3374
      %3417 = vmatprep.subr.bf16.mxu0 0
      %3418 = vmatpush1.bf16.msra.mxu0 0
      %3419 = vmatprep.subr.bf16.mxu0 0
      %3420 = vmatpush1.bf16.msra.mxu0 0
      %3421 = vmatprep.subr.bf16.mxu0 0
      %3422 = vmatpush1.bf16.msra.mxu0 0
      %3423 = vmatprep.subr.bf16.mxu0 0
      %3424 = vmatpush1.bf16.msra.mxu0 0
      %3425 = vmatprep.subr.bf16.mxu0 0
      %3426 = vmatpush1.bf16.msra.mxu0 0
      %3427 = vmatprep.subr.bf16.mxu0 0
      %3428 = vmatpush1.bf16.msra.mxu0 0
      %3429 = vmatprep.subr.bf16.mxu0 0
      %3430 = vmatpush1.bf16.msra.mxu0 0
      %3431 = vmatprep.subr.bf16.mxu0 0
      %3432 = vmatpush1.bf16.msra.mxu0 0
      %3433 = vmatprep.mubr.bf16.mxu0 0
      %3434 = vmatmul.mubr.bf16.gmra.mrb[0].mxu0 %v3213
      %v3435 = vpop.f32.mrb[0].mxu0
      %v3436 = vadd.f32 %v3264, %v3435
      %v3437 = vpop.f32.mrb[0].mxu0
      %v3438 = vadd.f32 %v3268, %v3437
      %v3439 = vpop.f32.mrb[0].mxu0
      %v3440 = vadd.f32 %v3264, %v3439
      %v3441 = vpop.f32.mrb[0].mxu0
      %v3442 = vadd.f32 %v3268, %v3441
      %3443 = vdwg.mxu0
      %3444 = vmatprep.subr.bf16.mxu0 0
      %3445 = vmatpush1.bf16.msra.mxu0 %v3355
      %3446 = vmatprep.subr.bf16.mxu0 0
      %3447 = vmatpush1.bf16.msra.mxu0 %v3358
      %3448 = vmatprep.subr.bf16.mxu0 0
      %3449 = vmatpush1.bf16.msra.mxu0 %v3361
      %3450 = vmatprep.subr.bf16.mxu0 0
      %3451 = vmatpush1.bf16.msra.mxu0 %v3364
      %3452 = vmatprep.subr.bf16.mxu0 0
      %3453 = vmatpush1.bf16.msra.mxu0 %v3367
      %3454 = vmatprep.subr.bf16.mxu0 0
      %3455 = vmatpush1.bf16.msra.mxu0 %v3370
      %3456 = vmatprep.subr.bf16.mxu0 0
      %3457 = vmatpush1.bf16.msra.mxu0 %v3373
      %3458 = vmatprep.subr.bf16.mxu0 0
      %3459 = vmatpush1.bf16.msra.mxu0 %v3376
      %3460 = vmatprep.subr.bf16.mxu0 0
      %3461 = vmatpush1.bf16.msra.mxu0 0
      %3462 = vmatprep.subr.bf16.mxu0 0
      %3463 = vmatpush1.bf16.msra.mxu0 0
      %3464 = vmatprep.subr.bf16.mxu0 0
      %3465 = vmatpush1.bf16.msra.mxu0 0
      %3466 = vmatprep.subr.bf16.mxu0 0
      %3467 = vmatpush1.bf16.msra.mxu0 0
      %3468 = vmatprep.subr.bf16.mxu0 0
      %3469 = vmatpush1.bf16.msra.mxu0 0
      %3470 = vmatprep.subr.bf16.mxu0 0
      %3471 = vmatpush1.bf16.msra.mxu0 0
      %3472 = vmatprep.subr.bf16.mxu0 0
      %3473 = vmatpush1.bf16.msra.mxu0 0
      %3474 = vmatprep.subr.bf16.mxu0 0
      %3475 = vmatpush1.bf16.msra.mxu0 0
      %3476 = vmatprep.mubr.bf16.mxu0 0
      %3477 = vmatmul.mubr.bf16.gmra.mrb[0].mxu0 %v3213
      %v3478 = vpop.f32.mrb[0].mxu0
      %v3479 = vadd.f32 %v3272, %v3478
      %v3480 = vpop.f32.mrb[0].mxu0
      %v3481 = vpop.f32.mrb[0].mxu0
      %v3482 = vadd.f32 %v3272, %v3481
      %v3483 = vpop.f32.mrb[0].mxu0
      %3484 = vdwg.mxu0
      %v3485 = vadd.f32 %v3164, %v3436
      %v3486 = vadd.f32 %v3168, %v3440
      %v3487 = vxor.u32 %v3485, 2147483648
      %v3488 = vxor.u32 %v3486, 2147483648
      %v3489 = vmul.f32 %v3487, 1.442695
      %v3490 = vpow.pop %v3489
      %v3491 = vmul.f32 %v3488, 1.442695
      %v3492 = vpow.pop %v3491
      %v3493 = vadd.f32 %v3490, 1.0
      %v3494 = vadd.f32 %v3492, 1.0
      %v3495 = vrcp.pop %v3493
      %v3496 = vmul.f32 1.0, %v3495
      %v3497 = vrcp.pop %v3494
      %v3498 = vmul.f32 1.0, %v3497
      %v3499 = vadd.f32 %v3166, %v3438
      %v3500 = vadd.f32 %v3170, %v3442
      %v3501 = vxor.u32 %v3499, 2147483648
      %v3502 = vxor.u32 %v3500, 2147483648
      %v3503 = vmul.f32 %v3501, 1.442695
      %v3504 = vpow.pop %v3503
      %v3505 = vmul.f32 %v3502, 1.442695
      %v3506 = vpow.pop %v3505
      %v3507 = vadd.f32 %v3504, 1.0
      %v3508 = vadd.f32 %v3506, 1.0
      %v3509 = vrcp.pop %v3507
      %v3510 = vmul.f32 1.0, %v3509
      %v3511 = vrcp.pop %v3508
      %v3512 = vmul.f32 1.0, %v3511
      %v3513 = vmul.f32 %v3496, %v3479
      %v3514 = vmul.f32 %v3498, %v3482
      %v3515 = vadd.f32 %v3207, %v3513
      %v3516 = vadd.f32 %v3210, %v3514
      %v3517 = vtanh.pop %v3515
      %v3518 = vtanh.pop %v3516
      %v3519 = vsub.f32 1.0, %v3510
      %v3520 = vsub.f32 1.0, %v3512
      %v3521 = vmul.f32 %v3519, %v3517
      %v3522 = vmul.f32 %v3520, %v3518
      %v3523 = vmul.f32 %v3510, %v2937
      %v3524 = vmul.f32 %v3512, %v2938
      %v3525 = vadd.f32 %v3521, %v3523
      %v3526 = vadd.f32 %v3522, %v3524
      %3527 = vst [vmem:[#allocation3] sm:$0xff] %v3525
      %3528 = vst [vmem:[#allocation3 + $0x8] sm:$0xff] %v3526
      %v3529 = vlaneseq
      %v3530 = vshrl.u32 %v3529, 7
      %v3531 = vsub.s32 6, %v3530
      %v3532 = vrot.slane %v115, %v3531
      %v3533 = vmul.f32 %v3525, %v3532
      %v3534 = vmul.f32 %v3526, %v3532
      %3535 = vadd.xlane.f32.xlu0 %v3533
      %v3536 = vpop.xlane.xlu0 %3535
      %3537 = vadd.xlane.f32.xlu0 %v3534
      %v3538 = vpop.xlane.xlu0 %3537
      %vm3539 = vcmask 7168
      %3540 = vst.msk [vmem:[%s13] sm:$0xff] %vm3539, %v3536
      %3541 = vst.msk [vmem:[%s13 + $0x8] sm:$0xff] %vm3539, %v3538
    $region57: #{tpar_forward.3} parent=1 // pred_fallthru
      _
    // Predicated region
    $region58: #{tpar_forward.3} parent=1 // pred_check
      _
    $region59: #{tpar_forward.3} parent=1 // pred_check_branch
      %3543 = sbr.rel (0) target = $region61
    $region60: #{tpar_forward.3} parent=1 // pred_region
      %s3545 = ssub.s32 256, 256
      %3546 = vsyncadd [#allocation4], %s3545
      %s3547 = sshll.u32 [#allocation3], 4
      %s3548 = int_to_ptr.vmem [resolvable:$true] %s3547
      %3553 = dma.vmem_to_hbm [thread:$0]  %s3548, 256, %s12, [#allocation4], 128, 128, 8
    $region61: #{tpar_forward.3} parent=1 // pred_fallthru
      _
    // Predicated region
    $region62: #{tpar_forward.3} parent=1 // pred_check
      _
    $region63: #{tpar_forward.3} parent=1 // pred_check_branch
      %3555 = sbr.rel (0) target = $region65
    $region64: #{tpar_forward.3} parent=1 // pred_region
      _
    $region65: #{tpar_forward.3} parent=1 // pred_fallthru
      _
    // Predicated region
    $region66: #{tpar_forward.3} parent=1 // pred_check
      _
    $region67: #{tpar_forward.3} parent=1 // pred_check_branch
      %3557 = sbr.rel (0) target = $region69
    $region68: #{tpar_forward.3} parent=1 // pred_region
      %3558 = dma.done [#allocation4], 256
    $region69: #{tpar_forward.3} parent=1 // pred_fallthru
      _
    // Predicated region
    $region70: #{tpar_forward.3} parent=1 // pred_check
      _
    $region71: #{tpar_forward.3} parent=1 // pred_check_branch
      %3560 = sbr.rel (0) target = $region73
    $region72: #{tpar_forward.3} parent=1 // pred_region
      _
    $region73: #{tpar_forward.3} parent=1 // pred_fallthru
      _
    %3561 = vsyncpa [#allocation4], 1

</llo_original>
